<compile_context>
chip_gen: v7x
topology: tpu7x:2x2x1
jax: 0.10.0
libtpu: 0.0.40
codegen_flags: <defaults>
</compile_context>

<pallas_src>
import functools

import jax
import jax.numpy as jnp
from jax import lax
from jax.experimental import pallas as pl
from jax.experimental.pallas import tpu as pltpu


# ----------------------------------------------------------------------------
# Fused separable-conv kernel:
#   depthwise KxK (valid) + bias -> pointwise 1x1 + bias -> ReLU -> BN affine
#   -> optional 2x2 max-pool, for a block of output rows of one batch element.
# ----------------------------------------------------------------------------
def _sepconv_kernel(x_ref, dww_ref, dwb_ref, pww_ref, pwb_ref, sc_ref, sh_ref,
                    o_ref, *scratch, K, th, Wo, pool, bcast):
    """x_ref: (H, W, Cin) one batch element (batch dim squeezed by BlockSpec).
       o_ref: (th_out, W_out, Cout) row block of this layer's output."""
    Cin = x_ref.shape[-1]
    row0 = pl.program_id(1) * th            # first depthwise-output row of block

    dww = dww_ref[...]                      # (K*K, Cin) depthwise weights
    dwb = dwb_ref[...]                      # (1, Cin)   depthwise bias
    pww = pww_ref[...]                      # (Cin, Cout) bf16 | (1, Cout) f32
    pwb = pwb_ref[...]                      # (1, Cout)
    sc = sc_ref[...]                        # (1, Cout) BN scale
    sh = sh_ref[...]                        # (1, Cout) BN shift

    def compute_row(row):
        """One depthwise output row -> pointwise -> ReLU -> BN. (Wo, Cout)."""
        acc = jnp.zeros((Wo, Cin), jnp.float32)      # small, register-resident
        for ky in range(K):
            slab = x_ref[row + ky]                   # (W, Cin), dynamic row idx
            for kx in range(K):
                t = ky * K + kx
                acc = acc + slab[kx:kx + Wo, :] * dww[t:t + 1, :]
        dwr = acc + dwb                              # (Wo, Cin)
        if bcast:                                    # Cin == 1: VPU outer product
            y = dwr * pww                            # (Wo,1)*(1,Cout)->(Wo,Cout)
        else:                                        # MXU matmul, bf16 in/f32 acc
            y = jnp.dot(dwr.astype(pww.dtype), pww,
                        preferred_element_type=jnp.float32)
        y = jnp.maximum(y + pwb, 0.0)                # bias + ReLU
        return y * sc + sh                           # eval-mode BatchNorm affine

    if pool:
        row_scr = scratch[0]                         # (Wo, Cout) VMEM scratch
        W2 = Wo // 2

        def body(r2, carry):
            row = row0 + 2 * r2
            # vertical (H) pool: max over the row pair
            row_scr[...] = jnp.maximum(compute_row(row), compute_row(row + 1))
            # horizontal (W) pool: strided column reads (stride=2)
            a = row_scr[pl.ds(0, W2, 2), :]          # even columns
            b = row_scr[pl.ds(1, W2, 2), :]          # odd columns
            o_ref[r2] = jnp.maximum(a, b)
            return carry

        lax.fori_loop(0, th // 2, body, 0)
    else:
        def body(r, carry):
            o_ref[r] = compute_row(row0 + r)
            return carry

        lax.fori_loop(0, th, body, 0)


# ----------------------------------------------------------------------------
# Fused tail kernel: AdaptiveAvgPool2d((1,1)) + fc1/ReLU/BN + fc2/ReLU/BN + fc3.
# ----------------------------------------------------------------------------
def _tail_kernel(x_ref, w1_ref, b1_ref, s1_ref, t1_ref,
                 w2_ref, b2_ref, s2_ref, t2_ref, w3_ref, b3_ref, o_ref):
    N, H, W, C = x_ref.shape
    acc = jnp.zeros((N, C), jnp.float32)
    for h in range(H):
        for w in range(W):
            acc = acc + x_ref[:, h, w, :]
    x = acc * (1.0 / (H * W))                        # global average pool

    h1 = jnp.dot(x.astype(w1_ref.dtype), w1_ref[...],
                 preferred_element_type=jnp.float32)
    h1 = jnp.maximum(h1 + b1_ref[...], 0.0) * s1_ref[...] + t1_ref[...]
    h2 = jnp.dot(h1.astype(w2_ref.dtype), w2_ref[...],
                 preferred_element_type=jnp.float32)
    h2 = jnp.maximum(h2 + b2_ref[...], 0.0) * s2_ref[...] + t2_ref[...]
    o_ref[...] = (jnp.dot(h2.astype(w3_ref.dtype), w3_ref[...],
                          preferred_element_type=jnp.float32) + b3_ref[...])


# ----------------------------------------------------------------------------
# Wrappers
# ----------------------------------------------------------------------------
def _row_tile(Ho, pool):
    """Largest divisor of Ho that is <= 24 (and even when pooling is fused)."""
    step = 2 if pool else 1
    for d in range(min(Ho, 24), 0, -1):
        if Ho % d == 0 and d % step == 0:
            return d
    return step


def separable_conv_layer(x, p, *, pool):
    """SeparableConvolutionLayer -> ReLU -> BatchNorm2d (eval) [-> maxpool 2x2]."""
    N, H, W, Cin = x.shape
    KK = p["dw_w"].shape[0]
    K = int(round(KK ** 0.5))
    Ho, Wo = H - K + 1, W - K + 1
    Cout = p["pw_b"].shape[1]
    H_out = Ho // 2 if pool else Ho
    W_out = Wo // 2 if pool else Wo
    th = _row_tile(Ho, pool)
    G = Ho // th
    th_out = th // 2 if pool else th
    bcast = (Cin == 1)

    kernel = functools.partial(_sepconv_kernel, K=K, th=th, Wo=Wo,
                               pool=pool, bcast=bcast)
    return pl.pallas_call(
        kernel,
        out_shape=jax.ShapeDtypeStruct((N, H_out, W_out, Cout), jnp.float32),
        grid=(N, G),
        in_specs=[
            pl.BlockSpec((None, H, W, Cin), lambda n, g: (n, 0, 0, 0)),
            pl.BlockSpec((KK, Cin), lambda n, g: (0, 0)),
            pl.BlockSpec((1, Cin), lambda n, g: (0, 0)),
            pl.BlockSpec(tuple(p["pw_w"].shape), lambda n, g: (0, 0)),
            pl.BlockSpec((1, Cout), lambda n, g: (0, 0)),
            pl.BlockSpec((1, Cout), lambda n, g: (0, 0)),
            pl.BlockSpec((1, Cout), lambda n, g: (0, 0)),
        ],
        out_specs=pl.BlockSpec((None, th_out, W_out, Cout),
                               lambda n, g: (n, g, 0, 0)),
        scratch_shapes=([pltpu.VMEM((Wo, Cout), jnp.float32)] if pool else []),
        compiler_params=pltpu.CompilerParams(
            dimension_semantics=("parallel", "parallel")),
    )(x, p["dw_w"], p["dw_b"], p["pw_w"], p["pw_b"],
      p["bn_scale"], p["bn_shift"])


def _full_spec(shape):
    nd = len(shape)
    return pl.BlockSpec(tuple(shape), lambda i: (0,) * nd)


def fc_tail(x, f1, f2, f3):
    """GAP + fc1/ReLU/BN + fc2/ReLU/BN + fc3 in a single pallas_call."""
    N = x.shape[0]
    n_class = f3["w"].shape[1]
    args = [x, f1["w"], f1["b"], f1["bn_scale"], f1["bn_shift"],
            f2["w"], f2["b"], f2["bn_scale"], f2["bn_shift"],
            f3["w"], f3["b"]]
    return pl.pallas_call(
        _tail_kernel,
        out_shape=jax.ShapeDtypeStruct((N, n_class), jnp.float32),
        grid=(1,),
        in_specs=[_full_spec(a.shape) for a in args],
        out_specs=_full_spec((N, n_class)),
        compiler_params=pltpu.CompilerParams(dimension_semantics=("arbitrary",)),
    )(*args)


# ----------------------------------------------------------------------------
# Deterministic parameter initialization (shapes follow the PyTorch module)
# ----------------------------------------------------------------------------
def _bn_affine(keys, c, eps):
    k1, k2, k3, k4 = keys
    gamma = 1.0 + 0.1 * jax.random.normal(k1, (1, c), jnp.float32)
    beta = 0.1 * jax.random.normal(k2, (1, c), jnp.float32)
    mean = 0.1 * jax.random.normal(k3, (1, c), jnp.float32)
    var = 1.0 + 0.1 * jnp.abs(jax.random.normal(k4, (1, c), jnp.float32))
    scale = gamma / jnp.sqrt(var + eps)
    shift = beta - mean * scale
    return scale, shift


def init_params(key, n_channels=1, n_filters=(64, 128, 256, 512),
                kernels_size=(3, 3, 3, 3), n_class=7, eps=1e-5):
    # conv1..conv8: (cin, cout, k) — two separable conv layers per block
    plan = []
    cin = n_channels
    for blk in range(4):
        k, cout = kernels_size[blk], n_filters[blk]
        plan.append((cin, cout, k))
        plan.append((cout, cout, k))
        cin = cout

    convs = []
    for (ci, co, k) in plan:
        key, *ks = jax.random.split(key, 9)
        dw_w = jax.random.normal(ks[0], (k * k, ci), jnp.float32) * (1.0 / (k * k))
        dw_b = 0.05 * jax.random.normal(ks[1], (1, ci), jnp.float32)
        pw_w = jax.random.normal(ks[2], (ci, co), jnp.float32) * (1.0 / float(ci) ** 0.5)
        if ci > 1:
            pw_w = pw_w.astype(jnp.bfloat16)   # MXU path: bf16 operands, f32 acc
        pw_b = 0.05 * jax.random.normal(ks[3], (1, co), jnp.float32)
        bn_scale, bn_shift = _bn_affine(ks[4:8], co, eps)
        convs.append(dict(dw_w=dw_w, dw_b=dw_b, pw_w=pw_w, pw_b=pw_b,
                          bn_scale=bn_scale, bn_shift=bn_shift))

    fcs = {}
    for name, (fi, fo, has_bn) in zip(
        ("fc1", "fc2", "fc3"),
        ((n_filters[3], 256, True), (256, 128, True), (128, n_class, False)),
    ):
        key, *ks = jax.random.split(key, 7)
        w = (jax.random.normal(ks[0], (fi, fo), jnp.float32)
             * (1.0 / float(fi) ** 0.5)).astype(jnp.bfloat16)
        b = 0.05 * jax.random.normal(ks[1], (1, fo), jnp.float32)
        d = dict(w=w, b=b)
        if has_bn:
            d["bn_scale"], d["bn_shift"] = _bn_affine(ks[2:6], fo, eps)
        fcs[name] = d

    return dict(convs=convs, **fcs)


# ----------------------------------------------------------------------------
# Full forward pass (mirrors SeparableConvolutionModel.forward, eval mode)
# ----------------------------------------------------------------------------
def separable_convolution_model(params, x_nchw):
    x = jnp.transpose(x_nchw, (0, 2, 3, 1)).astype(jnp.float32)  # NCHW -> NHWC
    for i, p in enumerate(params["convs"]):
        # conv_i -> ReLU -> BatchNorm_i  (+ fused max_pool2d(2) after conv2/conv4)
        x = separable_conv_layer(x, p, pool=(i in (1, 3)))
        # dropout after the second pool: identity in eval mode
    # AdaptiveAvgPool2d((1,1)) + view + fc1/fc2/fc3 (dropout = identity in eval)
    return fc_tail(x, params["fc1"], params["fc2"], params["fc3"])


if __name__ == "__main__":
    key = jax.random.PRNGKey(0)
    pkey, xkey = jax.random.split(key)
    params = init_params(pkey)

    # batch=2, 1 channel, 48x48: survives the eight 'valid' 3x3 convs and the
    # two 2x2 max-pools, ending at 1x1 spatial before the global average pool.
    x = jax.random.normal(xkey, (2, 1, 48, 48), jnp.float32)

    out = jax.block_until_ready(jax.jit(separable_convolution_model)(params, x))
    assert out.shape == (2, 7) and out.dtype == jnp.float32
    print("KERNEL_OK")
</pallas_src>

<mosaic_0001>
module attributes {stable_mosaic.version = 11 : i64} {
  func.func @_sepconv_kernel(%arg0: i32, %arg1: i32, %arg2: memref<1x48x48x1xf32, #tpu.memory_space<vmem>>, %arg3: memref<9x1xf32, #tpu.memory_space<vmem>>, %arg4: memref<1x1xf32, #tpu.memory_space<vmem>>, %arg5: memref<1x64xf32, #tpu.memory_space<vmem>>, %arg6: memref<1x64xf32, #tpu.memory_space<vmem>>, %arg7: memref<1x64xf32, #tpu.memory_space<vmem>>, %arg8: memref<1x64xf32, #tpu.memory_space<vmem>>, %arg9: memref<1x23x46x64xf32, #tpu.memory_space<vmem>>) attributes {dimension_semantics = [#tpu.dimension_semantics<parallel>, #tpu.dimension_semantics<parallel>], iteration_bounds = array<i64: 2, 2>, scalar_prefetch = 0 : i64, scratch_operands = 0 : i64, tpu.core_type = #tpu.core_type<tc>, window_params = [{transform_indices = @transform_0, window_bounds = array<i64: 1, 48, 48, 1>}, {pipeline_mode = #tpu.pipeline_mode<synchronous>, transform_indices = @transform_1, window_bounds = array<i64: 9, 1>}, {pipeline_mode = #tpu.pipeline_mode<synchronous>, transform_indices = @transform_2, window_bounds = array<i64: 1, 1>}, {pipeline_mode = #tpu.pipeline_mode<synchronous>, transform_indices = @transform_3, window_bounds = array<i64: 1, 64>}, {pipeline_mode = #tpu.pipeline_mode<synchronous>, transform_indices = @transform_4, window_bounds = array<i64: 1, 64>}, {pipeline_mode = #tpu.pipeline_mode<synchronous>, transform_indices = @transform_5, window_bounds = array<i64: 1, 64>}, {pipeline_mode = #tpu.pipeline_mode<synchronous>, transform_indices = @transform_6, window_bounds = array<i64: 1, 64>}, {transform_indices = @transform_7, window_bounds = array<i64: 1, 23, 46, 64>}]} {
    %c23_i32 = arith.constant 23 : i32
    %0 = arith.muli %arg1, %c23_i32 : i32
    %c0 = arith.constant 0 : index
    %c0_0 = arith.constant 0 : index
    %1 = vector.load %arg3[%c0, %c0_0] : memref<9x1xf32, #tpu.memory_space<vmem>>, vector<9x1xf32>
    %c0_1 = arith.constant 0 : index
    %c0_2 = arith.constant 0 : index
    %2 = vector.load %arg4[%c0_1, %c0_2] : memref<1x1xf32, #tpu.memory_space<vmem>>, vector<1x1xf32>
    %c0_3 = arith.constant 0 : index
    %c0_4 = arith.constant 0 : index
    %3 = vector.load %arg5[%c0_3, %c0_4] : memref<1x64xf32, #tpu.memory_space<vmem>>, vector<1x64xf32>
    %c0_5 = arith.constant 0 : index
    %c0_6 = arith.constant 0 : index
    %4 = vector.load %arg6[%c0_5, %c0_6] : memref<1x64xf32, #tpu.memory_space<vmem>>, vector<1x64xf32>
    %c0_7 = arith.constant 0 : index
    %c0_8 = arith.constant 0 : index
    %5 = vector.load %arg7[%c0_7, %c0_8] : memref<1x64xf32, #tpu.memory_space<vmem>>, vector<1x64xf32>
    %c0_9 = arith.constant 0 : index
    %c0_10 = arith.constant 0 : index
    %6 = vector.load %arg8[%c0_9, %c0_10] : memref<1x64xf32, #tpu.memory_space<vmem>>, vector<1x64xf32>
    %c0_i32 = arith.constant 0 : i32
    %c23_i32_11 = arith.constant 23 : i32
    %7 = arith.addi %c0_i32, %c23_i32_11 : i32
    %c1_i32 = arith.constant 1 : i32
    scf.for %arg10 = %c0_i32 to %7 step %c1_i32  : i32 {
      %8 = arith.addi %0, %arg10 : i32
      %cst = arith.constant 0.000000e+00 : f32
      %9 = vector.broadcast %cst : f32 to vector<46x1xf32>
      %c0_i32_13 = arith.constant 0 : i32
      %10 = arith.addi %8, %c0_i32_13 : i32
      %c0_14 = arith.constant 0 : index
      %11 = arith.index_cast %10 : i32 to index
      %c0_15 = arith.constant 0 : index
      %c0_16 = arith.constant 0 : index
      %12 = vector.load %arg2[%c0_14, %11, %c0_15, %c0_16] : memref<1x48x48x1xf32, #tpu.memory_space<vmem>>, vector<1x1x48x1xf32>
      %13 = vector.shape_cast %12 : vector<1x1x48x1xf32> to vector<48x1xf32>
      %14 = vector.extract_strided_slice %13 {offsets = [0, 0], sizes = [46, 1], strides = [1, 1]} : vector<48x1xf32> to vector<46x1xf32>
      %15 = vector.extract_strided_slice %1 {offsets = [0, 0], sizes = [1, 1], strides = [1, 1]} : vector<9x1xf32> to vector<1x1xf32>
      %16 = vector.broadcast %15 : vector<1x1xf32> to vector<46x1xf32>
      %17 = arith.mulf %14, %16 : vector<46x1xf32>
      %18 = arith.addf %9, %17 : vector<46x1xf32>
      %19 = vector.extract_strided_slice %13 {offsets = [1, 0], sizes = [46, 1], strides = [1, 1]} : vector<48x1xf32> to vector<46x1xf32>
      %20 = vector.extract_strided_slice %1 {offsets = [1, 0], sizes = [1, 1], strides = [1, 1]} : vector<9x1xf32> to vector<1x1xf32>
      %21 = vector.broadcast %20 : vector<1x1xf32> to vector<46x1xf32>
      %22 = arith.mulf %19, %21 : vector<46x1xf32>
      %23 = arith.addf %18, %22 : vector<46x1xf32>
      %24 = vector.extract_strided_slice %13 {offsets = [2, 0], sizes = [46, 1], strides = [1, 1]} : vector<48x1xf32> to vector<46x1xf32>
      %25 = vector.extract_strided_slice %1 {offsets = [2, 0], sizes = [1, 1], strides = [1, 1]} : vector<9x1xf32> to vector<1x1xf32>
      %26 = vector.broadcast %25 : vector<1x1xf32> to vector<46x1xf32>
      %27 = arith.mulf %24, %26 : vector<46x1xf32>
      %28 = arith.addf %23, %27 : vector<46x1xf32>
      %c1_i32_17 = arith.constant 1 : i32
      %29 = arith.addi %8, %c1_i32_17 : i32
      %c0_18 = arith.constant 0 : index
      %30 = arith.index_cast %29 : i32 to index
      %c0_19 = arith.constant 0 : index
      %c0_20 = arith.constant 0 : index
      %31 = vector.load %arg2[%c0_18, %30, %c0_19, %c0_20] : memref<1x48x48x1xf32, #tpu.memory_space<vmem>>, vector<1x1x48x1xf32>
      %32 = vector.shape_cast %31 : vector<1x1x48x1xf32> to vector<48x1xf32>
      %33 = vector.extract_strided_slice %32 {offsets = [0, 0], sizes = [46, 1], strides = [1, 1]} : vector<48x1xf32> to vector<46x1xf32>
      %34 = vector.extract_strided_slice %1 {offsets = [3, 0], sizes = [1, 1], strides = [1, 1]} : vector<9x1xf32> to vector<1x1xf32>
      %35 = vector.broadcast %34 : vector<1x1xf32> to vector<46x1xf32>
      %36 = arith.mulf %33, %35 : vector<46x1xf32>
      %37 = arith.addf %28, %36 : vector<46x1xf32>
      %38 = vector.extract_strided_slice %32 {offsets = [1, 0], sizes = [46, 1], strides = [1, 1]} : vector<48x1xf32> to vector<46x1xf32>
      %39 = vector.extract_strided_slice %1 {offsets = [4, 0], sizes = [1, 1], strides = [1, 1]} : vector<9x1xf32> to vector<1x1xf32>
      %40 = vector.broadcast %39 : vector<1x1xf32> to vector<46x1xf32>
      %41 = arith.mulf %38, %40 : vector<46x1xf32>
      %42 = arith.addf %37, %41 : vector<46x1xf32>
      %43 = vector.extract_strided_slice %32 {offsets = [2, 0], sizes = [46, 1], strides = [1, 1]} : vector<48x1xf32> to vector<46x1xf32>
      %44 = vector.extract_strided_slice %1 {offsets = [5, 0], sizes = [1, 1], strides = [1, 1]} : vector<9x1xf32> to vector<1x1xf32>
      %45 = vector.broadcast %44 : vector<1x1xf32> to vector<46x1xf32>
      %46 = arith.mulf %43, %45 : vector<46x1xf32>
      %47 = arith.addf %42, %46 : vector<46x1xf32>
      %c2_i32 = arith.constant 2 : i32
      %48 = arith.addi %8, %c2_i32 : i32
      %c0_21 = arith.constant 0 : index
      %49 = arith.index_cast %48 : i32 to index
      %c0_22 = arith.constant 0 : index
      %c0_23 = arith.constant 0 : index
      %50 = vector.load %arg2[%c0_21, %49, %c0_22, %c0_23] : memref<1x48x48x1xf32, #tpu.memory_space<vmem>>, vector<1x1x48x1xf32>
      %51 = vector.shape_cast %50 : vector<1x1x48x1xf32> to vector<48x1xf32>
      %52 = vector.extract_strided_slice %51 {offsets = [0, 0], sizes = [46, 1], strides = [1, 1]} : vector<48x1xf32> to vector<46x1xf32>
      %53 = vector.extract_strided_slice %1 {offsets = [6, 0], sizes = [1, 1], strides = [1, 1]} : vector<9x1xf32> to vector<1x1xf32>
      %54 = vector.broadcast %53 : vector<1x1xf32> to vector<46x1xf32>
      %55 = arith.mulf %52, %54 : vector<46x1xf32>
      %56 = arith.addf %47, %55 : vector<46x1xf32>
      %57 = vector.extract_strided_slice %51 {offsets = [1, 0], sizes = [46, 1], strides = [1, 1]} : vector<48x1xf32> to vector<46x1xf32>
      %58 = vector.extract_strided_slice %1 {offsets = [7, 0], sizes = [1, 1], strides = [1, 1]} : vector<9x1xf32> to vector<1x1xf32>
      %59 = vector.broadcast %58 : vector<1x1xf32> to vector<46x1xf32>
      %60 = arith.mulf %57, %59 : vector<46x1xf32>
      %61 = arith.addf %56, %60 : vector<46x1xf32>
      %62 = vector.extract_strided_slice %51 {offsets = [2, 0], sizes = [46, 1], strides = [1, 1]} : vector<48x1xf32> to vector<46x1xf32>
      %63 = vector.extract_strided_slice %1 {offsets = [8, 0], sizes = [1, 1], strides = [1, 1]} : vector<9x1xf32> to vector<1x1xf32>
      %64 = vector.broadcast %63 : vector<1x1xf32> to vector<46x1xf32>
      %65 = arith.mulf %62, %64 : vector<46x1xf32>
      %66 = arith.addf %61, %65 : vector<46x1xf32>
      %67 = vector.broadcast %2 : vector<1x1xf32> to vector<46x1xf32>
      %68 = arith.addf %66, %67 : vector<46x1xf32>
      %69 = vector.broadcast %68 : vector<46x1xf32> to vector<46x64xf32>
      %70 = vector.broadcast %3 : vector<1x64xf32> to vector<46x64xf32>
      %71 = arith.mulf %69, %70 : vector<46x64xf32>
      %72 = vector.broadcast %4 : vector<1x64xf32> to vector<46x64xf32>
      %73 = arith.addf %71, %72 : vector<46x64xf32>
      %cst_24 = arith.constant 0.000000e+00 : f32
      %74 = vector.broadcast %cst_24 : f32 to vector<46x64xf32>
      %75 = arith.maximumf %73, %74 : vector<46x64xf32>
      %76 = vector.broadcast %5 : vector<1x64xf32> to vector<46x64xf32>
      %77 = arith.mulf %75, %76 : vector<46x64xf32>
      %78 = vector.broadcast %6 : vector<1x64xf32> to vector<46x64xf32>
      %79 = arith.addf %77, %78 : vector<46x64xf32>
      %c0_25 = arith.constant 0 : index
      %80 = arith.index_cast %arg10 : i32 to index
      %c0_26 = arith.constant 0 : index
      %c0_27 = arith.constant 0 : index
      %81 = vector.load %arg9[%c0_25, %80, %c0_26, %c0_27] : memref<1x23x46x64xf32, #tpu.memory_space<vmem>>, vector<1x1x46x64xf32>
      %82 = vector.shape_cast %81 : vector<1x1x46x64xf32> to vector<46x64xf32>
      %83 = vector.shape_cast %79 : vector<46x64xf32> to vector<1x1x46x64xf32>
      tpu.vector_store %arg9[%c0_25, %80, %c0_26, %c0_27], %83 {strides = array<i32>} : memref<1x23x46x64xf32, #tpu.memory_space<vmem>>, vector<1x1x46x64xf32>,
    }
    %c23_i32_12 = arith.constant 23 : i32
    return
  }
  func.func @transform_0(%arg0: i32, %arg1: i32) -> (i32, i32, i32, i32) {
    %c0_i32 = arith.constant 0 : i32
    %c0_i32_0 = arith.constant 0 : i32
    %c0_i32_1 = arith.constant 0 : i32
    %c0_i32_2 = arith.constant 0 : i32
    return %arg0, %c0_i32, %c0_i32_0, %c0_i32_1 : i32, i32, i32, i32
  }
  func.func @transform_1(%arg0: i32, %arg1: i32) -> (i32, i32) {
    %c0_i32 = arith.constant 0 : i32
    %c0_i32_0 = arith.constant 0 : i32
    %c0_i32_1 = arith.constant 0 : i32
    return %c0_i32, %c0_i32_0 : i32, i32
  }
  func.func @transform_2(%arg0: i32, %arg1: i32) -> (i32, i32) {
    %c0_i32 = arith.constant 0 : i32
    %c0_i32_0 = arith.constant 0 : i32
    %c0_i32_1 = arith.constant 0 : i32
    return %c0_i32, %c0_i32_0 : i32, i32
  }
  func.func @transform_3(%arg0: i32, %arg1: i32) -> (i32, i32) {
    %c0_i32 = arith.constant 0 : i32
    %c0_i32_0 = arith.constant 0 : i32
    %c0_i32_1 = arith.constant 0 : i32
    return %c0_i32, %c0_i32_0 : i32, i32
  }
  func.func @transform_4(%arg0: i32, %arg1: i32) -> (i32, i32) {
    %c0_i32 = arith.constant 0 : i32
    %c0_i32_0 = arith.constant 0 : i32
    %c0_i32_1 = arith.constant 0 : i32
    return %c0_i32, %c0_i32_0 : i32, i32
  }
  func.func @transform_5(%arg0: i32, %arg1: i32) -> (i32, i32) {
    %c0_i32 = arith.constant 0 : i32
    %c0_i32_0 = arith.constant 0 : i32
    %c0_i32_1 = arith.constant 0 : i32
    return %c0_i32, %c0_i32_0 : i32, i32
  }
  func.func @transform_6(%arg0: i32, %arg1: i32) -> (i32, i32) {
    %c0_i32 = arith.constant 0 : i32
    %c0_i32_0 = arith.constant 0 : i32
    %c0_i32_1 = arith.constant 0 : i32
    return %c0_i32, %c0_i32_0 : i32, i32
  }
  func.func @transform_7(%arg0: i32, %arg1: i32) -> (i32, i32, i32, i32) {
    %c0_i32 = arith.constant 0 : i32
    %c0_i32_0 = arith.constant 0 : i32
    %c0_i32_1 = arith.constant 0 : i32
    return %arg0, %arg1, %c0_i32, %c0_i32_0 : i32, i32, i32, i32
  }
}

module attributes {stable_mosaic.version = 11 : i64} {
  func.func @_sepconv_kernel(%arg0: i32, %arg1: i32, %arg2: memref<1x46x46x64xf32, #tpu.memory_space<vmem>>, %arg3: memref<9x64xf32, #tpu.memory_space<vmem>>, %arg4: memref<1x64xf32, #tpu.memory_space<vmem>>, %arg5: memref<64x64xbf16, #tpu.memory_space<vmem>>, %arg6: memref<1x64xf32, #tpu.memory_space<vmem>>, %arg7: memref<1x64xf32, #tpu.memory_space<vmem>>, %arg8: memref<1x64xf32, #tpu.memory_space<vmem>>, %arg9: memref<1x11x22x64xf32, #tpu.memory_space<vmem>>, %arg10: memref<44x64xf32, #tpu.memory_space<vmem>>) attributes {dimension_semantics = [#tpu.dimension_semantics<parallel>, #tpu.dimension_semantics<parallel>], iteration_bounds = array<i64: 2, 2>, scalar_prefetch = 0 : i64, scratch_operands = 1 : i64, tpu.core_type = #tpu.core_type<tc>, window_params = [{transform_indices = @transform_0, window_bounds = array<i64: 1, 46, 46, 64>}, {pipeline_mode = #tpu.pipeline_mode<synchronous>, transform_indices = @transform_1, window_bounds = array<i64: 9, 64>}, {pipeline_mode = #tpu.pipeline_mode<synchronous>, transform_indices = @transform_2, window_bounds = array<i64: 1, 64>}, {pipeline_mode = #tpu.pipeline_mode<synchronous>, transform_indices = @transform_3, window_bounds = array<i64: 64, 64>}, {pipeline_mode = #tpu.pipeline_mode<synchronous>, transform_indices = @transform_4, window_bounds = array<i64: 1, 64>}, {pipeline_mode = #tpu.pipeline_mode<synchronous>, transform_indices = @transform_5, window_bounds = array<i64: 1, 64>}, {pipeline_mode = #tpu.pipeline_mode<synchronous>, transform_indices = @transform_6, window_bounds = array<i64: 1, 64>}, {transform_indices = @transform_7, window_bounds = array<i64: 1, 11, 22, 64>}]} {
    %c22_i32 = arith.constant 22 : i32
    %0 = arith.muli %arg1, %c22_i32 : i32
    %c0 = arith.constant 0 : index
    %c0_0 = arith.constant 0 : index
    %1 = vector.load %arg3[%c0, %c0_0] : memref<9x64xf32, #tpu.memory_space<vmem>>, vector<9x64xf32>
    %c0_1 = arith.constant 0 : index
    %c0_2 = arith.constant 0 : index
    %2 = vector.load %arg4[%c0_1, %c0_2] : memref<1x64xf32, #tpu.memory_space<vmem>>, vector<1x64xf32>
    %c0_3 = arith.constant 0 : index
    %c0_4 = arith.constant 0 : index
    %3 = vector.load %arg5[%c0_3, %c0_4] : memref<64x64xbf16, #tpu.memory_space<vmem>>, vector<64x64xbf16>
    %c0_5 = arith.constant 0 : index
    %c0_6 = arith.constant 0 : index
    %4 = vector.load %arg6[%c0_5, %c0_6] : memref<1x64xf32, #tpu.memory_space<vmem>>, vector<1x64xf32>
    %c0_7 = arith.constant 0 : index
    %c0_8 = arith.constant 0 : index
    %5 = vector.load %arg7[%c0_7, %c0_8] : memref<1x64xf32, #tpu.memory_space<vmem>>, vector<1x64xf32>
    %c0_9 = arith.constant 0 : index
    %c0_10 = arith.constant 0 : index
    %6 = vector.load %arg8[%c0_9, %c0_10] : memref<1x64xf32, #tpu.memory_space<vmem>>, vector<1x64xf32>
    %c0_i32 = arith.constant 0 : i32
    %c11_i32 = arith.constant 11 : i32
    %7 = arith.addi %c0_i32, %c11_i32 : i32
    %c1_i32 = arith.constant 1 : i32
    scf.for %arg11 = %c0_i32 to %7 step %c1_i32  : i32 {
      %c2_i32 = arith.constant 2 : i32
      %8 = arith.muli %c2_i32, %arg11 : i32
      %9 = arith.addi %0, %8 : i32
      %cst = arith.constant 0.000000e+00 : f32
      %10 = vector.broadcast %cst : f32 to vector<44x64xf32>
      %c0_i32_12 = arith.constant 0 : i32
      %11 = arith.addi %9, %c0_i32_12 : i32
      %c0_13 = arith.constant 0 : index
      %12 = arith.index_cast %11 : i32 to index
      %c0_14 = arith.constant 0 : index
      %c0_15 = arith.constant 0 : index
      %13 = vector.load %arg2[%c0_13, %12, %c0_14, %c0_15] : memref<1x46x46x64xf32, #tpu.memory_space<vmem>>, vector<1x1x46x64xf32>
      %14 = vector.shape_cast %13 : vector<1x1x46x64xf32> to vector<46x64xf32>
      %15 = vector.extract_strided_slice %14 {offsets = [0, 0], sizes = [44, 64], strides = [1, 1]} : vector<46x64xf32> to vector<44x64xf32>
      %16 = vector.extract_strided_slice %1 {offsets = [0, 0], sizes = [1, 64], strides = [1, 1]} : vector<9x64xf32> to vector<1x64xf32>
      %17 = vector.broadcast %16 : vector<1x64xf32> to vector<44x64xf32>
      %18 = arith.mulf %15, %17 : vector<44x64xf32>
      %19 = arith.addf %10, %18 : vector<44x64xf32>
      %20 = vector.extract_strided_slice %14 {offsets = [1, 0], sizes = [44, 64], strides = [1, 1]} : vector<46x64xf32> to vector<44x64xf32>
      %21 = vector.extract_strided_slice %1 {offsets = [1, 0], sizes = [1, 64], strides = [1, 1]} : vector<9x64xf32> to vector<1x64xf32>
      %22 = vector.broadcast %21 : vector<1x64xf32> to vector<44x64xf32>
      %23 = arith.mulf %20, %22 : vector<44x64xf32>
      %24 = arith.addf %19, %23 : vector<44x64xf32>
      %25 = vector.extract_strided_slice %14 {offsets = [2, 0], sizes = [44, 64], strides = [1, 1]} : vector<46x64xf32> to vector<44x64xf32>
      %26 = vector.extract_strided_slice %1 {offsets = [2, 0], sizes = [1, 64], strides = [1, 1]} : vector<9x64xf32> to vector<1x64xf32>
      %27 = vector.broadcast %26 : vector<1x64xf32> to vector<44x64xf32>
      %28 = arith.mulf %25, %27 : vector<44x64xf32>
      %29 = arith.addf %24, %28 : vector<44x64xf32>
      %c1_i32_16 = arith.constant 1 : i32
      %30 = arith.addi %9, %c1_i32_16 : i32
      %c0_17 = arith.constant 0 : index
      %31 = arith.index_cast %30 : i32 to index
      %c0_18 = arith.constant 0 : index
      %c0_19 = arith.constant 0 : index
      %32 = vector.load %arg2[%c0_17, %31, %c0_18, %c0_19] : memref<1x46x46x64xf32, #tpu.memory_space<vmem>>, vector<1x1x46x64xf32>
      %33 = vector.shape_cast %32 : vector<1x1x46x64xf32> to vector<46x64xf32>
      %34 = vector.extract_strided_slice %33 {offsets = [0, 0], sizes = [44, 64], strides = [1, 1]} : vector<46x64xf32> to vector<44x64xf32>
      %35 = vector.extract_strided_slice %1 {offsets = [3, 0], sizes = [1, 64], strides = [1, 1]} : vector<9x64xf32> to vector<1x64xf32>
      %36 = vector.broadcast %35 : vector<1x64xf32> to vector<44x64xf32>
      %37 = arith.mulf %34, %36 : vector<44x64xf32>
      %38 = arith.addf %29, %37 : vector<44x64xf32>
      %39 = vector.extract_strided_slice %33 {offsets = [1, 0], sizes = [44, 64], strides = [1, 1]} : vector<46x64xf32> to vector<44x64xf32>
      %40 = vector.extract_strided_slice %1 {offsets = [4, 0], sizes = [1, 64], strides = [1, 1]} : vector<9x64xf32> to vector<1x64xf32>
      %41 = vector.broadcast %40 : vector<1x64xf32> to vector<44x64xf32>
      %42 = arith.mulf %39, %41 : vector<44x64xf32>
      %43 = arith.addf %38, %42 : vector<44x64xf32>
      %44 = vector.extract_strided_slice %33 {offsets = [2, 0], sizes = [44, 64], strides = [1, 1]} : vector<46x64xf32> to vector<44x64xf32>
      %45 = vector.extract_strided_slice %1 {offsets = [5, 0], sizes = [1, 64], strides = [1, 1]} : vector<9x64xf32> to vector<1x64xf32>
      %46 = vector.broadcast %45 : vector<1x64xf32> to vector<44x64xf32>
      %47 = arith.mulf %44, %46 : vector<44x64xf32>
      %48 = arith.addf %43, %47 : vector<44x64xf32>
      %c2_i32_20 = arith.constant 2 : i32
      %49 = arith.addi %9, %c2_i32_20 : i32
      %c0_21 = arith.constant 0 : index
      %50 = arith.index_cast %49 : i32 to index
      %c0_22 = arith.constant 0 : index
      %c0_23 = arith.constant 0 : index
      %51 = vector.load %arg2[%c0_21, %50, %c0_22, %c0_23] : memref<1x46x46x64xf32, #tpu.memory_space<vmem>>, vector<1x1x46x64xf32>
      %52 = vector.shape_cast %51 : vector<1x1x46x64xf32> to vector<46x64xf32>
      %53 = vector.extract_strided_slice %52 {offsets = [0, 0], sizes = [44, 64], strides = [1, 1]} : vector<46x64xf32> to vector<44x64xf32>
      %54 = vector.extract_strided_slice %1 {offsets = [6, 0], sizes = [1, 64], strides = [1, 1]} : vector<9x64xf32> to vector<1x64xf32>
      %55 = vector.broadcast %54 : vector<1x64xf32> to vector<44x64xf32>
      %56 = arith.mulf %53, %55 : vector<44x64xf32>
      %57 = arith.addf %48, %56 : vector<44x64xf32>
      %58 = vector.extract_strided_slice %52 {offsets = [1, 0], sizes = [44, 64], strides = [1, 1]} : vector<46x64xf32> to vector<44x64xf32>
      %59 = vector.extract_strided_slice %1 {offsets = [7, 0], sizes = [1, 64], strides = [1, 1]} : vector<9x64xf32> to vector<1x64xf32>
      %60 = vector.broadcast %59 : vector<1x64xf32> to vector<44x64xf32>
      %61 = arith.mulf %58, %60 : vector<44x64xf32>
      %62 = arith.addf %57, %61 : vector<44x64xf32>
      %63 = vector.extract_strided_slice %52 {offsets = [2, 0], sizes = [44, 64], strides = [1, 1]} : vector<46x64xf32> to vector<44x64xf32>
      %64 = vector.extract_strided_slice %1 {offsets = [8, 0], sizes = [1, 64], strides = [1, 1]} : vector<9x64xf32> to vector<1x64xf32>
      %65 = vector.broadcast %64 : vector<1x64xf32> to vector<44x64xf32>
      %66 = arith.mulf %63, %65 : vector<44x64xf32>
      %67 = arith.addf %62, %66 : vector<44x64xf32>
      %68 = vector.broadcast %2 : vector<1x64xf32> to vector<44x64xf32>
      %69 = arith.addf %67, %68 : vector<44x64xf32>
      %70 = arith.truncf %69 : vector<44x64xf32> to vector<44x64xbf16>
      %cst_24 = arith.constant dense<0.000000e+00> : vector<44x64xf32>
      %71 = tpu.matmul %70, %3, %cst_24 {dimension_numbers = #tpu.dot_dimension_numbers<[1], [0], [0], [1], [0, 0, 1, 1], [], []>} : vector<44x64xbf16>, vector<64x64xbf16>, vector<44x64xf32> -> vector<44x64xf32>
      %72 = vector.broadcast %4 : vector<1x64xf32> to vector<44x64xf32>
      %73 = arith.addf %71, %72 : vector<44x64xf32>
      %cst_25 = arith.constant 0.000000e+00 : f32
      %74 = vector.broadcast %cst_25 : f32 to vector<44x64xf32>
      %75 = arith.maximumf %73, %74 : vector<44x64xf32>
      %76 = vector.broadcast %5 : vector<1x64xf32> to vector<44x64xf32>
      %77 = arith.mulf %75, %76 : vector<44x64xf32>
      %78 = vector.broadcast %6 : vector<1x64xf32> to vector<44x64xf32>
      %79 = arith.addf %77, %78 : vector<44x64xf32>
      %c1_i32_26 = arith.constant 1 : i32
      %80 = arith.addi %9, %c1_i32_26 : i32
      %cst_27 = arith.constant 0.000000e+00 : f32
      %81 = vector.broadcast %cst_27 : f32 to vector<44x64xf32>
      %c0_i32_28 = arith.constant 0 : i32
      %82 = arith.addi %80, %c0_i32_28 : i32
      %c0_29 = arith.constant 0 : index
      %83 = arith.index_cast %82 : i32 to index
      %c0_30 = arith.constant 0 : index
      %c0_31 = arith.constant 0 : index
      %84 = vector.load %arg2[%c0_29, %83, %c0_30, %c0_31] : memref<1x46x46x64xf32, #tpu.memory_space<vmem>>, vector<1x1x46x64xf32>
      %85 = vector.shape_cast %84 : vector<1x1x46x64xf32> to vector<46x64xf32>
      %86 = vector.extract_strided_slice %85 {offsets = [0, 0], sizes = [44, 64], strides = [1, 1]} : vector<46x64xf32> to vector<44x64xf32>
      %87 = vector.extract_strided_slice %1 {offsets = [0, 0], sizes = [1, 64], strides = [1, 1]} : vector<9x64xf32> to vector<1x64xf32>
      %88 = vector.broadcast %87 : vector<1x64xf32> to vector<44x64xf32>
      %89 = arith.mulf %86, %88 : vector<44x64xf32>
      %90 = arith.addf %81, %89 : vector<44x64xf32>
      %91 = vector.extract_strided_slice %85 {offsets = [1, 0], sizes = [44, 64], strides = [1, 1]} : vector<46x64xf32> to vector<44x64xf32>
      %92 = vector.extract_strided_slice %1 {offsets = [1, 0], sizes = [1, 64], strides = [1, 1]} : vector<9x64xf32> to vector<1x64xf32>
      %93 = vector.broadcast %92 : vector<1x64xf32> to vector<44x64xf32>
      %94 = arith.mulf %91, %93 : vector<44x64xf32>
      %95 = arith.addf %90, %94 : vector<44x64xf32>
      %96 = vector.extract_strided_slice %85 {offsets = [2, 0], sizes = [44, 64], strides = [1, 1]} : vector<46x64xf32> to vector<44x64xf32>
      %97 = vector.extract_strided_slice %1 {offsets = [2, 0], sizes = [1, 64], strides = [1, 1]} : vector<9x64xf32> to vector<1x64xf32>
      %98 = vector.broadcast %97 : vector<1x64xf32> to vector<44x64xf32>
      %99 = arith.mulf %96, %98 : vector<44x64xf32>
      %100 = arith.addf %95, %99 : vector<44x64xf32>
      %c1_i32_32 = arith.constant 1 : i32
      %101 = arith.addi %80, %c1_i32_32 : i32
      %c0_33 = arith.constant 0 : index
      %102 = arith.index_cast %101 : i32 to index
      %c0_34 = arith.constant 0 : index
      %c0_35 = arith.constant 0 : index
      %103 = vector.load %arg2[%c0_33, %102, %c0_34, %c0_35] : memref<1x46x46x64xf32, #tpu.memory_space<vmem>>, vector<1x1x46x64xf32>
      %104 = vector.shape_cast %103 : vector<1x1x46x64xf32> to vector<46x64xf32>
      %105 = vector.extract_strided_slice %104 {offsets = [0, 0], sizes = [44, 64], strides = [1, 1]} : vector<46x64xf32> to vector<44x64xf32>
      %106 = vector.extract_strided_slice %1 {offsets = [3, 0], sizes = [1, 64], strides = [1, 1]} : vector<9x64xf32> to vector<1x64xf32>
      %107 = vector.broadcast %106 : vector<1x64xf32> to vector<44x64xf32>
      %108 = arith.mulf %105, %107 : vector<44x64xf32>
      %109 = arith.addf %100, %108 : vector<44x64xf32>
      %110 = vector.extract_strided_slice %104 {offsets = [1, 0], sizes = [44, 64], strides = [1, 1]} : vector<46x64xf32> to vector<44x64xf32>
      %111 = vector.extract_strided_slice %1 {offsets = [4, 0], sizes = [1, 64], strides = [1, 1]} : vector<9x64xf32> to vector<1x64xf32>
      %112 = vector.broadcast %111 : vector<1x64xf32> to vector<44x64xf32>
      %113 = arith.mulf %110, %112 : vector<44x64xf32>
      %114 = arith.addf %109, %113 : vector<44x64xf32>
      %115 = vector.extract_strided_slice %104 {offsets = [2, 0], sizes = [44, 64], strides = [1, 1]} : vector<46x64xf32> to vector<44x64xf32>
      %116 = vector.extract_strided_slice %1 {offsets = [5, 0], sizes = [1, 64], strides = [1, 1]} : vector<9x64xf32> to vector<1x64xf32>
      %117 = vector.broadcast %116 : vector<1x64xf32> to vector<44x64xf32>
      %118 = arith.mulf %115, %117 : vector<44x64xf32>
      %119 = arith.addf %114, %118 : vector<44x64xf32>
      %c2_i32_36 = arith.constant 2 : i32
      %120 = arith.addi %80, %c2_i32_36 : i32
      %c0_37 = arith.constant 0 : index
      %121 = arith.index_cast %120 : i32 to index
      %c0_38 = arith.constant 0 : index
      %c0_39 = arith.constant 0 : index
      %122 = vector.load %arg2[%c0_37, %121, %c0_38, %c0_39] : memref<1x46x46x64xf32, #tpu.memory_space<vmem>>, vector<1x1x46x64xf32>
      %123 = vector.shape_cast %122 : vector<1x1x46x64xf32> to vector<46x64xf32>
      %124 = vector.extract_strided_slice %123 {offsets = [0, 0], sizes = [44, 64], strides = [1, 1]} : vector<46x64xf32> to vector<44x64xf32>
      %125 = vector.extract_strided_slice %1 {offsets = [6, 0], sizes = [1, 64], strides = [1, 1]} : vector<9x64xf32> to vector<1x64xf32>
      %126 = vector.broadcast %125 : vector<1x64xf32> to vector<44x64xf32>
      %127 = arith.mulf %124, %126 : vector<44x64xf32>
      %128 = arith.addf %119, %127 : vector<44x64xf32>
      %129 = vector.extract_strided_slice %123 {offsets = [1, 0], sizes = [44, 64], strides = [1, 1]} : vector<46x64xf32> to vector<44x64xf32>
      %130 = vector.extract_strided_slice %1 {offsets = [7, 0], sizes = [1, 64], strides = [1, 1]} : vector<9x64xf32> to vector<1x64xf32>
      %131 = vector.broadcast %130 : vector<1x64xf32> to vector<44x64xf32>
      %132 = arith.mulf %129, %131 : vector<44x64xf32>
      %133 = arith.addf %128, %132 : vector<44x64xf32>
      %134 = vector.extract_strided_slice %123 {offsets = [2, 0], sizes = [44, 64], strides = [1, 1]} : vector<46x64xf32> to vector<44x64xf32>
      %135 = vector.extract_strided_slice %1 {offsets = [8, 0], sizes = [1, 64], strides = [1, 1]} : vector<9x64xf32> to vector<1x64xf32>
      %136 = vector.broadcast %135 : vector<1x64xf32> to vector<44x64xf32>
      %137 = arith.mulf %134, %136 : vector<44x64xf32>
      %138 = arith.addf %133, %137 : vector<44x64xf32>
      %139 = vector.broadcast %2 : vector<1x64xf32> to vector<44x64xf32>
      %140 = arith.addf %138, %139 : vector<44x64xf32>
      %141 = arith.truncf %140 : vector<44x64xf32> to vector<44x64xbf16>
      %cst_40 = arith.constant dense<0.000000e+00> : vector<44x64xf32>
      %142 = tpu.matmul %141, %3, %cst_40 {dimension_numbers = #tpu.dot_dimension_numbers<[1], [0], [0], [1], [0, 0, 1, 1], [], []>} : vector<44x64xbf16>, vector<64x64xbf16>, vector<44x64xf32> -> vector<44x64xf32>
      %143 = vector.broadcast %4 : vector<1x64xf32> to vector<44x64xf32>
      %144 = arith.addf %142, %143 : vector<44x64xf32>
      %cst_41 = arith.constant 0.000000e+00 : f32
      %145 = vector.broadcast %cst_41 : f32 to vector<44x64xf32>
      %146 = arith.maximumf %144, %145 : vector<44x64xf32>
      %147 = vector.broadcast %5 : vector<1x64xf32> to vector<44x64xf32>
      %148 = arith.mulf %146, %147 : vector<44x64xf32>
      %149 = vector.broadcast %6 : vector<1x64xf32> to vector<44x64xf32>
      %150 = arith.addf %148, %149 : vector<44x64xf32>
      %151 = arith.maximumf %79, %150 : vector<44x64xf32>
      %c0_42 = arith.constant 0 : index
      %c0_43 = arith.constant 0 : index
      %152 = vector.load %arg10[%c0_42, %c0_43] : memref<44x64xf32, #tpu.memory_space<vmem>>, vector<44x64xf32>
      tpu.vector_store %arg10[%c0_42, %c0_43], %151 {strides = array<i32>} : memref<44x64xf32, #tpu.memory_space<vmem>>, vector<44x64xf32>,
      %c0_44 = arith.constant 0 : index
      %c0_45 = arith.constant 0 : index
      %153 = tpu.strided_load %arg10[%c0_44, %c0_45] {strides = array<i32: 2, 1>} : memref<44x64xf32, #tpu.memory_space<vmem>>, vector<22x64xf32>
      %c1 = arith.constant 1 : index
      %c0_46 = arith.constant 0 : index
      %154 = tpu.strided_load %arg10[%c1, %c0_46] {strides = array<i32: 2, 1>} : memref<44x64xf32, #tpu.memory_space<vmem>>, vector<22x64xf32>
      %155 = arith.maximumf %153, %154 : vector<22x64xf32>
      %c0_47 = arith.constant 0 : index
      %156 = arith.index_cast %arg11 : i32 to index
      %c0_48 = arith.constant 0 : index
      %c0_49 = arith.constant 0 : index
      %157 = vector.load %arg9[%c0_47, %156, %c0_48, %c0_49] : memref<1x11x22x64xf32, #tpu.memory_space<vmem>>, vector<1x1x22x64xf32>
      %158 = vector.shape_cast %157 : vector<1x1x22x64xf32> to vector<22x64xf32>
      %159 = vector.shape_cast %155 : vector<22x64xf32> to vector<1x1x22x64xf32>
      tpu.vector_store %arg9[%c0_47, %156, %c0_48, %c0_49], %159 {strides = array<i32>} : memref<1x11x22x64xf32, #tpu.memory_space<vmem>>, vector<1x1x22x64xf32>,
    }
    %c11_i32_11 = arith.constant 11 : i32
    return
  }
  func.func @transform_0(%arg0: i32, %arg1: i32) -> (i32, i32, i32, i32) {
    %c0_i32 = arith.constant 0 : i32
    %c0_i32_0 = arith.constant 0 : i32
    %c0_i32_1 = arith.constant 0 : i32
    %c0_i32_2 = arith.constant 0 : i32
    return %arg0, %c0_i32, %c0_i32_0, %c0_i32_1 : i32, i32, i32, i32
  }
  func.func @transform_1(%arg0: i32, %arg1: i32) -> (i32, i32) {
    %c0_i32 = arith.constant 0 : i32
    %c0_i32_0 = arith.constant 0 : i32
    %c0_i32_1 = arith.constant 0 : i32
    return %c0_i32, %c0_i32_0 : i32, i32
  }
  func.func @transform_2(%arg0: i32, %arg1: i32) -> (i32, i32) {
    %c0_i32 = arith.constant 0 : i32
    %c0_i32_0 = arith.constant 0 : i32
    %c0_i32_1 = arith.constant 0 : i32
    return %c0_i32, %c0_i32_0 : i32, i32
  }
  func.func @transform_3(%arg0: i32, %arg1: i32) -> (i32, i32) {
    %c0_i32 = arith.constant 0 : i32
    %c0_i32_0 = arith.constant 0 : i32
    %c0_i32_1 = arith.constant 0 : i32
    return %c0_i32, %c0_i32_0 : i32, i32
  }
  func.func @transform_4(%arg0: i32, %arg1: i32) -> (i32, i32) {
    %c0_i32 = arith.constant 0 : i32
    %c0_i32_0 = arith.constant 0 : i32
    %c0_i32_1 = arith.constant 0 : i32
    return %c0_i32, %c0_i32_0 : i32, i32
  }
  func.func @transform_5(%arg0: i32, %arg1: i32) -> (i32, i32) {
    %c0_i32 = arith.constant 0 : i32
    %c0_i32_0 = arith.constant 0 : i32
    %c0_i32_1 = arith.constant 0 : i32
    return %c0_i32, %c0_i32_0 : i32, i32
  }
  func.func @transform_6(%arg0: i32, %arg1: i32) -> (i32, i32) {
    %c0_i32 = arith.constant 0 : i32
    %c0_i32_0 = arith.constant 0 : i32
    %c0_i32_1 = arith.constant 0 : i32
    return %c0_i32, %c0_i32_0 : i32, i32
  }
  func.func @transform_7(%arg0: i32, %arg1: i32) -> (i32, i32, i32, i32) {
    %c0_i32 = arith.constant 0 : i32
    %c0_i32_0 = arith.constant 0 : i32
    %c0_i32_1 = arith.constant 0 : i32
    return %arg0, %arg1, %c0_i32, %c0_i32_0 : i32, i32, i32, i32
  }
}

module attributes {stable_mosaic.version = 11 : i64} {
  func.func @_sepconv_kernel(%arg0: i32, %arg1: i32, %arg2: memref<1x22x22x64xf32, #tpu.memory_space<vmem>>, %arg3: memref<9x64xf32, #tpu.memory_space<vmem>>, %arg4: memref<1x64xf32, #tpu.memory_space<vmem>>, %arg5: memref<64x128xbf16, #tpu.memory_space<vmem>>, %arg6: memref<1x128xf32, #tpu.memory_space<vmem>>, %arg7: memref<1x128xf32, #tpu.memory_space<vmem>>, %arg8: memref<1x128xf32, #tpu.memory_space<vmem>>, %arg9: memref<1x20x20x128xf32, #tpu.memory_space<vmem>>) attributes {dimension_semantics = [#tpu.dimension_semantics<parallel>, #tpu.dimension_semantics<parallel>], iteration_bounds = array<i64: 2, 1>, scalar_prefetch = 0 : i64, scratch_operands = 0 : i64, tpu.core_type = #tpu.core_type<tc>, window_params = [{transform_indices = @transform_0, window_bounds = array<i64: 1, 22, 22, 64>}, {pipeline_mode = #tpu.pipeline_mode<synchronous>, transform_indices = @transform_1, window_bounds = array<i64: 9, 64>}, {pipeline_mode = #tpu.pipeline_mode<synchronous>, transform_indices = @transform_2, window_bounds = array<i64: 1, 64>}, {pipeline_mode = #tpu.pipeline_mode<synchronous>, transform_indices = @transform_3, window_bounds = array<i64: 64, 128>}, {pipeline_mode = #tpu.pipeline_mode<synchronous>, transform_indices = @transform_4, window_bounds = array<i64: 1, 128>}, {pipeline_mode = #tpu.pipeline_mode<synchronous>, transform_indices = @transform_5, window_bounds = array<i64: 1, 128>}, {pipeline_mode = #tpu.pipeline_mode<synchronous>, transform_indices = @transform_6, window_bounds = array<i64: 1, 128>}, {transform_indices = @transform_7, window_bounds = array<i64: 1, 20, 20, 128>}]} {
    %c20_i32 = arith.constant 20 : i32
    %0 = arith.muli %arg1, %c20_i32 : i32
    %c0 = arith.constant 0 : index
    %c0_0 = arith.constant 0 : index
    %1 = vector.load %arg3[%c0, %c0_0] : memref<9x64xf32, #tpu.memory_space<vmem>>, vector<9x64xf32>
    %c0_1 = arith.constant 0 : index
    %c0_2 = arith.constant 0 : index
    %2 = vector.load %arg4[%c0_1, %c0_2] : memref<1x64xf32, #tpu.memory_space<vmem>>, vector<1x64xf32>
    %c0_3 = arith.constant 0 : index
    %c0_4 = arith.constant 0 : index
    %3 = vector.load %arg5[%c0_3, %c0_4] : memref<64x128xbf16, #tpu.memory_space<vmem>>, vector<64x128xbf16>
    %c0_5 = arith.constant 0 : index
    %c0_6 = arith.constant 0 : index
    %4 = vector.load %arg6[%c0_5, %c0_6] : memref<1x128xf32, #tpu.memory_space<vmem>>, vector<1x128xf32>
    %c0_7 = arith.constant 0 : index
    %c0_8 = arith.constant 0 : index
    %5 = vector.load %arg7[%c0_7, %c0_8] : memref<1x128xf32, #tpu.memory_space<vmem>>, vector<1x128xf32>
    %c0_9 = arith.constant 0 : index
    %c0_10 = arith.constant 0 : index
    %6 = vector.load %arg8[%c0_9, %c0_10] : memref<1x128xf32, #tpu.memory_space<vmem>>, vector<1x128xf32>
    %c0_i32 = arith.constant 0 : i32
    %c20_i32_11 = arith.constant 20 : i32
    %7 = arith.addi %c0_i32, %c20_i32_11 : i32
    %c1_i32 = arith.constant 1 : i32
    scf.for %arg10 = %c0_i32 to %7 step %c1_i32  : i32 {
      %8 = arith.addi %0, %arg10 : i32
      %cst = arith.constant 0.000000e+00 : f32
      %9 = vector.broadcast %cst : f32 to vector<20x64xf32>
      %c0_i32_13 = arith.constant 0 : i32
      %10 = arith.addi %8, %c0_i32_13 : i32
      %c0_14 = arith.constant 0 : index
      %11 = arith.index_cast %10 : i32 to index
      %c0_15 = arith.constant 0 : index
      %c0_16 = arith.constant 0 : index
      %12 = vector.load %arg2[%c0_14, %11, %c0_15, %c0_16] : memref<1x22x22x64xf32, #tpu.memory_space<vmem>>, vector<1x1x22x64xf32>
      %13 = vector.shape_cast %12 : vector<1x1x22x64xf32> to vector<22x64xf32>
      %14 = vector.extract_strided_slice %13 {offsets = [0, 0], sizes = [20, 64], strides = [1, 1]} : vector<22x64xf32> to vector<20x64xf32>
      %15 = vector.extract_strided_slice %1 {offsets = [0, 0], sizes = [1, 64], strides = [1, 1]} : vector<9x64xf32> to vector<1x64xf32>
      %16 = vector.broadcast %15 : vector<1x64xf32> to vector<20x64xf32>
      %17 = arith.mulf %14, %16 : vector<20x64xf32>
      %18 = arith.addf %9, %17 : vector<20x64xf32>
      %19 = vector.extract_strided_slice %13 {offsets = [1, 0], sizes = [20, 64], strides = [1, 1]} : vector<22x64xf32> to vector<20x64xf32>
      %20 = vector.extract_strided_slice %1 {offsets = [1, 0], sizes = [1, 64], strides = [1, 1]} : vector<9x64xf32> to vector<1x64xf32>
      %21 = vector.broadcast %20 : vector<1x64xf32> to vector<20x64xf32>
      %22 = arith.mulf %19, %21 : vector<20x64xf32>
      %23 = arith.addf %18, %22 : vector<20x64xf32>
      %24 = vector.extract_strided_slice %13 {offsets = [2, 0], sizes = [20, 64], strides = [1, 1]} : vector<22x64xf32> to vector<20x64xf32>
      %25 = vector.extract_strided_slice %1 {offsets = [2, 0], sizes = [1, 64], strides = [1, 1]} : vector<9x64xf32> to vector<1x64xf32>
      %26 = vector.broadcast %25 : vector<1x64xf32> to vector<20x64xf32>
      %27 = arith.mulf %24, %26 : vector<20x64xf32>
      %28 = arith.addf %23, %27 : vector<20x64xf32>
      %c1_i32_17 = arith.constant 1 : i32
      %29 = arith.addi %8, %c1_i32_17 : i32
      %c0_18 = arith.constant 0 : index
      %30 = arith.index_cast %29 : i32 to index
      %c0_19 = arith.constant 0 : index
      %c0_20 = arith.constant 0 : index
      %31 = vector.load %arg2[%c0_18, %30, %c0_19, %c0_20] : memref<1x22x22x64xf32, #tpu.memory_space<vmem>>, vector<1x1x22x64xf32>
      %32 = vector.shape_cast %31 : vector<1x1x22x64xf32> to vector<22x64xf32>
      %33 = vector.extract_strided_slice %32 {offsets = [0, 0], sizes = [20, 64], strides = [1, 1]} : vector<22x64xf32> to vector<20x64xf32>
      %34 = vector.extract_strided_slice %1 {offsets = [3, 0], sizes = [1, 64], strides = [1, 1]} : vector<9x64xf32> to vector<1x64xf32>
      %35 = vector.broadcast %34 : vector<1x64xf32> to vector<20x64xf32>
      %36 = arith.mulf %33, %35 : vector<20x64xf32>
      %37 = arith.addf %28, %36 : vector<20x64xf32>
      %38 = vector.extract_strided_slice %32 {offsets = [1, 0], sizes = [20, 64], strides = [1, 1]} : vector<22x64xf32> to vector<20x64xf32>
      %39 = vector.extract_strided_slice %1 {offsets = [4, 0], sizes = [1, 64], strides = [1, 1]} : vector<9x64xf32> to vector<1x64xf32>
      %40 = vector.broadcast %39 : vector<1x64xf32> to vector<20x64xf32>
      %41 = arith.mulf %38, %40 : vector<20x64xf32>
      %42 = arith.addf %37, %41 : vector<20x64xf32>
      %43 = vector.extract_strided_slice %32 {offsets = [2, 0], sizes = [20, 64], strides = [1, 1]} : vector<22x64xf32> to vector<20x64xf32>
      %44 = vector.extract_strided_slice %1 {offsets = [5, 0], sizes = [1, 64], strides = [1, 1]} : vector<9x64xf32> to vector<1x64xf32>
      %45 = vector.broadcast %44 : vector<1x64xf32> to vector<20x64xf32>
      %46 = arith.mulf %43, %45 : vector<20x64xf32>
      %47 = arith.addf %42, %46 : vector<20x64xf32>
      %c2_i32 = arith.constant 2 : i32
      %48 = arith.addi %8, %c2_i32 : i32
      %c0_21 = arith.constant 0 : index
      %49 = arith.index_cast %48 : i32 to index
      %c0_22 = arith.constant 0 : index
      %c0_23 = arith.constant 0 : index
      %50 = vector.load %arg2[%c0_21, %49, %c0_22, %c0_23] : memref<1x22x22x64xf32, #tpu.memory_space<vmem>>, vector<1x1x22x64xf32>
      %51 = vector.shape_cast %50 : vector<1x1x22x64xf32> to vector<22x64xf32>
      %52 = vector.extract_strided_slice %51 {offsets = [0, 0], sizes = [20, 64], strides = [1, 1]} : vector<22x64xf32> to vector<20x64xf32>
      %53 = vector.extract_strided_slice %1 {offsets = [6, 0], sizes = [1, 64], strides = [1, 1]} : vector<9x64xf32> to vector<1x64xf32>
      %54 = vector.broadcast %53 : vector<1x64xf32> to vector<20x64xf32>
      %55 = arith.mulf %52, %54 : vector<20x64xf32>
      %56 = arith.addf %47, %55 : vector<20x64xf32>
      %57 = vector.extract_strided_slice %51 {offsets = [1, 0], sizes = [20, 64], strides = [1, 1]} : vector<22x64xf32> to vector<20x64xf32>
      %58 = vector.extract_strided_slice %1 {offsets = [7, 0], sizes = [1, 64], strides = [1, 1]} : vector<9x64xf32> to vector<1x64xf32>
      %59 = vector.broadcast %58 : vector<1x64xf32> to vector<20x64xf32>
      %60 = arith.mulf %57, %59 : vector<20x64xf32>
      %61 = arith.addf %56, %60 : vector<20x64xf32>
      %62 = vector.extract_strided_slice %51 {offsets = [2, 0], sizes = [20, 64], strides = [1, 1]} : vector<22x64xf32> to vector<20x64xf32>
      %63 = vector.extract_strided_slice %1 {offsets = [8, 0], sizes = [1, 64], strides = [1, 1]} : vector<9x64xf32> to vector<1x64xf32>
      %64 = vector.broadcast %63 : vector<1x64xf32> to vector<20x64xf32>
      %65 = arith.mulf %62, %64 : vector<20x64xf32>
      %66 = arith.addf %61, %65 : vector<20x64xf32>
      %67 = vector.broadcast %2 : vector<1x64xf32> to vector<20x64xf32>
      %68 = arith.addf %66, %67 : vector<20x64xf32>
      %69 = arith.truncf %68 : vector<20x64xf32> to vector<20x64xbf16>
      %cst_24 = arith.constant dense<0.000000e+00> : vector<20x128xf32>
      %70 = tpu.matmul %69, %3, %cst_24 {dimension_numbers = #tpu.dot_dimension_numbers<[1], [0], [0], [1], [0, 0, 1, 1], [], []>} : vector<20x64xbf16>, vector<64x128xbf16>, vector<20x128xf32> -> vector<20x128xf32>
      %71 = vector.broadcast %4 : vector<1x128xf32> to vector<20x128xf32>
      %72 = arith.addf %70, %71 : vector<20x128xf32>
      %cst_25 = arith.constant 0.000000e+00 : f32
      %73 = vector.broadcast %cst_25 : f32 to vector<20x128xf32>
      %74 = arith.maximumf %72, %73 : vector<20x128xf32>
      %75 = vector.broadcast %5 : vector<1x128xf32> to vector<20x128xf32>
      %76 = arith.mulf %74, %75 : vector<20x128xf32>
      %77 = vector.broadcast %6 : vector<1x128xf32> to vector<20x128xf32>
      %78 = arith.addf %76, %77 : vector<20x128xf32>
      %c0_26 = arith.constant 0 : index
      %79 = arith.index_cast %arg10 : i32 to index
      %c0_27 = arith.constant 0 : index
      %c0_28 = arith.constant 0 : index
      %80 = vector.load %arg9[%c0_26, %79, %c0_27, %c0_28] : memref<1x20x20x128xf32, #tpu.memory_space<vmem>>, vector<1x1x20x128xf32>
      %81 = vector.shape_cast %80 : vector<1x1x20x128xf32> to vector<20x128xf32>
      %82 = vector.shape_cast %78 : vector<20x128xf32> to vector<1x1x20x128xf32>
      tpu.vector_store %arg9[%c0_26, %79, %c0_27, %c0_28], %82 {strides = array<i32>} : memref<1x20x20x128xf32, #tpu.memory_space<vmem>>, vector<1x1x20x128xf32>,
    }
    %c20_i32_12 = arith.constant 20 : i32
    return
  }
  func.func @transform_0(%arg0: i32, %arg1: i32) -> (i32, i32, i32, i32) {
    %c0_i32 = arith.constant 0 : i32
    %c0_i32_0 = arith.constant 0 : i32
    %c0_i32_1 = arith.constant 0 : i32
    %c0_i32_2 = arith.constant 0 : i32
    return %arg0, %c0_i32, %c0_i32_0, %c0_i32_1 : i32, i32, i32, i32
  }
  func.func @transform_1(%arg0: i32, %arg1: i32) -> (i32, i32) {
    %c0_i32 = arith.constant 0 : i32
    %c0_i32_0 = arith.constant 0 : i32
    %c0_i32_1 = arith.constant 0 : i32
    return %c0_i32, %c0_i32_0 : i32, i32
  }
  func.func @transform_2(%arg0: i32, %arg1: i32) -> (i32, i32) {
    %c0_i32 = arith.constant 0 : i32
    %c0_i32_0 = arith.constant 0 : i32
    %c0_i32_1 = arith.constant 0 : i32
    return %c0_i32, %c0_i32_0 : i32, i32
  }
  func.func @transform_3(%arg0: i32, %arg1: i32) -> (i32, i32) {
    %c0_i32 = arith.constant 0 : i32
    %c0_i32_0 = arith.constant 0 : i32
    %c0_i32_1 = arith.constant 0 : i32
    return %c0_i32, %c0_i32_0 : i32, i32
  }
  func.func @transform_4(%arg0: i32, %arg1: i32) -> (i32, i32) {
    %c0_i32 = arith.constant 0 : i32
    %c0_i32_0 = arith.constant 0 : i32
    %c0_i32_1 = arith.constant 0 : i32
    return %c0_i32, %c0_i32_0 : i32, i32
  }
  func.func @transform_5(%arg0: i32, %arg1: i32) -> (i32, i32) {
    %c0_i32 = arith.constant 0 : i32
    %c0_i32_0 = arith.constant 0 : i32
    %c0_i32_1 = arith.constant 0 : i32
    return %c0_i32, %c0_i32_0 : i32, i32
  }
  func.func @transform_6(%arg0: i32, %arg1: i32) -> (i32, i32) {
    %c0_i32 = arith.constant 0 : i32
    %c0_i32_0 = arith.constant 0 : i32
    %c0_i32_1 = arith.constant 0 : i32
    return %c0_i32, %c0_i32_0 : i32, i32
  }
  func.func @transform_7(%arg0: i32, %arg1: i32) -> (i32, i32, i32, i32) {
    %c0_i32 = arith.constant 0 : i32
    %c0_i32_0 = arith.constant 0 : i32
    %c0_i32_1 = arith.constant 0 : i32
    return %arg0, %arg1, %c0_i32, %c0_i32_0 : i32, i32, i32, i32
  }
}

module attributes {stable_mosaic.version = 11 : i64} {
  func.func @_sepconv_kernel(%arg0: i32, %arg1: i32, %arg2: memref<1x20x20x128xf32, #tpu.memory_space<vmem>>, %arg3: memref<9x128xf32, #tpu.memory_space<vmem>>, %arg4: memref<1x128xf32, #tpu.memory_space<vmem>>, %arg5: memref<128x128xbf16, #tpu.memory_space<vmem>>, %arg6: memref<1x128xf32, #tpu.memory_space<vmem>>, %arg7: memref<1x128xf32, #tpu.memory_space<vmem>>, %arg8: memref<1x128xf32, #tpu.memory_space<vmem>>, %arg9: memref<1x9x9x128xf32, #tpu.memory_space<vmem>>, %arg10: memref<18x128xf32, #tpu.memory_space<vmem>>) attributes {dimension_semantics = [#tpu.dimension_semantics<parallel>, #tpu.dimension_semantics<parallel>], iteration_bounds = array<i64: 2, 1>, scalar_prefetch = 0 : i64, scratch_operands = 1 : i64, tpu.core_type = #tpu.core_type<tc>, window_params = [{transform_indices = @transform_0, window_bounds = array<i64: 1, 20, 20, 128>}, {pipeline_mode = #tpu.pipeline_mode<synchronous>, transform_indices = @transform_1, window_bounds = array<i64: 9, 128>}, {pipeline_mode = #tpu.pipeline_mode<synchronous>, transform_indices = @transform_2, window_bounds = array<i64: 1, 128>}, {pipeline_mode = #tpu.pipeline_mode<synchronous>, transform_indices = @transform_3, window_bounds = array<i64: 128, 128>}, {pipeline_mode = #tpu.pipeline_mode<synchronous>, transform_indices = @transform_4, window_bounds = array<i64: 1, 128>}, {pipeline_mode = #tpu.pipeline_mode<synchronous>, transform_indices = @transform_5, window_bounds = array<i64: 1, 128>}, {pipeline_mode = #tpu.pipeline_mode<synchronous>, transform_indices = @transform_6, window_bounds = array<i64: 1, 128>}, {transform_indices = @transform_7, window_bounds = array<i64: 1, 9, 9, 128>}]} {
    %c18_i32 = arith.constant 18 : i32
    %0 = arith.muli %arg1, %c18_i32 : i32
    %c0 = arith.constant 0 : index
    %c0_0 = arith.constant 0 : index
    %1 = vector.load %arg3[%c0, %c0_0] : memref<9x128xf32, #tpu.memory_space<vmem>>, vector<9x128xf32>
    %c0_1 = arith.constant 0 : index
    %c0_2 = arith.constant 0 : index
    %2 = vector.load %arg4[%c0_1, %c0_2] : memref<1x128xf32, #tpu.memory_space<vmem>>, vector<1x128xf32>
    %c0_3 = arith.constant 0 : index
    %c0_4 = arith.constant 0 : index
    %3 = vector.load %arg5[%c0_3, %c0_4] : memref<128x128xbf16, #tpu.memory_space<vmem>>, vector<128x128xbf16>
    %c0_5 = arith.constant 0 : index
    %c0_6 = arith.constant 0 : index
    %4 = vector.load %arg6[%c0_5, %c0_6] : memref<1x128xf32, #tpu.memory_space<vmem>>, vector<1x128xf32>
    %c0_7 = arith.constant 0 : index
    %c0_8 = arith.constant 0 : index
    %5 = vector.load %arg7[%c0_7, %c0_8] : memref<1x128xf32, #tpu.memory_space<vmem>>, vector<1x128xf32>
    %c0_9 = arith.constant 0 : index
    %c0_10 = arith.constant 0 : index
    %6 = vector.load %arg8[%c0_9, %c0_10] : memref<1x128xf32, #tpu.memory_space<vmem>>, vector<1x128xf32>
    %c0_i32 = arith.constant 0 : i32
    %c9_i32 = arith.constant 9 : i32
    %7 = arith.addi %c0_i32, %c9_i32 : i32
    %c1_i32 = arith.constant 1 : i32
    scf.for %arg11 = %c0_i32 to %7 step %c1_i32  : i32 {
      %c2_i32 = arith.constant 2 : i32
      %8 = arith.muli %c2_i32, %arg11 : i32
      %9 = arith.addi %0, %8 : i32
      %cst = arith.constant 0.000000e+00 : f32
      %10 = vector.broadcast %cst : f32 to vector<18x128xf32>
      %c0_i32_12 = arith.constant 0 : i32
      %11 = arith.addi %9, %c0_i32_12 : i32
      %c0_13 = arith.constant 0 : index
      %12 = arith.index_cast %11 : i32 to index
      %c0_14 = arith.constant 0 : index
      %c0_15 = arith.constant 0 : index
      %13 = vector.load %arg2[%c0_13, %12, %c0_14, %c0_15] : memref<1x20x20x128xf32, #tpu.memory_space<vmem>>, vector<1x1x20x128xf32>
      %14 = vector.shape_cast %13 : vector<1x1x20x128xf32> to vector<20x128xf32>
      %15 = vector.extract_strided_slice %14 {offsets = [0, 0], sizes = [18, 128], strides = [1, 1]} : vector<20x128xf32> to vector<18x128xf32>
      %16 = vector.extract_strided_slice %1 {offsets = [0, 0], sizes = [1, 128], strides = [1, 1]} : vector<9x128xf32> to vector<1x128xf32>
      %17 = vector.broadcast %16 : vector<1x128xf32> to vector<18x128xf32>
      %18 = arith.mulf %15, %17 : vector<18x128xf32>
      %19 = arith.addf %10, %18 : vector<18x128xf32>
      %20 = vector.extract_strided_slice %14 {offsets = [1, 0], sizes = [18, 128], strides = [1, 1]} : vector<20x128xf32> to vector<18x128xf32>
      %21 = vector.extract_strided_slice %1 {offsets = [1, 0], sizes = [1, 128], strides = [1, 1]} : vector<9x128xf32> to vector<1x128xf32>
      %22 = vector.broadcast %21 : vector<1x128xf32> to vector<18x128xf32>
      %23 = arith.mulf %20, %22 : vector<18x128xf32>
      %24 = arith.addf %19, %23 : vector<18x128xf32>
      %25 = vector.extract_strided_slice %14 {offsets = [2, 0], sizes = [18, 128], strides = [1, 1]} : vector<20x128xf32> to vector<18x128xf32>
      %26 = vector.extract_strided_slice %1 {offsets = [2, 0], sizes = [1, 128], strides = [1, 1]} : vector<9x128xf32> to vector<1x128xf32>
      %27 = vector.broadcast %26 : vector<1x128xf32> to vector<18x128xf32>
      %28 = arith.mulf %25, %27 : vector<18x128xf32>
      %29 = arith.addf %24, %28 : vector<18x128xf32>
      %c1_i32_16 = arith.constant 1 : i32
      %30 = arith.addi %9, %c1_i32_16 : i32
      %c0_17 = arith.constant 0 : index
      %31 = arith.index_cast %30 : i32 to index
      %c0_18 = arith.constant 0 : index
      %c0_19 = arith.constant 0 : index
      %32 = vector.load %arg2[%c0_17, %31, %c0_18, %c0_19] : memref<1x20x20x128xf32, #tpu.memory_space<vmem>>, vector<1x1x20x128xf32>
      %33 = vector.shape_cast %32 : vector<1x1x20x128xf32> to vector<20x128xf32>
      %34 = vector.extract_strided_slice %33 {offsets = [0, 0], sizes = [18, 128], strides = [1, 1]} : vector<20x128xf32> to vector<18x128xf32>
      %35 = vector.extract_strided_slice %1 {offsets = [3, 0], sizes = [1, 128], strides = [1, 1]} : vector<9x128xf32> to vector<1x128xf32>
      %36 = vector.broadcast %35 : vector<1x128xf32> to vector<18x128xf32>
      %37 = arith.mulf %34, %36 : vector<18x128xf32>
      %38 = arith.addf %29, %37 : vector<18x128xf32>
      %39 = vector.extract_strided_slice %33 {offsets = [1, 0], sizes = [18, 128], strides = [1, 1]} : vector<20x128xf32> to vector<18x128xf32>
      %40 = vector.extract_strided_slice %1 {offsets = [4, 0], sizes = [1, 128], strides = [1, 1]} : vector<9x128xf32> to vector<1x128xf32>
      %41 = vector.broadcast %40 : vector<1x128xf32> to vector<18x128xf32>
      %42 = arith.mulf %39, %41 : vector<18x128xf32>
      %43 = arith.addf %38, %42 : vector<18x128xf32>
      %44 = vector.extract_strided_slice %33 {offsets = [2, 0], sizes = [18, 128], strides = [1, 1]} : vector<20x128xf32> to vector<18x128xf32>
      %45 = vector.extract_strided_slice %1 {offsets = [5, 0], sizes = [1, 128], strides = [1, 1]} : vector<9x128xf32> to vector<1x128xf32>
      %46 = vector.broadcast %45 : vector<1x128xf32> to vector<18x128xf32>
      %47 = arith.mulf %44, %46 : vector<18x128xf32>
      %48 = arith.addf %43, %47 : vector<18x128xf32>
      %c2_i32_20 = arith.constant 2 : i32
      %49 = arith.addi %9, %c2_i32_20 : i32
      %c0_21 = arith.constant 0 : index
      %50 = arith.index_cast %49 : i32 to index
      %c0_22 = arith.constant 0 : index
      %c0_23 = arith.constant 0 : index
      %51 = vector.load %arg2[%c0_21, %50, %c0_22, %c0_23] : memref<1x20x20x128xf32, #tpu.memory_space<vmem>>, vector<1x1x20x128xf32>
      %52 = vector.shape_cast %51 : vector<1x1x20x128xf32> to vector<20x128xf32>
      %53 = vector.extract_strided_slice %52 {offsets = [0, 0], sizes = [18, 128], strides = [1, 1]} : vector<20x128xf32> to vector<18x128xf32>
      %54 = vector.extract_strided_slice %1 {offsets = [6, 0], sizes = [1, 128], strides = [1, 1]} : vector<9x128xf32> to vector<1x128xf32>
      %55 = vector.broadcast %54 : vector<1x128xf32> to vector<18x128xf32>
      %56 = arith.mulf %53, %55 : vector<18x128xf32>
      %57 = arith.addf %48, %56 : vector<18x128xf32>
      %58 = vector.extract_strided_slice %52 {offsets = [1, 0], sizes = [18, 128], strides = [1, 1]} : vector<20x128xf32> to vector<18x128xf32>
      %59 = vector.extract_strided_slice %1 {offsets = [7, 0], sizes = [1, 128], strides = [1, 1]} : vector<9x128xf32> to vector<1x128xf32>
      %60 = vector.broadcast %59 : vector<1x128xf32> to vector<18x128xf32>
      %61 = arith.mulf %58, %60 : vector<18x128xf32>
      %62 = arith.addf %57, %61 : vector<18x128xf32>
      %63 = vector.extract_strided_slice %52 {offsets = [2, 0], sizes = [18, 128], strides = [1, 1]} : vector<20x128xf32> to vector<18x128xf32>
      %64 = vector.extract_strided_slice %1 {offsets = [8, 0], sizes = [1, 128], strides = [1, 1]} : vector<9x128xf32> to vector<1x128xf32>
      %65 = vector.broadcast %64 : vector<1x128xf32> to vector<18x128xf32>
      %66 = arith.mulf %63, %65 : vector<18x128xf32>
      %67 = arith.addf %62, %66 : vector<18x128xf32>
      %68 = vector.broadcast %2 : vector<1x128xf32> to vector<18x128xf32>
      %69 = arith.addf %67, %68 : vector<18x128xf32>
      %70 = arith.truncf %69 : vector<18x128xf32> to vector<18x128xbf16>
      %cst_24 = arith.constant dense<0.000000e+00> : vector<18x128xf32>
      %71 = tpu.matmul %70, %3, %cst_24 {dimension_numbers = #tpu.dot_dimension_numbers<[1], [0], [0], [1], [0, 0, 1, 1], [], []>} : vector<18x128xbf16>, vector<128x128xbf16>, vector<18x128xf32> -> vector<18x128xf32>
      %72 = vector.broadcast %4 : vector<1x128xf32> to vector<18x128xf32>
      %73 = arith.addf %71, %72 : vector<18x128xf32>
      %cst_25 = arith.constant 0.000000e+00 : f32
      %74 = vector.broadcast %cst_25 : f32 to vector<18x128xf32>
      %75 = arith.maximumf %73, %74 : vector<18x128xf32>
      %76 = vector.broadcast %5 : vector<1x128xf32> to vector<18x128xf32>
      %77 = arith.mulf %75, %76 : vector<18x128xf32>
      %78 = vector.broadcast %6 : vector<1x128xf32> to vector<18x128xf32>
      %79 = arith.addf %77, %78 : vector<18x128xf32>
      %c1_i32_26 = arith.constant 1 : i32
      %80 = arith.addi %9, %c1_i32_26 : i32
      %cst_27 = arith.constant 0.000000e+00 : f32
      %81 = vector.broadcast %cst_27 : f32 to vector<18x128xf32>
      %c0_i32_28 = arith.constant 0 : i32
      %82 = arith.addi %80, %c0_i32_28 : i32
      %c0_29 = arith.constant 0 : index
      %83 = arith.index_cast %82 : i32 to index
      %c0_30 = arith.constant 0 : index
      %c0_31 = arith.constant 0 : index
      %84 = vector.load %arg2[%c0_29, %83, %c0_30, %c0_31] : memref<1x20x20x128xf32, #tpu.memory_space<vmem>>, vector<1x1x20x128xf32>
      %85 = vector.shape_cast %84 : vector<1x1x20x128xf32> to vector<20x128xf32>
      %86 = vector.extract_strided_slice %85 {offsets = [0, 0], sizes = [18, 128], strides = [1, 1]} : vector<20x128xf32> to vector<18x128xf32>
      %87 = vector.extract_strided_slice %1 {offsets = [0, 0], sizes = [1, 128], strides = [1, 1]} : vector<9x128xf32> to vector<1x128xf32>
      %88 = vector.broadcast %87 : vector<1x128xf32> to vector<18x128xf32>
      %89 = arith.mulf %86, %88 : vector<18x128xf32>
      %90 = arith.addf %81, %89 : vector<18x128xf32>
      %91 = vector.extract_strided_slice %85 {offsets = [1, 0], sizes = [18, 128], strides = [1, 1]} : vector<20x128xf32> to vector<18x128xf32>
      %92 = vector.extract_strided_slice %1 {offsets = [1, 0], sizes = [1, 128], strides = [1, 1]} : vector<9x128xf32> to vector<1x128xf32>
      %93 = vector.broadcast %92 : vector<1x128xf32> to vector<18x128xf32>
      %94 = arith.mulf %91, %93 : vector<18x128xf32>
      %95 = arith.addf %90, %94 : vector<18x128xf32>
      %96 = vector.extract_strided_slice %85 {offsets = [2, 0], sizes = [18, 128], strides = [1, 1]} : vector<20x128xf32> to vector<18x128xf32>
      %97 = vector.extract_strided_slice %1 {offsets = [2, 0], sizes = [1, 128], strides = [1, 1]} : vector<9x128xf32> to vector<1x128xf32>
      %98 = vector.broadcast %97 : vector<1x128xf32> to vector<18x128xf32>
      %99 = arith.mulf %96, %98 : vector<18x128xf32>
      %100 = arith.addf %95, %99 : vector<18x128xf32>
      %c1_i32_32 = arith.constant 1 : i32
      %101 = arith.addi %80, %c1_i32_32 : i32
      %c0_33 = arith.constant 0 : index
      %102 = arith.index_cast %101 : i32 to index
      %c0_34 = arith.constant 0 : index
      %c0_35 = arith.constant 0 : index
      %103 = vector.load %arg2[%c0_33, %102, %c0_34, %c0_35] : memref<1x20x20x128xf32, #tpu.memory_space<vmem>>, vector<1x1x20x128xf32>
      %104 = vector.shape_cast %103 : vector<1x1x20x128xf32> to vector<20x128xf32>
      %105 = vector.extract_strided_slice %104 {offsets = [0, 0], sizes = [18, 128], strides = [1, 1]} : vector<20x128xf32> to vector<18x128xf32>
      %106 = vector.extract_strided_slice %1 {offsets = [3, 0], sizes = [1, 128], strides = [1, 1]} : vector<9x128xf32> to vector<1x128xf32>
      %107 = vector.broadcast %106 : vector<1x128xf32> to vector<18x128xf32>
      %108 = arith.mulf %105, %107 : vector<18x128xf32>
      %109 = arith.addf %100, %108 : vector<18x128xf32>
      %110 = vector.extract_strided_slice %104 {offsets = [1, 0], sizes = [18, 128], strides = [1, 1]} : vector<20x128xf32> to vector<18x128xf32>
      %111 = vector.extract_strided_slice %1 {offsets = [4, 0], sizes = [1, 128], strides = [1, 1]} : vector<9x128xf32> to vector<1x128xf32>
      %112 = vector.broadcast %111 : vector<1x128xf32> to vector<18x128xf32>
      %113 = arith.mulf %110, %112 : vector<18x128xf32>
      %114 = arith.addf %109, %113 : vector<18x128xf32>
      %115 = vector.extract_strided_slice %104 {offsets = [2, 0], sizes = [18, 128], strides = [1, 1]} : vector<20x128xf32> to vector<18x128xf32>
      %116 = vector.extract_strided_slice %1 {offsets = [5, 0], sizes = [1, 128], strides = [1, 1]} : vector<9x128xf32> to vector<1x128xf32>
      %117 = vector.broadcast %116 : vector<1x128xf32> to vector<18x128xf32>
      %118 = arith.mulf %115, %117 : vector<18x128xf32>
      %119 = arith.addf %114, %118 : vector<18x128xf32>
      %c2_i32_36 = arith.constant 2 : i32
      %120 = arith.addi %80, %c2_i32_36 : i32
      %c0_37 = arith.constant 0 : index
      %121 = arith.index_cast %120 : i32 to index
      %c0_38 = arith.constant 0 : index
      %c0_39 = arith.constant 0 : index
      %122 = vector.load %arg2[%c0_37, %121, %c0_38, %c0_39] : memref<1x20x20x128xf32, #tpu.memory_space<vmem>>, vector<1x1x20x128xf32>
      %123 = vector.shape_cast %122 : vector<1x1x20x128xf32> to vector<20x128xf32>
      %124 = vector.extract_strided_slice %123 {offsets = [0, 0], sizes = [18, 128], strides = [1, 1]} : vector<20x128xf32> to vector<18x128xf32>
      %125 = vector.extract_strided_slice %1 {offsets = [6, 0], sizes = [1, 128], strides = [1, 1]} : vector<9x128xf32> to vector<1x128xf32>
      %126 = vector.broadcast %125 : vector<1x128xf32> to vector<18x128xf32>
      %127 = arith.mulf %124, %126 : vector<18x128xf32>
      %128 = arith.addf %119, %127 : vector<18x128xf32>
      %129 = vector.extract_strided_slice %123 {offsets = [1, 0], sizes = [18, 128], strides = [1, 1]} : vector<20x128xf32> to vector<18x128xf32>
      %130 = vector.extract_strided_slice %1 {offsets = [7, 0], sizes = [1, 128], strides = [1, 1]} : vector<9x128xf32> to vector<1x128xf32>
      %131 = vector.broadcast %130 : vector<1x128xf32> to vector<18x128xf32>
      %132 = arith.mulf %129, %131 : vector<18x128xf32>
      %133 = arith.addf %128, %132 : vector<18x128xf32>
      %134 = vector.extract_strided_slice %123 {offsets = [2, 0], sizes = [18, 128], strides = [1, 1]} : vector<20x128xf32> to vector<18x128xf32>
      %135 = vector.extract_strided_slice %1 {offsets = [8, 0], sizes = [1, 128], strides = [1, 1]} : vector<9x128xf32> to vector<1x128xf32>
      %136 = vector.broadcast %135 : vector<1x128xf32> to vector<18x128xf32>
      %137 = arith.mulf %134, %136 : vector<18x128xf32>
      %138 = arith.addf %133, %137 : vector<18x128xf32>
      %139 = vector.broadcast %2 : vector<1x128xf32> to vector<18x128xf32>
      %140 = arith.addf %138, %139 : vector<18x128xf32>
      %141 = arith.truncf %140 : vector<18x128xf32> to vector<18x128xbf16>
      %cst_40 = arith.constant dense<0.000000e+00> : vector<18x128xf32>
      %142 = tpu.matmul %141, %3, %cst_40 {dimension_numbers = #tpu.dot_dimension_numbers<[1], [0], [0], [1], [0, 0, 1, 1], [], []>} : vector<18x128xbf16>, vector<128x128xbf16>, vector<18x128xf32> -> vector<18x128xf32>
      %143 = vector.broadcast %4 : vector<1x128xf32> to vector<18x128xf32>
      %144 = arith.addf %142, %143 : vector<18x128xf32>
      %cst_41 = arith.constant 0.000000e+00 : f32
      %145 = vector.broadcast %cst_41 : f32 to vector<18x128xf32>
      %146 = arith.maximumf %144, %145 : vector<18x128xf32>
      %147 = vector.broadcast %5 : vector<1x128xf32> to vector<18x128xf32>
      %148 = arith.mulf %146, %147 : vector<18x128xf32>
      %149 = vector.broadcast %6 : vector<1x128xf32> to vector<18x128xf32>
      %150 = arith.addf %148, %149 : vector<18x128xf32>
      %151 = arith.maximumf %79, %150 : vector<18x128xf32>
      %c0_42 = arith.constant 0 : index
      %c0_43 = arith.constant 0 : index
      %152 = vector.load %arg10[%c0_42, %c0_43] : memref<18x128xf32, #tpu.memory_space<vmem>>, vector<18x128xf32>
      tpu.vector_store %arg10[%c0_42, %c0_43], %151 {strides = array<i32>} : memref<18x128xf32, #tpu.memory_space<vmem>>, vector<18x128xf32>,
      %c0_44 = arith.constant 0 : index
      %c0_45 = arith.constant 0 : index
      %153 = tpu.strided_load %arg10[%c0_44, %c0_45] {strides = array<i32: 2, 1>} : memref<18x128xf32, #tpu.memory_space<vmem>>, vector<9x128xf32>
      %c1 = arith.constant 1 : index
      %c0_46 = arith.constant 0 : index
      %154 = tpu.strided_load %arg10[%c1, %c0_46] {strides = array<i32: 2, 1>} : memref<18x128xf32, #tpu.memory_space<vmem>>, vector<9x128xf32>
      %155 = arith.maximumf %153, %154 : vector<9x128xf32>
      %c0_47 = arith.constant 0 : index
      %156 = arith.index_cast %arg11 : i32 to index
      %c0_48 = arith.constant 0 : index
      %c0_49 = arith.constant 0 : index
      %157 = vector.load %arg9[%c0_47, %156, %c0_48, %c0_49] : memref<1x9x9x128xf32, #tpu.memory_space<vmem>>, vector<1x1x9x128xf32>
      %158 = vector.shape_cast %157 : vector<1x1x9x128xf32> to vector<9x128xf32>
      %159 = vector.shape_cast %155 : vector<9x128xf32> to vector<1x1x9x128xf32>
      tpu.vector_store %arg9[%c0_47, %156, %c0_48, %c0_49], %159 {strides = array<i32>} : memref<1x9x9x128xf32, #tpu.memory_space<vmem>>, vector<1x1x9x128xf32>,
    }
    %c9_i32_11 = arith.constant 9 : i32
    return
  }
  func.func @transform_0(%arg0: i32, %arg1: i32) -> (i32, i32, i32, i32) {
    %c0_i32 = arith.constant 0 : i32
    %c0_i32_0 = arith.constant 0 : i32
    %c0_i32_1 = arith.constant 0 : i32
    %c0_i32_2 = arith.constant 0 : i32
    return %arg0, %c0_i32, %c0_i32_0, %c0_i32_1 : i32, i32, i32, i32
  }
  func.func @transform_1(%arg0: i32, %arg1: i32) -> (i32, i32) {
    %c0_i32 = arith.constant 0 : i32
    %c0_i32_0 = arith.constant 0 : i32
    %c0_i32_1 = arith.constant 0 : i32
    return %c0_i32, %c0_i32_0 : i32, i32
  }
  func.func @transform_2(%arg0: i32, %arg1: i32) -> (i32, i32) {
    %c0_i32 = arith.constant 0 : i32
    %c0_i32_0 = arith.constant 0 : i32
    %c0_i32_1 = arith.constant 0 : i32
    return %c0_i32, %c0_i32_0 : i32, i32
  }
  func.func @transform_3(%arg0: i32, %arg1: i32) -> (i32, i32) {
    %c0_i32 = arith.constant 0 : i32
    %c0_i32_0 = arith.constant 0 : i32
    %c0_i32_1 = arith.constant 0 : i32
    return %c0_i32, %c0_i32_0 : i32, i32
  }
  func.func @transform_4(%arg0: i32, %arg1: i32) -> (i32, i32) {
    %c0_i32 = arith.constant 0 : i32
    %c0_i32_0 = arith.constant 0 : i32
    %c0_i32_1 = arith.constant 0 : i32
    return %c0_i32, %c0_i32_0 : i32, i32
  }
  func.func @transform_5(%arg0: i32, %arg1: i32) -> (i32, i32) {
    %c0_i32 = arith.constant 0 : i32
    %c0_i32_0 = arith.constant 0 : i32
    %c0_i32_1 = arith.constant 0 : i32
    return %c0_i32, %c0_i32_0 : i32, i32
  }
  func.func @transform_6(%arg0: i32, %arg1: i32) -> (i32, i32) {
    %c0_i32 = arith.constant 0 : i32
    %c0_i32_0 = arith.constant 0 : i32
    %c0_i32_1 = arith.constant 0 : i32
    return %c0_i32, %c0_i32_0 : i32, i32
  }
  func.func @transform_7(%arg0: i32, %arg1: i32) -> (i32, i32, i32, i32) {
    %c0_i32 = arith.constant 0 : i32
    %c0_i32_0 = arith.constant 0 : i32
    %c0_i32_1 = arith.constant 0 : i32
    return %arg0, %arg1, %c0_i32, %c0_i32_0 : i32, i32, i32, i32
  }
}

module attributes {stable_mosaic.version = 11 : i64} {
  func.func @_sepconv_kernel(%arg0: i32, %arg1: i32, %arg2: memref<1x9x9x128xf32, #tpu.memory_space<vmem>>, %arg3: memref<9x128xf32, #tpu.memory_space<vmem>>, %arg4: memref<1x128xf32, #tpu.memory_space<vmem>>, %arg5: memref<128x256xbf16, #tpu.memory_space<vmem>>, %arg6: memref<1x256xf32, #tpu.memory_space<vmem>>, %arg7: memref<1x256xf32, #tpu.memory_space<vmem>>, %arg8: memref<1x256xf32, #tpu.memory_space<vmem>>, %arg9: memref<1x7x7x256xf32, #tpu.memory_space<vmem>>) attributes {dimension_semantics = [#tpu.dimension_semantics<parallel>, #tpu.dimension_semantics<parallel>], iteration_bounds = array<i64: 2, 1>, scalar_prefetch = 0 : i64, scratch_operands = 0 : i64, tpu.core_type = #tpu.core_type<tc>, window_params = [{transform_indices = @transform_0, window_bounds = array<i64: 1, 9, 9, 128>}, {pipeline_mode = #tpu.pipeline_mode<synchronous>, transform_indices = @transform_1, window_bounds = array<i64: 9, 128>}, {pipeline_mode = #tpu.pipeline_mode<synchronous>, transform_indices = @transform_2, window_bounds = array<i64: 1, 128>}, {pipeline_mode = #tpu.pipeline_mode<synchronous>, transform_indices = @transform_3, window_bounds = array<i64: 128, 256>}, {pipeline_mode = #tpu.pipeline_mode<synchronous>, transform_indices = @transform_4, window_bounds = array<i64: 1, 256>}, {pipeline_mode = #tpu.pipeline_mode<synchronous>, transform_indices = @transform_5, window_bounds = array<i64: 1, 256>}, {pipeline_mode = #tpu.pipeline_mode<synchronous>, transform_indices = @transform_6, window_bounds = array<i64: 1, 256>}, {transform_indices = @transform_7, window_bounds = array<i64: 1, 7, 7, 256>}]} {
    %c7_i32 = arith.constant 7 : i32
    %0 = arith.muli %arg1, %c7_i32 : i32
    %c0 = arith.constant 0 : index
    %c0_0 = arith.constant 0 : index
    %1 = vector.load %arg3[%c0, %c0_0] : memref<9x128xf32, #tpu.memory_space<vmem>>, vector<9x128xf32>
    %c0_1 = arith.constant 0 : index
    %c0_2 = arith.constant 0 : index
    %2 = vector.load %arg4[%c0_1, %c0_2] : memref<1x128xf32, #tpu.memory_space<vmem>>, vector<1x128xf32>
    %c0_3 = arith.constant 0 : index
    %c0_4 = arith.constant 0 : index
    %3 = vector.load %arg5[%c0_3, %c0_4] : memref<128x256xbf16, #tpu.memory_space<vmem>>, vector<128x256xbf16>
    %c0_5 = arith.constant 0 : index
    %c0_6 = arith.constant 0 : index
    %4 = vector.load %arg6[%c0_5, %c0_6] : memref<1x256xf32, #tpu.memory_space<vmem>>, vector<1x256xf32>
    %c0_7 = arith.constant 0 : index
    %c0_8 = arith.constant 0 : index
    %5 = vector.load %arg7[%c0_7, %c0_8] : memref<1x256xf32, #tpu.memory_space<vmem>>, vector<1x256xf32>
    %c0_9 = arith.constant 0 : index
    %c0_10 = arith.constant 0 : index
    %6 = vector.load %arg8[%c0_9, %c0_10] : memref<1x256xf32, #tpu.memory_space<vmem>>, vector<1x256xf32>
    %c0_i32 = arith.constant 0 : i32
    %c7_i32_11 = arith.constant 7 : i32
    %7 = arith.addi %c0_i32, %c7_i32_11 : i32
    %c1_i32 = arith.constant 1 : i32
    scf.for %arg10 = %c0_i32 to %7 step %c1_i32  : i32 {
      %8 = arith.addi %0, %arg10 : i32
      %cst = arith.constant 0.000000e+00 : f32
      %9 = vector.broadcast %cst : f32 to vector<7x128xf32>
      %c0_i32_13 = arith.constant 0 : i32
      %10 = arith.addi %8, %c0_i32_13 : i32
      %c0_14 = arith.constant 0 : index
      %11 = arith.index_cast %10 : i32 to index
      %c0_15 = arith.constant 0 : index
      %c0_16 = arith.constant 0 : index
      %12 = vector.load %arg2[%c0_14, %11, %c0_15, %c0_16] : memref<1x9x9x128xf32, #tpu.memory_space<vmem>>, vector<1x1x9x128xf32>
      %13 = vector.shape_cast %12 : vector<1x1x9x128xf32> to vector<9x128xf32>
      %14 = vector.extract_strided_slice %13 {offsets = [0, 0], sizes = [7, 128], strides = [1, 1]} : vector<9x128xf32> to vector<7x128xf32>
      %15 = vector.extract_strided_slice %1 {offsets = [0, 0], sizes = [1, 128], strides = [1, 1]} : vector<9x128xf32> to vector<1x128xf32>
      %16 = vector.broadcast %15 : vector<1x128xf32> to vector<7x128xf32>
      %17 = arith.mulf %14, %16 : vector<7x128xf32>
      %18 = arith.addf %9, %17 : vector<7x128xf32>
      %19 = vector.extract_strided_slice %13 {offsets = [1, 0], sizes = [7, 128], strides = [1, 1]} : vector<9x128xf32> to vector<7x128xf32>
      %20 = vector.extract_strided_slice %1 {offsets = [1, 0], sizes = [1, 128], strides = [1, 1]} : vector<9x128xf32> to vector<1x128xf32>
      %21 = vector.broadcast %20 : vector<1x128xf32> to vector<7x128xf32>
      %22 = arith.mulf %19, %21 : vector<7x128xf32>
      %23 = arith.addf %18, %22 : vector<7x128xf32>
      %24 = vector.extract_strided_slice %13 {offsets = [2, 0], sizes = [7, 128], strides = [1, 1]} : vector<9x128xf32> to vector<7x128xf32>
      %25 = vector.extract_strided_slice %1 {offsets = [2, 0], sizes = [1, 128], strides = [1, 1]} : vector<9x128xf32> to vector<1x128xf32>
      %26 = vector.broadcast %25 : vector<1x128xf32> to vector<7x128xf32>
      %27 = arith.mulf %24, %26 : vector<7x128xf32>
      %28 = arith.addf %23, %27 : vector<7x128xf32>
      %c1_i32_17 = arith.constant 1 : i32
      %29 = arith.addi %8, %c1_i32_17 : i32
      %c0_18 = arith.constant 0 : index
      %30 = arith.index_cast %29 : i32 to index
      %c0_19 = arith.constant 0 : index
      %c0_20 = arith.constant 0 : index
      %31 = vector.load %arg2[%c0_18, %30, %c0_19, %c0_20] : memref<1x9x9x128xf32, #tpu.memory_space<vmem>>, vector<1x1x9x128xf32>
      %32 = vector.shape_cast %31 : vector<1x1x9x128xf32> to vector<9x128xf32>
      %33 = vector.extract_strided_slice %32 {offsets = [0, 0], sizes = [7, 128], strides = [1, 1]} : vector<9x128xf32> to vector<7x128xf32>
      %34 = vector.extract_strided_slice %1 {offsets = [3, 0], sizes = [1, 128], strides = [1, 1]} : vector<9x128xf32> to vector<1x128xf32>
      %35 = vector.broadcast %34 : vector<1x128xf32> to vector<7x128xf32>
      %36 = arith.mulf %33, %35 : vector<7x128xf32>
      %37 = arith.addf %28, %36 : vector<7x128xf32>
      %38 = vector.extract_strided_slice %32 {offsets = [1, 0], sizes = [7, 128], strides = [1, 1]} : vector<9x128xf32> to vector<7x128xf32>
      %39 = vector.extract_strided_slice %1 {offsets = [4, 0], sizes = [1, 128], strides = [1, 1]} : vector<9x128xf32> to vector<1x128xf32>
      %40 = vector.broadcast %39 : vector<1x128xf32> to vector<7x128xf32>
      %41 = arith.mulf %38, %40 : vector<7x128xf32>
      %42 = arith.addf %37, %41 : vector<7x128xf32>
      %43 = vector.extract_strided_slice %32 {offsets = [2, 0], sizes = [7, 128], strides = [1, 1]} : vector<9x128xf32> to vector<7x128xf32>
      %44 = vector.extract_strided_slice %1 {offsets = [5, 0], sizes = [1, 128], strides = [1, 1]} : vector<9x128xf32> to vector<1x128xf32>
      %45 = vector.broadcast %44 : vector<1x128xf32> to vector<7x128xf32>
      %46 = arith.mulf %43, %45 : vector<7x128xf32>
      %47 = arith.addf %42, %46 : vector<7x128xf32>
      %c2_i32 = arith.constant 2 : i32
      %48 = arith.addi %8, %c2_i32 : i32
      %c0_21 = arith.constant 0 : index
      %49 = arith.index_cast %48 : i32 to index
      %c0_22 = arith.constant 0 : index
      %c0_23 = arith.constant 0 : index
      %50 = vector.load %arg2[%c0_21, %49, %c0_22, %c0_23] : memref<1x9x9x128xf32, #tpu.memory_space<vmem>>, vector<1x1x9x128xf32>
      %51 = vector.shape_cast %50 : vector<1x1x9x128xf32> to vector<9x128xf32>
      %52 = vector.extract_strided_slice %51 {offsets = [0, 0], sizes = [7, 128], strides = [1, 1]} : vector<9x128xf32> to vector<7x128xf32>
      %53 = vector.extract_strided_slice %1 {offsets = [6, 0], sizes = [1, 128], strides = [1, 1]} : vector<9x128xf32> to vector<1x128xf32>
      %54 = vector.broadcast %53 : vector<1x128xf32> to vector<7x128xf32>
      %55 = arith.mulf %52, %54 : vector<7x128xf32>
      %56 = arith.addf %47, %55 : vector<7x128xf32>
      %57 = vector.extract_strided_slice %51 {offsets = [1, 0], sizes = [7, 128], strides = [1, 1]} : vector<9x128xf32> to vector<7x128xf32>
      %58 = vector.extract_strided_slice %1 {offsets = [7, 0], sizes = [1, 128], strides = [1, 1]} : vector<9x128xf32> to vector<1x128xf32>
      %59 = vector.broadcast %58 : vector<1x128xf32> to vector<7x128xf32>
      %60 = arith.mulf %57, %59 : vector<7x128xf32>
      %61 = arith.addf %56, %60 : vector<7x128xf32>
      %62 = vector.extract_strided_slice %51 {offsets = [2, 0], sizes = [7, 128], strides = [1, 1]} : vector<9x128xf32> to vector<7x128xf32>
      %63 = vector.extract_strided_slice %1 {offsets = [8, 0], sizes = [1, 128], strides = [1, 1]} : vector<9x128xf32> to vector<1x128xf32>
      %64 = vector.broadcast %63 : vector<1x128xf32> to vector<7x128xf32>
      %65 = arith.mulf %62, %64 : vector<7x128xf32>
      %66 = arith.addf %61, %65 : vector<7x128xf32>
      %67 = vector.broadcast %2 : vector<1x128xf32> to vector<7x128xf32>
      %68 = arith.addf %66, %67 : vector<7x128xf32>
      %69 = arith.truncf %68 : vector<7x128xf32> to vector<7x128xbf16>
      %cst_24 = arith.constant dense<0.000000e+00> : vector<7x256xf32>
      %70 = tpu.matmul %69, %3, %cst_24 {dimension_numbers = #tpu.dot_dimension_numbers<[1], [0], [0], [1], [0, 0, 1, 1], [], []>} : vector<7x128xbf16>, vector<128x256xbf16>, vector<7x256xf32> -> vector<7x256xf32>
      %71 = vector.broadcast %4 : vector<1x256xf32> to vector<7x256xf32>
      %72 = arith.addf %70, %71 : vector<7x256xf32>
      %cst_25 = arith.constant 0.000000e+00 : f32
      %73 = vector.broadcast %cst_25 : f32 to vector<7x256xf32>
      %74 = arith.maximumf %72, %73 : vector<7x256xf32>
      %75 = vector.broadcast %5 : vector<1x256xf32> to vector<7x256xf32>
      %76 = arith.mulf %74, %75 : vector<7x256xf32>
      %77 = vector.broadcast %6 : vector<1x256xf32> to vector<7x256xf32>
      %78 = arith.addf %76, %77 : vector<7x256xf32>
      %c0_26 = arith.constant 0 : index
      %79 = arith.index_cast %arg10 : i32 to index
      %c0_27 = arith.constant 0 : index
      %c0_28 = arith.constant 0 : index
      %80 = vector.load %arg9[%c0_26, %79, %c0_27, %c0_28] : memref<1x7x7x256xf32, #tpu.memory_space<vmem>>, vector<1x1x7x256xf32>
      %81 = vector.shape_cast %80 : vector<1x1x7x256xf32> to vector<7x256xf32>
      %82 = vector.shape_cast %78 : vector<7x256xf32> to vector<1x1x7x256xf32>
      tpu.vector_store %arg9[%c0_26, %79, %c0_27, %c0_28], %82 {strides = array<i32>} : memref<1x7x7x256xf32, #tpu.memory_space<vmem>>, vector<1x1x7x256xf32>,
    }
    %c7_i32_12 = arith.constant 7 : i32
    return
  }
  func.func @transform_0(%arg0: i32, %arg1: i32) -> (i32, i32, i32, i32) {
    %c0_i32 = arith.constant 0 : i32
    %c0_i32_0 = arith.constant 0 : i32
    %c0_i32_1 = arith.constant 0 : i32
    %c0_i32_2 = arith.constant 0 : i32
    return %arg0, %c0_i32, %c0_i32_0, %c0_i32_1 : i32, i32, i32, i32
  }
  func.func @transform_1(%arg0: i32, %arg1: i32) -> (i32, i32) {
    %c0_i32 = arith.constant 0 : i32
    %c0_i32_0 = arith.constant 0 : i32
    %c0_i32_1 = arith.constant 0 : i32
    return %c0_i32, %c0_i32_0 : i32, i32
  }
  func.func @transform_2(%arg0: i32, %arg1: i32) -> (i32, i32) {
    %c0_i32 = arith.constant 0 : i32
    %c0_i32_0 = arith.constant 0 : i32
    %c0_i32_1 = arith.constant 0 : i32
    return %c0_i32, %c0_i32_0 : i32, i32
  }
  func.func @transform_3(%arg0: i32, %arg1: i32) -> (i32, i32) {
    %c0_i32 = arith.constant 0 : i32
    %c0_i32_0 = arith.constant 0 : i32
    %c0_i32_1 = arith.constant 0 : i32
    return %c0_i32, %c0_i32_0 : i32, i32
  }
  func.func @transform_4(%arg0: i32, %arg1: i32) -> (i32, i32) {
    %c0_i32 = arith.constant 0 : i32
    %c0_i32_0 = arith.constant 0 : i32
    %c0_i32_1 = arith.constant 0 : i32
    return %c0_i32, %c0_i32_0 : i32, i32
  }
  func.func @transform_5(%arg0: i32, %arg1: i32) -> (i32, i32) {
    %c0_i32 = arith.constant 0 : i32
    %c0_i32_0 = arith.constant 0 : i32
    %c0_i32_1 = arith.constant 0 : i32
    return %c0_i32, %c0_i32_0 : i32, i32
  }
  func.func @transform_6(%arg0: i32, %arg1: i32) -> (i32, i32) {
    %c0_i32 = arith.constant 0 : i32
    %c0_i32_0 = arith.constant 0 : i32
    %c0_i32_1 = arith.constant 0 : i32
    return %c0_i32, %c0_i32_0 : i32, i32
  }
  func.func @transform_7(%arg0: i32, %arg1: i32) -> (i32, i32, i32, i32) {
    %c0_i32 = arith.constant 0 : i32
    %c0_i32_0 = arith.constant 0 : i32
    %c0_i32_1 = arith.constant 0 : i32
    return %arg0, %arg1, %c0_i32, %c0_i32_0 : i32, i32, i32, i32
  }
}

module attributes {stable_mosaic.version = 11 : i64} {
  func.func @_sepconv_kernel(%arg0: i32, %arg1: i32, %arg2: memref<1x7x7x256xf32, #tpu.memory_space<vmem>>, %arg3: memref<9x256xf32, #tpu.memory_space<vmem>>, %arg4: memref<1x256xf32, #tpu.memory_space<vmem>>, %arg5: memref<256x256xbf16, #tpu.memory_space<vmem>>, %arg6: memref<1x256xf32, #tpu.memory_space<vmem>>, %arg7: memref<1x256xf32, #tpu.memory_space<vmem>>, %arg8: memref<1x256xf32, #tpu.memory_space<vmem>>, %arg9: memref<1x5x5x256xf32, #tpu.memory_space<vmem>>) attributes {dimension_semantics = [#tpu.dimension_semantics<parallel>, #tpu.dimension_semantics<parallel>], iteration_bounds = array<i64: 2, 1>, scalar_prefetch = 0 : i64, scratch_operands = 0 : i64, tpu.core_type = #tpu.core_type<tc>, window_params = [{transform_indices = @transform_0, window_bounds = array<i64: 1, 7, 7, 256>}, {pipeline_mode = #tpu.pipeline_mode<synchronous>, transform_indices = @transform_1, window_bounds = array<i64: 9, 256>}, {pipeline_mode = #tpu.pipeline_mode<synchronous>, transform_indices = @transform_2, window_bounds = array<i64: 1, 256>}, {pipeline_mode = #tpu.pipeline_mode<synchronous>, transform_indices = @transform_3, window_bounds = array<i64: 256, 256>}, {pipeline_mode = #tpu.pipeline_mode<synchronous>, transform_indices = @transform_4, window_bounds = array<i64: 1, 256>}, {pipeline_mode = #tpu.pipeline_mode<synchronous>, transform_indices = @transform_5, window_bounds = array<i64: 1, 256>}, {pipeline_mode = #tpu.pipeline_mode<synchronous>, transform_indices = @transform_6, window_bounds = array<i64: 1, 256>}, {transform_indices = @transform_7, window_bounds = array<i64: 1, 5, 5, 256>}]} {
    %c5_i32 = arith.constant 5 : i32
    %0 = arith.muli %arg1, %c5_i32 : i32
    %c0 = arith.constant 0 : index
    %c0_0 = arith.constant 0 : index
    %1 = vector.load %arg3[%c0, %c0_0] : memref<9x256xf32, #tpu.memory_space<vmem>>, vector<9x256xf32>
    %c0_1 = arith.constant 0 : index
    %c0_2 = arith.constant 0 : index
    %2 = vector.load %arg4[%c0_1, %c0_2] : memref<1x256xf32, #tpu.memory_space<vmem>>, vector<1x256xf32>
    %c0_3 = arith.constant 0 : index
    %c0_4 = arith.constant 0 : index
    %3 = vector.load %arg5[%c0_3, %c0_4] : memref<256x256xbf16, #tpu.memory_space<vmem>>, vector<256x256xbf16>
    %c0_5 = arith.constant 0 : index
    %c0_6 = arith.constant 0 : index
    %4 = vector.load %arg6[%c0_5, %c0_6] : memref<1x256xf32, #tpu.memory_space<vmem>>, vector<1x256xf32>
    %c0_7 = arith.constant 0 : index
    %c0_8 = arith.constant 0 : index
    %5 = vector.load %arg7[%c0_7, %c0_8] : memref<1x256xf32, #tpu.memory_space<vmem>>, vector<1x256xf32>
    %c0_9 = arith.constant 0 : index
    %c0_10 = arith.constant 0 : index
    %6 = vector.load %arg8[%c0_9, %c0_10] : memref<1x256xf32, #tpu.memory_space<vmem>>, vector<1x256xf32>
    %c0_i32 = arith.constant 0 : i32
    %c5_i32_11 = arith.constant 5 : i32
    %7 = arith.addi %c0_i32, %c5_i32_11 : i32
    %c1_i32 = arith.constant 1 : i32
    scf.for %arg10 = %c0_i32 to %7 step %c1_i32  : i32 {
      %8 = arith.addi %0, %arg10 : i32
      %cst = arith.constant 0.000000e+00 : f32
      %9 = vector.broadcast %cst : f32 to vector<5x256xf32>
      %c0_i32_13 = arith.constant 0 : i32
      %10 = arith.addi %8, %c0_i32_13 : i32
      %c0_14 = arith.constant 0 : index
      %11 = arith.index_cast %10 : i32 to index
      %c0_15 = arith.constant 0 : index
      %c0_16 = arith.constant 0 : index
      %12 = vector.load %arg2[%c0_14, %11, %c0_15, %c0_16] : memref<1x7x7x256xf32, #tpu.memory_space<vmem>>, vector<1x1x7x256xf32>
      %13 = vector.shape_cast %12 : vector<1x1x7x256xf32> to vector<7x256xf32>
      %14 = vector.extract_strided_slice %13 {offsets = [0, 0], sizes = [5, 256], strides = [1, 1]} : vector<7x256xf32> to vector<5x256xf32>
      %15 = vector.extract_strided_slice %1 {offsets = [0, 0], sizes = [1, 256], strides = [1, 1]} : vector<9x256xf32> to vector<1x256xf32>
      %16 = vector.broadcast %15 : vector<1x256xf32> to vector<5x256xf32>
      %17 = arith.mulf %14, %16 : vector<5x256xf32>
      %18 = arith.addf %9, %17 : vector<5x256xf32>
      %19 = vector.extract_strided_slice %13 {offsets = [1, 0], sizes = [5, 256], strides = [1, 1]} : vector<7x256xf32> to vector<5x256xf32>
      %20 = vector.extract_strided_slice %1 {offsets = [1, 0], sizes = [1, 256], strides = [1, 1]} : vector<9x256xf32> to vector<1x256xf32>
      %21 = vector.broadcast %20 : vector<1x256xf32> to vector<5x256xf32>
      %22 = arith.mulf %19, %21 : vector<5x256xf32>
      %23 = arith.addf %18, %22 : vector<5x256xf32>
      %24 = vector.extract_strided_slice %13 {offsets = [2, 0], sizes = [5, 256], strides = [1, 1]} : vector<7x256xf32> to vector<5x256xf32>
      %25 = vector.extract_strided_slice %1 {offsets = [2, 0], sizes = [1, 256], strides = [1, 1]} : vector<9x256xf32> to vector<1x256xf32>
      %26 = vector.broadcast %25 : vector<1x256xf32> to vector<5x256xf32>
      %27 = arith.mulf %24, %26 : vector<5x256xf32>
      %28 = arith.addf %23, %27 : vector<5x256xf32>
      %c1_i32_17 = arith.constant 1 : i32
      %29 = arith.addi %8, %c1_i32_17 : i32
      %c0_18 = arith.constant 0 : index
      %30 = arith.index_cast %29 : i32 to index
      %c0_19 = arith.constant 0 : index
      %c0_20 = arith.constant 0 : index
      %31 = vector.load %arg2[%c0_18, %30, %c0_19, %c0_20] : memref<1x7x7x256xf32, #tpu.memory_space<vmem>>, vector<1x1x7x256xf32>
      %32 = vector.shape_cast %31 : vector<1x1x7x256xf32> to vector<7x256xf32>
      %33 = vector.extract_strided_slice %32 {offsets = [0, 0], sizes = [5, 256], strides = [1, 1]} : vector<7x256xf32> to vector<5x256xf32>
      %34 = vector.extract_strided_slice %1 {offsets = [3, 0], sizes = [1, 256], strides = [1, 1]} : vector<9x256xf32> to vector<1x256xf32>
      %35 = vector.broadcast %34 : vector<1x256xf32> to vector<5x256xf32>
      %36 = arith.mulf %33, %35 : vector<5x256xf32>
      %37 = arith.addf %28, %36 : vector<5x256xf32>
      %38 = vector.extract_strided_slice %32 {offsets = [1, 0], sizes = [5, 256], strides = [1, 1]} : vector<7x256xf32> to vector<5x256xf32>
      %39 = vector.extract_strided_slice %1 {offsets = [4, 0], sizes = [1, 256], strides = [1, 1]} : vector<9x256xf32> to vector<1x256xf32>
      %40 = vector.broadcast %39 : vector<1x256xf32> to vector<5x256xf32>
      %41 = arith.mulf %38, %40 : vector<5x256xf32>
      %42 = arith.addf %37, %41 : vector<5x256xf32>
      %43 = vector.extract_strided_slice %32 {offsets = [2, 0], sizes = [5, 256], strides = [1, 1]} : vector<7x256xf32> to vector<5x256xf32>
      %44 = vector.extract_strided_slice %1 {offsets = [5, 0], sizes = [1, 256], strides = [1, 1]} : vector<9x256xf32> to vector<1x256xf32>
      %45 = vector.broadcast %44 : vector<1x256xf32> to vector<5x256xf32>
      %46 = arith.mulf %43, %45 : vector<5x256xf32>
      %47 = arith.addf %42, %46 : vector<5x256xf32>
      %c2_i32 = arith.constant 2 : i32
      %48 = arith.addi %8, %c2_i32 : i32
      %c0_21 = arith.constant 0 : index
      %49 = arith.index_cast %48 : i32 to index
      %c0_22 = arith.constant 0 : index
      %c0_23 = arith.constant 0 : index
      %50 = vector.load %arg2[%c0_21, %49, %c0_22, %c0_23] : memref<1x7x7x256xf32, #tpu.memory_space<vmem>>, vector<1x1x7x256xf32>
      %51 = vector.shape_cast %50 : vector<1x1x7x256xf32> to vector<7x256xf32>
      %52 = vector.extract_strided_slice %51 {offsets = [0, 0], sizes = [5, 256], strides = [1, 1]} : vector<7x256xf32> to vector<5x256xf32>
      %53 = vector.extract_strided_slice %1 {offsets = [6, 0], sizes = [1, 256], strides = [1, 1]} : vector<9x256xf32> to vector<1x256xf32>
      %54 = vector.broadcast %53 : vector<1x256xf32> to vector<5x256xf32>
      %55 = arith.mulf %52, %54 : vector<5x256xf32>
      %56 = arith.addf %47, %55 : vector<5x256xf32>
      %57 = vector.extract_strided_slice %51 {offsets = [1, 0], sizes = [5, 256], strides = [1, 1]} : vector<7x256xf32> to vector<5x256xf32>
      %58 = vector.extract_strided_slice %1 {offsets = [7, 0], sizes = [1, 256], strides = [1, 1]} : vector<9x256xf32> to vector<1x256xf32>
      %59 = vector.broadcast %58 : vector<1x256xf32> to vector<5x256xf32>
      %60 = arith.mulf %57, %59 : vector<5x256xf32>
      %61 = arith.addf %56, %60 : vector<5x256xf32>
      %62 = vector.extract_strided_slice %51 {offsets = [2, 0], sizes = [5, 256], strides = [1, 1]} : vector<7x256xf32> to vector<5x256xf32>
      %63 = vector.extract_strided_slice %1 {offsets = [8, 0], sizes = [1, 256], strides = [1, 1]} : vector<9x256xf32> to vector<1x256xf32>
      %64 = vector.broadcast %63 : vector<1x256xf32> to vector<5x256xf32>
      %65 = arith.mulf %62, %64 : vector<5x256xf32>
      %66 = arith.addf %61, %65 : vector<5x256xf32>
      %67 = vector.broadcast %2 : vector<1x256xf32> to vector<5x256xf32>
      %68 = arith.addf %66, %67 : vector<5x256xf32>
      %69 = arith.truncf %68 : vector<5x256xf32> to vector<5x256xbf16>
      %cst_24 = arith.constant dense<0.000000e+00> : vector<5x256xf32>
      %70 = tpu.matmul %69, %3, %cst_24 {dimension_numbers = #tpu.dot_dimension_numbers<[1], [0], [0], [1], [0, 0, 1, 1], [], []>} : vector<5x256xbf16>, vector<256x256xbf16>, vector<5x256xf32> -> vector<5x256xf32>
      %71 = vector.broadcast %4 : vector<1x256xf32> to vector<5x256xf32>
      %72 = arith.addf %70, %71 : vector<5x256xf32>
      %cst_25 = arith.constant 0.000000e+00 : f32
      %73 = vector.broadcast %cst_25 : f32 to vector<5x256xf32>
      %74 = arith.maximumf %72, %73 : vector<5x256xf32>
      %75 = vector.broadcast %5 : vector<1x256xf32> to vector<5x256xf32>
      %76 = arith.mulf %74, %75 : vector<5x256xf32>
      %77 = vector.broadcast %6 : vector<1x256xf32> to vector<5x256xf32>
      %78 = arith.addf %76, %77 : vector<5x256xf32>
      %c0_26 = arith.constant 0 : index
      %79 = arith.index_cast %arg10 : i32 to index
      %c0_27 = arith.constant 0 : index
      %c0_28 = arith.constant 0 : index
      %80 = vector.load %arg9[%c0_26, %79, %c0_27, %c0_28] : memref<1x5x5x256xf32, #tpu.memory_space<vmem>>, vector<1x1x5x256xf32>
      %81 = vector.shape_cast %80 : vector<1x1x5x256xf32> to vector<5x256xf32>
      %82 = vector.shape_cast %78 : vector<5x256xf32> to vector<1x1x5x256xf32>
      tpu.vector_store %arg9[%c0_26, %79, %c0_27, %c0_28], %82 {strides = array<i32>} : memref<1x5x5x256xf32, #tpu.memory_space<vmem>>, vector<1x1x5x256xf32>,
    }
    %c5_i32_12 = arith.constant 5 : i32
    return
  }
  func.func @transform_0(%arg0: i32, %arg1: i32) -> (i32, i32, i32, i32) {
    %c0_i32 = arith.constant 0 : i32
    %c0_i32_0 = arith.constant 0 : i32
    %c0_i32_1 = arith.constant 0 : i32
    %c0_i32_2 = arith.constant 0 : i32
    return %arg0, %c0_i32, %c0_i32_0, %c0_i32_1 : i32, i32, i32, i32
  }
  func.func @transform_1(%arg0: i32, %arg1: i32) -> (i32, i32) {
    %c0_i32 = arith.constant 0 : i32
    %c0_i32_0 = arith.constant 0 : i32
    %c0_i32_1 = arith.constant 0 : i32
    return %c0_i32, %c0_i32_0 : i32, i32
  }
  func.func @transform_2(%arg0: i32, %arg1: i32) -> (i32, i32) {
    %c0_i32 = arith.constant 0 : i32
    %c0_i32_0 = arith.constant 0 : i32
    %c0_i32_1 = arith.constant 0 : i32
    return %c0_i32, %c0_i32_0 : i32, i32
  }
  func.func @transform_3(%arg0: i32, %arg1: i32) -> (i32, i32) {
    %c0_i32 = arith.constant 0 : i32
    %c0_i32_0 = arith.constant 0 : i32
    %c0_i32_1 = arith.constant 0 : i32
    return %c0_i32, %c0_i32_0 : i32, i32
  }
  func.func @transform_4(%arg0: i32, %arg1: i32) -> (i32, i32) {
    %c0_i32 = arith.constant 0 : i32
    %c0_i32_0 = arith.constant 0 : i32
    %c0_i32_1 = arith.constant 0 : i32
    return %c0_i32, %c0_i32_0 : i32, i32
  }
  func.func @transform_5(%arg0: i32, %arg1: i32) -> (i32, i32) {
    %c0_i32 = arith.constant 0 : i32
    %c0_i32_0 = arith.constant 0 : i32
    %c0_i32_1 = arith.constant 0 : i32
    return %c0_i32, %c0_i32_0 : i32, i32
  }
  func.func @transform_6(%arg0: i32, %arg1: i32) -> (i32, i32) {
    %c0_i32 = arith.constant 0 : i32
    %c0_i32_0 = arith.constant 0 : i32
    %c0_i32_1 = arith.constant 0 : i32
    return %c0_i32, %c0_i32_0 : i32, i32
  }
  func.func @transform_7(%arg0: i32, %arg1: i32) -> (i32, i32, i32, i32) {
    %c0_i32 = arith.constant 0 : i32
    %c0_i32_0 = arith.constant 0 : i32
    %c0_i32_1 = arith.constant 0 : i32
    return %arg0, %arg1, %c0_i32, %c0_i32_0 : i32, i32, i32, i32
  }
}

module attributes {stable_mosaic.version = 11 : i64} {
  func.func @_sepconv_kernel(%arg0: i32, %arg1: i32, %arg2: memref<1x5x5x256xf32, #tpu.memory_space<vmem>>, %arg3: memref<9x256xf32, #tpu.memory_space<vmem>>, %arg4: memref<1x256xf32, #tpu.memory_space<vmem>>, %arg5: memref<256x512xbf16, #tpu.memory_space<vmem>>, %arg6: memref<1x512xf32, #tpu.memory_space<vmem>>, %arg7: memref<1x512xf32, #tpu.memory_space<vmem>>, %arg8: memref<1x512xf32, #tpu.memory_space<vmem>>, %arg9: memref<1x3x3x512xf32, #tpu.memory_space<vmem>>) attributes {dimension_semantics = [#tpu.dimension_semantics<parallel>, #tpu.dimension_semantics<parallel>], iteration_bounds = array<i64: 2, 1>, scalar_prefetch = 0 : i64, scratch_operands = 0 : i64, tpu.core_type = #tpu.core_type<tc>, window_params = [{transform_indices = @transform_0, window_bounds = array<i64: 1, 5, 5, 256>}, {pipeline_mode = #tpu.pipeline_mode<synchronous>, transform_indices = @transform_1, window_bounds = array<i64: 9, 256>}, {pipeline_mode = #tpu.pipeline_mode<synchronous>, transform_indices = @transform_2, window_bounds = array<i64: 1, 256>}, {pipeline_mode = #tpu.pipeline_mode<synchronous>, transform_indices = @transform_3, window_bounds = array<i64: 256, 512>}, {pipeline_mode = #tpu.pipeline_mode<synchronous>, transform_indices = @transform_4, window_bounds = array<i64: 1, 512>}, {pipeline_mode = #tpu.pipeline_mode<synchronous>, transform_indices = @transform_5, window_bounds = array<i64: 1, 512>}, {pipeline_mode = #tpu.pipeline_mode<synchronous>, transform_indices = @transform_6, window_bounds = array<i64: 1, 512>}, {transform_indices = @transform_7, window_bounds = array<i64: 1, 3, 3, 512>}]} {
    %c3_i32 = arith.constant 3 : i32
    %0 = arith.muli %arg1, %c3_i32 : i32
    %c0 = arith.constant 0 : index
    %c0_0 = arith.constant 0 : index
    %1 = vector.load %arg3[%c0, %c0_0] : memref<9x256xf32, #tpu.memory_space<vmem>>, vector<9x256xf32>
    %c0_1 = arith.constant 0 : index
    %c0_2 = arith.constant 0 : index
    %2 = vector.load %arg4[%c0_1, %c0_2] : memref<1x256xf32, #tpu.memory_space<vmem>>, vector<1x256xf32>
    %c0_3 = arith.constant 0 : index
    %c0_4 = arith.constant 0 : index
    %3 = vector.load %arg5[%c0_3, %c0_4] : memref<256x512xbf16, #tpu.memory_space<vmem>>, vector<256x512xbf16>
    %c0_5 = arith.constant 0 : index
    %c0_6 = arith.constant 0 : index
    %4 = vector.load %arg6[%c0_5, %c0_6] : memref<1x512xf32, #tpu.memory_space<vmem>>, vector<1x512xf32>
    %c0_7 = arith.constant 0 : index
    %c0_8 = arith.constant 0 : index
    %5 = vector.load %arg7[%c0_7, %c0_8] : memref<1x512xf32, #tpu.memory_space<vmem>>, vector<1x512xf32>
    %c0_9 = arith.constant 0 : index
    %c0_10 = arith.constant 0 : index
    %6 = vector.load %arg8[%c0_9, %c0_10] : memref<1x512xf32, #tpu.memory_space<vmem>>, vector<1x512xf32>
    %c0_i32 = arith.constant 0 : i32
    %c3_i32_11 = arith.constant 3 : i32
    %7 = arith.addi %c0_i32, %c3_i32_11 : i32
    %c1_i32 = arith.constant 1 : i32
    scf.for %arg10 = %c0_i32 to %7 step %c1_i32  : i32 {
      %8 = arith.addi %0, %arg10 : i32
      %cst = arith.constant 0.000000e+00 : f32
      %9 = vector.broadcast %cst : f32 to vector<3x256xf32>
      %c0_i32_13 = arith.constant 0 : i32
      %10 = arith.addi %8, %c0_i32_13 : i32
      %c0_14 = arith.constant 0 : index
      %11 = arith.index_cast %10 : i32 to index
      %c0_15 = arith.constant 0 : index
      %c0_16 = arith.constant 0 : index
      %12 = vector.load %arg2[%c0_14, %11, %c0_15, %c0_16] : memref<1x5x5x256xf32, #tpu.memory_space<vmem>>, vector<1x1x5x256xf32>
      %13 = vector.shape_cast %12 : vector<1x1x5x256xf32> to vector<5x256xf32>
      %14 = vector.extract_strided_slice %13 {offsets = [0, 0], sizes = [3, 256], strides = [1, 1]} : vector<5x256xf32> to vector<3x256xf32>
      %15 = vector.extract_strided_slice %1 {offsets = [0, 0], sizes = [1, 256], strides = [1, 1]} : vector<9x256xf32> to vector<1x256xf32>
      %16 = vector.broadcast %15 : vector<1x256xf32> to vector<3x256xf32>
      %17 = arith.mulf %14, %16 : vector<3x256xf32>
      %18 = arith.addf %9, %17 : vector<3x256xf32>
      %19 = vector.extract_strided_slice %13 {offsets = [1, 0], sizes = [3, 256], strides = [1, 1]} : vector<5x256xf32> to vector<3x256xf32>
      %20 = vector.extract_strided_slice %1 {offsets = [1, 0], sizes = [1, 256], strides = [1, 1]} : vector<9x256xf32> to vector<1x256xf32>
      %21 = vector.broadcast %20 : vector<1x256xf32> to vector<3x256xf32>
      %22 = arith.mulf %19, %21 : vector<3x256xf32>
      %23 = arith.addf %18, %22 : vector<3x256xf32>
      %24 = vector.extract_strided_slice %13 {offsets = [2, 0], sizes = [3, 256], strides = [1, 1]} : vector<5x256xf32> to vector<3x256xf32>
      %25 = vector.extract_strided_slice %1 {offsets = [2, 0], sizes = [1, 256], strides = [1, 1]} : vector<9x256xf32> to vector<1x256xf32>
      %26 = vector.broadcast %25 : vector<1x256xf32> to vector<3x256xf32>
      %27 = arith.mulf %24, %26 : vector<3x256xf32>
      %28 = arith.addf %23, %27 : vector<3x256xf32>
      %c1_i32_17 = arith.constant 1 : i32
      %29 = arith.addi %8, %c1_i32_17 : i32
      %c0_18 = arith.constant 0 : index
      %30 = arith.index_cast %29 : i32 to index
      %c0_19 = arith.constant 0 : index
      %c0_20 = arith.constant 0 : index
      %31 = vector.load %arg2[%c0_18, %30, %c0_19, %c0_20] : memref<1x5x5x256xf32, #tpu.memory_space<vmem>>, vector<1x1x5x256xf32>
      %32 = vector.shape_cast %31 : vector<1x1x5x256xf32> to vector<5x256xf32>
      %33 = vector.extract_strided_slice %32 {offsets = [0, 0], sizes = [3, 256], strides = [1, 1]} : vector<5x256xf32> to vector<3x256xf32>
      %34 = vector.extract_strided_slice %1 {offsets = [3, 0], sizes = [1, 256], strides = [1, 1]} : vector<9x256xf32> to vector<1x256xf32>
      %35 = vector.broadcast %34 : vector<1x256xf32> to vector<3x256xf32>
      %36 = arith.mulf %33, %35 : vector<3x256xf32>
      %37 = arith.addf %28, %36 : vector<3x256xf32>
      %38 = vector.extract_strided_slice %32 {offsets = [1, 0], sizes = [3, 256], strides = [1, 1]} : vector<5x256xf32> to vector<3x256xf32>
      %39 = vector.extract_strided_slice %1 {offsets = [4, 0], sizes = [1, 256], strides = [1, 1]} : vector<9x256xf32> to vector<1x256xf32>
      %40 = vector.broadcast %39 : vector<1x256xf32> to vector<3x256xf32>
      %41 = arith.mulf %38, %40 : vector<3x256xf32>
      %42 = arith.addf %37, %41 : vector<3x256xf32>
      %43 = vector.extract_strided_slice %32 {offsets = [2, 0], sizes = [3, 256], strides = [1, 1]} : vector<5x256xf32> to vector<3x256xf32>
      %44 = vector.extract_strided_slice %1 {offsets = [5, 0], sizes = [1, 256], strides = [1, 1]} : vector<9x256xf32> to vector<1x256xf32>
      %45 = vector.broadcast %44 : vector<1x256xf32> to vector<3x256xf32>
      %46 = arith.mulf %43, %45 : vector<3x256xf32>
      %47 = arith.addf %42, %46 : vector<3x256xf32>
      %c2_i32 = arith.constant 2 : i32
      %48 = arith.addi %8, %c2_i32 : i32
      %c0_21 = arith.constant 0 : index
      %49 = arith.index_cast %48 : i32 to index
      %c0_22 = arith.constant 0 : index
      %c0_23 = arith.constant 0 : index
      %50 = vector.load %arg2[%c0_21, %49, %c0_22, %c0_23] : memref<1x5x5x256xf32, #tpu.memory_space<vmem>>, vector<1x1x5x256xf32>
      %51 = vector.shape_cast %50 : vector<1x1x5x256xf32> to vector<5x256xf32>
      %52 = vector.extract_strided_slice %51 {offsets = [0, 0], sizes = [3, 256], strides = [1, 1]} : vector<5x256xf32> to vector<3x256xf32>
      %53 = vector.extract_strided_slice %1 {offsets = [6, 0], sizes = [1, 256], strides = [1, 1]} : vector<9x256xf32> to vector<1x256xf32>
      %54 = vector.broadcast %53 : vector<1x256xf32> to vector<3x256xf32>
      %55 = arith.mulf %52, %54 : vector<3x256xf32>
      %56 = arith.addf %47, %55 : vector<3x256xf32>
      %57 = vector.extract_strided_slice %51 {offsets = [1, 0], sizes = [3, 256], strides = [1, 1]} : vector<5x256xf32> to vector<3x256xf32>
      %58 = vector.extract_strided_slice %1 {offsets = [7, 0], sizes = [1, 256], strides = [1, 1]} : vector<9x256xf32> to vector<1x256xf32>
      %59 = vector.broadcast %58 : vector<1x256xf32> to vector<3x256xf32>
      %60 = arith.mulf %57, %59 : vector<3x256xf32>
      %61 = arith.addf %56, %60 : vector<3x256xf32>
      %62 = vector.extract_strided_slice %51 {offsets = [2, 0], sizes = [3, 256], strides = [1, 1]} : vector<5x256xf32> to vector<3x256xf32>
      %63 = vector.extract_strided_slice %1 {offsets = [8, 0], sizes = [1, 256], strides = [1, 1]} : vector<9x256xf32> to vector<1x256xf32>
      %64 = vector.broadcast %63 : vector<1x256xf32> to vector<3x256xf32>
      %65 = arith.mulf %62, %64 : vector<3x256xf32>
      %66 = arith.addf %61, %65 : vector<3x256xf32>
      %67 = vector.broadcast %2 : vector<1x256xf32> to vector<3x256xf32>
      %68 = arith.addf %66, %67 : vector<3x256xf32>
      %69 = arith.truncf %68 : vector<3x256xf32> to vector<3x256xbf16>
      %cst_24 = arith.constant dense<0.000000e+00> : vector<3x512xf32>
      %70 = tpu.matmul %69, %3, %cst_24 {dimension_numbers = #tpu.dot_dimension_numbers<[1], [0], [0], [1], [0, 0, 1, 1], [], []>} : vector<3x256xbf16>, vector<256x512xbf16>, vector<3x512xf32> -> vector<3x512xf32>
      %71 = vector.broadcast %4 : vector<1x512xf32> to vector<3x512xf32>
      %72 = arith.addf %70, %71 : vector<3x512xf32>
      %cst_25 = arith.constant 0.000000e+00 : f32
      %73 = vector.broadcast %cst_25 : f32 to vector<3x512xf32>
      %74 = arith.maximumf %72, %73 : vector<3x512xf32>
      %75 = vector.broadcast %5 : vector<1x512xf32> to vector<3x512xf32>
      %76 = arith.mulf %74, %75 : vector<3x512xf32>
      %77 = vector.broadcast %6 : vector<1x512xf32> to vector<3x512xf32>
      %78 = arith.addf %76, %77 : vector<3x512xf32>
      %c0_26 = arith.constant 0 : index
      %79 = arith.index_cast %arg10 : i32 to index
      %c0_27 = arith.constant 0 : index
      %c0_28 = arith.constant 0 : index
      %80 = vector.load %arg9[%c0_26, %79, %c0_27, %c0_28] : memref<1x3x3x512xf32, #tpu.memory_space<vmem>>, vector<1x1x3x512xf32>
      %81 = vector.shape_cast %80 : vector<1x1x3x512xf32> to vector<3x512xf32>
      %82 = vector.shape_cast %78 : vector<3x512xf32> to vector<1x1x3x512xf32>
      tpu.vector_store %arg9[%c0_26, %79, %c0_27, %c0_28], %82 {strides = array<i32>} : memref<1x3x3x512xf32, #tpu.memory_space<vmem>>, vector<1x1x3x512xf32>,
    }
    %c3_i32_12 = arith.constant 3 : i32
    return
  }
  func.func @transform_0(%arg0: i32, %arg1: i32) -> (i32, i32, i32, i32) {
    %c0_i32 = arith.constant 0 : i32
    %c0_i32_0 = arith.constant 0 : i32
    %c0_i32_1 = arith.constant 0 : i32
    %c0_i32_2 = arith.constant 0 : i32
    return %arg0, %c0_i32, %c0_i32_0, %c0_i32_1 : i32, i32, i32, i32
  }
  func.func @transform_1(%arg0: i32, %arg1: i32) -> (i32, i32) {
    %c0_i32 = arith.constant 0 : i32
    %c0_i32_0 = arith.constant 0 : i32
    %c0_i32_1 = arith.constant 0 : i32
    return %c0_i32, %c0_i32_0 : i32, i32
  }
  func.func @transform_2(%arg0: i32, %arg1: i32) -> (i32, i32) {
    %c0_i32 = arith.constant 0 : i32
    %c0_i32_0 = arith.constant 0 : i32
    %c0_i32_1 = arith.constant 0 : i32
    return %c0_i32, %c0_i32_0 : i32, i32
  }
  func.func @transform_3(%arg0: i32, %arg1: i32) -> (i32, i32) {
    %c0_i32 = arith.constant 0 : i32
    %c0_i32_0 = arith.constant 0 : i32
    %c0_i32_1 = arith.constant 0 : i32
    return %c0_i32, %c0_i32_0 : i32, i32
  }
  func.func @transform_4(%arg0: i32, %arg1: i32) -> (i32, i32) {
    %c0_i32 = arith.constant 0 : i32
    %c0_i32_0 = arith.constant 0 : i32
    %c0_i32_1 = arith.constant 0 : i32
    return %c0_i32, %c0_i32_0 : i32, i32
  }
  func.func @transform_5(%arg0: i32, %arg1: i32) -> (i32, i32) {
    %c0_i32 = arith.constant 0 : i32
    %c0_i32_0 = arith.constant 0 : i32
    %c0_i32_1 = arith.constant 0 : i32
    return %c0_i32, %c0_i32_0 : i32, i32
  }
  func.func @transform_6(%arg0: i32, %arg1: i32) -> (i32, i32) {
    %c0_i32 = arith.constant 0 : i32
    %c0_i32_0 = arith.constant 0 : i32
    %c0_i32_1 = arith.constant 0 : i32
    return %c0_i32, %c0_i32_0 : i32, i32
  }
  func.func @transform_7(%arg0: i32, %arg1: i32) -> (i32, i32, i32, i32) {
    %c0_i32 = arith.constant 0 : i32
    %c0_i32_0 = arith.constant 0 : i32
    %c0_i32_1 = arith.constant 0 : i32
    return %arg0, %arg1, %c0_i32, %c0_i32_0 : i32, i32, i32, i32
  }
}

module attributes {stable_mosaic.version = 11 : i64} {
  func.func @_sepconv_kernel(%arg0: i32, %arg1: i32, %arg2: memref<1x3x3x512xf32, #tpu.memory_space<vmem>>, %arg3: memref<9x512xf32, #tpu.memory_space<vmem>>, %arg4: memref<1x512xf32, #tpu.memory_space<vmem>>, %arg5: memref<512x512xbf16, #tpu.memory_space<vmem>>, %arg6: memref<1x512xf32, #tpu.memory_space<vmem>>, %arg7: memref<1x512xf32, #tpu.memory_space<vmem>>, %arg8: memref<1x512xf32, #tpu.memory_space<vmem>>, %arg9: memref<1x1x1x512xf32, #tpu.memory_space<vmem>>) attributes {dimension_semantics = [#tpu.dimension_semantics<parallel>, #tpu.dimension_semantics<parallel>], iteration_bounds = array<i64: 2, 1>, scalar_prefetch = 0 : i64, scratch_operands = 0 : i64, tpu.core_type = #tpu.core_type<tc>, window_params = [{transform_indices = @transform_0, window_bounds = array<i64: 1, 3, 3, 512>}, {pipeline_mode = #tpu.pipeline_mode<synchronous>, transform_indices = @transform_1, window_bounds = array<i64: 9, 512>}, {pipeline_mode = #tpu.pipeline_mode<synchronous>, transform_indices = @transform_2, window_bounds = array<i64: 1, 512>}, {pipeline_mode = #tpu.pipeline_mode<synchronous>, transform_indices = @transform_3, window_bounds = array<i64: 512, 512>}, {pipeline_mode = #tpu.pipeline_mode<synchronous>, transform_indices = @transform_4, window_bounds = array<i64: 1, 512>}, {pipeline_mode = #tpu.pipeline_mode<synchronous>, transform_indices = @transform_5, window_bounds = array<i64: 1, 512>}, {pipeline_mode = #tpu.pipeline_mode<synchronous>, transform_indices = @transform_6, window_bounds = array<i64: 1, 512>}, {transform_indices = @transform_7, window_bounds = array<i64: 1, 1, 1, 512>}]} {
    %c1_i32 = arith.constant 1 : i32
    %0 = arith.muli %arg1, %c1_i32 : i32
    %c0 = arith.constant 0 : index
    %c0_0 = arith.constant 0 : index
    %1 = vector.load %arg3[%c0, %c0_0] : memref<9x512xf32, #tpu.memory_space<vmem>>, vector<9x512xf32>
    %c0_1 = arith.constant 0 : index
    %c0_2 = arith.constant 0 : index
    %2 = vector.load %arg4[%c0_1, %c0_2] : memref<1x512xf32, #tpu.memory_space<vmem>>, vector<1x512xf32>
    %c0_3 = arith.constant 0 : index
    %c0_4 = arith.constant 0 : index
    %3 = vector.load %arg5[%c0_3, %c0_4] : memref<512x512xbf16, #tpu.memory_space<vmem>>, vector<512x512xbf16>
    %c0_5 = arith.constant 0 : index
    %c0_6 = arith.constant 0 : index
    %4 = vector.load %arg6[%c0_5, %c0_6] : memref<1x512xf32, #tpu.memory_space<vmem>>, vector<1x512xf32>
    %c0_7 = arith.constant 0 : index
    %c0_8 = arith.constant 0 : index
    %5 = vector.load %arg7[%c0_7, %c0_8] : memref<1x512xf32, #tpu.memory_space<vmem>>, vector<1x512xf32>
    %c0_9 = arith.constant 0 : index
    %c0_10 = arith.constant 0 : index
    %6 = vector.load %arg8[%c0_9, %c0_10] : memref<1x512xf32, #tpu.memory_space<vmem>>, vector<1x512xf32>
    %c0_i32 = arith.constant 0 : i32
    %7 = arith.addi %0, %c0_i32 : i32
    %cst = arith.constant 0.000000e+00 : f32
    %8 = vector.broadcast %cst : f32 to vector<1x512xf32>
    %c0_i32_11 = arith.constant 0 : i32
    %9 = arith.addi %7, %c0_i32_11 : i32
    %c0_12 = arith.constant 0 : index
    %10 = arith.index_cast %9 : i32 to index
    %c0_13 = arith.constant 0 : index
    %c0_14 = arith.constant 0 : index
    %11 = vector.load %arg2[%c0_12, %10, %c0_13, %c0_14] : memref<1x3x3x512xf32, #tpu.memory_space<vmem>>, vector<1x1x3x512xf32>
    %12 = vector.shape_cast %11 : vector<1x1x3x512xf32> to vector<3x512xf32>
    %13 = vector.extract_strided_slice %12 {offsets = [0, 0], sizes = [1, 512], strides = [1, 1]} : vector<3x512xf32> to vector<1x512xf32>
    %14 = vector.extract_strided_slice %1 {offsets = [0, 0], sizes = [1, 512], strides = [1, 1]} : vector<9x512xf32> to vector<1x512xf32>
    %15 = arith.mulf %13, %14 : vector<1x512xf32>
    %16 = arith.addf %8, %15 : vector<1x512xf32>
    %17 = vector.extract_strided_slice %12 {offsets = [1, 0], sizes = [1, 512], strides = [1, 1]} : vector<3x512xf32> to vector<1x512xf32>
    %18 = vector.extract_strided_slice %1 {offsets = [1, 0], sizes = [1, 512], strides = [1, 1]} : vector<9x512xf32> to vector<1x512xf32>
    %19 = arith.mulf %17, %18 : vector<1x512xf32>
    %20 = arith.addf %16, %19 : vector<1x512xf32>
    %21 = vector.extract_strided_slice %12 {offsets = [2, 0], sizes = [1, 512], strides = [1, 1]} : vector<3x512xf32> to vector<1x512xf32>
    %22 = vector.extract_strided_slice %1 {offsets = [2, 0], sizes = [1, 512], strides = [1, 1]} : vector<9x512xf32> to vector<1x512xf32>
    %23 = arith.mulf %21, %22 : vector<1x512xf32>
    %24 = arith.addf %20, %23 : vector<1x512xf32>
    %c1_i32_15 = arith.constant 1 : i32
    %25 = arith.addi %7, %c1_i32_15 : i32
    %c0_16 = arith.constant 0 : index
    %26 = arith.index_cast %25 : i32 to index
    %c0_17 = arith.constant 0 : index
    %c0_18 = arith.constant 0 : index
    %27 = vector.load %arg2[%c0_16, %26, %c0_17, %c0_18] : memref<1x3x3x512xf32, #tpu.memory_space<vmem>>, vector<1x1x3x512xf32>
    %28 = vector.shape_cast %27 : vector<1x1x3x512xf32> to vector<3x512xf32>
    %29 = vector.extract_strided_slice %28 {offsets = [0, 0], sizes = [1, 512], strides = [1, 1]} : vector<3x512xf32> to vector<1x512xf32>
    %30 = vector.extract_strided_slice %1 {offsets = [3, 0], sizes = [1, 512], strides = [1, 1]} : vector<9x512xf32> to vector<1x512xf32>
    %31 = arith.mulf %29, %30 : vector<1x512xf32>
    %32 = arith.addf %24, %31 : vector<1x512xf32>
    %33 = vector.extract_strided_slice %28 {offsets = [1, 0], sizes = [1, 512], strides = [1, 1]} : vector<3x512xf32> to vector<1x512xf32>
    %34 = vector.extract_strided_slice %1 {offsets = [4, 0], sizes = [1, 512], strides = [1, 1]} : vector<9x512xf32> to vector<1x512xf32>
    %35 = arith.mulf %33, %34 : vector<1x512xf32>
    %36 = arith.addf %32, %35 : vector<1x512xf32>
    %37 = vector.extract_strided_slice %28 {offsets = [2, 0], sizes = [1, 512], strides = [1, 1]} : vector<3x512xf32> to vector<1x512xf32>
    %38 = vector.extract_strided_slice %1 {offsets = [5, 0], sizes = [1, 512], strides = [1, 1]} : vector<9x512xf32> to vector<1x512xf32>
    %39 = arith.mulf %37, %38 : vector<1x512xf32>
    %40 = arith.addf %36, %39 : vector<1x512xf32>
    %c2_i32 = arith.constant 2 : i32
    %41 = arith.addi %7, %c2_i32 : i32
    %c0_19 = arith.constant 0 : index
    %42 = arith.index_cast %41 : i32 to index
    %c0_20 = arith.constant 0 : index
    %c0_21 = arith.constant 0 : index
    %43 = vector.load %arg2[%c0_19, %42, %c0_20, %c0_21] : memref<1x3x3x512xf32, #tpu.memory_space<vmem>>, vector<1x1x3x512xf32>
    %44 = vector.shape_cast %43 : vector<1x1x3x512xf32> to vector<3x512xf32>
    %45 = vector.extract_strided_slice %44 {offsets = [0, 0], sizes = [1, 512], strides = [1, 1]} : vector<3x512xf32> to vector<1x512xf32>
    %46 = vector.extract_strided_slice %1 {offsets = [6, 0], sizes = [1, 512], strides = [1, 1]} : vector<9x512xf32> to vector<1x512xf32>
    %47 = arith.mulf %45, %46 : vector<1x512xf32>
    %48 = arith.addf %40, %47 : vector<1x512xf32>
    %49 = vector.extract_strided_slice %44 {offsets = [1, 0], sizes = [1, 512], strides = [1, 1]} : vector<3x512xf32> to vector<1x512xf32>
    %50 = vector.extract_strided_slice %1 {offsets = [7, 0], sizes = [1, 512], strides = [1, 1]} : vector<9x512xf32> to vector<1x512xf32>
    %51 = arith.mulf %49, %50 : vector<1x512xf32>
    %52 = arith.addf %48, %51 : vector<1x512xf32>
    %53 = vector.extract_strided_slice %44 {offsets = [2, 0], sizes = [1, 512], strides = [1, 1]} : vector<3x512xf32> to vector<1x512xf32>
    %54 = vector.extract_strided_slice %1 {offsets = [8, 0], sizes = [1, 512], strides = [1, 1]} : vector<9x512xf32> to vector<1x512xf32>
    %55 = arith.mulf %53, %54 : vector<1x512xf32>
    %56 = arith.addf %52, %55 : vector<1x512xf32>
    %57 = arith.addf %56, %2 : vector<1x512xf32>
    %58 = arith.truncf %57 : vector<1x512xf32> to vector<1x512xbf16>
    %cst_22 = arith.constant dense<0.000000e+00> : vector<1x512xf32>
    %59 = tpu.matmul %58, %3, %cst_22 {dimension_numbers = #tpu.dot_dimension_numbers<[1], [0], [0], [1], [0, 0, 1, 1], [], []>} : vector<1x512xbf16>, vector<512x512xbf16>, vector<1x512xf32> -> vector<1x512xf32>
    %60 = arith.addf %59, %4 : vector<1x512xf32>
    %cst_23 = arith.constant 0.000000e+00 : f32
    %61 = vector.broadcast %cst_23 : f32 to vector<1x512xf32>
    %62 = arith.maximumf %60, %61 : vector<1x512xf32>
    %63 = arith.mulf %62, %5 : vector<1x512xf32>
    %64 = arith.addf %63, %6 : vector<1x512xf32>
    %c0_24 = arith.constant 0 : index
    %65 = arith.index_cast %c0_i32 : i32 to index
    %c0_25 = arith.constant 0 : index
    %c0_26 = arith.constant 0 : index
    %66 = vector.load %arg9[%c0_24, %65, %c0_25, %c0_26] : memref<1x1x1x512xf32, #tpu.memory_space<vmem>>, vector<1x1x1x512xf32>
    %67 = vector.shape_cast %66 : vector<1x1x1x512xf32> to vector<1x512xf32>
    %68 = vector.shape_cast %64 : vector<1x512xf32> to vector<1x1x1x512xf32>
    tpu.vector_store %arg9[%c0_24, %65, %c0_25, %c0_26], %68 {strides = array<i32>} : memref<1x1x1x512xf32, #tpu.memory_space<vmem>>, vector<1x1x1x512xf32>,
    %c1_i32_27 = arith.constant 1 : i32
    return
  }
  func.func @transform_0(%arg0: i32, %arg1: i32) -> (i32, i32, i32, i32) {
    %c0_i32 = arith.constant 0 : i32
    %c0_i32_0 = arith.constant 0 : i32
    %c0_i32_1 = arith.constant 0 : i32
    %c0_i32_2 = arith.constant 0 : i32
    return %arg0, %c0_i32, %c0_i32_0, %c0_i32_1 : i32, i32, i32, i32
  }
  func.func @transform_1(%arg0: i32, %arg1: i32) -> (i32, i32) {
    %c0_i32 = arith.constant 0 : i32
    %c0_i32_0 = arith.constant 0 : i32
    %c0_i32_1 = arith.constant 0 : i32
    return %c0_i32, %c0_i32_0 : i32, i32
  }
  func.func @transform_2(%arg0: i32, %arg1: i32) -> (i32, i32) {
    %c0_i32 = arith.constant 0 : i32
    %c0_i32_0 = arith.constant 0 : i32
    %c0_i32_1 = arith.constant 0 : i32
    return %c0_i32, %c0_i32_0 : i32, i32
  }
  func.func @transform_3(%arg0: i32, %arg1: i32) -> (i32, i32) {
    %c0_i32 = arith.constant 0 : i32
    %c0_i32_0 = arith.constant 0 : i32
    %c0_i32_1 = arith.constant 0 : i32
    return %c0_i32, %c0_i32_0 : i32, i32
  }
  func.func @transform_4(%arg0: i32, %arg1: i32) -> (i32, i32) {
    %c0_i32 = arith.constant 0 : i32
    %c0_i32_0 = arith.constant 0 : i32
    %c0_i32_1 = arith.constant 0 : i32
    return %c0_i32, %c0_i32_0 : i32, i32
  }
  func.func @transform_5(%arg0: i32, %arg1: i32) -> (i32, i32) {
    %c0_i32 = arith.constant 0 : i32
    %c0_i32_0 = arith.constant 0 : i32
    %c0_i32_1 = arith.constant 0 : i32
    return %c0_i32, %c0_i32_0 : i32, i32
  }
  func.func @transform_6(%arg0: i32, %arg1: i32) -> (i32, i32) {
    %c0_i32 = arith.constant 0 : i32
    %c0_i32_0 = arith.constant 0 : i32
    %c0_i32_1 = arith.constant 0 : i32
    return %c0_i32, %c0_i32_0 : i32, i32
  }
  func.func @transform_7(%arg0: i32, %arg1: i32) -> (i32, i32, i32, i32) {
    %c0_i32 = arith.constant 0 : i32
    %c0_i32_0 = arith.constant 0 : i32
    %c0_i32_1 = arith.constant 0 : i32
    return %arg0, %arg1, %c0_i32, %c0_i32_0 : i32, i32, i32, i32
  }
}

module attributes {stable_mosaic.version = 11 : i64} {
  func.func @_tail_kernel(%arg0: i32, %arg1: memref<2x1x1x512xf32, #tpu.memory_space<vmem>>, %arg2: memref<512x256xbf16, #tpu.memory_space<vmem>>, %arg3: memref<1x256xf32, #tpu.memory_space<vmem>>, %arg4: memref<1x256xf32, #tpu.memory_space<vmem>>, %arg5: memref<1x256xf32, #tpu.memory_space<vmem>>, %arg6: memref<256x128xbf16, #tpu.memory_space<vmem>>, %arg7: memref<1x128xf32, #tpu.memory_space<vmem>>, %arg8: memref<1x128xf32, #tpu.memory_space<vmem>>, %arg9: memref<1x128xf32, #tpu.memory_space<vmem>>, %arg10: memref<128x7xbf16, #tpu.memory_space<vmem>>, %arg11: memref<1x7xf32, #tpu.memory_space<vmem>>, %arg12: memref<2x7xf32, #tpu.memory_space<vmem>>) attributes {dimension_semantics = [#tpu.dimension_semantics<arbitrary>], iteration_bounds = array<i64: 1>, scalar_prefetch = 0 : i64, scratch_operands = 0 : i64, tpu.core_type = #tpu.core_type<tc>, window_params = [{pipeline_mode = #tpu.pipeline_mode<synchronous>, transform_indices = @transform_0, window_bounds = array<i64: 2, 1, 1, 512>}, {pipeline_mode = #tpu.pipeline_mode<synchronous>, transform_indices = @transform_1, window_bounds = array<i64: 512, 256>}, {pipeline_mode = #tpu.pipeline_mode<synchronous>, transform_indices = @transform_2, window_bounds = array<i64: 1, 256>}, {pipeline_mode = #tpu.pipeline_mode<synchronous>, transform_indices = @transform_3, window_bounds = array<i64: 1, 256>}, {pipeline_mode = #tpu.pipeline_mode<synchronous>, transform_indices = @transform_4, window_bounds = array<i64: 1, 256>}, {pipeline_mode = #tpu.pipeline_mode<synchronous>, transform_indices = @transform_5, window_bounds = array<i64: 256, 128>}, {pipeline_mode = #tpu.pipeline_mode<synchronous>, transform_indices = @transform_6, window_bounds = array<i64: 1, 128>}, {pipeline_mode = #tpu.pipeline_mode<synchronous>, transform_indices = @transform_7, window_bounds = array<i64: 1, 128>}, {pipeline_mode = #tpu.pipeline_mode<synchronous>, transform_indices = @transform_8, window_bounds = array<i64: 1, 128>}, {pipeline_mode = #tpu.pipeline_mode<synchronous>, transform_indices = @transform_9, window_bounds = array<i64: 128, 7>}, {pipeline_mode = #tpu.pipeline_mode<synchronous>, transform_indices = @transform_10, window_bounds = array<i64: 1, 7>}, {pipeline_mode = #tpu.pipeline_mode<synchronous>, transform_indices = @transform_11, window_bounds = array<i64: 2, 7>}]} {
    %cst = arith.constant 0.000000e+00 : f32
    %0 = vector.broadcast %cst : f32 to vector<2x512xf32>
    %c0 = arith.constant 0 : index
    %c0_0 = arith.constant 0 : index
    %c0_1 = arith.constant 0 : index
    %c0_2 = arith.constant 0 : index
    %1 = vector.load %arg1[%c0, %c0_0, %c0_1, %c0_2] : memref<2x1x1x512xf32, #tpu.memory_space<vmem>>, vector<2x1x1x512xf32>
    %2 = vector.shape_cast %1 : vector<2x1x1x512xf32> to vector<2x512xf32>
    %3 = arith.addf %0, %2 : vector<2x512xf32>
    %cst_3 = arith.constant 1.000000e+00 : f32
    %4 = vector.broadcast %cst_3 : f32 to vector<2x512xf32>
    %5 = arith.mulf %3, %4 : vector<2x512xf32>
    %6 = arith.truncf %5 : vector<2x512xf32> to vector<2x512xbf16>
    %c0_4 = arith.constant 0 : index
    %c0_5 = arith.constant 0 : index
    %7 = vector.load %arg2[%c0_4, %c0_5] : memref<512x256xbf16, #tpu.memory_space<vmem>>, vector<512x256xbf16>
    %cst_6 = arith.constant dense<0.000000e+00> : vector<2x256xf32>
    %8 = tpu.matmul %6, %7, %cst_6 {dimension_numbers = #tpu.dot_dimension_numbers<[1], [0], [0], [1], [0, 0, 1, 1], [], []>} : vector<2x512xbf16>, vector<512x256xbf16>, vector<2x256xf32> -> vector<2x256xf32>
    %c0_7 = arith.constant 0 : index
    %c0_8 = arith.constant 0 : index
    %9 = vector.load %arg3[%c0_7, %c0_8] : memref<1x256xf32, #tpu.memory_space<vmem>>, vector<1x256xf32>
    %10 = vector.broadcast %9 : vector<1x256xf32> to vector<2x256xf32>
    %11 = arith.addf %8, %10 : vector<2x256xf32>
    %cst_9 = arith.constant 0.000000e+00 : f32
    %12 = vector.broadcast %cst_9 : f32 to vector<2x256xf32>
    %13 = arith.maximumf %11, %12 : vector<2x256xf32>
    %c0_10 = arith.constant 0 : index
    %c0_11 = arith.constant 0 : index
    %14 = vector.load %arg4[%c0_10, %c0_11] : memref<1x256xf32, #tpu.memory_space<vmem>>, vector<1x256xf32>
    %15 = vector.broadcast %14 : vector<1x256xf32> to vector<2x256xf32>
    %16 = arith.mulf %13, %15 : vector<2x256xf32>
    %c0_12 = arith.constant 0 : index
    %c0_13 = arith.constant 0 : index
    %17 = vector.load %arg5[%c0_12, %c0_13] : memref<1x256xf32, #tpu.memory_space<vmem>>, vector<1x256xf32>
    %18 = vector.broadcast %17 : vector<1x256xf32> to vector<2x256xf32>
    %19 = arith.addf %16, %18 : vector<2x256xf32>
    %20 = arith.truncf %19 : vector<2x256xf32> to vector<2x256xbf16>
    %c0_14 = arith.constant 0 : index
    %c0_15 = arith.constant 0 : index
    %21 = vector.load %arg6[%c0_14, %c0_15] : memref<256x128xbf16, #tpu.memory_space<vmem>>, vector<256x128xbf16>
    %cst_16 = arith.constant dense<0.000000e+00> : vector<2x128xf32>
    %22 = tpu.matmul %20, %21, %cst_16 {dimension_numbers = #tpu.dot_dimension_numbers<[1], [0], [0], [1], [0, 0, 1, 1], [], []>} : vector<2x256xbf16>, vector<256x128xbf16>, vector<2x128xf32> -> vector<2x128xf32>
    %c0_17 = arith.constant 0 : index
    %c0_18 = arith.constant 0 : index
    %23 = vector.load %arg7[%c0_17, %c0_18] : memref<1x128xf32, #tpu.memory_space<vmem>>, vector<1x128xf32>
    %24 = vector.broadcast %23 : vector<1x128xf32> to vector<2x128xf32>
    %25 = arith.addf %22, %24 : vector<2x128xf32>
    %cst_19 = arith.constant 0.000000e+00 : f32
    %26 = vector.broadcast %cst_19 : f32 to vector<2x128xf32>
    %27 = arith.maximumf %25, %26 : vector<2x128xf32>
    %c0_20 = arith.constant 0 : index
    %c0_21 = arith.constant 0 : index
    %28 = vector.load %arg8[%c0_20, %c0_21] : memref<1x128xf32, #tpu.memory_space<vmem>>, vector<1x128xf32>
    %29 = vector.broadcast %28 : vector<1x128xf32> to vector<2x128xf32>
    %30 = arith.mulf %27, %29 : vector<2x128xf32>
    %c0_22 = arith.constant 0 : index
    %c0_23 = arith.constant 0 : index
    %31 = vector.load %arg9[%c0_22, %c0_23] : memref<1x128xf32, #tpu.memory_space<vmem>>, vector<1x128xf32>
    %32 = vector.broadcast %31 : vector<1x128xf32> to vector<2x128xf32>
    %33 = arith.addf %30, %32 : vector<2x128xf32>
    %34 = arith.truncf %33 : vector<2x128xf32> to vector<2x128xbf16>
    %c0_24 = arith.constant 0 : index
    %c0_25 = arith.constant 0 : index
    %35 = vector.load %arg10[%c0_24, %c0_25] : memref<128x7xbf16, #tpu.memory_space<vmem>>, vector<128x7xbf16>
    %cst_26 = arith.constant dense<0.000000e+00> : vector<2x7xf32>
    %36 = tpu.matmul %34, %35, %cst_26 {dimension_numbers = #tpu.dot_dimension_numbers<[1], [0], [0], [1], [0, 0, 1, 1], [], []>} : vector<2x128xbf16>, vector<128x7xbf16>, vector<2x7xf32> -> vector<2x7xf32>
    %c0_27 = arith.constant 0 : index
    %c0_28 = arith.constant 0 : index
    %37 = vector.load %arg11[%c0_27, %c0_28] : memref<1x7xf32, #tpu.memory_space<vmem>>, vector<1x7xf32>
    %38 = vector.broadcast %37 : vector<1x7xf32> to vector<2x7xf32>
    %39 = arith.addf %36, %38 : vector<2x7xf32>
    %c0_29 = arith.constant 0 : index
    %c0_30 = arith.constant 0 : index
    %40 = vector.load %arg12[%c0_29, %c0_30] : memref<2x7xf32, #tpu.memory_space<vmem>>, vector<2x7xf32>
    tpu.vector_store %arg12[%c0_29, %c0_30], %39 {strides = array<i32>} : memref<2x7xf32, #tpu.memory_space<vmem>>, vector<2x7xf32>,
    return
  }
  func.func @transform_0(%arg0: i32) -> (i32, i32, i32, i32) {
    %c0_i32 = arith.constant 0 : i32
    %c0_i32_0 = arith.constant 0 : i32
    %c0_i32_1 = arith.constant 0 : i32
    %c0_i32_2 = arith.constant 0 : i32
    %c0_i32_3 = arith.constant 0 : i32
    return %c0_i32, %c0_i32_0, %c0_i32_1, %c0_i32_2 : i32, i32, i32, i32
  }
  func.func @transform_1(%arg0: i32) -> (i32, i32) {
    %c0_i32 = arith.constant 0 : i32
    %c0_i32_0 = arith.constant 0 : i32
    %c0_i32_1 = arith.constant 0 : i32
    return %c0_i32, %c0_i32_0 : i32, i32
  }
  func.func @transform_2(%arg0: i32) -> (i32, i32) {
    %c0_i32 = arith.constant 0 : i32
    %c0_i32_0 = arith.constant 0 : i32
    %c0_i32_1 = arith.constant 0 : i32
    return %c0_i32, %c0_i32_0 : i32, i32
  }
  func.func @transform_3(%arg0: i32) -> (i32, i32) {
    %c0_i32 = arith.constant 0 : i32
    %c0_i32_0 = arith.constant 0 : i32
    %c0_i32_1 = arith.constant 0 : i32
    return %c0_i32, %c0_i32_0 : i32, i32
  }
  func.func @transform_4(%arg0: i32) -> (i32, i32) {
    %c0_i32 = arith.constant 0 : i32
    %c0_i32_0 = arith.constant 0 : i32
    %c0_i32_1 = arith.constant 0 : i32
    return %c0_i32, %c0_i32_0 : i32, i32
  }
  func.func @transform_5(%arg0: i32) -> (i32, i32) {
    %c0_i32 = arith.constant 0 : i32
    %c0_i32_0 = arith.constant 0 : i32
    %c0_i32_1 = arith.constant 0 : i32
    return %c0_i32, %c0_i32_0 : i32, i32
  }
  func.func @transform_6(%arg0: i32) -> (i32, i32) {
    %c0_i32 = arith.constant 0 : i32
    %c0_i32_0 = arith.constant 0 : i32
    %c0_i32_1 = arith.constant 0 : i32
    return %c0_i32, %c0_i32_0 : i32, i32
  }
  func.func @transform_7(%arg0: i32) -> (i32, i32) {
    %c0_i32 = arith.constant 0 : i32
    %c0_i32_0 = arith.constant 0 : i32
    %c0_i32_1 = arith.constant 0 : i32
    return %c0_i32, %c0_i32_0 : i32, i32
  }
  func.func @transform_8(%arg0: i32) -> (i32, i32) {
    %c0_i32 = arith.constant 0 : i32
    %c0_i32_0 = arith.constant 0 : i32
    %c0_i32_1 = arith.constant 0 : i32
    return %c0_i32, %c0_i32_0 : i32, i32
  }
  func.func @transform_9(%arg0: i32) -> (i32, i32) {
    %c0_i32 = arith.constant 0 : i32
    %c0_i32_0 = arith.constant 0 : i32
    %c0_i32_1 = arith.constant 0 : i32
    return %c0_i32, %c0_i32_0 : i32, i32
  }
  func.func @transform_10(%arg0: i32) -> (i32, i32) {
    %c0_i32 = arith.constant 0 : i32
    %c0_i32_0 = arith.constant 0 : i32
    %c0_i32_1 = arith.constant 0 : i32
    return %c0_i32, %c0_i32_0 : i32, i32
  }
  func.func @transform_11(%arg0: i32) -> (i32, i32) {
    %c0_i32 = arith.constant 0 : i32
    %c0_i32_0 = arith.constant 0 : i32
    %c0_i32_1 = arith.constant 0 : i32
    return %c0_i32, %c0_i32_0 : i32, i32
  }
}

</mosaic_0001>

<llo_original>
// kernel: separable_convolution_model.9
$region0: #{separable_convolution_model.9}
  #allocation0 [shape = 'u32[]', space=smem, size = 0x4, offset = 0x4, fixed_abs, tag = 'smem constant byte address 0x4 - core index']
  #allocation1 [shape = 'u32[144,128]{1,0:T(1,128)}', space=vmem, size = 0x12000, scoped, tag = 'internal scratch']
  #allocation2 [shape = 'f32[1,1]{1,0:T(1,128)S(1)}', space=vmem, size = 0x200, scoped, tag = 'scoped memory for separable_convolution_model.9']
  %s0 = inlined_call_operand.vmem [shape: f32[2,48,48,1], index: 0, kind: input, shape index: {}]
  %s1 = inlined_call_operand.vmem [shape: f32[9,1], index: 1, kind: input, shape index: {}]
  %s2 = inlined_call_operand.<no memory space> [shape: f32[1,1], index: 2, kind: input, shape index: {}]
  %s3 = inlined_call_operand.vmem [shape: f32[1,64], index: 3, kind: input, shape index: {}]
  %s4 = inlined_call_operand.vmem [shape: f32[1,64], index: 4, kind: input, shape index: {}]
  %s5 = inlined_call_operand.vmem [shape: f32[1,64], index: 5, kind: input, shape index: {}]
  %s6 = inlined_call_operand.vmem [shape: f32[1,64], index: 6, kind: input, shape index: {}]
  %s7 = inlined_call_operand.vmem [shape: f32[2,46,46,64], index: 7, kind: output, shape index: {}]
  %s8 = sld [smem:[#allocation0]]
  $region68: #{separable_convolution_model.9} parent=0
    _
  %s10 = ssub.s32 1, %s8
  %s11 = scalar_select 0, %s10, %s8
  %v12 = vstv %s2
  %13 = vst [vmem:[#allocation2] sm:$0x1] %v12
  loop: start=0, step=1, limit=6
  $region2: #{separable_convolution_model.9} parent=0 // loop_pre_header
    _
  $region3: #{separable_convolution_model.9} parent=0 // loop_header
    %s15 = sphi 0, %s19
    %p16 = scmp.ge.s32.totalorder %s15, 6
    %s22 = sphi 0, %s34
    %s23 = sphi 0, %s30
    %s24 = sphi 0, %s22
    %s25 = sphi 0, %s23
    %s26 = sphi 0, %s24
    %s27 = sphi 0, %s25
    %s37 = sphi 0, %s39
    %s40 = sphi 0, %s37
    %s41 = sphi 0, %s40
    %s57 = sphi 0, %s41
    %s61 = sphi 0, %s61
    %s63 = sphi 0, %s61
    %s64 = sphi 0, %s63
    %s78 = sphi 0, %s64
    %s82 = sphi 0, %s82
    %s84 = sphi 0, %s82
    %s85 = sphi 0, %s84
    %s99 = sphi 0, %s85
    %s103 = sphi 0, %s103
    %s105 = sphi 0, %s103
    %s106 = sphi 0, %s105
    %s120 = sphi 0, %s106
    %s124 = sphi 0, %s124
    %s126 = sphi 0, %s124
    %s127 = sphi 0, %s126
    %s141 = sphi 0, %s127
    %s145 = sphi 0, %s145
    %s147 = sphi 0, %s145
    %s148 = sphi 0, %s147
    %s162 = sphi 0, %s148
    %s166 = sphi 0, %s166
    %s168 = sphi 0, %s166
    %s169 = sphi 0, %s168
    %s183 = sphi 0, %s169
    %s191 = sphi 0, %s193
    %s194 = sphi 0, %s191
    %s195 = sphi 0, %s194
    %s211 = sphi 0, %s195
  $region4: #{separable_convolution_model.9} parent=0 // loop_header_branch
    %18 = sbr.rel (%p16) target = $region8
  $region5: #{separable_convolution_model.9} parent=0 // loop_body
    %s20 = ssub.s32 %s15, 1
    %s21 = ssub.s32 %s15, 2
    %s28 = sadd.s32 1, %s23
    %p29 = scmp.ge.s32.totalorder %s28, 2
    %s30 = scalar_select %p29, 0, %s28
    %s31 = sadd.s32 1, %s22
    %s32 = scalar_select %p29, %s31, %s22
    %p33 = scmp.ge.s32.totalorder %s32, 2
    %s34 = scalar_select %p33, 0, %s32
    %s35 = ssub.s32 %s22, %s34
    %p36 = scmp.eq.s32.totalorder %s35, 0
    %s38 = sadd.s32 %s37, 1
    %s39 = scalar_select %p36, %s37, %s38
    %p42 = pneg %p36
    %p43 = scmp.eq.s32.totalorder %s15, 3
    %p44 = por %p42, %p43
    %p45 = scmp.ne.s32.totalorder %s37, %s40
    %p46 = scmp.eq.s32.totalorder %s15, 0
    %p47 = por %p45, %p46
    %p48 = scmp.ne.s32.totalorder %s37, %s40
    %p49 = scmp.eq.s32.totalorder %s20, 3
    %p50 = por %p48, %p49
    %p51 = scmp.ne.s32.totalorder %s40, %s41
    %p52 = scmp.eq.s32.totalorder %s20, 0
    %p53 = por %p51, %p52
    %p54 = scmp.ne.s32.totalorder %s40, %s41
    %p55 = scmp.eq.s32.totalorder %s21, 3
    %p56 = por %p54, %p55
    %p58 = scmp.ne.s32.totalorder %s41, %s57
    %p59 = scmp.eq.s32.totalorder %s21, 0
    %p60 = por %p58, %p59
    %s62 = sadd.s32 %s61, 1
    %p65 = scmp.eq.s32.totalorder %s15, 3
    %p66 = scmp.ne.s32.totalorder %s61, %s63
    %p67 = scmp.eq.s32.totalorder %s15, 0
    %p68 = por %p66, %p67
    %p69 = scmp.ne.s32.totalorder %s61, %s63
    %p70 = scmp.eq.s32.totalorder %s20, 3
    %p71 = por %p69, %p70
    %p72 = scmp.ne.s32.totalorder %s63, %s64
    %p73 = scmp.eq.s32.totalorder %s20, 0
    %p74 = por %p72, %p73
    %p75 = scmp.ne.s32.totalorder %s63, %s64
    %p76 = scmp.eq.s32.totalorder %s21, 3
    %p77 = por %p75, %p76
    %p79 = scmp.ne.s32.totalorder %s64, %s78
    %p80 = scmp.eq.s32.totalorder %s21, 0
    %p81 = por %p79, %p80
    %s83 = sadd.s32 %s82, 1
    %p86 = scmp.eq.s32.totalorder %s15, 3
    %p87 = scmp.ne.s32.totalorder %s82, %s84
    %p88 = scmp.eq.s32.totalorder %s15, 0
    %p89 = por %p87, %p88
    %p90 = scmp.ne.s32.totalorder %s82, %s84
    %p91 = scmp.eq.s32.totalorder %s20, 3
    %p92 = por %p90, %p91
    %p93 = scmp.ne.s32.totalorder %s84, %s85
    %p94 = scmp.eq.s32.totalorder %s20, 0
    %p95 = por %p93, %p94
    %p96 = scmp.ne.s32.totalorder %s84, %s85
    %p97 = scmp.eq.s32.totalorder %s21, 3
    %p98 = por %p96, %p97
    %p100 = scmp.ne.s32.totalorder %s85, %s99
    %p101 = scmp.eq.s32.totalorder %s21, 0
    %p102 = por %p100, %p101
    %s104 = sadd.s32 %s103, 1
    %p107 = scmp.eq.s32.totalorder %s15, 3
    %p108 = scmp.ne.s32.totalorder %s103, %s105
    %p109 = scmp.eq.s32.totalorder %s15, 0
    %p110 = por %p108, %p109
    %p111 = scmp.ne.s32.totalorder %s103, %s105
    %p112 = scmp.eq.s32.totalorder %s20, 3
    %p113 = por %p111, %p112
    %p114 = scmp.ne.s32.totalorder %s105, %s106
    %p115 = scmp.eq.s32.totalorder %s20, 0
    %p116 = por %p114, %p115
    %p117 = scmp.ne.s32.totalorder %s105, %s106
    %p118 = scmp.eq.s32.totalorder %s21, 3
    %p119 = por %p117, %p118
    %p121 = scmp.ne.s32.totalorder %s106, %s120
    %p122 = scmp.eq.s32.totalorder %s21, 0
    %p123 = por %p121, %p122
    %s125 = sadd.s32 %s124, 1
    %p128 = scmp.eq.s32.totalorder %s15, 3
    %p129 = scmp.ne.s32.totalorder %s124, %s126
    %p130 = scmp.eq.s32.totalorder %s15, 0
    %p131 = por %p129, %p130
    %p132 = scmp.ne.s32.totalorder %s124, %s126
    %p133 = scmp.eq.s32.totalorder %s20, 3
    %p134 = por %p132, %p133
    %p135 = scmp.ne.s32.totalorder %s126, %s127
    %p136 = scmp.eq.s32.totalorder %s20, 0
    %p137 = por %p135, %p136
    %p138 = scmp.ne.s32.totalorder %s126, %s127
    %p139 = scmp.eq.s32.totalorder %s21, 3
    %p140 = por %p138, %p139
    %p142 = scmp.ne.s32.totalorder %s127, %s141
    %p143 = scmp.eq.s32.totalorder %s21, 0
    %p144 = por %p142, %p143
    %s146 = sadd.s32 %s145, 1
    %p149 = scmp.eq.s32.totalorder %s15, 3
    %p150 = scmp.ne.s32.totalorder %s145, %s147
    %p151 = scmp.eq.s32.totalorder %s15, 0
    %p152 = por %p150, %p151
    %p153 = scmp.ne.s32.totalorder %s145, %s147
    %p154 = scmp.eq.s32.totalorder %s20, 3
    %p155 = por %p153, %p154
    %p156 = scmp.ne.s32.totalorder %s147, %s148
    %p157 = scmp.eq.s32.totalorder %s20, 0
    %p158 = por %p156, %p157
    %p159 = scmp.ne.s32.totalorder %s147, %s148
    %p160 = scmp.eq.s32.totalorder %s21, 3
    %p161 = por %p159, %p160
    %p163 = scmp.ne.s32.totalorder %s148, %s162
    %p164 = scmp.eq.s32.totalorder %s21, 0
    %p165 = por %p163, %p164
    %s167 = sadd.s32 %s166, 1
    %p170 = scmp.eq.s32.totalorder %s15, 3
    %p171 = scmp.ne.s32.totalorder %s166, %s168
    %p172 = scmp.eq.s32.totalorder %s15, 0
    %p173 = por %p171, %p172
    %p174 = scmp.ne.s32.totalorder %s166, %s168
    %p175 = scmp.eq.s32.totalorder %s20, 3
    %p176 = por %p174, %p175
    %p177 = scmp.ne.s32.totalorder %s168, %s169
    %p178 = scmp.eq.s32.totalorder %s20, 0
    %p179 = por %p177, %p178
    %p180 = scmp.ne.s32.totalorder %s168, %s169
    %p181 = scmp.eq.s32.totalorder %s21, 3
    %p182 = por %p180, %p181
    %p184 = scmp.ne.s32.totalorder %s169, %s183
    %p185 = scmp.eq.s32.totalorder %s21, 0
    %p186 = por %p184, %p185
    %s187 = ssub.s32 %s22, %s34
    %s188 = ssub.s32 %s23, %s30
    %s189 = sor.u32 %s187, %s188
    %p190 = scmp.eq.s32.totalorder %s189, 0
    %s192 = sadd.s32 %s191, 1
    %s193 = scalar_select %p190, %s191, %s192
    %p196 = pneg %p190
    %p197 = scmp.eq.s32.totalorder %s15, 3
    %p198 = por %p196, %p197
    %p199 = scmp.ne.s32.totalorder %s191, %s194
    %p200 = scmp.eq.s32.totalorder %s15, 0
    %p201 = por %p199, %p200
    %p202 = scmp.ne.s32.totalorder %s191, %s194
    %p203 = scmp.eq.s32.totalorder %s20, 3
    %p204 = por %p202, %p203
    %p205 = scmp.ne.s32.totalorder %s194, %s195
    %p206 = scmp.eq.s32.totalorder %s20, 0
    %p207 = por %p205, %p206
    %p208 = scmp.ne.s32.totalorder %s194, %s195
    %p209 = scmp.eq.s32.totalorder %s21, 3
    %p210 = por %p208, %p209
    %p212 = scmp.ne.s32.totalorder %s195, %s211
    %p213 = scmp.eq.s32.totalorder %s21, 0
    %p214 = por %p212, %p213
    %p215 = scmp.le.s32.totalorder 1, %s15
    %p216 = scmp.lt.s32.totalorder %s15, 5
    %p217 = pnand %p215, %p216
    %p218 = pneg %p217
    // Predicated region
    $region9: #{separable_convolution_model.9} parent=5 // pred_check
      _
    $region10: #{separable_convolution_model.9} parent=5 // pred_check_branch
      %220 = sbr.rel (%p217) target = $region12
    $region11: #{separable_convolution_model.9} parent=5 // pred_region
      %s221 = ssub.s32 %s15, 1
      // Predicated region
      $region13: #{separable_convolution_model.9} parent=11 // pred_check
        %p222 = pneg %p74
      $region14: #{separable_convolution_model.9} parent=11 // pred_check_branch
        %224 = sbr.rel (%p222) target = $region16
      $region15: #{separable_convolution_model.9} parent=11 // pred_region
        _
      $region16: #{separable_convolution_model.9} parent=11 // pred_fallthru
        _
      // Predicated region
      $region17: #{separable_convolution_model.9} parent=11 // pred_check
        %p225 = pneg %p95
      $region18: #{separable_convolution_model.9} parent=11 // pred_check_branch
        %227 = sbr.rel (%p225) target = $region20
      $region19: #{separable_convolution_model.9} parent=11 // pred_region
        _
      $region20: #{separable_convolution_model.9} parent=11 // pred_fallthru
        _
      // Predicated region
      $region21: #{separable_convolution_model.9} parent=11 // pred_check
        %p228 = pneg %p116
      $region22: #{separable_convolution_model.9} parent=11 // pred_check_branch
        %230 = sbr.rel (%p228) target = $region24
      $region23: #{separable_convolution_model.9} parent=11 // pred_region
        _
      $region24: #{separable_convolution_model.9} parent=11 // pred_fallthru
        _
      // Predicated region
      $region25: #{separable_convolution_model.9} parent=11 // pred_check
        %p231 = pneg %p137
      $region26: #{separable_convolution_model.9} parent=11 // pred_check_branch
        %233 = sbr.rel (%p231) target = $region28
      $region27: #{separable_convolution_model.9} parent=11 // pred_region
        _
      $region28: #{separable_convolution_model.9} parent=11 // pred_fallthru
        _
      // Predicated region
      $region29: #{separable_convolution_model.9} parent=11 // pred_check
        %p234 = pneg %p158
      $region30: #{separable_convolution_model.9} parent=11 // pred_check_branch
        %236 = sbr.rel (%p234) target = $region32
      $region31: #{separable_convolution_model.9} parent=11 // pred_region
        _
      $region32: #{separable_convolution_model.9} parent=11 // pred_fallthru
        _
      // Predicated region
      $region33: #{separable_convolution_model.9} parent=11 // pred_check
        %p237 = pneg %p179
      $region34: #{separable_convolution_model.9} parent=11 // pred_check_branch
        %239 = sbr.rel (%p237) target = $region36
      $region35: #{separable_convolution_model.9} parent=11 // pred_region
        _
      $region36: #{separable_convolution_model.9} parent=11 // pred_fallthru
        _
    $region12: #{separable_convolution_model.9} parent=5 // pred_fallthru
      _
    %p240 = scmp.lt.s32.totalorder %s15, 4
    // Predicated region
    $region37: #{separable_convolution_model.9} parent=5 // pred_check
      %p241 = pneg %p240
    $region38: #{separable_convolution_model.9} parent=5 // pred_check_branch
      %243 = sbr.rel (%p241) target = $region40
    $region39: #{separable_convolution_model.9} parent=5 // pred_region
      // Predicated region
      $region41: #{separable_convolution_model.9} parent=39 // pred_check
        %p244 = pneg %p47
      $region42: #{separable_convolution_model.9} parent=39 // pred_check_branch
        %246 = sbr.rel (%p244) target = $region44
      $region43: #{separable_convolution_model.9} parent=39 // pred_region
        %p247 = scmp.lt.s32.totalorder %s22, 1
        %s248 = scalar_select %p247, %s22, 1
        %s249 = smul.addr %s248, 288
        %s250 = smul.addr %s249, 8
        %s251 = scalar_lea.vmem %s0, %s250
      $region44: #{separable_convolution_model.9} parent=39 // pred_fallthru
        _
    $region40: #{separable_convolution_model.9} parent=5 // pred_fallthru
      _
    %p252 = scmp.le.s32.totalorder 1, %s15
    %p253 = scmp.lt.s32.totalorder %s15, 5
    %p254 = pnand %p252, %p253
    %p255 = pneg %p254
    // Predicated region
    $region45: #{separable_convolution_model.9} parent=5 // pred_check
      _
    $region46: #{separable_convolution_model.9} parent=5 // pred_check_branch
      %257 = sbr.rel (%p254) target = $region48
    $region47: #{separable_convolution_model.9} parent=5 // pred_region
      %s258 = ssub.s32 %s15, 1
      %p259 = scmp.lt.s32.totalorder %s24, 1
      %s260 = scalar_select %p259, %s24, 1
      %s261 = smul.addr %s260, 288
      %s262 = smul.addr %s261, 8
      %s263 = scalar_lea.vmem %s0, %s262
      %p264 = pneg %p53
      %p265 = pneg %p50
      %p266 = pneg %p74
      %p267 = pneg %p71
      %p268 = pneg %p95
      %p269 = pneg %p92
      %p270 = pneg %p116
      %p271 = pneg %p113
      %p272 = pneg %p137
      %p273 = pneg %p134
      %p274 = pneg %p158
      %p275 = pneg %p155
      %p276 = pneg %p179
      %p277 = pneg %p176
      %p278 = pneg %p207
      %p279 = pneg %p204
      %s280 = smul.u32 23, %s25
      %p281 = scmp.lt.s32.totalorder %s24, 1
      %s282 = scalar_select %p281, %s24, 1
      %p283 = scmp.lt.s32.totalorder %s280, 45
      %s284 = scalar_select %p283, %s280, 45
      %s285 = smul.addr %s284, 6
      %s286 = smul.addr %s282, 276
      %s287 = sadd.s32 %s285, %s286
      %s288 = smul.addr %s287, 8
      %s289 = scalar_lea.vmem %s7, %s288
      %p290 = scmp.lt.s32.totalorder %s24, 1
      %s291 = scalar_select %p290, %s24, 1
      %s292 = smul.addr %s291, 288
      %s293 = smul.addr %s292, 8
      %s294 = scalar_lea.vmem %s0, %s293
      %s295 = smul.u32 23, %s25
      %p296 = scmp.lt.s32.totalorder %s24, 1
      %s297 = scalar_select %p296, %s24, 1
      %p298 = scmp.lt.s32.totalorder %s295, 45
      %s299 = scalar_select %p298, %s295, 45
      %s300 = smul.addr %s299, 6
      %s301 = smul.addr %s297, 276
      %s302 = sadd.s32 %s300, %s301
      %s303 = smul.addr %s302, 8
      %s304 = scalar_lea.vmem %s7, %s303
      %s305 = smul.u32 23, %s25
      %s306 = smul.u32 %s25, 23
      %v307 = vld [vmem:[%s1] sm:$0xff]
      %v308 = vld [vmem:[%s1 + $0x8] sm:$0x1]
      %v309 = vld [vmem:[#allocation2] sm:$0x1]
      %v310 = vld [vmem:[%s3] sm:$0x1]
      %v311 = vld [vmem:[%s4] sm:$0x1]
      %v312 = vld [vmem:[%s5] sm:$0x1]
      %v313 = vld [vmem:[%s6] sm:$0x1]
      loop: start=0, step=1, limit=23
      $region49: #{separable_convolution_model.9} parent=47 // loop_pre_header
        _
      $region50: #{separable_convolution_model.9} parent=47 // loop_header
        %s315 = sphi 0, %s319
        %p316 = scmp.ge.s32.totalorder %s315, 23
      $region51: #{separable_convolution_model.9} parent=47 // loop_header_branch
        %318 = sbr.rel (%p316) target = $region55
      $region52: #{separable_convolution_model.9} parent=47 // loop_body
        %s320 = sadd.s32 %s306, %s315
        %s321 = smul.u32 %s320, 48
        %s322 = scalar_lea.vmem %s294, %s321
        %v323 = vld [vmem:[%s322] sm:$0xff]
        %v324 = vld [vmem:[%s322 + $0x8] sm:$0xff]
        %v325 = vld [vmem:[%s322 + $0x10] sm:$0xff]
        %v326 = vld [vmem:[%s322 + $0x18] sm:$0xff]
        %v327 = vld [vmem:[%s322 + $0x20] sm:$0xff]
        %v328 = vld [vmem:[%s322 + $0x28] sm:$0xff]
        %v329 = vlaneseq
        %v330 = vshrl.u32 %v329, 7
        %v331 = vsub.s32 0, %v330
        %v332 = vrot.slane %v307, %v331
        %v333 = vmul.f32 %v323, %v332
        %v334 = vmul.f32 %v324, %v332
        %v335 = vmul.f32 %v325, %v332
        %v336 = vmul.f32 %v326, %v332
        %v337 = vmul.f32 %v327, %v332
        %v338 = vmul.f32 %v328, %v332
        %v339 = vadd.f32 %v333, 0.0
        %v340 = vadd.f32 %v334, 0.0
        %v341 = vadd.f32 %v335, 0.0
        %v342 = vadd.f32 %v336, 0.0
        %v343 = vadd.f32 %v337, 0.0
        %v344 = vadd.f32 %v338, 0.0
        %v345 = vlaneseq
        %v346 = vshrl.u32 %v345, 7
        %v347 = vsub.s32 1, %v346
        %v348 = vrot.slane %v307, %v347
        %v349 = vmul.f32 %v323, %v348
        %v350 = vmul.f32 %v324, %v348
        %v351 = vmul.f32 %v325, %v348
        %v352 = vmul.f32 %v326, %v348
        %v353 = vmul.f32 %v327, %v348
        %v354 = vmul.f32 %v328, %v348
        %vm361 = vcmask 1046528
        %v362 = vrot.slane %v349, 1
        %v363 = vrot.slane %v350, 1
        %v364 = vsel %vm361, %v362, %v363
        %v365 = vrot.slane %v351, 1
        %v366 = vsel %vm361, %v363, %v365
        %v367 = vrot.slane %v352, 1
        %v368 = vsel %vm361, %v365, %v367
        %v369 = vrot.slane %v353, 1
        %v370 = vsel %vm361, %v367, %v369
        %v371 = vrot.slane %v354, 1
        %v372 = vsel %vm361, %v369, %v371
        %v379 = vadd.f32 %v339, %v364
        %v380 = vadd.f32 %v340, %v366
        %v381 = vadd.f32 %v341, %v368
        %v382 = vadd.f32 %v342, %v370
        %v383 = vadd.f32 %v343, %v372
        %v384 = vadd.f32 %v344, %v371
        %v385 = vlaneseq
        %v386 = vshrl.u32 %v385, 7
        %v387 = vsub.s32 2, %v386
        %v388 = vrot.slane %v307, %v387
        %v389 = vmul.f32 %v323, %v388
        %v390 = vmul.f32 %v324, %v388
        %v391 = vmul.f32 %v325, %v388
        %v392 = vmul.f32 %v326, %v388
        %v393 = vmul.f32 %v327, %v388
        %v394 = vmul.f32 %v328, %v388
        %vm401 = vcmask 1045504
        %v402 = vrot.slane %v389, 2
        %v403 = vrot.slane %v390, 2
        %v404 = vsel %vm401, %v402, %v403
        %v405 = vrot.slane %v391, 2
        %v406 = vsel %vm401, %v403, %v405
        %v407 = vrot.slane %v392, 2
        %v408 = vsel %vm401, %v405, %v407
        %v409 = vrot.slane %v393, 2
        %v410 = vsel %vm401, %v407, %v409
        %v411 = vrot.slane %v394, 2
        %v412 = vsel %vm401, %v409, %v411
        %v419 = vadd.f32 %v379, %v404
        %v420 = vadd.f32 %v380, %v406
        %v421 = vadd.f32 %v381, %v408
        %v422 = vadd.f32 %v382, %v410
        %v423 = vadd.f32 %v383, %v412
        %v424 = vadd.f32 %v384, %v411
        %s425 = sadd.s32 %s320, 1
        %s426 = smul.u32 %s425, 48
        %s427 = scalar_lea.vmem %s294, %s426
        %v428 = vld [vmem:[%s427] sm:$0xff]
        %v429 = vld [vmem:[%s427 + $0x8] sm:$0xff]
        %v430 = vld [vmem:[%s427 + $0x10] sm:$0xff]
        %v431 = vld [vmem:[%s427 + $0x18] sm:$0xff]
        %v432 = vld [vmem:[%s427 + $0x20] sm:$0xff]
        %v433 = vld [vmem:[%s427 + $0x28] sm:$0xff]
        %v434 = vlaneseq
        %v435 = vshrl.u32 %v434, 7
        %v436 = vsub.s32 3, %v435
        %v437 = vrot.slane %v307, %v436
        %v438 = vmul.f32 %v428, %v437
        %v439 = vmul.f32 %v429, %v437
        %v440 = vmul.f32 %v430, %v437
        %v441 = vmul.f32 %v431, %v437
        %v442 = vmul.f32 %v432, %v437
        %v443 = vmul.f32 %v433, %v437
        %v444 = vadd.f32 %v419, %v438
        %v445 = vadd.f32 %v420, %v439
        %v446 = vadd.f32 %v421, %v440
        %v447 = vadd.f32 %v422, %v441
        %v448 = vadd.f32 %v423, %v442
        %v449 = vadd.f32 %v424, %v443
        %v450 = vlaneseq
        %v451 = vshrl.u32 %v450, 7
        %v452 = vsub.s32 4, %v451
        %v453 = vrot.slane %v307, %v452
        %v454 = vmul.f32 %v428, %v453
        %v455 = vmul.f32 %v429, %v453
        %v456 = vmul.f32 %v430, %v453
        %v457 = vmul.f32 %v431, %v453
        %v458 = vmul.f32 %v432, %v453
        %v459 = vmul.f32 %v433, %v453
        %v466 = vrot.slane %v454, 1
        %v467 = vrot.slane %v455, 1
        %v468 = vsel %vm361, %v466, %v467
        %v469 = vrot.slane %v456, 1
        %v470 = vsel %vm361, %v467, %v469
        %v471 = vrot.slane %v457, 1
        %v472 = vsel %vm361, %v469, %v471
        %v473 = vrot.slane %v458, 1
        %v474 = vsel %vm361, %v471, %v473
        %v475 = vrot.slane %v459, 1
        %v476 = vsel %vm361, %v473, %v475
        %v483 = vadd.f32 %v444, %v468
        %v484 = vadd.f32 %v445, %v470
        %v485 = vadd.f32 %v446, %v472
        %v486 = vadd.f32 %v447, %v474
        %v487 = vadd.f32 %v448, %v476
        %v488 = vadd.f32 %v449, %v475
        %v489 = vlaneseq
        %v490 = vshrl.u32 %v489, 7
        %v491 = vsub.s32 5, %v490
        %v492 = vrot.slane %v307, %v491
        %v493 = vmul.f32 %v428, %v492
        %v494 = vmul.f32 %v429, %v492
        %v495 = vmul.f32 %v430, %v492
        %v496 = vmul.f32 %v431, %v492
        %v497 = vmul.f32 %v432, %v492
        %v498 = vmul.f32 %v433, %v492
        %v505 = vrot.slane %v493, 2
        %v506 = vrot.slane %v494, 2
        %v507 = vsel %vm401, %v505, %v506
        %v508 = vrot.slane %v495, 2
        %v509 = vsel %vm401, %v506, %v508
        %v510 = vrot.slane %v496, 2
        %v511 = vsel %vm401, %v508, %v510
        %v512 = vrot.slane %v497, 2
        %v513 = vsel %vm401, %v510, %v512
        %v514 = vrot.slane %v498, 2
        %v515 = vsel %vm401, %v512, %v514
        %v522 = vadd.f32 %v483, %v507
        %v523 = vadd.f32 %v484, %v509
        %v524 = vadd.f32 %v485, %v511
        %v525 = vadd.f32 %v486, %v513
        %v526 = vadd.f32 %v487, %v515
        %v527 = vadd.f32 %v488, %v514
        %s528 = sadd.s32 %s320, 2
        %s529 = smul.u32 %s528, 48
        %s530 = scalar_lea.vmem %s294, %s529
        %v531 = vld [vmem:[%s530] sm:$0xff]
        %v532 = vld [vmem:[%s530 + $0x8] sm:$0xff]
        %v533 = vld [vmem:[%s530 + $0x10] sm:$0xff]
        %v534 = vld [vmem:[%s530 + $0x18] sm:$0xff]
        %v535 = vld [vmem:[%s530 + $0x20] sm:$0xff]
        %v536 = vld [vmem:[%s530 + $0x28] sm:$0xff]
        %v537 = vlaneseq
        %v538 = vshrl.u32 %v537, 7
        %v539 = vsub.s32 6, %v538
        %v540 = vrot.slane %v307, %v539
        %v541 = vmul.f32 %v531, %v540
        %v542 = vmul.f32 %v532, %v540
        %v543 = vmul.f32 %v533, %v540
        %v544 = vmul.f32 %v534, %v540
        %v545 = vmul.f32 %v535, %v540
        %v546 = vmul.f32 %v536, %v540
        %v547 = vadd.f32 %v522, %v541
        %v548 = vadd.f32 %v523, %v542
        %v549 = vadd.f32 %v524, %v543
        %v550 = vadd.f32 %v525, %v544
        %v551 = vadd.f32 %v526, %v545
        %v552 = vadd.f32 %v527, %v546
        %v553 = vlaneseq
        %v554 = vshrl.u32 %v553, 7
        %v555 = vsub.s32 7, %v554
        %v556 = vrot.slane %v307, %v555
        %v557 = vmul.f32 %v531, %v556
        %v558 = vmul.f32 %v532, %v556
        %v559 = vmul.f32 %v533, %v556
        %v560 = vmul.f32 %v534, %v556
        %v561 = vmul.f32 %v535, %v556
        %v562 = vmul.f32 %v536, %v556
        %v569 = vrot.slane %v557, 1
        %v570 = vrot.slane %v558, 1
        %v571 = vsel %vm361, %v569, %v570
        %v572 = vrot.slane %v559, 1
        %v573 = vsel %vm361, %v570, %v572
        %v574 = vrot.slane %v560, 1
        %v575 = vsel %vm361, %v572, %v574
        %v576 = vrot.slane %v561, 1
        %v577 = vsel %vm361, %v574, %v576
        %v578 = vrot.slane %v562, 1
        %v579 = vsel %vm361, %v576, %v578
        %v586 = vadd.f32 %v547, %v571
        %v587 = vadd.f32 %v548, %v573
        %v588 = vadd.f32 %v549, %v575
        %v589 = vadd.f32 %v550, %v577
        %v590 = vadd.f32 %v551, %v579
        %v591 = vadd.f32 %v552, %v578
        %v592 = vlaneseq
        %v593 = vshrl.u32 %v592, 7
        %v594 = vsub.s32 0, %v593
        %v595 = vrot.slane %v308, %v594
        %v596 = vmul.f32 %v531, %v595
        %v597 = vmul.f32 %v532, %v595
        %v598 = vmul.f32 %v533, %v595
        %v599 = vmul.f32 %v534, %v595
        %v600 = vmul.f32 %v535, %v595
        %v601 = vmul.f32 %v536, %v595
        %v608 = vrot.slane %v596, 2
        %v609 = vrot.slane %v597, 2
        %v610 = vsel %vm401, %v608, %v609
        %v611 = vrot.slane %v598, 2
        %v612 = vsel %vm401, %v609, %v611
        %v613 = vrot.slane %v599, 2
        %v614 = vsel %vm401, %v611, %v613
        %v615 = vrot.slane %v600, 2
        %v616 = vsel %vm401, %v613, %v615
        %v617 = vrot.slane %v601, 2
        %v618 = vsel %vm401, %v615, %v617
        %v625 = vadd.f32 %v586, %v610
        %v626 = vadd.f32 %v587, %v612
        %v627 = vadd.f32 %v588, %v614
        %v628 = vadd.f32 %v589, %v616
        %v629 = vadd.f32 %v590, %v618
        %v630 = vadd.f32 %v591, %v617
        %v632 = vlaneseq
        %v633 = vshrl.u32 %v632, 7
        %v634 = vsub.s32 0, %v633
        %v635 = vrot.slane %v309, %v634
        %v637 = vadd.f32 %v625, %v635
        %v638 = vadd.f32 %v626, %v635
        %v639 = vadd.f32 %v627, %v635
        %v640 = vadd.f32 %v628, %v635
        %v641 = vadd.f32 %v629, %v635
        %v642 = vadd.f32 %v630, %v635
        %644 = vset.pattern.permute.xlu0 0
        %645 = vperm.xlu0 %644, %v637
        %v646 = vpop.permute.xlu0 %645
        %649 = vset.pattern.permute.xlu0 0
        %650 = vperm.xlu0 %649, %v638
        %v651 = vpop.permute.xlu0 %650
        %654 = vset.pattern.permute.xlu0 0
        %655 = vperm.xlu0 %654, %v639
        %v656 = vpop.permute.xlu0 %655
        %659 = vset.pattern.permute.xlu0 0
        %660 = vperm.xlu0 %659, %v640
        %v661 = vpop.permute.xlu0 %660
        %664 = vset.pattern.permute.xlu0 0
        %665 = vperm.xlu0 %664, %v641
        %v666 = vpop.permute.xlu0 %665
        %669 = vset.pattern.permute.xlu0 0
        %670 = vperm.xlu0 %669, %v642
        %v671 = vpop.permute.xlu0 %670
        %v674 = vlaneseq
        %v675 = vshrl.u32 %v674, 7
        %v676 = vsub.s32 0, %v675
        %v677 = vrot.slane %v310, %v676
        %v679 = vmul.f32 %v646, %v677
        %v680 = vmul.f32 %v651, %v677
        %v681 = vmul.f32 %v656, %v677
        %v682 = vmul.f32 %v661, %v677
        %v683 = vmul.f32 %v666, %v677
        %v684 = vmul.f32 %v671, %v677
        %v686 = vlaneseq
        %v687 = vshrl.u32 %v686, 7
        %v688 = vsub.s32 0, %v687
        %v689 = vrot.slane %v311, %v688
        %v691 = vadd.f32 %v679, %v689
        %v692 = vadd.f32 %v680, %v689
        %v693 = vadd.f32 %v681, %v689
        %v694 = vadd.f32 %v682, %v689
        %v695 = vadd.f32 %v683, %v689
        %v696 = vadd.f32 %v684, %v689
        %v697 = vmax.f32 %v691, 0.0
        %v698 = vmax.f32 %v692, 0.0
        %v699 = vmax.f32 %v693, 0.0
        %v700 = vmax.f32 %v694, 0.0
        %v701 = vmax.f32 %v695, 0.0
        %v702 = vmax.f32 %v696, 0.0
        %v704 = vlaneseq
        %v705 = vshrl.u32 %v704, 7
        %v706 = vsub.s32 0, %v705
        %v707 = vrot.slane %v312, %v706
        %v709 = vmul.f32 %v697, %v707
        %v710 = vmul.f32 %v698, %v707
        %v711 = vmul.f32 %v699, %v707
        %v712 = vmul.f32 %v700, %v707
        %v713 = vmul.f32 %v701, %v707
        %v714 = vmul.f32 %v702, %v707
        %v716 = vlaneseq
        %v717 = vshrl.u32 %v716, 7
        %v718 = vsub.s32 0, %v717
        %v719 = vrot.slane %v313, %v718
        %v721 = vadd.f32 %v709, %v719
        %v722 = vadd.f32 %v710, %v719
        %v723 = vadd.f32 %v711, %v719
        %v724 = vadd.f32 %v712, %v719
        %v725 = vadd.f32 %v713, %v719
        %v726 = vadd.f32 %v714, %v719
        %s727 = smul.u32 %s315, 48
        %s728 = scalar_lea.vmem %s304, %s727
        %vm729 = vcmask 523264
        %730 = vst.msk [vmem:[%s728] sm:$0xff] %vm729, %v721
        %731 = vst.msk [vmem:[%s728 + $0x8] sm:$0xff] %vm729, %v722
        %732 = vst.msk [vmem:[%s728 + $0x10] sm:$0xff] %vm729, %v723
        %733 = vst.msk [vmem:[%s728 + $0x18] sm:$0xff] %vm729, %v724
        %734 = vst.msk [vmem:[%s728 + $0x20] sm:$0xff] %vm729, %v725
        %vm735 = vcmask 521216
        %736 = vst.msk [vmem:[%s728 + $0x28] sm:$0x3f] %vm735, %v726
      $region53: #{separable_convolution_model.9} parent=47 // loop_footer
        %s319 = sadd.s32 1, %s315
      $region54: #{separable_convolution_model.9} parent=47 // loop_footer_branch
        %314 = sbr.rel target = $region50
      $region55: #{separable_convolution_model.9} parent=47 // loop_exit
        _
      %s737 = smul.u32 23, %s25
      %p738 = scmp.lt.s32.totalorder %s24, 1
      %s739 = scalar_select %p738, %s24, 1
      %p740 = scmp.lt.s32.totalorder %s737, 45
      %s741 = scalar_select %p740, %s737, 45
      %s742 = smul.addr %s741, 6
      %s743 = smul.addr %s739, 276
      %s744 = sadd.s32 %s742, %s743
      %s745 = smul.addr %s744, 8
      %s746 = scalar_lea.vmem %s7, %s745
      // Predicated region
      $region56: #{separable_convolution_model.9} parent=47 // pred_check
        %p747 = pneg %p204
      $region57: #{separable_convolution_model.9} parent=47 // pred_check_branch
        %749 = sbr.rel (%p747) target = $region59
      $region58: #{separable_convolution_model.9} parent=47 // pred_region
        %s750 = smul.u32 23, %s25
      $region59: #{separable_convolution_model.9} parent=47 // pred_fallthru
        _
    $region48: #{separable_convolution_model.9} parent=5 // pred_fallthru
      _
    %p751 = scmp.le.s32.totalorder 2, %s15
    // Predicated region
    $region60: #{separable_convolution_model.9} parent=5 // pred_check
      %p752 = pneg %p751
    $region61: #{separable_convolution_model.9} parent=5 // pred_check_branch
      %754 = sbr.rel (%p752) target = $region63
    $region62: #{separable_convolution_model.9} parent=5 // pred_region
      %s755 = ssub.s32 %s15, 2
      // Predicated region
      $region64: #{separable_convolution_model.9} parent=62 // pred_check
        %p756 = pneg %p210
      $region65: #{separable_convolution_model.9} parent=62 // pred_check_branch
        %758 = sbr.rel (%p756) target = $region67
      $region66: #{separable_convolution_model.9} parent=62 // pred_region
        %s759 = smul.u32 23, %s27
        %p760 = scmp.lt.s32.totalorder %s26, 1
        %s761 = scalar_select %p760, %s26, 1
        %p762 = scmp.lt.s32.totalorder %s759, 45
        %s763 = scalar_select %p762, %s759, 45
        %s764 = smul.addr %s763, 6
        %s765 = smul.addr %s761, 276
        %s766 = sadd.s32 %s764, %s765
        %s767 = smul.addr %s766, 8
        %s768 = scalar_lea.vmem %s7, %s767
      $region67: #{separable_convolution_model.9} parent=62 // pred_fallthru
        _
    $region63: #{separable_convolution_model.9} parent=5 // pred_fallthru
      _
  $region6: #{separable_convolution_model.9} parent=0 // loop_footer
    %s19 = sadd.s32 1, %s15
  $region7: #{separable_convolution_model.9} parent=0 // loop_footer_branch
    %14 = sbr.rel target = $region3
  $region8: #{separable_convolution_model.9} parent=0 // loop_exit
    _

// kernel: separable_convolution_model.10
$region0: #{separable_convolution_model.10}
  #allocation0 [shape = 'u32[]', space=smem, size = 0x4, offset = 0x4, fixed_abs, tag = 'smem constant byte address 0x4 - core index']
  #allocation1 [shape = 'u32[144,128]{1,0:T(1,128)}', space=vmem, size = 0x12000, scoped, tag = 'internal scratch']
  #allocation2 [shape = 'f32[44,64]{1,0:T(8,128)}', space=vmem, size = 0x6000, scoped, tag = 'scratch operand']
  %s0 = inlined_call_operand.vmem [shape: f32[2,46,46,64], index: 0, kind: input, shape index: {}]
  %s1 = inlined_call_operand.vmem [shape: f32[9,64], index: 1, kind: input, shape index: {}]
  %s2 = inlined_call_operand.vmem [shape: f32[1,64], index: 2, kind: input, shape index: {}]
  %s3 = inlined_call_operand.vmem [shape: bf16[64,64], index: 3, kind: input, shape index: {}]
  %s4 = inlined_call_operand.vmem [shape: f32[1,64], index: 4, kind: input, shape index: {}]
  %s5 = inlined_call_operand.vmem [shape: f32[1,64], index: 5, kind: input, shape index: {}]
  %s6 = inlined_call_operand.vmem [shape: f32[1,64], index: 6, kind: input, shape index: {}]
  %s7 = inlined_call_operand.vmem [shape: f32[2,22,22,64], index: 7, kind: output, shape index: {}]
  %s8 = sld [smem:[#allocation0]]
  $region68: #{separable_convolution_model.10} parent=0
    _
  %s10 = ssub.s32 1, %s8
  %s11 = scalar_select 0, %s10, %s8
  loop: start=0, step=1, limit=6
  $region2: #{separable_convolution_model.10} parent=0 // loop_pre_header
    _
  $region3: #{separable_convolution_model.10} parent=0 // loop_header
    %s13 = sphi 0, %s17
    %p14 = scmp.ge.s32.totalorder %s13, 6
    %s20 = sphi 0, %s32
    %s21 = sphi 0, %s28
    %s22 = sphi 0, %s20
    %s23 = sphi 0, %s21
    %s24 = sphi 0, %s22
    %s25 = sphi 0, %s23
    %s35 = sphi 0, %s37
    %s38 = sphi 0, %s35
    %s39 = sphi 0, %s38
    %s55 = sphi 0, %s39
    %s59 = sphi 0, %s59
    %s61 = sphi 0, %s59
    %s62 = sphi 0, %s61
    %s76 = sphi 0, %s62
    %s80 = sphi 0, %s80
    %s82 = sphi 0, %s80
    %s83 = sphi 0, %s82
    %s97 = sphi 0, %s83
    %s101 = sphi 0, %s101
    %s103 = sphi 0, %s101
    %s104 = sphi 0, %s103
    %s118 = sphi 0, %s104
    %s122 = sphi 0, %s122
    %s124 = sphi 0, %s122
    %s125 = sphi 0, %s124
    %s139 = sphi 0, %s125
    %s143 = sphi 0, %s143
    %s145 = sphi 0, %s143
    %s146 = sphi 0, %s145
    %s160 = sphi 0, %s146
    %s164 = sphi 0, %s164
    %s166 = sphi 0, %s164
    %s167 = sphi 0, %s166
    %s181 = sphi 0, %s167
    %s189 = sphi 0, %s191
    %s192 = sphi 0, %s189
    %s193 = sphi 0, %s192
    %s209 = sphi 0, %s193
  $region4: #{separable_convolution_model.10} parent=0 // loop_header_branch
    %16 = sbr.rel (%p14) target = $region8
  $region5: #{separable_convolution_model.10} parent=0 // loop_body
    %s18 = ssub.s32 %s13, 1
    %s19 = ssub.s32 %s13, 2
    %s26 = sadd.s32 1, %s21
    %p27 = scmp.ge.s32.totalorder %s26, 2
    %s28 = scalar_select %p27, 0, %s26
    %s29 = sadd.s32 1, %s20
    %s30 = scalar_select %p27, %s29, %s20
    %p31 = scmp.ge.s32.totalorder %s30, 2
    %s32 = scalar_select %p31, 0, %s30
    %s33 = ssub.s32 %s20, %s32
    %p34 = scmp.eq.s32.totalorder %s33, 0
    %s36 = sadd.s32 %s35, 1
    %s37 = scalar_select %p34, %s35, %s36
    %p40 = pneg %p34
    %p41 = scmp.eq.s32.totalorder %s13, 3
    %p42 = por %p40, %p41
    %p43 = scmp.ne.s32.totalorder %s35, %s38
    %p44 = scmp.eq.s32.totalorder %s13, 0
    %p45 = por %p43, %p44
    %p46 = scmp.ne.s32.totalorder %s35, %s38
    %p47 = scmp.eq.s32.totalorder %s18, 3
    %p48 = por %p46, %p47
    %p49 = scmp.ne.s32.totalorder %s38, %s39
    %p50 = scmp.eq.s32.totalorder %s18, 0
    %p51 = por %p49, %p50
    %p52 = scmp.ne.s32.totalorder %s38, %s39
    %p53 = scmp.eq.s32.totalorder %s19, 3
    %p54 = por %p52, %p53
    %p56 = scmp.ne.s32.totalorder %s39, %s55
    %p57 = scmp.eq.s32.totalorder %s19, 0
    %p58 = por %p56, %p57
    %s60 = sadd.s32 %s59, 1
    %p63 = scmp.eq.s32.totalorder %s13, 3
    %p64 = scmp.ne.s32.totalorder %s59, %s61
    %p65 = scmp.eq.s32.totalorder %s13, 0
    %p66 = por %p64, %p65
    %p67 = scmp.ne.s32.totalorder %s59, %s61
    %p68 = scmp.eq.s32.totalorder %s18, 3
    %p69 = por %p67, %p68
    %p70 = scmp.ne.s32.totalorder %s61, %s62
    %p71 = scmp.eq.s32.totalorder %s18, 0
    %p72 = por %p70, %p71
    %p73 = scmp.ne.s32.totalorder %s61, %s62
    %p74 = scmp.eq.s32.totalorder %s19, 3
    %p75 = por %p73, %p74
    %p77 = scmp.ne.s32.totalorder %s62, %s76
    %p78 = scmp.eq.s32.totalorder %s19, 0
    %p79 = por %p77, %p78
    %s81 = sadd.s32 %s80, 1
    %p84 = scmp.eq.s32.totalorder %s13, 3
    %p85 = scmp.ne.s32.totalorder %s80, %s82
    %p86 = scmp.eq.s32.totalorder %s13, 0
    %p87 = por %p85, %p86
    %p88 = scmp.ne.s32.totalorder %s80, %s82
    %p89 = scmp.eq.s32.totalorder %s18, 3
    %p90 = por %p88, %p89
    %p91 = scmp.ne.s32.totalorder %s82, %s83
    %p92 = scmp.eq.s32.totalorder %s18, 0
    %p93 = por %p91, %p92
    %p94 = scmp.ne.s32.totalorder %s82, %s83
    %p95 = scmp.eq.s32.totalorder %s19, 3
    %p96 = por %p94, %p95
    %p98 = scmp.ne.s32.totalorder %s83, %s97
    %p99 = scmp.eq.s32.totalorder %s19, 0
    %p100 = por %p98, %p99
    %s102 = sadd.s32 %s101, 1
    %p105 = scmp.eq.s32.totalorder %s13, 3
    %p106 = scmp.ne.s32.totalorder %s101, %s103
    %p107 = scmp.eq.s32.totalorder %s13, 0
    %p108 = por %p106, %p107
    %p109 = scmp.ne.s32.totalorder %s101, %s103
    %p110 = scmp.eq.s32.totalorder %s18, 3
    %p111 = por %p109, %p110
    %p112 = scmp.ne.s32.totalorder %s103, %s104
    %p113 = scmp.eq.s32.totalorder %s18, 0
    %p114 = por %p112, %p113
    %p115 = scmp.ne.s32.totalorder %s103, %s104
    %p116 = scmp.eq.s32.totalorder %s19, 3
    %p117 = por %p115, %p116
    %p119 = scmp.ne.s32.totalorder %s104, %s118
    %p120 = scmp.eq.s32.totalorder %s19, 0
    %p121 = por %p119, %p120
    %s123 = sadd.s32 %s122, 1
    %p126 = scmp.eq.s32.totalorder %s13, 3
    %p127 = scmp.ne.s32.totalorder %s122, %s124
    %p128 = scmp.eq.s32.totalorder %s13, 0
    %p129 = por %p127, %p128
    %p130 = scmp.ne.s32.totalorder %s122, %s124
    %p131 = scmp.eq.s32.totalorder %s18, 3
    %p132 = por %p130, %p131
    %p133 = scmp.ne.s32.totalorder %s124, %s125
    %p134 = scmp.eq.s32.totalorder %s18, 0
    %p135 = por %p133, %p134
    %p136 = scmp.ne.s32.totalorder %s124, %s125
    %p137 = scmp.eq.s32.totalorder %s19, 3
    %p138 = por %p136, %p137
    %p140 = scmp.ne.s32.totalorder %s125, %s139
    %p141 = scmp.eq.s32.totalorder %s19, 0
    %p142 = por %p140, %p141
    %s144 = sadd.s32 %s143, 1
    %p147 = scmp.eq.s32.totalorder %s13, 3
    %p148 = scmp.ne.s32.totalorder %s143, %s145
    %p149 = scmp.eq.s32.totalorder %s13, 0
    %p150 = por %p148, %p149
    %p151 = scmp.ne.s32.totalorder %s143, %s145
    %p152 = scmp.eq.s32.totalorder %s18, 3
    %p153 = por %p151, %p152
    %p154 = scmp.ne.s32.totalorder %s145, %s146
    %p155 = scmp.eq.s32.totalorder %s18, 0
    %p156 = por %p154, %p155
    %p157 = scmp.ne.s32.totalorder %s145, %s146
    %p158 = scmp.eq.s32.totalorder %s19, 3
    %p159 = por %p157, %p158
    %p161 = scmp.ne.s32.totalorder %s146, %s160
    %p162 = scmp.eq.s32.totalorder %s19, 0
    %p163 = por %p161, %p162
    %s165 = sadd.s32 %s164, 1
    %p168 = scmp.eq.s32.totalorder %s13, 3
    %p169 = scmp.ne.s32.totalorder %s164, %s166
    %p170 = scmp.eq.s32.totalorder %s13, 0
    %p171 = por %p169, %p170
    %p172 = scmp.ne.s32.totalorder %s164, %s166
    %p173 = scmp.eq.s32.totalorder %s18, 3
    %p174 = por %p172, %p173
    %p175 = scmp.ne.s32.totalorder %s166, %s167
    %p176 = scmp.eq.s32.totalorder %s18, 0
    %p177 = por %p175, %p176
    %p178 = scmp.ne.s32.totalorder %s166, %s167
    %p179 = scmp.eq.s32.totalorder %s19, 3
    %p180 = por %p178, %p179
    %p182 = scmp.ne.s32.totalorder %s167, %s181
    %p183 = scmp.eq.s32.totalorder %s19, 0
    %p184 = por %p182, %p183
    %s185 = ssub.s32 %s20, %s32
    %s186 = ssub.s32 %s21, %s28
    %s187 = sor.u32 %s185, %s186
    %p188 = scmp.eq.s32.totalorder %s187, 0
    %s190 = sadd.s32 %s189, 1
    %s191 = scalar_select %p188, %s189, %s190
    %p194 = pneg %p188
    %p195 = scmp.eq.s32.totalorder %s13, 3
    %p196 = por %p194, %p195
    %p197 = scmp.ne.s32.totalorder %s189, %s192
    %p198 = scmp.eq.s32.totalorder %s13, 0
    %p199 = por %p197, %p198
    %p200 = scmp.ne.s32.totalorder %s189, %s192
    %p201 = scmp.eq.s32.totalorder %s18, 3
    %p202 = por %p200, %p201
    %p203 = scmp.ne.s32.totalorder %s192, %s193
    %p204 = scmp.eq.s32.totalorder %s18, 0
    %p205 = por %p203, %p204
    %p206 = scmp.ne.s32.totalorder %s192, %s193
    %p207 = scmp.eq.s32.totalorder %s19, 3
    %p208 = por %p206, %p207
    %p210 = scmp.ne.s32.totalorder %s193, %s209
    %p211 = scmp.eq.s32.totalorder %s19, 0
    %p212 = por %p210, %p211
    %p213 = scmp.le.s32.totalorder 1, %s13
    %p214 = scmp.lt.s32.totalorder %s13, 5
    %p215 = pnand %p213, %p214
    %p216 = pneg %p215
    // Predicated region
    $region9: #{separable_convolution_model.10} parent=5 // pred_check
      _
    $region10: #{separable_convolution_model.10} parent=5 // pred_check_branch
      %218 = sbr.rel (%p215) target = $region12
    $region11: #{separable_convolution_model.10} parent=5 // pred_region
      %s219 = ssub.s32 %s13, 1
      // Predicated region
      $region13: #{separable_convolution_model.10} parent=11 // pred_check
        %p220 = pneg %p72
      $region14: #{separable_convolution_model.10} parent=11 // pred_check_branch
        %222 = sbr.rel (%p220) target = $region16
      $region15: #{separable_convolution_model.10} parent=11 // pred_region
        _
      $region16: #{separable_convolution_model.10} parent=11 // pred_fallthru
        _
      // Predicated region
      $region17: #{separable_convolution_model.10} parent=11 // pred_check
        %p223 = pneg %p93
      $region18: #{separable_convolution_model.10} parent=11 // pred_check_branch
        %225 = sbr.rel (%p223) target = $region20
      $region19: #{separable_convolution_model.10} parent=11 // pred_region
        _
      $region20: #{separable_convolution_model.10} parent=11 // pred_fallthru
        _
      // Predicated region
      $region21: #{separable_convolution_model.10} parent=11 // pred_check
        %p226 = pneg %p114
      $region22: #{separable_convolution_model.10} parent=11 // pred_check_branch
        %228 = sbr.rel (%p226) target = $region24
      $region23: #{separable_convolution_model.10} parent=11 // pred_region
        _
      $region24: #{separable_convolution_model.10} parent=11 // pred_fallthru
        _
      // Predicated region
      $region25: #{separable_convolution_model.10} parent=11 // pred_check
        %p229 = pneg %p135
      $region26: #{separable_convolution_model.10} parent=11 // pred_check_branch
        %231 = sbr.rel (%p229) target = $region28
      $region27: #{separable_convolution_model.10} parent=11 // pred_region
        _
      $region28: #{separable_convolution_model.10} parent=11 // pred_fallthru
        _
      // Predicated region
      $region29: #{separable_convolution_model.10} parent=11 // pred_check
        %p232 = pneg %p156
      $region30: #{separable_convolution_model.10} parent=11 // pred_check_branch
        %234 = sbr.rel (%p232) target = $region32
      $region31: #{separable_convolution_model.10} parent=11 // pred_region
        _
      $region32: #{separable_convolution_model.10} parent=11 // pred_fallthru
        _
      // Predicated region
      $region33: #{separable_convolution_model.10} parent=11 // pred_check
        %p235 = pneg %p177
      $region34: #{separable_convolution_model.10} parent=11 // pred_check_branch
        %237 = sbr.rel (%p235) target = $region36
      $region35: #{separable_convolution_model.10} parent=11 // pred_region
        _
      $region36: #{separable_convolution_model.10} parent=11 // pred_fallthru
        _
    $region12: #{separable_convolution_model.10} parent=5 // pred_fallthru
      _
    %p238 = scmp.lt.s32.totalorder %s13, 4
    // Predicated region
    $region37: #{separable_convolution_model.10} parent=5 // pred_check
      %p239 = pneg %p238
    $region38: #{separable_convolution_model.10} parent=5 // pred_check_branch
      %241 = sbr.rel (%p239) target = $region40
    $region39: #{separable_convolution_model.10} parent=5 // pred_region
      // Predicated region
      $region41: #{separable_convolution_model.10} parent=39 // pred_check
        %p242 = pneg %p45
      $region42: #{separable_convolution_model.10} parent=39 // pred_check_branch
        %244 = sbr.rel (%p242) target = $region44
      $region43: #{separable_convolution_model.10} parent=39 // pred_region
        %p245 = scmp.lt.s32.totalorder %s20, 1
        %s246 = scalar_select %p245, %s20, 1
        %s247 = smul.addr %s246, 276
        %s248 = smul.addr %s247, 8
        %s249 = scalar_lea.vmem %s0, %s248
      $region44: #{separable_convolution_model.10} parent=39 // pred_fallthru
        _
    $region40: #{separable_convolution_model.10} parent=5 // pred_fallthru
      _
    %p250 = scmp.le.s32.totalorder 1, %s13
    %p251 = scmp.lt.s32.totalorder %s13, 5
    %p252 = pnand %p250, %p251
    %p253 = pneg %p252
    // Predicated region
    $region45: #{separable_convolution_model.10} parent=5 // pred_check
      _
    $region46: #{separable_convolution_model.10} parent=5 // pred_check_branch
      %255 = sbr.rel (%p252) target = $region48
    $region47: #{separable_convolution_model.10} parent=5 // pred_region
      %s256 = ssub.s32 %s13, 1
      %p257 = scmp.lt.s32.totalorder %s22, 1
      %s258 = scalar_select %p257, %s22, 1
      %s259 = smul.addr %s258, 276
      %s260 = smul.addr %s259, 8
      %s261 = scalar_lea.vmem %s0, %s260
      %p262 = pneg %p51
      %p263 = pneg %p48
      %p264 = pneg %p72
      %p265 = pneg %p69
      %p266 = pneg %p93
      %p267 = pneg %p90
      %p268 = pneg %p114
      %p269 = pneg %p111
      %p270 = pneg %p135
      %p271 = pneg %p132
      %p272 = pneg %p156
      %p273 = pneg %p153
      %p274 = pneg %p177
      %p275 = pneg %p174
      %p276 = pneg %p205
      %p277 = pneg %p202
      %s278 = smul.u32 11, %s23
      %p279 = scmp.lt.s32.totalorder %s22, 1
      %s280 = scalar_select %p279, %s22, 1
      %p281 = scmp.lt.s32.totalorder %s278, 21
      %s282 = scalar_select %p281, %s278, 21
      %s283 = smul.addr %s282, 3
      %s284 = smul.addr %s280, 66
      %s285 = sadd.s32 %s283, %s284
      %s286 = smul.addr %s285, 8
      %s287 = scalar_lea.vmem %s7, %s286
      %p288 = scmp.lt.s32.totalorder %s22, 1
      %s289 = scalar_select %p288, %s22, 1
      %s290 = smul.addr %s289, 276
      %s291 = smul.addr %s290, 8
      %s292 = scalar_lea.vmem %s0, %s291
      %s293 = smul.u32 11, %s23
      %p294 = scmp.lt.s32.totalorder %s22, 1
      %s295 = scalar_select %p294, %s22, 1
      %p296 = scmp.lt.s32.totalorder %s293, 21
      %s297 = scalar_select %p296, %s293, 21
      %s298 = smul.addr %s297, 3
      %s299 = smul.addr %s295, 66
      %s300 = sadd.s32 %s298, %s299
      %s301 = smul.addr %s300, 8
      %s302 = scalar_lea.vmem %s7, %s301
      %s303 = smul.u32 11, %s23
      %s305 = smul.u32 %s23, 22
      %v306 = vld [vmem:[%s1] sm:$0xff]
      %v307 = vld [vmem:[%s1 + $0x8] sm:$0x1]
      %v308 = vld [vmem:[%s2] sm:$0x1]
      %v309 = vld [vmem:[%s3] sm:$0xf]
      %v310 = vld [vmem:[%s3 + $0x4] sm:$0xf]
      %v311 = vld [vmem:[%s3 + $0x8] sm:$0xf]
      %v312 = vld [vmem:[%s3 + $0xc] sm:$0xf]
      %v313 = vld [vmem:[%s3 + $0x10] sm:$0xf]
      %v314 = vld [vmem:[%s3 + $0x14] sm:$0xf]
      %v315 = vld [vmem:[%s3 + $0x18] sm:$0xf]
      %v316 = vld [vmem:[%s3 + $0x1c] sm:$0xf]
      %v317 = vld [vmem:[%s4] sm:$0x1]
      %v318 = vld [vmem:[%s5] sm:$0x1]
      %v319 = vld [vmem:[%s6] sm:$0x1]
      loop: start=0, step=1, limit=11
      $region49: #{separable_convolution_model.10} parent=47 // loop_pre_header
        _
      $region50: #{separable_convolution_model.10} parent=47 // loop_header
        %s321 = sphi 0, %s325
        %p322 = scmp.ge.s32.totalorder %s321, 11
      $region51: #{separable_convolution_model.10} parent=47 // loop_header_branch
        %324 = sbr.rel (%p322) target = $region55
      $region52: #{separable_convolution_model.10} parent=47 // loop_body
        %s326 = smul.u32 %s321, 2
        %s327 = sadd.s32 %s305, %s326
        %s328 = smul.u32 %s327, 48
        %s329 = scalar_lea.vmem %s292, %s328
        %v330 = vld [vmem:[%s329] sm:$0xff]
        %v331 = vld [vmem:[%s329 + $0x8] sm:$0xff]
        %v332 = vld [vmem:[%s329 + $0x10] sm:$0xff]
        %v333 = vld [vmem:[%s329 + $0x18] sm:$0xff]
        %v334 = vld [vmem:[%s329 + $0x20] sm:$0xff]
        %v335 = vld [vmem:[%s329 + $0x28] sm:$0x3f]
        %v336 = vlaneseq
        %v337 = vshrl.u32 %v336, 7
        %v338 = vsub.s32 0, %v337
        %v339 = vrot.slane %v306, %v338
        %v340 = vmul.f32 %v330, %v339
        %v341 = vmul.f32 %v331, %v339
        %v342 = vmul.f32 %v332, %v339
        %v343 = vmul.f32 %v333, %v339
        %v344 = vmul.f32 %v334, %v339
        %v345 = vmul.f32 %v335, %v339
        %v346 = vadd.f32 %v340, 0.0
        %v347 = vadd.f32 %v341, 0.0
        %v348 = vadd.f32 %v342, 0.0
        %v349 = vadd.f32 %v343, 0.0
        %v350 = vadd.f32 %v344, 0.0
        %v351 = vadd.f32 %v345, 0.0
        %v352 = vlaneseq
        %v353 = vshrl.u32 %v352, 7
        %v354 = vsub.s32 1, %v353
        %v355 = vrot.slane %v306, %v354
        %v356 = vmul.f32 %v330, %v355
        %v357 = vmul.f32 %v331, %v355
        %v358 = vmul.f32 %v332, %v355
        %v359 = vmul.f32 %v333, %v355
        %v360 = vmul.f32 %v334, %v355
        %v361 = vmul.f32 %v335, %v355
        %vm368 = vcmask 1046528
        %v369 = vrot.slane %v356, 1
        %v370 = vrot.slane %v357, 1
        %v371 = vsel %vm368, %v369, %v370
        %v372 = vrot.slane %v358, 1
        %v373 = vsel %vm368, %v370, %v372
        %v374 = vrot.slane %v359, 1
        %v375 = vsel %vm368, %v372, %v374
        %v376 = vrot.slane %v360, 1
        %v377 = vsel %vm368, %v374, %v376
        %v378 = vrot.slane %v361, 1
        %v379 = vsel %vm368, %v376, %v378
        %v386 = vadd.f32 %v346, %v371
        %v387 = vadd.f32 %v347, %v373
        %v388 = vadd.f32 %v348, %v375
        %v389 = vadd.f32 %v349, %v377
        %v390 = vadd.f32 %v350, %v379
        %v391 = vadd.f32 %v351, %v378
        %v392 = vlaneseq
        %v393 = vshrl.u32 %v392, 7
        %v394 = vsub.s32 2, %v393
        %v395 = vrot.slane %v306, %v394
        %v396 = vmul.f32 %v330, %v395
        %v397 = vmul.f32 %v331, %v395
        %v398 = vmul.f32 %v332, %v395
        %v399 = vmul.f32 %v333, %v395
        %v400 = vmul.f32 %v334, %v395
        %v401 = vmul.f32 %v335, %v395
        %vm408 = vcmask 1045504
        %v409 = vrot.slane %v396, 2
        %v410 = vrot.slane %v397, 2
        %v411 = vsel %vm408, %v409, %v410
        %v412 = vrot.slane %v398, 2
        %v413 = vsel %vm408, %v410, %v412
        %v414 = vrot.slane %v399, 2
        %v415 = vsel %vm408, %v412, %v414
        %v416 = vrot.slane %v400, 2
        %v417 = vsel %vm408, %v414, %v416
        %v418 = vrot.slane %v401, 2
        %v419 = vsel %vm408, %v416, %v418
        %v426 = vadd.f32 %v386, %v411
        %v427 = vadd.f32 %v387, %v413
        %v428 = vadd.f32 %v388, %v415
        %v429 = vadd.f32 %v389, %v417
        %v430 = vadd.f32 %v390, %v419
        %v431 = vadd.f32 %v391, %v418
        %s432 = sadd.s32 %s327, 1
        %s433 = smul.u32 %s432, 48
        %s434 = scalar_lea.vmem %s292, %s433
        %v435 = vld [vmem:[%s434] sm:$0xff]
        %v436 = vld [vmem:[%s434 + $0x8] sm:$0xff]
        %v437 = vld [vmem:[%s434 + $0x10] sm:$0xff]
        %v438 = vld [vmem:[%s434 + $0x18] sm:$0xff]
        %v439 = vld [vmem:[%s434 + $0x20] sm:$0xff]
        %v440 = vld [vmem:[%s434 + $0x28] sm:$0x3f]
        %v441 = vlaneseq
        %v442 = vshrl.u32 %v441, 7
        %v443 = vsub.s32 3, %v442
        %v444 = vrot.slane %v306, %v443
        %v445 = vmul.f32 %v435, %v444
        %v446 = vmul.f32 %v436, %v444
        %v447 = vmul.f32 %v437, %v444
        %v448 = vmul.f32 %v438, %v444
        %v449 = vmul.f32 %v439, %v444
        %v450 = vmul.f32 %v440, %v444
        %v451 = vadd.f32 %v426, %v445
        %v452 = vadd.f32 %v427, %v446
        %v453 = vadd.f32 %v428, %v447
        %v454 = vadd.f32 %v429, %v448
        %v455 = vadd.f32 %v430, %v449
        %v456 = vadd.f32 %v431, %v450
        %v457 = vlaneseq
        %v458 = vshrl.u32 %v457, 7
        %v459 = vsub.s32 4, %v458
        %v460 = vrot.slane %v306, %v459
        %v461 = vmul.f32 %v435, %v460
        %v462 = vmul.f32 %v436, %v460
        %v463 = vmul.f32 %v437, %v460
        %v464 = vmul.f32 %v438, %v460
        %v465 = vmul.f32 %v439, %v460
        %v466 = vmul.f32 %v440, %v460
        %v473 = vrot.slane %v461, 1
        %v474 = vrot.slane %v462, 1
        %v475 = vsel %vm368, %v473, %v474
        %v476 = vrot.slane %v463, 1
        %v477 = vsel %vm368, %v474, %v476
        %v478 = vrot.slane %v464, 1
        %v479 = vsel %vm368, %v476, %v478
        %v480 = vrot.slane %v465, 1
        %v481 = vsel %vm368, %v478, %v480
        %v482 = vrot.slane %v466, 1
        %v483 = vsel %vm368, %v480, %v482
        %v490 = vadd.f32 %v451, %v475
        %v491 = vadd.f32 %v452, %v477
        %v492 = vadd.f32 %v453, %v479
        %v493 = vadd.f32 %v454, %v481
        %v494 = vadd.f32 %v455, %v483
        %v495 = vadd.f32 %v456, %v482
        %v496 = vlaneseq
        %v497 = vshrl.u32 %v496, 7
        %v498 = vsub.s32 5, %v497
        %v499 = vrot.slane %v306, %v498
        %v500 = vmul.f32 %v435, %v499
        %v501 = vmul.f32 %v436, %v499
        %v502 = vmul.f32 %v437, %v499
        %v503 = vmul.f32 %v438, %v499
        %v504 = vmul.f32 %v439, %v499
        %v505 = vmul.f32 %v440, %v499
        %v512 = vrot.slane %v500, 2
        %v513 = vrot.slane %v501, 2
        %v514 = vsel %vm408, %v512, %v513
        %v515 = vrot.slane %v502, 2
        %v516 = vsel %vm408, %v513, %v515
        %v517 = vrot.slane %v503, 2
        %v518 = vsel %vm408, %v515, %v517
        %v519 = vrot.slane %v504, 2
        %v520 = vsel %vm408, %v517, %v519
        %v521 = vrot.slane %v505, 2
        %v522 = vsel %vm408, %v519, %v521
        %v529 = vadd.f32 %v490, %v514
        %v530 = vadd.f32 %v491, %v516
        %v531 = vadd.f32 %v492, %v518
        %v532 = vadd.f32 %v493, %v520
        %v533 = vadd.f32 %v494, %v522
        %v534 = vadd.f32 %v495, %v521
        %s535 = sadd.s32 %s327, 2
        %s536 = smul.u32 %s535, 48
        %s537 = scalar_lea.vmem %s292, %s536
        %v538 = vld [vmem:[%s537] sm:$0xff]
        %v539 = vld [vmem:[%s537 + $0x8] sm:$0xff]
        %v540 = vld [vmem:[%s537 + $0x10] sm:$0xff]
        %v541 = vld [vmem:[%s537 + $0x18] sm:$0xff]
        %v542 = vld [vmem:[%s537 + $0x20] sm:$0xff]
        %v543 = vld [vmem:[%s537 + $0x28] sm:$0x3f]
        %v544 = vlaneseq
        %v545 = vshrl.u32 %v544, 7
        %v546 = vsub.s32 6, %v545
        %v547 = vrot.slane %v306, %v546
        %v548 = vmul.f32 %v538, %v547
        %v549 = vmul.f32 %v539, %v547
        %v550 = vmul.f32 %v540, %v547
        %v551 = vmul.f32 %v541, %v547
        %v552 = vmul.f32 %v542, %v547
        %v553 = vmul.f32 %v543, %v547
        %v554 = vadd.f32 %v529, %v548
        %v555 = vadd.f32 %v530, %v549
        %v556 = vadd.f32 %v531, %v550
        %v557 = vadd.f32 %v532, %v551
        %v558 = vadd.f32 %v533, %v552
        %v559 = vadd.f32 %v534, %v553
        %v560 = vlaneseq
        %v561 = vshrl.u32 %v560, 7
        %v562 = vsub.s32 7, %v561
        %v563 = vrot.slane %v306, %v562
        %v564 = vmul.f32 %v538, %v563
        %v565 = vmul.f32 %v539, %v563
        %v566 = vmul.f32 %v540, %v563
        %v567 = vmul.f32 %v541, %v563
        %v568 = vmul.f32 %v542, %v563
        %v569 = vmul.f32 %v543, %v563
        %v576 = vrot.slane %v564, 1
        %v577 = vrot.slane %v565, 1
        %v578 = vsel %vm368, %v576, %v577
        %v579 = vrot.slane %v566, 1
        %v580 = vsel %vm368, %v577, %v579
        %v581 = vrot.slane %v567, 1
        %v582 = vsel %vm368, %v579, %v581
        %v583 = vrot.slane %v568, 1
        %v584 = vsel %vm368, %v581, %v583
        %v585 = vrot.slane %v569, 1
        %v586 = vsel %vm368, %v583, %v585
        %v593 = vadd.f32 %v554, %v578
        %v594 = vadd.f32 %v555, %v580
        %v595 = vadd.f32 %v556, %v582
        %v596 = vadd.f32 %v557, %v584
        %v597 = vadd.f32 %v558, %v586
        %v598 = vadd.f32 %v559, %v585
        %v599 = vlaneseq
        %v600 = vshrl.u32 %v599, 7
        %v601 = vsub.s32 0, %v600
        %v602 = vrot.slane %v307, %v601
        %v603 = vmul.f32 %v538, %v602
        %v604 = vmul.f32 %v539, %v602
        %v605 = vmul.f32 %v540, %v602
        %v606 = vmul.f32 %v541, %v602
        %v607 = vmul.f32 %v542, %v602
        %v608 = vmul.f32 %v543, %v602
        %v615 = vrot.slane %v603, 2
        %v616 = vrot.slane %v604, 2
        %v617 = vsel %vm408, %v615, %v616
        %v618 = vrot.slane %v605, 2
        %v619 = vsel %vm408, %v616, %v618
        %v620 = vrot.slane %v606, 2
        %v621 = vsel %vm408, %v618, %v620
        %v622 = vrot.slane %v607, 2
        %v623 = vsel %vm408, %v620, %v622
        %v624 = vrot.slane %v608, 2
        %v625 = vsel %vm408, %v622, %v624
        %v632 = vadd.f32 %v593, %v617
        %v633 = vadd.f32 %v594, %v619
        %v634 = vadd.f32 %v595, %v621
        %v635 = vadd.f32 %v596, %v623
        %v636 = vadd.f32 %v597, %v625
        %v637 = vadd.f32 %v598, %v624
        %v639 = vlaneseq
        %v640 = vshrl.u32 %v639, 7
        %v641 = vsub.s32 0, %v640
        %v642 = vrot.slane %v308, %v641
        %v644 = vadd.f32 %v632, %v642
        %v645 = vadd.f32 %v633, %v642
        %v646 = vadd.f32 %v634, %v642
        %v647 = vadd.f32 %v635, %v642
        %v648 = vadd.f32 %v636, %v642
        %v649 = vadd.f32 %v637, %v642
        %v650 = vpack.c.bf16 %v645, %v644
        %v651 = vpack.c.bf16 %v647, %v646
        %v652 = vpack.c.bf16 %v649, %v648
        %v654 = vlaneseq
        %v655 = vshrl.u32 %v654, 7
        %v656 = vsub.s32 0, %v655
        %v657 = vrot.slane %v317, %v656
        %v667 = vunpack.c.l.b16 %v309
        %v668 = vunpack.c.l.b16 %v310
        %v669 = vunpack.c.l.b16 %v311
        %v670 = vunpack.c.l.b16 %v312
        %v671 = vunpack.c.l.b16 %v313
        %v672 = vunpack.c.l.b16 %v314
        %v673 = vunpack.c.l.b16 %v315
        %v674 = vunpack.c.l.b16 %v316
        %v675 = vpack.c.b16 %v668, %v667
        %v676 = vpack.c.b16 %v670, %v669
        %v677 = vpack.c.b16 %v672, %v671
        %v678 = vpack.c.b16 %v674, %v673
        %vm683 = vcmask 523264
        %v685 = vsel %vm683, %v650, 0
        %v688 = vsel %vm683, %v651, 0
        %v691 = vsel %vm683, %v652, 0
        %693 = vmatprep.subr.bf16.mxu0 0
        %694 = vmatpush1.bf16.msra.mxu0 %v675
        %695 = vmatprep.subr.bf16.mxu0 0
        %696 = vmatpush1.bf16.msra.mxu0 %v676
        %697 = vmatprep.subr.bf16.mxu0 0
        %698 = vmatpush1.bf16.msra.mxu0 %v677
        %699 = vmatprep.subr.bf16.mxu0 0
        %700 = vmatpush1.bf16.msra.mxu0 %v678
        %701 = vmatprep.subr.bf16.mxu0 0
        %702 = vmatpush1.bf16.msra.mxu0 0
        %703 = vmatprep.subr.bf16.mxu0 0
        %704 = vmatpush1.bf16.msra.mxu0 0
        %705 = vmatprep.subr.bf16.mxu0 0
        %706 = vmatpush1.bf16.msra.mxu0 0
        %707 = vmatprep.subr.bf16.mxu0 0
        %708 = vmatpush1.bf16.msra.mxu0 0
        %709 = vmatprep.subr.bf16.mxu0 0
        %710 = vmatpush1.bf16.msra.mxu0 0
        %711 = vmatprep.subr.bf16.mxu0 0
        %712 = vmatpush1.bf16.msra.mxu0 0
        %713 = vmatprep.subr.bf16.mxu0 0
        %714 = vmatpush1.bf16.msra.mxu0 0
        %715 = vmatprep.subr.bf16.mxu0 0
        %716 = vmatpush1.bf16.msra.mxu0 0
        %717 = vmatprep.subr.bf16.mxu0 0
        %718 = vmatpush1.bf16.msra.mxu0 0
        %719 = vmatprep.subr.bf16.mxu0 0
        %720 = vmatpush1.bf16.msra.mxu0 0
        %721 = vmatprep.subr.bf16.mxu0 0
        %722 = vmatpush1.bf16.msra.mxu0 0
        %723 = vmatprep.subr.bf16.mxu0 0
        %724 = vmatpush1.bf16.msra.mxu0 0
        %725 = vmatprep.mubr.bf16.mxu0 0
        %726 = vmatmul.mubr.bf16.gmra.mrb[0].mxu0 %v685
        %v727 = vpop.f32.mrb[0].mxu0
        %v728 = vadd.f32 %v657, %v727
        %v729 = vpop.f32.mrb[0].mxu0
        %v730 = vpop.f32.mrb[0].mxu0
        %v731 = vadd.f32 %v657, %v730
        %v732 = vpop.f32.mrb[0].mxu0
        %733 = vmatprep.mubr.bf16.mxu0 0
        %734 = vmatmul.mubr.bf16.gmra.mrb[0].mxu0 %v688
        %v735 = vpop.f32.mrb[0].mxu0
        %v736 = vadd.f32 %v657, %v735
        %v737 = vpop.f32.mrb[0].mxu0
        %v738 = vpop.f32.mrb[0].mxu0
        %v739 = vadd.f32 %v657, %v738
        %v740 = vpop.f32.mrb[0].mxu0
        %741 = vmatprep.mubr.bf16.mxu0 0
        %742 = vmatmul.mubr.bf16.gmra.mrb[0].mxu0 %v691
        %v743 = vpop.f32.mrb[0].mxu0
        %v744 = vadd.f32 %v657, %v743
        %v745 = vpop.f32.mrb[0].mxu0
        %v746 = vpop.f32.mrb[0].mxu0
        %v747 = vadd.f32 %v657, %v746
        %v748 = vpop.f32.mrb[0].mxu0
        %749 = vdwg.mxu0
        %v750 = vmax.f32 %v728, 0.0
        %v751 = vmax.f32 %v731, 0.0
        %v752 = vmax.f32 %v736, 0.0
        %v753 = vmax.f32 %v739, 0.0
        %v754 = vmax.f32 %v744, 0.0
        %v755 = vmax.f32 %v747, 0.0
        %v757 = vlaneseq
        %v758 = vshrl.u32 %v757, 7
        %v759 = vsub.s32 0, %v758
        %v760 = vrot.slane %v318, %v759
        %v762 = vmul.f32 %v750, %v760
        %v763 = vmul.f32 %v751, %v760
        %v764 = vmul.f32 %v752, %v760
        %v765 = vmul.f32 %v753, %v760
        %v766 = vmul.f32 %v754, %v760
        %v767 = vmul.f32 %v755, %v760
        %v769 = vlaneseq
        %v770 = vshrl.u32 %v769, 7
        %v771 = vsub.s32 0, %v770
        %v772 = vrot.slane %v319, %v771
        %v774 = vadd.f32 %v762, %v772
        %v775 = vadd.f32 %v763, %v772
        %v776 = vadd.f32 %v764, %v772
        %v777 = vadd.f32 %v765, %v772
        %v778 = vadd.f32 %v766, %v772
        %v779 = vadd.f32 %v767, %v772
        %v780 = vmul.f32 %v435, %v339
        %v781 = vmul.f32 %v436, %v339
        %v782 = vmul.f32 %v437, %v339
        %v783 = vmul.f32 %v438, %v339
        %v784 = vmul.f32 %v439, %v339
        %v785 = vmul.f32 %v440, %v339
        %v786 = vadd.f32 %v780, 0.0
        %v787 = vadd.f32 %v781, 0.0
        %v788 = vadd.f32 %v782, 0.0
        %v789 = vadd.f32 %v783, 0.0
        %v790 = vadd.f32 %v784, 0.0
        %v791 = vadd.f32 %v785, 0.0
        %v792 = vmul.f32 %v435, %v355
        %v793 = vmul.f32 %v436, %v355
        %v794 = vmul.f32 %v437, %v355
        %v795 = vmul.f32 %v438, %v355
        %v796 = vmul.f32 %v439, %v355
        %v797 = vmul.f32 %v440, %v355
        %v804 = vrot.slane %v792, 1
        %v805 = vrot.slane %v793, 1
        %v806 = vsel %vm368, %v804, %v805
        %v807 = vrot.slane %v794, 1
        %v808 = vsel %vm368, %v805, %v807
        %v809 = vrot.slane %v795, 1
        %v810 = vsel %vm368, %v807, %v809
        %v811 = vrot.slane %v796, 1
        %v812 = vsel %vm368, %v809, %v811
        %v813 = vrot.slane %v797, 1
        %v814 = vsel %vm368, %v811, %v813
        %v821 = vadd.f32 %v786, %v806
        %v822 = vadd.f32 %v787, %v808
        %v823 = vadd.f32 %v788, %v810
        %v824 = vadd.f32 %v789, %v812
        %v825 = vadd.f32 %v790, %v814
        %v826 = vadd.f32 %v791, %v813
        %v827 = vmul.f32 %v435, %v395
        %v828 = vmul.f32 %v436, %v395
        %v829 = vmul.f32 %v437, %v395
        %v830 = vmul.f32 %v438, %v395
        %v831 = vmul.f32 %v439, %v395
        %v832 = vmul.f32 %v440, %v395
        %v839 = vrot.slane %v827, 2
        %v840 = vrot.slane %v828, 2
        %v841 = vsel %vm408, %v839, %v840
        %v842 = vrot.slane %v829, 2
        %v843 = vsel %vm408, %v840, %v842
        %v844 = vrot.slane %v830, 2
        %v845 = vsel %vm408, %v842, %v844
        %v846 = vrot.slane %v831, 2
        %v847 = vsel %vm408, %v844, %v846
        %v848 = vrot.slane %v832, 2
        %v849 = vsel %vm408, %v846, %v848
        %v856 = vadd.f32 %v821, %v841
        %v857 = vadd.f32 %v822, %v843
        %v858 = vadd.f32 %v823, %v845
        %v859 = vadd.f32 %v824, %v847
        %v860 = vadd.f32 %v825, %v849
        %v861 = vadd.f32 %v826, %v848
        %v862 = vmul.f32 %v538, %v444
        %v863 = vmul.f32 %v539, %v444
        %v864 = vmul.f32 %v540, %v444
        %v865 = vmul.f32 %v541, %v444
        %v866 = vmul.f32 %v542, %v444
        %v867 = vmul.f32 %v543, %v444
        %v868 = vadd.f32 %v856, %v862
        %v869 = vadd.f32 %v857, %v863
        %v870 = vadd.f32 %v858, %v864
        %v871 = vadd.f32 %v859, %v865
        %v872 = vadd.f32 %v860, %v866
        %v873 = vadd.f32 %v861, %v867
        %v874 = vmul.f32 %v538, %v460
        %v875 = vmul.f32 %v539, %v460
        %v876 = vmul.f32 %v540, %v460
        %v877 = vmul.f32 %v541, %v460
        %v878 = vmul.f32 %v542, %v460
        %v879 = vmul.f32 %v543, %v460
        %v886 = vrot.slane %v874, 1
        %v887 = vrot.slane %v875, 1
        %v888 = vsel %vm368, %v886, %v887
        %v889 = vrot.slane %v876, 1
        %v890 = vsel %vm368, %v887, %v889
        %v891 = vrot.slane %v877, 1
        %v892 = vsel %vm368, %v889, %v891
        %v893 = vrot.slane %v878, 1
        %v894 = vsel %vm368, %v891, %v893
        %v895 = vrot.slane %v879, 1
        %v896 = vsel %vm368, %v893, %v895
        %v903 = vadd.f32 %v868, %v888
        %v904 = vadd.f32 %v869, %v890
        %v905 = vadd.f32 %v870, %v892
        %v906 = vadd.f32 %v871, %v894
        %v907 = vadd.f32 %v872, %v896
        %v908 = vadd.f32 %v873, %v895
        %v909 = vmul.f32 %v538, %v499
        %v910 = vmul.f32 %v539, %v499
        %v911 = vmul.f32 %v540, %v499
        %v912 = vmul.f32 %v541, %v499
        %v913 = vmul.f32 %v542, %v499
        %v914 = vmul.f32 %v543, %v499
        %v921 = vrot.slane %v909, 2
        %v922 = vrot.slane %v910, 2
        %v923 = vsel %vm408, %v921, %v922
        %v924 = vrot.slane %v911, 2
        %v925 = vsel %vm408, %v922, %v924
        %v926 = vrot.slane %v912, 2
        %v927 = vsel %vm408, %v924, %v926
        %v928 = vrot.slane %v913, 2
        %v929 = vsel %vm408, %v926, %v928
        %v930 = vrot.slane %v914, 2
        %v931 = vsel %vm408, %v928, %v930
        %v938 = vadd.f32 %v903, %v923
        %v939 = vadd.f32 %v904, %v925
        %v940 = vadd.f32 %v905, %v927
        %v941 = vadd.f32 %v906, %v929
        %v942 = vadd.f32 %v907, %v931
        %v943 = vadd.f32 %v908, %v930
        %s944 = sadd.s32 %s327, 3
        %s945 = smul.u32 %s944, 48
        %s946 = scalar_lea.vmem %s292, %s945
        %v947 = vld [vmem:[%s946] sm:$0xff]
        %v948 = vld [vmem:[%s946 + $0x8] sm:$0xff]
        %v949 = vld [vmem:[%s946 + $0x10] sm:$0xff]
        %v950 = vld [vmem:[%s946 + $0x18] sm:$0xff]
        %v951 = vld [vmem:[%s946 + $0x20] sm:$0xff]
        %v952 = vld [vmem:[%s946 + $0x28] sm:$0x3f]
        %v953 = vmul.f32 %v947, %v547
        %v954 = vmul.f32 %v948, %v547
        %v955 = vmul.f32 %v949, %v547
        %v956 = vmul.f32 %v950, %v547
        %v957 = vmul.f32 %v951, %v547
        %v958 = vmul.f32 %v952, %v547
        %v959 = vadd.f32 %v938, %v953
        %v960 = vadd.f32 %v939, %v954
        %v961 = vadd.f32 %v940, %v955
        %v962 = vadd.f32 %v941, %v956
        %v963 = vadd.f32 %v942, %v957
        %v964 = vadd.f32 %v943, %v958
        %v965 = vmul.f32 %v947, %v563
        %v966 = vmul.f32 %v948, %v563
        %v967 = vmul.f32 %v949, %v563
        %v968 = vmul.f32 %v950, %v563
        %v969 = vmul.f32 %v951, %v563
        %v970 = vmul.f32 %v952, %v563
        %v977 = vrot.slane %v965, 1
        %v978 = vrot.slane %v966, 1
        %v979 = vsel %vm368, %v977, %v978
        %v980 = vrot.slane %v967, 1
        %v981 = vsel %vm368, %v978, %v980
        %v982 = vrot.slane %v968, 1
        %v983 = vsel %vm368, %v980, %v982
        %v984 = vrot.slane %v969, 1
        %v985 = vsel %vm368, %v982, %v984
        %v986 = vrot.slane %v970, 1
        %v987 = vsel %vm368, %v984, %v986
        %v994 = vadd.f32 %v959, %v979
        %v995 = vadd.f32 %v960, %v981
        %v996 = vadd.f32 %v961, %v983
        %v997 = vadd.f32 %v962, %v985
        %v998 = vadd.f32 %v963, %v987
        %v999 = vadd.f32 %v964, %v986
        %v1000 = vmul.f32 %v947, %v602
        %v1001 = vmul.f32 %v948, %v602
        %v1002 = vmul.f32 %v949, %v602
        %v1003 = vmul.f32 %v950, %v602
        %v1004 = vmul.f32 %v951, %v602
        %v1005 = vmul.f32 %v952, %v602
        %v1012 = vrot.slane %v1000, 2
        %v1013 = vrot.slane %v1001, 2
        %v1014 = vsel %vm408, %v1012, %v1013
        %v1015 = vrot.slane %v1002, 2
        %v1016 = vsel %vm408, %v1013, %v1015
        %v1017 = vrot.slane %v1003, 2
        %v1018 = vsel %vm408, %v1015, %v1017
        %v1019 = vrot.slane %v1004, 2
        %v1020 = vsel %vm408, %v1017, %v1019
        %v1021 = vrot.slane %v1005, 2
        %v1022 = vsel %vm408, %v1019, %v1021
        %v1029 = vadd.f32 %v994, %v1014
        %v1030 = vadd.f32 %v995, %v1016
        %v1031 = vadd.f32 %v996, %v1018
        %v1032 = vadd.f32 %v997, %v1020
        %v1033 = vadd.f32 %v998, %v1022
        %v1034 = vadd.f32 %v999, %v1021
        %v1035 = vadd.f32 %v1029, %v642
        %v1036 = vadd.f32 %v1030, %v642
        %v1037 = vadd.f32 %v1031, %v642
        %v1038 = vadd.f32 %v1032, %v642
        %v1039 = vadd.f32 %v1033, %v642
        %v1040 = vadd.f32 %v1034, %v642
        %v1041 = vpack.c.bf16 %v1036, %v1035
        %v1042 = vpack.c.bf16 %v1038, %v1037
        %v1043 = vpack.c.bf16 %v1040, %v1039
        %v1045 = vsel %vm683, %v1041, 0
        %v1048 = vsel %vm683, %v1042, 0
        %v1051 = vsel %vm683, %v1043, 0
        %1053 = vmatprep.subr.bf16.mxu0 0
        %1054 = vmatpush1.bf16.msra.mxu0 %v675
        %1055 = vmatprep.subr.bf16.mxu0 0
        %1056 = vmatpush1.bf16.msra.mxu0 %v676
        %1057 = vmatprep.subr.bf16.mxu0 0
        %1058 = vmatpush1.bf16.msra.mxu0 %v677
        %1059 = vmatprep.subr.bf16.mxu0 0
        %1060 = vmatpush1.bf16.msra.mxu0 %v678
        %1061 = vmatprep.subr.bf16.mxu0 0
        %1062 = vmatpush1.bf16.msra.mxu0 0
        %1063 = vmatprep.subr.bf16.mxu0 0
        %1064 = vmatpush1.bf16.msra.mxu0 0
        %1065 = vmatprep.subr.bf16.mxu0 0
        %1066 = vmatpush1.bf16.msra.mxu0 0
        %1067 = vmatprep.subr.bf16.mxu0 0
        %1068 = vmatpush1.bf16.msra.mxu0 0
        %1069 = vmatprep.subr.bf16.mxu0 0
        %1070 = vmatpush1.bf16.msra.mxu0 0
        %1071 = vmatprep.subr.bf16.mxu0 0
        %1072 = vmatpush1.bf16.msra.mxu0 0
        %1073 = vmatprep.subr.bf16.mxu0 0
        %1074 = vmatpush1.bf16.msra.mxu0 0
        %1075 = vmatprep.subr.bf16.mxu0 0
        %1076 = vmatpush1.bf16.msra.mxu0 0
        %1077 = vmatprep.subr.bf16.mxu0 0
        %1078 = vmatpush1.bf16.msra.mxu0 0
        %1079 = vmatprep.subr.bf16.mxu0 0
        %1080 = vmatpush1.bf16.msra.mxu0 0
        %1081 = vmatprep.subr.bf16.mxu0 0
        %1082 = vmatpush1.bf16.msra.mxu0 0
        %1083 = vmatprep.subr.bf16.mxu0 0
        %1084 = vmatpush1.bf16.msra.mxu0 0
        %1085 = vmatprep.mubr.bf16.mxu0 0
        %1086 = vmatmul.mubr.bf16.gmra.mrb[0].mxu0 %v1045
        %v1087 = vpop.f32.mrb[0].mxu0
        %v1088 = vadd.f32 %v657, %v1087
        %v1089 = vpop.f32.mrb[0].mxu0
        %v1090 = vpop.f32.mrb[0].mxu0
        %v1091 = vadd.f32 %v657, %v1090
        %v1092 = vpop.f32.mrb[0].mxu0
        %1093 = vmatprep.mubr.bf16.mxu0 0
        %1094 = vmatmul.mubr.bf16.gmra.mrb[0].mxu0 %v1048
        %v1095 = vpop.f32.mrb[0].mxu0
        %v1096 = vadd.f32 %v657, %v1095
        %v1097 = vpop.f32.mrb[0].mxu0
        %v1098 = vpop.f32.mrb[0].mxu0
        %v1099 = vadd.f32 %v657, %v1098
        %v1100 = vpop.f32.mrb[0].mxu0
        %1101 = vmatprep.mubr.bf16.mxu0 0
        %1102 = vmatmul.mubr.bf16.gmra.mrb[0].mxu0 %v1051
        %v1103 = vpop.f32.mrb[0].mxu0
        %v1104 = vadd.f32 %v657, %v1103
        %v1105 = vpop.f32.mrb[0].mxu0
        %v1106 = vpop.f32.mrb[0].mxu0
        %v1107 = vadd.f32 %v657, %v1106
        %v1108 = vpop.f32.mrb[0].mxu0
        %1109 = vdwg.mxu0
        %v1110 = vmax.f32 %v1088, 0.0
        %v1111 = vmax.f32 %v1091, 0.0
        %v1112 = vmax.f32 %v1096, 0.0
        %v1113 = vmax.f32 %v1099, 0.0
        %v1114 = vmax.f32 %v1104, 0.0
        %v1115 = vmax.f32 %v1107, 0.0
        %v1116 = vmul.f32 %v1110, %v760
        %v1117 = vmul.f32 %v1111, %v760
        %v1118 = vmul.f32 %v1112, %v760
        %v1119 = vmul.f32 %v1113, %v760
        %v1120 = vmul.f32 %v1114, %v760
        %v1121 = vmul.f32 %v1115, %v760
        %v1122 = vadd.f32 %v1116, %v772
        %v1123 = vadd.f32 %v1117, %v772
        %v1124 = vadd.f32 %v1118, %v772
        %v1125 = vadd.f32 %v1119, %v772
        %v1126 = vadd.f32 %v1120, %v772
        %v1127 = vadd.f32 %v1121, %v772
        %v1128 = vmax.f32 %v774, %v1122
        %v1129 = vmax.f32 %v775, %v1123
        %v1130 = vmax.f32 %v776, %v1124
        %v1131 = vmax.f32 %v777, %v1125
        %v1132 = vmax.f32 %v778, %v1126
        %v1133 = vmax.f32 %v779, %v1127
        %1134 = vst.msk [vmem:[#allocation2] sm:$0xff] %vm683, %v1128
        %1135 = vst.msk [vmem:[#allocation2 + $0x8] sm:$0xff] %vm683, %v1129
        %1136 = vst.msk [vmem:[#allocation2 + $0x10] sm:$0xff] %vm683, %v1130
        %1137 = vst.msk [vmem:[#allocation2 + $0x18] sm:$0xff] %vm683, %v1131
        %1138 = vst.msk [vmem:[#allocation2 + $0x20] sm:$0xff] %vm683, %v1132
        %vm1139 = vcmask 519168
        %1140 = vst.msk [vmem:[#allocation2 + $0x28] sm:$0xf] %vm1139, %v1133
        %v1141 = vld [vmem:[#allocation2] ss:$2 sm:$0xff]
        %s1142 = scalar_lea.vmem [#allocation2], 16
        %v1143 = vld [vmem:[%s1142] ss:$2 sm:$0xff]
        %s1144 = scalar_lea.vmem [#allocation2], 32
        %v1145 = vld [vmem:[%s1144] ss:$2 sm:$0x3f]
        %s1146 = scalar_lea.vmem [#allocation2], 1
        %v1147 = vld [vmem:[%s1146] ss:$2 sm:$0xff]
        %s1148 = scalar_lea.vmem [#allocation2], 17
        %v1149 = vld [vmem:[%s1148] ss:$2 sm:$0xff]
        %s1150 = scalar_lea.vmem [#allocation2], 33
        %v1151 = vld [vmem:[%s1150] ss:$2 sm:$0x3f]
        %v1152 = vmax.f32 %v1141, %v1147
        %v1153 = vmax.f32 %v1143, %v1149
        %v1154 = vmax.f32 %v1145, %v1151
        %s1155 = smul.u32 %s321, 24
        %s1156 = scalar_lea.vmem %s302, %s1155
        %1157 = vst.msk [vmem:[%s1156] sm:$0xff] %vm683, %v1152
        %1158 = vst.msk [vmem:[%s1156 + $0x8] sm:$0xff] %vm683, %v1153
        %vm1159 = vcmask 521216
        %1160 = vst.msk [vmem:[%s1156 + $0x10] sm:$0x3f] %vm1159, %v1154
      $region53: #{separable_convolution_model.10} parent=47 // loop_footer
        %s325 = sadd.s32 1, %s321
      $region54: #{separable_convolution_model.10} parent=47 // loop_footer_branch
        %320 = sbr.rel target = $region50
      $region55: #{separable_convolution_model.10} parent=47 // loop_exit
        _
      %s1161 = smul.u32 11, %s23
      %p1162 = scmp.lt.s32.totalorder %s22, 1
      %s1163 = scalar_select %p1162, %s22, 1
      %p1164 = scmp.lt.s32.totalorder %s1161, 21
      %s1165 = scalar_select %p1164, %s1161, 21
      %s1166 = smul.addr %s1165, 3
      %s1167 = smul.addr %s1163, 66
      %s1168 = sadd.s32 %s1166, %s1167
      %s1169 = smul.addr %s1168, 8
      %s1170 = scalar_lea.vmem %s7, %s1169
      // Predicated region
      $region56: #{separable_convolution_model.10} parent=47 // pred_check
        %p1171 = pneg %p202
      $region57: #{separable_convolution_model.10} parent=47 // pred_check_branch
        %1173 = sbr.rel (%p1171) target = $region59
      $region58: #{separable_convolution_model.10} parent=47 // pred_region
        %s1174 = smul.u32 11, %s23
      $region59: #{separable_convolution_model.10} parent=47 // pred_fallthru
        _
    $region48: #{separable_convolution_model.10} parent=5 // pred_fallthru
      _
    %p1175 = scmp.le.s32.totalorder 2, %s13
    // Predicated region
    $region60: #{separable_convolution_model.10} parent=5 // pred_check
      %p1176 = pneg %p1175
    $region61: #{separable_convolution_model.10} parent=5 // pred_check_branch
      %1178 = sbr.rel (%p1176) target = $region63
    $region62: #{separable_convolution_model.10} parent=5 // pred_region
      %s1179 = ssub.s32 %s13, 2
      // Predicated region
      $region64: #{separable_convolution_model.10} parent=62 // pred_check
        %p1180 = pneg %p208
      $region65: #{separable_convolution_model.10} parent=62 // pred_check_branch
        %1182 = sbr.rel (%p1180) target = $region67
      $region66: #{separable_convolution_model.10} parent=62 // pred_region
        %s1183 = smul.u32 11, %s25
        %p1184 = scmp.lt.s32.totalorder %s24, 1
        %s1185 = scalar_select %p1184, %s24, 1
        %p1186 = scmp.lt.s32.totalorder %s1183, 21
        %s1187 = scalar_select %p1186, %s1183, 21
        %s1188 = smul.addr %s1187, 3
        %s1189 = smul.addr %s1185, 66
        %s1190 = sadd.s32 %s1188, %s1189
        %s1191 = smul.addr %s1190, 8
        %s1192 = scalar_lea.vmem %s7, %s1191
      $region67: #{separable_convolution_model.10} parent=62 // pred_fallthru
        _
    $region63: #{separable_convolution_model.10} parent=5 // pred_fallthru
      _
  $region6: #{separable_convolution_model.10} parent=0 // loop_footer
    %s17 = sadd.s32 1, %s13
  $region7: #{separable_convolution_model.10} parent=0 // loop_footer_branch
    %12 = sbr.rel target = $region3
  $region8: #{separable_convolution_model.10} parent=0 // loop_exit
    _

// kernel: separable_convolution_model.11
$region0: #{separable_convolution_model.11}
  #allocation0 [shape = 'u32[]', space=smem, size = 0x4, offset = 0x4, fixed_abs, tag = 'smem constant byte address 0x4 - core index']
  #allocation1 [shape = 'u32[144,128]{1,0:T(1,128)}', space=vmem, size = 0x12000, scoped, tag = 'internal scratch']
  %s0 = inlined_call_operand.vmem [shape: f32[2,22,22,64], index: 0, kind: input, shape index: {}]
  %s1 = inlined_call_operand.vmem [shape: f32[9,64], index: 1, kind: input, shape index: {}]
  %s2 = inlined_call_operand.hbm [shape: f32[1,64], index: 2, kind: input, shape index: {}]
  %s3 = inlined_call_operand.vmem [shape: bf16[64,128], index: 3, kind: input, shape index: {}]
  %s4 = inlined_call_operand.hbm [shape: f32[1,128], index: 4, kind: input, shape index: {}]
  %s5 = inlined_call_operand.hbm [shape: f32[1,128], index: 5, kind: input, shape index: {}]
  %s6 = inlined_call_operand.hbm [shape: f32[1,128], index: 6, kind: input, shape index: {}]
  %s7 = inlined_call_operand.vmem [shape: f32[2,20,20,128], index: 7, kind: output, shape index: {}]
  %s8 = sld [smem:[#allocation0]]
  $region84: #{separable_convolution_model.11} parent=0
    _
  %s10 = ssub.s32 1, %s8
  %s11 = scalar_select 0, %s10, %s8
  $region1: #{separable_convolution_model.11} parent=0
    #allocation2 [shape = 'u8[512]{0}', space=vmem, size = 0x400, scoped, tag = 'input window, operand 2, single buffered']
    #allocation3 [shape = 's32[2]{0}', space=sflag, size = 0x8, scoped, tag = 'scoped memory for separable_convolution_model.11']
    #allocation4 [shape = 'u8[512]{0}', space=vmem, size = 0x400, scoped, tag = 'input window, operand 4, single buffered']
    #allocation5 [shape = 's32[1]{0}', space=sflag, size = 0x4, scoped, tag = 'scoped memory for separable_convolution_model.11']
    #allocation6 [shape = 'u8[512]{0}', space=vmem, size = 0x400, scoped, tag = 'input window, operand 5, single buffered']
    #allocation7 [shape = 'u8[512]{0}', space=vmem, size = 0x400, scoped, tag = 'input window, operand 6, single buffered']
    #allocation8 [shape = 's32[1]{0}', space=sflag, size = 0x4, scoped, tag = 'scoped memory for separable_convolution_model.11']
    %12 = vsyncpa [#allocation3], 0
    %13 = vsyncpa [#allocation5], 0
    %14 = vsyncpa [#allocation8], 0
    loop: start=0, step=1, limit=4
    $region2: #{separable_convolution_model.11} parent=1 // loop_pre_header
      _
    $region3: #{separable_convolution_model.11} parent=1 // loop_header
      %s16 = sphi 0, %s20
      %p17 = scmp.ge.s32.totalorder %s16, 4
      %s23 = sphi 0, %s35
      %s24 = sphi 0, %s31
      %s25 = sphi 0, %s23
      %s26 = sphi 0, %s24
      %s27 = sphi 0, %s25
      %s28 = sphi 0, %s26
      %s38 = sphi 0, %s40
      %s41 = sphi 0, %s38
      %s42 = sphi 0, %s41
      %s58 = sphi 0, %s42
      %s62 = sphi 0, %s62
      %s64 = sphi 0, %s62
      %s65 = sphi 0, %s64
      %s79 = sphi 0, %s65
      %s83 = sphi 0, %s83
      %s85 = sphi 0, %s83
      %s86 = sphi 0, %s85
      %s100 = sphi 0, %s86
      %s104 = sphi 0, %s104
      %s106 = sphi 0, %s104
      %s107 = sphi 0, %s106
      %s121 = sphi 0, %s107
      %s125 = sphi 0, %s125
      %s127 = sphi 0, %s125
      %s128 = sphi 0, %s127
      %s142 = sphi 0, %s128
      %s146 = sphi 0, %s146
      %s148 = sphi 0, %s146
      %s149 = sphi 0, %s148
      %s163 = sphi 0, %s149
      %s167 = sphi 0, %s167
      %s169 = sphi 0, %s167
      %s170 = sphi 0, %s169
      %s184 = sphi 0, %s170
      %s192 = sphi 0, %s194
      %s195 = sphi 0, %s192
      %s196 = sphi 0, %s195
      %s212 = sphi 0, %s196
    $region4: #{separable_convolution_model.11} parent=1 // loop_header_branch
      %19 = sbr.rel (%p17) target = $region8
    $region5: #{separable_convolution_model.11} parent=1 // loop_body
      %s21 = ssub.s32 %s16, 1
      %s22 = ssub.s32 %s16, 2
      %s29 = sadd.s32 1, %s24
      %p30 = scmp.ge.s32.totalorder %s29, 1
      %s31 = scalar_select %p30, 0, %s29
      %s32 = sadd.s32 1, %s23
      %s33 = scalar_select %p30, %s32, %s23
      %p34 = scmp.ge.s32.totalorder %s33, 2
      %s35 = scalar_select %p34, 0, %s33
      %s36 = ssub.s32 %s23, %s35
      %p37 = scmp.eq.s32.totalorder %s36, 0
      %s39 = sadd.s32 %s38, 1
      %s40 = scalar_select %p37, %s38, %s39
      %p43 = pneg %p37
      %p44 = scmp.eq.s32.totalorder %s16, 1
      %p45 = por %p43, %p44
      %p46 = scmp.ne.s32.totalorder %s38, %s41
      %p47 = scmp.eq.s32.totalorder %s16, 0
      %p48 = por %p46, %p47
      %p49 = scmp.ne.s32.totalorder %s38, %s41
      %p50 = scmp.eq.s32.totalorder %s21, 1
      %p51 = por %p49, %p50
      %p52 = scmp.ne.s32.totalorder %s41, %s42
      %p53 = scmp.eq.s32.totalorder %s21, 0
      %p54 = por %p52, %p53
      %p55 = scmp.ne.s32.totalorder %s41, %s42
      %p56 = scmp.eq.s32.totalorder %s22, 1
      %p57 = por %p55, %p56
      %p59 = scmp.ne.s32.totalorder %s42, %s58
      %p60 = scmp.eq.s32.totalorder %s22, 0
      %p61 = por %p59, %p60
      %s63 = sadd.s32 %s62, 1
      %p66 = scmp.eq.s32.totalorder %s16, 1
      %p67 = scmp.ne.s32.totalorder %s62, %s64
      %p68 = scmp.eq.s32.totalorder %s16, 0
      %p69 = por %p67, %p68
      %p70 = scmp.ne.s32.totalorder %s62, %s64
      %p71 = scmp.eq.s32.totalorder %s21, 1
      %p72 = por %p70, %p71
      %p73 = scmp.ne.s32.totalorder %s64, %s65
      %p74 = scmp.eq.s32.totalorder %s21, 0
      %p75 = por %p73, %p74
      %p76 = scmp.ne.s32.totalorder %s64, %s65
      %p77 = scmp.eq.s32.totalorder %s22, 1
      %p78 = por %p76, %p77
      %p80 = scmp.ne.s32.totalorder %s65, %s79
      %p81 = scmp.eq.s32.totalorder %s22, 0
      %p82 = por %p80, %p81
      %s84 = sadd.s32 %s83, 1
      %p87 = scmp.eq.s32.totalorder %s16, 1
      %p88 = scmp.ne.s32.totalorder %s83, %s85
      %p89 = scmp.eq.s32.totalorder %s16, 0
      %p90 = por %p88, %p89
      %p91 = scmp.ne.s32.totalorder %s83, %s85
      %p92 = scmp.eq.s32.totalorder %s21, 1
      %p93 = por %p91, %p92
      %p94 = scmp.ne.s32.totalorder %s85, %s86
      %p95 = scmp.eq.s32.totalorder %s21, 0
      %p96 = por %p94, %p95
      %p97 = scmp.ne.s32.totalorder %s85, %s86
      %p98 = scmp.eq.s32.totalorder %s22, 1
      %p99 = por %p97, %p98
      %p101 = scmp.ne.s32.totalorder %s86, %s100
      %p102 = scmp.eq.s32.totalorder %s22, 0
      %p103 = por %p101, %p102
      %s105 = sadd.s32 %s104, 1
      %p108 = scmp.eq.s32.totalorder %s16, 1
      %p109 = scmp.ne.s32.totalorder %s104, %s106
      %p110 = scmp.eq.s32.totalorder %s16, 0
      %p111 = por %p109, %p110
      %p112 = scmp.ne.s32.totalorder %s104, %s106
      %p113 = scmp.eq.s32.totalorder %s21, 1
      %p114 = por %p112, %p113
      %p115 = scmp.ne.s32.totalorder %s106, %s107
      %p116 = scmp.eq.s32.totalorder %s21, 0
      %p117 = por %p115, %p116
      %p118 = scmp.ne.s32.totalorder %s106, %s107
      %p119 = scmp.eq.s32.totalorder %s22, 1
      %p120 = por %p118, %p119
      %p122 = scmp.ne.s32.totalorder %s107, %s121
      %p123 = scmp.eq.s32.totalorder %s22, 0
      %p124 = por %p122, %p123
      %s126 = sadd.s32 %s125, 1
      %p129 = scmp.eq.s32.totalorder %s16, 1
      %p130 = scmp.ne.s32.totalorder %s125, %s127
      %p131 = scmp.eq.s32.totalorder %s16, 0
      %p132 = por %p130, %p131
      %p133 = scmp.ne.s32.totalorder %s125, %s127
      %p134 = scmp.eq.s32.totalorder %s21, 1
      %p135 = por %p133, %p134
      %p136 = scmp.ne.s32.totalorder %s127, %s128
      %p137 = scmp.eq.s32.totalorder %s21, 0
      %p138 = por %p136, %p137
      %p139 = scmp.ne.s32.totalorder %s127, %s128
      %p140 = scmp.eq.s32.totalorder %s22, 1
      %p141 = por %p139, %p140
      %p143 = scmp.ne.s32.totalorder %s128, %s142
      %p144 = scmp.eq.s32.totalorder %s22, 0
      %p145 = por %p143, %p144
      %s147 = sadd.s32 %s146, 1
      %p150 = scmp.eq.s32.totalorder %s16, 1
      %p151 = scmp.ne.s32.totalorder %s146, %s148
      %p152 = scmp.eq.s32.totalorder %s16, 0
      %p153 = por %p151, %p152
      %p154 = scmp.ne.s32.totalorder %s146, %s148
      %p155 = scmp.eq.s32.totalorder %s21, 1
      %p156 = por %p154, %p155
      %p157 = scmp.ne.s32.totalorder %s148, %s149
      %p158 = scmp.eq.s32.totalorder %s21, 0
      %p159 = por %p157, %p158
      %p160 = scmp.ne.s32.totalorder %s148, %s149
      %p161 = scmp.eq.s32.totalorder %s22, 1
      %p162 = por %p160, %p161
      %p164 = scmp.ne.s32.totalorder %s149, %s163
      %p165 = scmp.eq.s32.totalorder %s22, 0
      %p166 = por %p164, %p165
      %s168 = sadd.s32 %s167, 1
      %p171 = scmp.eq.s32.totalorder %s16, 1
      %p172 = scmp.ne.s32.totalorder %s167, %s169
      %p173 = scmp.eq.s32.totalorder %s16, 0
      %p174 = por %p172, %p173
      %p175 = scmp.ne.s32.totalorder %s167, %s169
      %p176 = scmp.eq.s32.totalorder %s21, 1
      %p177 = por %p175, %p176
      %p178 = scmp.ne.s32.totalorder %s169, %s170
      %p179 = scmp.eq.s32.totalorder %s21, 0
      %p180 = por %p178, %p179
      %p181 = scmp.ne.s32.totalorder %s169, %s170
      %p182 = scmp.eq.s32.totalorder %s22, 1
      %p183 = por %p181, %p182
      %p185 = scmp.ne.s32.totalorder %s170, %s184
      %p186 = scmp.eq.s32.totalorder %s22, 0
      %p187 = por %p185, %p186
      %s188 = ssub.s32 %s23, %s35
      %s189 = ssub.s32 %s24, %s31
      %s190 = sor.u32 %s188, %s189
      %p191 = scmp.eq.s32.totalorder %s190, 0
      %s193 = sadd.s32 %s192, 1
      %s194 = scalar_select %p191, %s192, %s193
      %p197 = pneg %p191
      %p198 = scmp.eq.s32.totalorder %s16, 1
      %p199 = por %p197, %p198
      %p200 = scmp.ne.s32.totalorder %s192, %s195
      %p201 = scmp.eq.s32.totalorder %s16, 0
      %p202 = por %p200, %p201
      %p203 = scmp.ne.s32.totalorder %s192, %s195
      %p204 = scmp.eq.s32.totalorder %s21, 1
      %p205 = por %p203, %p204
      %p206 = scmp.ne.s32.totalorder %s195, %s196
      %p207 = scmp.eq.s32.totalorder %s21, 0
      %p208 = por %p206, %p207
      %p209 = scmp.ne.s32.totalorder %s195, %s196
      %p210 = scmp.eq.s32.totalorder %s22, 1
      %p211 = por %p209, %p210
      %p213 = scmp.ne.s32.totalorder %s196, %s212
      %p214 = scmp.eq.s32.totalorder %s22, 0
      %p215 = por %p213, %p214
      %p216 = scmp.le.s32.totalorder 1, %s16
      %p217 = scmp.lt.s32.totalorder %s16, 3
      %p218 = pnand %p216, %p217
      %p219 = pneg %p218
      // Predicated region
      $region9: #{separable_convolution_model.11} parent=5 // pred_check
        _
      $region10: #{separable_convolution_model.11} parent=5 // pred_check_branch
        %221 = sbr.rel (%p218) target = $region12
      $region11: #{separable_convolution_model.11} parent=5 // pred_region
        %s222 = ssub.s32 %s16, 1
        // Predicated region
        $region13: #{separable_convolution_model.11} parent=11 // pred_check
          %p223 = pneg %p75
        $region14: #{separable_convolution_model.11} parent=11 // pred_check_branch
          %225 = sbr.rel (%p223) target = $region16
        $region15: #{separable_convolution_model.11} parent=11 // pred_region
          _
        $region16: #{separable_convolution_model.11} parent=11 // pred_fallthru
          _
        // Predicated region
        $region17: #{separable_convolution_model.11} parent=11 // pred_check
          %p226 = pneg %p96
        $region18: #{separable_convolution_model.11} parent=11 // pred_check_branch
          %228 = sbr.rel (%p226) target = $region20
        $region19: #{separable_convolution_model.11} parent=11 // pred_region
          %s230 = ssub.s32 16, 16
          %231 = vsyncadd [#allocation3], %s230
          %s233 = sshll.u32 [#allocation2], 4
          %s234 = int_to_ptr.vmem [resolvable:$true] %s233
          %236 = dma.hbm_to_vmem [thread:$0]  %s2, 16, %s234, [#allocation3]
        $region20: #{separable_convolution_model.11} parent=11 // pred_fallthru
          _
        // Predicated region
        $region21: #{separable_convolution_model.11} parent=11 // pred_check
          %p237 = pneg %p117
        $region22: #{separable_convolution_model.11} parent=11 // pred_check_branch
          %239 = sbr.rel (%p237) target = $region24
        $region23: #{separable_convolution_model.11} parent=11 // pred_region
          _
        $region24: #{separable_convolution_model.11} parent=11 // pred_fallthru
          _
        // Predicated region
        $region25: #{separable_convolution_model.11} parent=11 // pred_check
          %p240 = pneg %p138
        $region26: #{separable_convolution_model.11} parent=11 // pred_check_branch
          %242 = sbr.rel (%p240) target = $region28
        $region27: #{separable_convolution_model.11} parent=11 // pred_region
          %s244 = ssub.s32 16, 16
          %245 = vsyncadd [#allocation5], %s244
          %s247 = sshll.u32 [#allocation4], 4
          %s248 = int_to_ptr.vmem [resolvable:$true] %s247
          %250 = dma.hbm_to_vmem [thread:$0]  %s4, 16, %s248, [#allocation5]
        $region28: #{separable_convolution_model.11} parent=11 // pred_fallthru
          _
        // Predicated region
        $region29: #{separable_convolution_model.11} parent=11 // pred_check
          %p251 = pneg %p159
        $region30: #{separable_convolution_model.11} parent=11 // pred_check_branch
          %253 = sbr.rel (%p251) target = $region32
        $region31: #{separable_convolution_model.11} parent=11 // pred_region
          %s255 = ssub.s32 16, 16
          %256 = vsyncadd [#allocation5], %s255
          %s258 = sshll.u32 [#allocation6], 4
          %s259 = int_to_ptr.vmem [resolvable:$true] %s258
          %261 = dma.hbm_to_vmem [thread:$0]  %s5, 16, %s259, [#allocation5]
        $region32: #{separable_convolution_model.11} parent=11 // pred_fallthru
          _
        // Predicated region
        $region33: #{separable_convolution_model.11} parent=11 // pred_check
          %p262 = pneg %p180
        $region34: #{separable_convolution_model.11} parent=11 // pred_check_branch
          %264 = sbr.rel (%p262) target = $region36
        $region35: #{separable_convolution_model.11} parent=11 // pred_region
          %s266 = ssub.s32 16, 16
          %267 = vsyncadd [#allocation8], %s266
          %s269 = sshll.u32 [#allocation7], 4
          %s270 = int_to_ptr.vmem [resolvable:$true] %s269
          %272 = dma.hbm_to_vmem [thread:$0]  %s6, 16, %s270, [#allocation8]
        $region36: #{separable_convolution_model.11} parent=11 // pred_fallthru
          _
      $region12: #{separable_convolution_model.11} parent=5 // pred_fallthru
        _
      %p273 = scmp.lt.s32.totalorder %s16, 2
      // Predicated region
      $region37: #{separable_convolution_model.11} parent=5 // pred_check
        %p274 = pneg %p273
      $region38: #{separable_convolution_model.11} parent=5 // pred_check_branch
        %276 = sbr.rel (%p274) target = $region40
      $region39: #{separable_convolution_model.11} parent=5 // pred_region
        // Predicated region
        $region41: #{separable_convolution_model.11} parent=39 // pred_check
          %p277 = pneg %p48
        $region42: #{separable_convolution_model.11} parent=39 // pred_check_branch
          %279 = sbr.rel (%p277) target = $region44
        $region43: #{separable_convolution_model.11} parent=39 // pred_region
          %p280 = scmp.lt.s32.totalorder %s23, 1
          %s281 = scalar_select %p280, %s23, 1
          %s282 = smul.addr %s281, 66
          %s283 = smul.addr %s282, 8
          %s284 = scalar_lea.vmem %s0, %s283
        $region44: #{separable_convolution_model.11} parent=39 // pred_fallthru
          _
      $region40: #{separable_convolution_model.11} parent=5 // pred_fallthru
        _
      %p285 = scmp.le.s32.totalorder 1, %s16
      %p286 = scmp.lt.s32.totalorder %s16, 3
      %p287 = pnand %p285, %p286
      %p288 = pneg %p287
      // Predicated region
      $region45: #{separable_convolution_model.11} parent=5 // pred_check
        _
      $region46: #{separable_convolution_model.11} parent=5 // pred_check_branch
        %290 = sbr.rel (%p287) target = $region48
      $region47: #{separable_convolution_model.11} parent=5 // pred_region
        %s291 = ssub.s32 %s16, 1
        // Predicated region
        $region49: #{separable_convolution_model.11} parent=47 // pred_check
          %p292 = pneg %p96
        $region50: #{separable_convolution_model.11} parent=47 // pred_check_branch
          %294 = sbr.rel (%p292) target = $region52
        $region51: #{separable_convolution_model.11} parent=47 // pred_region
          %295 = dma.done [#allocation3], 16
        $region52: #{separable_convolution_model.11} parent=47 // pred_fallthru
          _
        // Predicated region
        $region53: #{separable_convolution_model.11} parent=47 // pred_check
          %p296 = pneg %p138
        $region54: #{separable_convolution_model.11} parent=47 // pred_check_branch
          %298 = sbr.rel (%p296) target = $region56
        $region55: #{separable_convolution_model.11} parent=47 // pred_region
          %299 = dma.done [#allocation5], 16
        $region56: #{separable_convolution_model.11} parent=47 // pred_fallthru
          _
        // Predicated region
        $region57: #{separable_convolution_model.11} parent=47 // pred_check
          %p300 = pneg %p159
        $region58: #{separable_convolution_model.11} parent=47 // pred_check_branch
          %302 = sbr.rel (%p300) target = $region60
        $region59: #{separable_convolution_model.11} parent=47 // pred_region
          %303 = dma.done [#allocation5], 16
        $region60: #{separable_convolution_model.11} parent=47 // pred_fallthru
          _
        // Predicated region
        $region61: #{separable_convolution_model.11} parent=47 // pred_check
          %p304 = pneg %p180
        $region62: #{separable_convolution_model.11} parent=47 // pred_check_branch
          %306 = sbr.rel (%p304) target = $region64
        $region63: #{separable_convolution_model.11} parent=47 // pred_region
          %307 = dma.done [#allocation8], 16
        $region64: #{separable_convolution_model.11} parent=47 // pred_fallthru
          _
        %p308 = scmp.lt.s32.totalorder %s25, 1
        %s309 = scalar_select %p308, %s25, 1
        %s310 = smul.addr %s309, 66
        %s311 = smul.addr %s310, 8
        %s312 = scalar_lea.vmem %s0, %s311
        %p313 = pneg %p54
        %p314 = pneg %p51
        %p315 = pneg %p75
        %p316 = pneg %p72
        %p317 = pneg %p96
        %p318 = pneg %p93
        %p319 = pneg %p117
        %p320 = pneg %p114
        %p321 = pneg %p138
        %p322 = pneg %p135
        %p323 = pneg %p159
        %p324 = pneg %p156
        %p325 = pneg %p180
        %p326 = pneg %p177
        %p327 = pneg %p208
        %p328 = pneg %p205
        %s329 = smul.u32 20, %s26
        %p330 = scmp.lt.s32.totalorder %s25, 1
        %s331 = scalar_select %p330, %s25, 1
        %p332 = scmp.lt.s32.totalorder %s329, 19
        %s333 = scalar_select %p332, %s329, 19
        %s334 = smul.addr %s333, 3
        %s335 = smul.addr %s331, 60
        %s336 = sadd.s32 %s334, %s335
        %s337 = smul.addr %s336, 8
        %s338 = scalar_lea.vmem %s7, %s337
        %p339 = scmp.lt.s32.totalorder %s25, 1
        %s340 = scalar_select %p339, %s25, 1
        %s341 = smul.addr %s340, 66
        %s342 = smul.addr %s341, 8
        %s343 = scalar_lea.vmem %s0, %s342
        %s344 = smul.u32 20, %s26
        %p345 = scmp.lt.s32.totalorder %s25, 1
        %s346 = scalar_select %p345, %s25, 1
        %p347 = scmp.lt.s32.totalorder %s344, 19
        %s348 = scalar_select %p347, %s344, 19
        %s349 = smul.addr %s348, 3
        %s350 = smul.addr %s346, 60
        %s351 = sadd.s32 %s349, %s350
        %s352 = smul.addr %s351, 8
        %s353 = scalar_lea.vmem %s7, %s352
        %s354 = smul.u32 20, %s26
        %s356 = smul.u32 %s26, 20
        %v357 = vld [vmem:[%s1] sm:$0xff]
        %v358 = vld [vmem:[%s1 + $0x8] sm:$0x1]
        %v359 = vld [vmem:[#allocation2] sm:$0x1]
        %v360 = vld [vmem:[%s3] sm:$0xf]
        %v361 = vld [vmem:[%s3 + $0x4] sm:$0xf]
        %v362 = vld [vmem:[%s3 + $0x8] sm:$0xf]
        %v363 = vld [vmem:[%s3 + $0xc] sm:$0xf]
        %v364 = vld [vmem:[%s3 + $0x10] sm:$0xf]
        %v365 = vld [vmem:[%s3 + $0x14] sm:$0xf]
        %v366 = vld [vmem:[%s3 + $0x18] sm:$0xf]
        %v367 = vld [vmem:[%s3 + $0x1c] sm:$0xf]
        %v368 = vld [vmem:[#allocation4] sm:$0x1]
        %v369 = vld [vmem:[#allocation6] sm:$0x1]
        %v370 = vld [vmem:[#allocation7] sm:$0x1]
        loop: start=0, step=1, limit=20
        $region65: #{separable_convolution_model.11} parent=47 // loop_pre_header
          _
        $region66: #{separable_convolution_model.11} parent=47 // loop_header
          %s372 = sphi 0, %s376
          %p373 = scmp.ge.s32.totalorder %s372, 20
        $region67: #{separable_convolution_model.11} parent=47 // loop_header_branch
          %375 = sbr.rel (%p373) target = $region71
        $region68: #{separable_convolution_model.11} parent=47 // loop_body
          %s377 = sadd.s32 %s356, %s372
          %s378 = smul.u32 %s377, 24
          %s379 = scalar_lea.vmem %s343, %s378
          %v380 = vld [vmem:[%s379] sm:$0xff]
          %v381 = vld [vmem:[%s379 + $0x8] sm:$0xff]
          %v382 = vld [vmem:[%s379 + $0x10] sm:$0x3f]
          %v383 = vlaneseq
          %v384 = vshrl.u32 %v383, 7
          %v385 = vsub.s32 0, %v384
          %v386 = vrot.slane %v357, %v385
          %v387 = vmul.f32 %v380, %v386
          %v388 = vmul.f32 %v381, %v386
          %v389 = vmul.f32 %v382, %v386
          %v390 = vadd.f32 %v387, 0.0
          %v391 = vadd.f32 %v388, 0.0
          %v392 = vadd.f32 %v389, 0.0
          %v393 = vlaneseq
          %v394 = vshrl.u32 %v393, 7
          %v395 = vsub.s32 1, %v394
          %v396 = vrot.slane %v357, %v395
          %v397 = vmul.f32 %v380, %v396
          %v398 = vmul.f32 %v381, %v396
          %v399 = vmul.f32 %v382, %v396
          %vm403 = vcmask 1046528
          %v404 = vrot.slane %v397, 1
          %v405 = vrot.slane %v398, 1
          %v406 = vsel %vm403, %v404, %v405
          %v407 = vrot.slane %v399, 1
          %v408 = vsel %vm403, %v405, %v407
          %v412 = vadd.f32 %v390, %v406
          %v413 = vadd.f32 %v391, %v408
          %v414 = vadd.f32 %v392, %v407
          %v415 = vlaneseq
          %v416 = vshrl.u32 %v415, 7
          %v417 = vsub.s32 2, %v416
          %v418 = vrot.slane %v357, %v417
          %v419 = vmul.f32 %v380, %v418
          %v420 = vmul.f32 %v381, %v418
          %v421 = vmul.f32 %v382, %v418
          %vm425 = vcmask 1045504
          %v426 = vrot.slane %v419, 2
          %v427 = vrot.slane %v420, 2
          %v428 = vsel %vm425, %v426, %v427
          %v429 = vrot.slane %v421, 2
          %v430 = vsel %vm425, %v427, %v429
          %v434 = vadd.f32 %v412, %v428
          %v435 = vadd.f32 %v413, %v430
          %v436 = vadd.f32 %v414, %v429
          %s437 = sadd.s32 %s377, 1
          %s438 = smul.u32 %s437, 24
          %s439 = scalar_lea.vmem %s343, %s438
          %v440 = vld [vmem:[%s439] sm:$0xff]
          %v441 = vld [vmem:[%s439 + $0x8] sm:$0xff]
          %v442 = vld [vmem:[%s439 + $0x10] sm:$0x3f]
          %v443 = vlaneseq
          %v444 = vshrl.u32 %v443, 7
          %v445 = vsub.s32 3, %v444
          %v446 = vrot.slane %v357, %v445
          %v447 = vmul.f32 %v440, %v446
          %v448 = vmul.f32 %v441, %v446
          %v449 = vmul.f32 %v442, %v446
          %v450 = vadd.f32 %v434, %v447
          %v451 = vadd.f32 %v435, %v448
          %v452 = vadd.f32 %v436, %v449
          %v453 = vlaneseq
          %v454 = vshrl.u32 %v453, 7
          %v455 = vsub.s32 4, %v454
          %v456 = vrot.slane %v357, %v455
          %v457 = vmul.f32 %v440, %v456
          %v458 = vmul.f32 %v441, %v456
          %v459 = vmul.f32 %v442, %v456
          %v463 = vrot.slane %v457, 1
          %v464 = vrot.slane %v458, 1
          %v465 = vsel %vm403, %v463, %v464
          %v466 = vrot.slane %v459, 1
          %v467 = vsel %vm403, %v464, %v466
          %v471 = vadd.f32 %v450, %v465
          %v472 = vadd.f32 %v451, %v467
          %v473 = vadd.f32 %v452, %v466
          %v474 = vlaneseq
          %v475 = vshrl.u32 %v474, 7
          %v476 = vsub.s32 5, %v475
          %v477 = vrot.slane %v357, %v476
          %v478 = vmul.f32 %v440, %v477
          %v479 = vmul.f32 %v441, %v477
          %v480 = vmul.f32 %v442, %v477
          %v484 = vrot.slane %v478, 2
          %v485 = vrot.slane %v479, 2
          %v486 = vsel %vm425, %v484, %v485
          %v487 = vrot.slane %v480, 2
          %v488 = vsel %vm425, %v485, %v487
          %v492 = vadd.f32 %v471, %v486
          %v493 = vadd.f32 %v472, %v488
          %v494 = vadd.f32 %v473, %v487
          %s495 = sadd.s32 %s377, 2
          %s496 = smul.u32 %s495, 24
          %s497 = scalar_lea.vmem %s343, %s496
          %v498 = vld [vmem:[%s497] sm:$0xff]
          %v499 = vld [vmem:[%s497 + $0x8] sm:$0xff]
          %v500 = vld [vmem:[%s497 + $0x10] sm:$0x3f]
          %v501 = vlaneseq
          %v502 = vshrl.u32 %v501, 7
          %v503 = vsub.s32 6, %v502
          %v504 = vrot.slane %v357, %v503
          %v505 = vmul.f32 %v498, %v504
          %v506 = vmul.f32 %v499, %v504
          %v507 = vmul.f32 %v500, %v504
          %v508 = vadd.f32 %v492, %v505
          %v509 = vadd.f32 %v493, %v506
          %v510 = vadd.f32 %v494, %v507
          %v511 = vlaneseq
          %v512 = vshrl.u32 %v511, 7
          %v513 = vsub.s32 7, %v512
          %v514 = vrot.slane %v357, %v513
          %v515 = vmul.f32 %v498, %v514
          %v516 = vmul.f32 %v499, %v514
          %v517 = vmul.f32 %v500, %v514
          %v521 = vrot.slane %v515, 1
          %v522 = vrot.slane %v516, 1
          %v523 = vsel %vm403, %v521, %v522
          %v524 = vrot.slane %v517, 1
          %v525 = vsel %vm403, %v522, %v524
          %v529 = vadd.f32 %v508, %v523
          %v530 = vadd.f32 %v509, %v525
          %v531 = vadd.f32 %v510, %v524
          %v532 = vlaneseq
          %v533 = vshrl.u32 %v532, 7
          %v534 = vsub.s32 0, %v533
          %v535 = vrot.slane %v358, %v534
          %v536 = vmul.f32 %v498, %v535
          %v537 = vmul.f32 %v499, %v535
          %v538 = vmul.f32 %v500, %v535
          %v542 = vrot.slane %v536, 2
          %v543 = vrot.slane %v537, 2
          %v544 = vsel %vm425, %v542, %v543
          %v545 = vrot.slane %v538, 2
          %v546 = vsel %vm425, %v543, %v545
          %v550 = vadd.f32 %v529, %v544
          %v551 = vadd.f32 %v530, %v546
          %v552 = vadd.f32 %v531, %v545
          %v554 = vlaneseq
          %v555 = vshrl.u32 %v554, 7
          %v556 = vsub.s32 0, %v555
          %v557 = vrot.slane %v359, %v556
          %v559 = vadd.f32 %v550, %v557
          %v560 = vadd.f32 %v551, %v557
          %v561 = vadd.f32 %v552, %v557
          %v562 = vpack.c.bf16 %v560, %v559
          %v563 = vpack.c.bf16 %v561, %v561
          %v565 = vlaneseq
          %v566 = vshrl.u32 %v565, 7
          %v567 = vsub.s32 0, %v566
          %v568 = vrot.slane %v368, %v567
          %v578 = vunpack.c.l.b16 %v360
          %v579 = vunpack.c.l.b16 %v361
          %v580 = vunpack.c.l.b16 %v362
          %v581 = vunpack.c.l.b16 %v363
          %v582 = vunpack.c.l.b16 %v364
          %v583 = vunpack.c.l.b16 %v365
          %v584 = vunpack.c.l.b16 %v366
          %v585 = vunpack.c.l.b16 %v367
          %v586 = vpack.c.b16 %v579, %v578
          %v587 = vpack.c.b16 %v581, %v580
          %v588 = vpack.c.b16 %v583, %v582
          %v589 = vpack.c.b16 %v585, %v584
          %vm594 = vcmask 523264
          %v596 = vsel %vm594, %v562, 0
          %v599 = vsel %vm594, %v563, 0
          %601 = vmatprep.subr.bf16.mxu0 0
          %602 = vmatpush1.bf16.msra.mxu0 %v586
          %603 = vmatprep.subr.bf16.mxu0 0
          %604 = vmatpush1.bf16.msra.mxu0 %v587
          %605 = vmatprep.subr.bf16.mxu0 0
          %606 = vmatpush1.bf16.msra.mxu0 %v588
          %607 = vmatprep.subr.bf16.mxu0 0
          %608 = vmatpush1.bf16.msra.mxu0 %v589
          %609 = vmatprep.subr.bf16.mxu0 0
          %610 = vmatpush1.bf16.msra.mxu0 0
          %611 = vmatprep.subr.bf16.mxu0 0
          %612 = vmatpush1.bf16.msra.mxu0 0
          %613 = vmatprep.subr.bf16.mxu0 0
          %614 = vmatpush1.bf16.msra.mxu0 0
          %615 = vmatprep.subr.bf16.mxu0 0
          %616 = vmatpush1.bf16.msra.mxu0 0
          %617 = vmatprep.subr.bf16.mxu0 0
          %618 = vmatpush1.bf16.msra.mxu0 0
          %619 = vmatprep.subr.bf16.mxu0 0
          %620 = vmatpush1.bf16.msra.mxu0 0
          %621 = vmatprep.subr.bf16.mxu0 0
          %622 = vmatpush1.bf16.msra.mxu0 0
          %623 = vmatprep.subr.bf16.mxu0 0
          %624 = vmatpush1.bf16.msra.mxu0 0
          %625 = vmatprep.subr.bf16.mxu0 0
          %626 = vmatpush1.bf16.msra.mxu0 0
          %627 = vmatprep.subr.bf16.mxu0 0
          %628 = vmatpush1.bf16.msra.mxu0 0
          %629 = vmatprep.subr.bf16.mxu0 0
          %630 = vmatpush1.bf16.msra.mxu0 0
          %631 = vmatprep.subr.bf16.mxu0 0
          %632 = vmatpush1.bf16.msra.mxu0 0
          %633 = vmatprep.mubr.bf16.mxu0 0
          %634 = vmatmul.mubr.bf16.gmra.mrb[0].mxu0 %v596
          %v635 = vpop.f32.mrb[0].mxu0
          %v636 = vadd.f32 %v568, %v635
          %v637 = vpop.f32.mrb[0].mxu0
          %v638 = vpop.f32.mrb[0].mxu0
          %v639 = vadd.f32 %v568, %v638
          %v640 = vpop.f32.mrb[0].mxu0
          %641 = vmatprep.mubr.bf16.mxu0 0
          %642 = vmatmul.mubr.bf16.gmra.mrb[0].mxu0 %v599
          %v643 = vpop.f32.mrb[0].mxu0
          %v644 = vadd.f32 %v568, %v643
          %v645 = vpop.f32.mrb[0].mxu0
          %v646 = vpop.f32.mrb[0].mxu0
          %v647 = vpop.f32.mrb[0].mxu0
          %648 = vdwg.mxu0
          %v649 = vmax.f32 %v636, 0.0
          %v650 = vmax.f32 %v639, 0.0
          %v651 = vmax.f32 %v644, 0.0
          %v653 = vlaneseq
          %v654 = vshrl.u32 %v653, 7
          %v655 = vsub.s32 0, %v654
          %v656 = vrot.slane %v369, %v655
          %v658 = vmul.f32 %v649, %v656
          %v659 = vmul.f32 %v650, %v656
          %v660 = vmul.f32 %v651, %v656
          %v662 = vlaneseq
          %v663 = vshrl.u32 %v662, 7
          %v664 = vsub.s32 0, %v663
          %v665 = vrot.slane %v370, %v664
          %v667 = vadd.f32 %v658, %v665
          %v668 = vadd.f32 %v659, %v665
          %v669 = vadd.f32 %v660, %v665
          %s670 = smul.u32 %s372, 24
          %s671 = scalar_lea.vmem %s353, %s670
          %672 = vst [vmem:[%s671] sm:$0xff] %v667
          %673 = vst [vmem:[%s671 + $0x8] sm:$0xff] %v668
          %674 = vst [vmem:[%s671 + $0x10] sm:$0xf] %v669
        $region69: #{separable_convolution_model.11} parent=47 // loop_footer
          %s376 = sadd.s32 1, %s372
        $region70: #{separable_convolution_model.11} parent=47 // loop_footer_branch
          %371 = sbr.rel target = $region66
        $region71: #{separable_convolution_model.11} parent=47 // loop_exit
          _
        %s675 = smul.u32 20, %s26
        %p676 = scmp.lt.s32.totalorder %s25, 1
        %s677 = scalar_select %p676, %s25, 1
        %p678 = scmp.lt.s32.totalorder %s675, 19
        %s679 = scalar_select %p678, %s675, 19
        %s680 = smul.addr %s679, 3
        %s681 = smul.addr %s677, 60
        %s682 = sadd.s32 %s680, %s681
        %s683 = smul.addr %s682, 8
        %s684 = scalar_lea.vmem %s7, %s683
        // Predicated region
        $region72: #{separable_convolution_model.11} parent=47 // pred_check
          %p685 = pneg %p205
        $region73: #{separable_convolution_model.11} parent=47 // pred_check_branch
          %687 = sbr.rel (%p685) target = $region75
        $region74: #{separable_convolution_model.11} parent=47 // pred_region
          %s688 = smul.u32 20, %s26
        $region75: #{separable_convolution_model.11} parent=47 // pred_fallthru
          _
      $region48: #{separable_convolution_model.11} parent=5 // pred_fallthru
        _
      %p689 = scmp.le.s32.totalorder 2, %s16
      // Predicated region
      $region76: #{separable_convolution_model.11} parent=5 // pred_check
        %p690 = pneg %p689
      $region77: #{separable_convolution_model.11} parent=5 // pred_check_branch
        %692 = sbr.rel (%p690) target = $region79
      $region78: #{separable_convolution_model.11} parent=5 // pred_region
        %s693 = ssub.s32 %s16, 2
        // Predicated region
        $region80: #{separable_convolution_model.11} parent=78 // pred_check
          %p694 = pneg %p211
        $region81: #{separable_convolution_model.11} parent=78 // pred_check_branch
          %696 = sbr.rel (%p694) target = $region83
        $region82: #{separable_convolution_model.11} parent=78 // pred_region
          %s697 = smul.u32 20, %s28
          %p698 = scmp.lt.s32.totalorder %s27, 1
          %s699 = scalar_select %p698, %s27, 1
          %p700 = scmp.lt.s32.totalorder %s697, 19
          %s701 = scalar_select %p700, %s697, 19
          %s702 = smul.addr %s701, 3
          %s703 = smul.addr %s699, 60
          %s704 = sadd.s32 %s702, %s703
          %s705 = smul.addr %s704, 8
          %s706 = scalar_lea.vmem %s7, %s705
        $region83: #{separable_convolution_model.11} parent=78 // pred_fallthru
          _
      $region79: #{separable_convolution_model.11} parent=5 // pred_fallthru
        _
    $region6: #{separable_convolution_model.11} parent=1 // loop_footer
      %s20 = sadd.s32 1, %s16
    $region7: #{separable_convolution_model.11} parent=1 // loop_footer_branch
      %15 = sbr.rel target = $region3
    $region8: #{separable_convolution_model.11} parent=1 // loop_exit
      _
    %707 = vsyncpa [#allocation3], 1
    %s708 = scalar_lea.sflag [#allocation3], 1
    %709 = vsyncpa %s708, 1
    %710 = vsyncpa [#allocation5], 1
    %711 = vsyncpa [#allocation8], 1

// kernel: separable_convolution_model.13
$region0: #{separable_convolution_model.13}
  #allocation0 [shape = 'u32[]', space=smem, size = 0x4, offset = 0x4, fixed_abs, tag = 'smem constant byte address 0x4 - core index']
  #allocation1 [shape = 'u32[144,128]{1,0:T(1,128)}', space=vmem, size = 0x12000, scoped, tag = 'internal scratch']
  %s0 = inlined_call_operand.vmem [shape: f32[2,9,9,128], index: 0, kind: input, shape index: {}]
  %s1 = inlined_call_operand.vmem [shape: f32[9,128], index: 1, kind: input, shape index: {}]
  %s2 = inlined_call_operand.hbm [shape: f32[1,128], index: 2, kind: input, shape index: {}]
  %s3 = inlined_call_operand.vmem [shape: bf16[128,256], index: 3, kind: input, shape index: {}]
  %s4 = inlined_call_operand.vmem [shape: f32[1,256], index: 4, kind: input, shape index: {}]
  %s5 = inlined_call_operand.vmem [shape: f32[1,256], index: 5, kind: input, shape index: {}]
  %s6 = inlined_call_operand.vmem [shape: f32[1,256], index: 6, kind: input, shape index: {}]
  %s7 = inlined_call_operand.vmem [shape: f32[2,7,7,256], index: 7, kind: output, shape index: {}]
  %s8 = sld [smem:[#allocation0]]
  $region72: #{separable_convolution_model.13} parent=0
    _
  %s10 = ssub.s32 1, %s8
  %s11 = scalar_select 0, %s10, %s8
  $region1: #{separable_convolution_model.13} parent=0
    #allocation2 [shape = 'u8[512]{0}', space=vmem, size = 0x400, scoped, tag = 'input window, operand 2, single buffered']
    #allocation3 [shape = 's32[2]{0}', space=sflag, size = 0x8, scoped, tag = 'scoped memory for separable_convolution_model.13']
    %12 = vsyncpa [#allocation3], 0
    loop: start=0, step=1, limit=4
    $region2: #{separable_convolution_model.13} parent=1 // loop_pre_header
      _
    $region3: #{separable_convolution_model.13} parent=1 // loop_header
      %s14 = sphi 0, %s18
      %p15 = scmp.ge.s32.totalorder %s14, 4
      %s21 = sphi 0, %s33
      %s22 = sphi 0, %s29
      %s23 = sphi 0, %s21
      %s24 = sphi 0, %s22
      %s25 = sphi 0, %s23
      %s26 = sphi 0, %s24
      %s36 = sphi 0, %s38
      %s39 = sphi 0, %s36
      %s40 = sphi 0, %s39
      %s56 = sphi 0, %s40
      %s60 = sphi 0, %s60
      %s62 = sphi 0, %s60
      %s63 = sphi 0, %s62
      %s77 = sphi 0, %s63
      %s81 = sphi 0, %s81
      %s83 = sphi 0, %s81
      %s84 = sphi 0, %s83
      %s98 = sphi 0, %s84
      %s102 = sphi 0, %s102
      %s104 = sphi 0, %s102
      %s105 = sphi 0, %s104
      %s119 = sphi 0, %s105
      %s123 = sphi 0, %s123
      %s125 = sphi 0, %s123
      %s126 = sphi 0, %s125
      %s140 = sphi 0, %s126
      %s144 = sphi 0, %s144
      %s146 = sphi 0, %s144
      %s147 = sphi 0, %s146
      %s161 = sphi 0, %s147
      %s165 = sphi 0, %s165
      %s167 = sphi 0, %s165
      %s168 = sphi 0, %s167
      %s182 = sphi 0, %s168
      %s190 = sphi 0, %s192
      %s193 = sphi 0, %s190
      %s194 = sphi 0, %s193
      %s210 = sphi 0, %s194
    $region4: #{separable_convolution_model.13} parent=1 // loop_header_branch
      %17 = sbr.rel (%p15) target = $region8
    $region5: #{separable_convolution_model.13} parent=1 // loop_body
      %s19 = ssub.s32 %s14, 1
      %s20 = ssub.s32 %s14, 2
      %s27 = sadd.s32 1, %s22
      %p28 = scmp.ge.s32.totalorder %s27, 1
      %s29 = scalar_select %p28, 0, %s27
      %s30 = sadd.s32 1, %s21
      %s31 = scalar_select %p28, %s30, %s21
      %p32 = scmp.ge.s32.totalorder %s31, 2
      %s33 = scalar_select %p32, 0, %s31
      %s34 = ssub.s32 %s21, %s33
      %p35 = scmp.eq.s32.totalorder %s34, 0
      %s37 = sadd.s32 %s36, 1
      %s38 = scalar_select %p35, %s36, %s37
      %p41 = pneg %p35
      %p42 = scmp.eq.s32.totalorder %s14, 1
      %p43 = por %p41, %p42
      %p44 = scmp.ne.s32.totalorder %s36, %s39
      %p45 = scmp.eq.s32.totalorder %s14, 0
      %p46 = por %p44, %p45
      %p47 = scmp.ne.s32.totalorder %s36, %s39
      %p48 = scmp.eq.s32.totalorder %s19, 1
      %p49 = por %p47, %p48
      %p50 = scmp.ne.s32.totalorder %s39, %s40
      %p51 = scmp.eq.s32.totalorder %s19, 0
      %p52 = por %p50, %p51
      %p53 = scmp.ne.s32.totalorder %s39, %s40
      %p54 = scmp.eq.s32.totalorder %s20, 1
      %p55 = por %p53, %p54
      %p57 = scmp.ne.s32.totalorder %s40, %s56
      %p58 = scmp.eq.s32.totalorder %s20, 0
      %p59 = por %p57, %p58
      %s61 = sadd.s32 %s60, 1
      %p64 = scmp.eq.s32.totalorder %s14, 1
      %p65 = scmp.ne.s32.totalorder %s60, %s62
      %p66 = scmp.eq.s32.totalorder %s14, 0
      %p67 = por %p65, %p66
      %p68 = scmp.ne.s32.totalorder %s60, %s62
      %p69 = scmp.eq.s32.totalorder %s19, 1
      %p70 = por %p68, %p69
      %p71 = scmp.ne.s32.totalorder %s62, %s63
      %p72 = scmp.eq.s32.totalorder %s19, 0
      %p73 = por %p71, %p72
      %p74 = scmp.ne.s32.totalorder %s62, %s63
      %p75 = scmp.eq.s32.totalorder %s20, 1
      %p76 = por %p74, %p75
      %p78 = scmp.ne.s32.totalorder %s63, %s77
      %p79 = scmp.eq.s32.totalorder %s20, 0
      %p80 = por %p78, %p79
      %s82 = sadd.s32 %s81, 1
      %p85 = scmp.eq.s32.totalorder %s14, 1
      %p86 = scmp.ne.s32.totalorder %s81, %s83
      %p87 = scmp.eq.s32.totalorder %s14, 0
      %p88 = por %p86, %p87
      %p89 = scmp.ne.s32.totalorder %s81, %s83
      %p90 = scmp.eq.s32.totalorder %s19, 1
      %p91 = por %p89, %p90
      %p92 = scmp.ne.s32.totalorder %s83, %s84
      %p93 = scmp.eq.s32.totalorder %s19, 0
      %p94 = por %p92, %p93
      %p95 = scmp.ne.s32.totalorder %s83, %s84
      %p96 = scmp.eq.s32.totalorder %s20, 1
      %p97 = por %p95, %p96
      %p99 = scmp.ne.s32.totalorder %s84, %s98
      %p100 = scmp.eq.s32.totalorder %s20, 0
      %p101 = por %p99, %p100
      %s103 = sadd.s32 %s102, 1
      %p106 = scmp.eq.s32.totalorder %s14, 1
      %p107 = scmp.ne.s32.totalorder %s102, %s104
      %p108 = scmp.eq.s32.totalorder %s14, 0
      %p109 = por %p107, %p108
      %p110 = scmp.ne.s32.totalorder %s102, %s104
      %p111 = scmp.eq.s32.totalorder %s19, 1
      %p112 = por %p110, %p111
      %p113 = scmp.ne.s32.totalorder %s104, %s105
      %p114 = scmp.eq.s32.totalorder %s19, 0
      %p115 = por %p113, %p114
      %p116 = scmp.ne.s32.totalorder %s104, %s105
      %p117 = scmp.eq.s32.totalorder %s20, 1
      %p118 = por %p116, %p117
      %p120 = scmp.ne.s32.totalorder %s105, %s119
      %p121 = scmp.eq.s32.totalorder %s20, 0
      %p122 = por %p120, %p121
      %s124 = sadd.s32 %s123, 1
      %p127 = scmp.eq.s32.totalorder %s14, 1
      %p128 = scmp.ne.s32.totalorder %s123, %s125
      %p129 = scmp.eq.s32.totalorder %s14, 0
      %p130 = por %p128, %p129
      %p131 = scmp.ne.s32.totalorder %s123, %s125
      %p132 = scmp.eq.s32.totalorder %s19, 1
      %p133 = por %p131, %p132
      %p134 = scmp.ne.s32.totalorder %s125, %s126
      %p135 = scmp.eq.s32.totalorder %s19, 0
      %p136 = por %p134, %p135
      %p137 = scmp.ne.s32.totalorder %s125, %s126
      %p138 = scmp.eq.s32.totalorder %s20, 1
      %p139 = por %p137, %p138
      %p141 = scmp.ne.s32.totalorder %s126, %s140
      %p142 = scmp.eq.s32.totalorder %s20, 0
      %p143 = por %p141, %p142
      %s145 = sadd.s32 %s144, 1
      %p148 = scmp.eq.s32.totalorder %s14, 1
      %p149 = scmp.ne.s32.totalorder %s144, %s146
      %p150 = scmp.eq.s32.totalorder %s14, 0
      %p151 = por %p149, %p150
      %p152 = scmp.ne.s32.totalorder %s144, %s146
      %p153 = scmp.eq.s32.totalorder %s19, 1
      %p154 = por %p152, %p153
      %p155 = scmp.ne.s32.totalorder %s146, %s147
      %p156 = scmp.eq.s32.totalorder %s19, 0
      %p157 = por %p155, %p156
      %p158 = scmp.ne.s32.totalorder %s146, %s147
      %p159 = scmp.eq.s32.totalorder %s20, 1
      %p160 = por %p158, %p159
      %p162 = scmp.ne.s32.totalorder %s147, %s161
      %p163 = scmp.eq.s32.totalorder %s20, 0
      %p164 = por %p162, %p163
      %s166 = sadd.s32 %s165, 1
      %p169 = scmp.eq.s32.totalorder %s14, 1
      %p170 = scmp.ne.s32.totalorder %s165, %s167
      %p171 = scmp.eq.s32.totalorder %s14, 0
      %p172 = por %p170, %p171
      %p173 = scmp.ne.s32.totalorder %s165, %s167
      %p174 = scmp.eq.s32.totalorder %s19, 1
      %p175 = por %p173, %p174
      %p176 = scmp.ne.s32.totalorder %s167, %s168
      %p177 = scmp.eq.s32.totalorder %s19, 0
      %p178 = por %p176, %p177
      %p179 = scmp.ne.s32.totalorder %s167, %s168
      %p180 = scmp.eq.s32.totalorder %s20, 1
      %p181 = por %p179, %p180
      %p183 = scmp.ne.s32.totalorder %s168, %s182
      %p184 = scmp.eq.s32.totalorder %s20, 0
      %p185 = por %p183, %p184
      %s186 = ssub.s32 %s21, %s33
      %s187 = ssub.s32 %s22, %s29
      %s188 = sor.u32 %s186, %s187
      %p189 = scmp.eq.s32.totalorder %s188, 0
      %s191 = sadd.s32 %s190, 1
      %s192 = scalar_select %p189, %s190, %s191
      %p195 = pneg %p189
      %p196 = scmp.eq.s32.totalorder %s14, 1
      %p197 = por %p195, %p196
      %p198 = scmp.ne.s32.totalorder %s190, %s193
      %p199 = scmp.eq.s32.totalorder %s14, 0
      %p200 = por %p198, %p199
      %p201 = scmp.ne.s32.totalorder %s190, %s193
      %p202 = scmp.eq.s32.totalorder %s19, 1
      %p203 = por %p201, %p202
      %p204 = scmp.ne.s32.totalorder %s193, %s194
      %p205 = scmp.eq.s32.totalorder %s19, 0
      %p206 = por %p204, %p205
      %p207 = scmp.ne.s32.totalorder %s193, %s194
      %p208 = scmp.eq.s32.totalorder %s20, 1
      %p209 = por %p207, %p208
      %p211 = scmp.ne.s32.totalorder %s194, %s210
      %p212 = scmp.eq.s32.totalorder %s20, 0
      %p213 = por %p211, %p212
      %p214 = scmp.le.s32.totalorder 1, %s14
      %p215 = scmp.lt.s32.totalorder %s14, 3
      %p216 = pnand %p214, %p215
      %p217 = pneg %p216
      // Predicated region
      $region9: #{separable_convolution_model.13} parent=5 // pred_check
        _
      $region10: #{separable_convolution_model.13} parent=5 // pred_check_branch
        %219 = sbr.rel (%p216) target = $region12
      $region11: #{separable_convolution_model.13} parent=5 // pred_region
        %s220 = ssub.s32 %s14, 1
        // Predicated region
        $region13: #{separable_convolution_model.13} parent=11 // pred_check
          %p221 = pneg %p73
        $region14: #{separable_convolution_model.13} parent=11 // pred_check_branch
          %223 = sbr.rel (%p221) target = $region16
        $region15: #{separable_convolution_model.13} parent=11 // pred_region
          _
        $region16: #{separable_convolution_model.13} parent=11 // pred_fallthru
          _
        // Predicated region
        $region17: #{separable_convolution_model.13} parent=11 // pred_check
          %p224 = pneg %p94
        $region18: #{separable_convolution_model.13} parent=11 // pred_check_branch
          %226 = sbr.rel (%p224) target = $region20
        $region19: #{separable_convolution_model.13} parent=11 // pred_region
          %s228 = ssub.s32 16, 16
          %229 = vsyncadd [#allocation3], %s228
          %s231 = sshll.u32 [#allocation2], 4
          %s232 = int_to_ptr.vmem [resolvable:$true] %s231
          %234 = dma.hbm_to_vmem [thread:$0]  %s2, 16, %s232, [#allocation3]
        $region20: #{separable_convolution_model.13} parent=11 // pred_fallthru
          _
        // Predicated region
        $region21: #{separable_convolution_model.13} parent=11 // pred_check
          %p235 = pneg %p115
        $region22: #{separable_convolution_model.13} parent=11 // pred_check_branch
          %237 = sbr.rel (%p235) target = $region24
        $region23: #{separable_convolution_model.13} parent=11 // pred_region
          _
        $region24: #{separable_convolution_model.13} parent=11 // pred_fallthru
          _
        // Predicated region
        $region25: #{separable_convolution_model.13} parent=11 // pred_check
          %p238 = pneg %p136
        $region26: #{separable_convolution_model.13} parent=11 // pred_check_branch
          %240 = sbr.rel (%p238) target = $region28
        $region27: #{separable_convolution_model.13} parent=11 // pred_region
          _
        $region28: #{separable_convolution_model.13} parent=11 // pred_fallthru
          _
        // Predicated region
        $region29: #{separable_convolution_model.13} parent=11 // pred_check
          %p241 = pneg %p157
        $region30: #{separable_convolution_model.13} parent=11 // pred_check_branch
          %243 = sbr.rel (%p241) target = $region32
        $region31: #{separable_convolution_model.13} parent=11 // pred_region
          _
        $region32: #{separable_convolution_model.13} parent=11 // pred_fallthru
          _
        // Predicated region
        $region33: #{separable_convolution_model.13} parent=11 // pred_check
          %p244 = pneg %p178
        $region34: #{separable_convolution_model.13} parent=11 // pred_check_branch
          %246 = sbr.rel (%p244) target = $region36
        $region35: #{separable_convolution_model.13} parent=11 // pred_region
          _
        $region36: #{separable_convolution_model.13} parent=11 // pred_fallthru
          _
      $region12: #{separable_convolution_model.13} parent=5 // pred_fallthru
        _
      %p247 = scmp.lt.s32.totalorder %s14, 2
      // Predicated region
      $region37: #{separable_convolution_model.13} parent=5 // pred_check
        %p248 = pneg %p247
      $region38: #{separable_convolution_model.13} parent=5 // pred_check_branch
        %250 = sbr.rel (%p248) target = $region40
      $region39: #{separable_convolution_model.13} parent=5 // pred_region
        // Predicated region
        $region41: #{separable_convolution_model.13} parent=39 // pred_check
          %p251 = pneg %p46
        $region42: #{separable_convolution_model.13} parent=39 // pred_check_branch
          %253 = sbr.rel (%p251) target = $region44
        $region43: #{separable_convolution_model.13} parent=39 // pred_region
          %p254 = scmp.lt.s32.totalorder %s21, 1
          %s255 = scalar_select %p254, %s21, 1
          %s256 = smul.addr %s255, 18
          %s257 = smul.addr %s256, 8
          %s258 = scalar_lea.vmem %s0, %s257
        $region44: #{separable_convolution_model.13} parent=39 // pred_fallthru
          _
      $region40: #{separable_convolution_model.13} parent=5 // pred_fallthru
        _
      %p259 = scmp.le.s32.totalorder 1, %s14
      %p260 = scmp.lt.s32.totalorder %s14, 3
      %p261 = pnand %p259, %p260
      %p262 = pneg %p261
      // Predicated region
      $region45: #{separable_convolution_model.13} parent=5 // pred_check
        _
      $region46: #{separable_convolution_model.13} parent=5 // pred_check_branch
        %264 = sbr.rel (%p261) target = $region48
      $region47: #{separable_convolution_model.13} parent=5 // pred_region
        %s265 = ssub.s32 %s14, 1
        // Predicated region
        $region49: #{separable_convolution_model.13} parent=47 // pred_check
          %p266 = pneg %p94
        $region50: #{separable_convolution_model.13} parent=47 // pred_check_branch
          %268 = sbr.rel (%p266) target = $region52
        $region51: #{separable_convolution_model.13} parent=47 // pred_region
          %269 = dma.done [#allocation3], 16
        $region52: #{separable_convolution_model.13} parent=47 // pred_fallthru
          _
        %p270 = scmp.lt.s32.totalorder %s23, 1
        %s271 = scalar_select %p270, %s23, 1
        %s272 = smul.addr %s271, 18
        %s273 = smul.addr %s272, 8
        %s274 = scalar_lea.vmem %s0, %s273
        %p275 = pneg %p52
        %p276 = pneg %p49
        %p277 = pneg %p73
        %p278 = pneg %p70
        %p279 = pneg %p94
        %p280 = pneg %p91
        %p281 = pneg %p115
        %p282 = pneg %p112
        %p283 = pneg %p136
        %p284 = pneg %p133
        %p285 = pneg %p157
        %p286 = pneg %p154
        %p287 = pneg %p178
        %p288 = pneg %p175
        %p289 = pneg %p206
        %p290 = pneg %p203
        %s291 = smul.u32 7, %s24
        %p292 = scmp.lt.s32.totalorder %s23, 1
        %s293 = scalar_select %p292, %s23, 1
        %p294 = scmp.lt.s32.totalorder %s291, 6
        %s295 = scalar_select %p294, %s291, 6
        %s296 = smul.addr %s295, 2
        %s297 = smul.addr %s293, 14
        %s298 = sadd.s32 %s296, %s297
        %s299 = smul.addr %s298, 8
        %s300 = scalar_lea.vmem %s7, %s299
        %p301 = scmp.lt.s32.totalorder %s23, 1
        %s302 = scalar_select %p301, %s23, 1
        %s303 = smul.addr %s302, 18
        %s304 = smul.addr %s303, 8
        %s305 = scalar_lea.vmem %s0, %s304
        %s306 = smul.u32 7, %s24
        %p307 = scmp.lt.s32.totalorder %s23, 1
        %s308 = scalar_select %p307, %s23, 1
        %p309 = scmp.lt.s32.totalorder %s306, 6
        %s310 = scalar_select %p309, %s306, 6
        %s311 = smul.addr %s310, 2
        %s312 = smul.addr %s308, 14
        %s313 = sadd.s32 %s311, %s312
        %s314 = smul.addr %s313, 8
        %s315 = scalar_lea.vmem %s7, %s314
        %s316 = smul.u32 7, %s24
        %s318 = smul.u32 %s24, 7
        %v319 = vld [vmem:[%s1] sm:$0xff]
        %v320 = vld [vmem:[%s1 + $0x8] sm:$0x1]
        %v321 = vld [vmem:[#allocation2] sm:$0x1]
        %v322 = vld [vmem:[%s3] sm:$0xff]
        %v323 = vld [vmem:[%s3 + $0x8] sm:$0xff]
        %v324 = vld [vmem:[%s3 + $0x10] sm:$0xff]
        %v325 = vld [vmem:[%s3 + $0x18] sm:$0xff]
        %v326 = vld [vmem:[%s3 + $0x20] sm:$0xff]
        %v327 = vld [vmem:[%s3 + $0x28] sm:$0xff]
        %v328 = vld [vmem:[%s3 + $0x30] sm:$0xff]
        %v329 = vld [vmem:[%s3 + $0x38] sm:$0xff]
        %v330 = vld [vmem:[%s3 + $0x40] sm:$0xff]
        %v331 = vld [vmem:[%s3 + $0x48] sm:$0xff]
        %v332 = vld [vmem:[%s3 + $0x50] sm:$0xff]
        %v333 = vld [vmem:[%s3 + $0x58] sm:$0xff]
        %v334 = vld [vmem:[%s3 + $0x60] sm:$0xff]
        %v335 = vld [vmem:[%s3 + $0x68] sm:$0xff]
        %v336 = vld [vmem:[%s3 + $0x70] sm:$0xff]
        %v337 = vld [vmem:[%s3 + $0x78] sm:$0xff]
        %v338 = vld [vmem:[%s4] sm:$0x3]
        %v339 = vld [vmem:[%s5] sm:$0x3]
        %v340 = vld [vmem:[%s6] sm:$0x3]
        loop: start=0, step=1, limit=7
        $region53: #{separable_convolution_model.13} parent=47 // loop_pre_header
          _
        $region54: #{separable_convolution_model.13} parent=47 // loop_header
          %s342 = sphi 0, %s346
          %p343 = scmp.ge.s32.totalorder %s342, 7
        $region55: #{separable_convolution_model.13} parent=47 // loop_header_branch
          %345 = sbr.rel (%p343) target = $region59
        $region56: #{separable_convolution_model.13} parent=47 // loop_body
          %s347 = sadd.s32 %s318, %s342
          %s348 = smul.u32 %s347, 16
          %s349 = scalar_lea.vmem %s305, %s348
          %v350 = vld [vmem:[%s349] sm:$0xff]
          %v351 = vld [vmem:[%s349 + $0x8] sm:$0x1]
          %v352 = vlaneseq
          %v353 = vshrl.u32 %v352, 7
          %v354 = vsub.s32 0, %v353
          %v355 = vrot.slane %v319, %v354
          %v356 = vmul.f32 %v350, %v355
          %v357 = vadd.f32 %v356, 0.0
          %v358 = vlaneseq
          %v359 = vshrl.u32 %v358, 7
          %v360 = vsub.s32 1, %v359
          %v361 = vrot.slane %v319, %v360
          %v362 = vmul.f32 %v350, %v361
          %v364 = vrot.slane %v362, 1
          %v366 = vadd.f32 %v357, %v364
          %v367 = vlaneseq
          %v368 = vshrl.u32 %v367, 7
          %v369 = vsub.s32 2, %v368
          %v370 = vrot.slane %v319, %v369
          %v371 = vmul.f32 %v350, %v370
          %v372 = vmul.f32 %v351, %v370
          %vm375 = vcmask 1045504
          %v376 = vrot.slane %v371, 2
          %v377 = vrot.slane %v372, 2
          %v378 = vsel %vm375, %v376, %v377
          %v380 = vadd.f32 %v366, %v378
          %s381 = sadd.s32 %s347, 1
          %s382 = smul.u32 %s381, 16
          %s383 = scalar_lea.vmem %s305, %s382
          %v384 = vld [vmem:[%s383] sm:$0xff]
          %v385 = vld [vmem:[%s383 + $0x8] sm:$0x1]
          %v386 = vlaneseq
          %v387 = vshrl.u32 %v386, 7
          %v388 = vsub.s32 3, %v387
          %v389 = vrot.slane %v319, %v388
          %v390 = vmul.f32 %v384, %v389
          %v391 = vadd.f32 %v380, %v390
          %v392 = vlaneseq
          %v393 = vshrl.u32 %v392, 7
          %v394 = vsub.s32 4, %v393
          %v395 = vrot.slane %v319, %v394
          %v396 = vmul.f32 %v384, %v395
          %v398 = vrot.slane %v396, 1
          %v400 = vadd.f32 %v391, %v398
          %v401 = vlaneseq
          %v402 = vshrl.u32 %v401, 7
          %v403 = vsub.s32 5, %v402
          %v404 = vrot.slane %v319, %v403
          %v405 = vmul.f32 %v384, %v404
          %v406 = vmul.f32 %v385, %v404
          %v409 = vrot.slane %v405, 2
          %v410 = vrot.slane %v406, 2
          %v411 = vsel %vm375, %v409, %v410
          %v413 = vadd.f32 %v400, %v411
          %s414 = sadd.s32 %s347, 2
          %s415 = smul.u32 %s414, 16
          %s416 = scalar_lea.vmem %s305, %s415
          %v417 = vld [vmem:[%s416] sm:$0xff]
          %v418 = vld [vmem:[%s416 + $0x8] sm:$0x1]
          %v419 = vlaneseq
          %v420 = vshrl.u32 %v419, 7
          %v421 = vsub.s32 6, %v420
          %v422 = vrot.slane %v319, %v421
          %v423 = vmul.f32 %v417, %v422
          %v424 = vadd.f32 %v413, %v423
          %v425 = vlaneseq
          %v426 = vshrl.u32 %v425, 7
          %v427 = vsub.s32 7, %v426
          %v428 = vrot.slane %v319, %v427
          %v429 = vmul.f32 %v417, %v428
          %v431 = vrot.slane %v429, 1
          %v433 = vadd.f32 %v424, %v431
          %v434 = vlaneseq
          %v435 = vshrl.u32 %v434, 7
          %v436 = vsub.s32 0, %v435
          %v437 = vrot.slane %v320, %v436
          %v438 = vmul.f32 %v417, %v437
          %v439 = vmul.f32 %v418, %v437
          %v442 = vrot.slane %v438, 2
          %v443 = vrot.slane %v439, 2
          %v444 = vsel %vm375, %v442, %v443
          %v446 = vadd.f32 %v433, %v444
          %v448 = vlaneseq
          %v449 = vshrl.u32 %v448, 7
          %v450 = vsub.s32 0, %v449
          %v451 = vrot.slane %v321, %v450
          %v453 = vadd.f32 %v446, %v451
          %v454 = vpack.c.bf16 %v453, %v453
          %v456 = vlaneseq
          %v457 = vshrl.u32 %v456, 7
          %v458 = vsub.s32 0, %v457
          %v459 = vrot.slane %v338, %v458
          %v460 = vlaneseq
          %v461 = vshrl.u32 %v460, 7
          %v462 = vsub.s32 1, %v461
          %v463 = vrot.slane %v338, %v462
          %v482 = vunpack.c.l.b16 %v322
          %v483 = vunpack.c.h.b16 %v322
          %v484 = vunpack.c.l.b16 %v323
          %v485 = vunpack.c.h.b16 %v323
          %v486 = vunpack.c.l.b16 %v324
          %v487 = vunpack.c.h.b16 %v324
          %v488 = vunpack.c.l.b16 %v325
          %v489 = vunpack.c.h.b16 %v325
          %v490 = vunpack.c.l.b16 %v326
          %v491 = vunpack.c.h.b16 %v326
          %v492 = vunpack.c.l.b16 %v327
          %v493 = vunpack.c.h.b16 %v327
          %v494 = vunpack.c.l.b16 %v328
          %v495 = vunpack.c.h.b16 %v328
          %v496 = vunpack.c.l.b16 %v329
          %v497 = vunpack.c.h.b16 %v329
          %v498 = vunpack.c.l.b16 %v330
          %v499 = vunpack.c.h.b16 %v330
          %v500 = vunpack.c.l.b16 %v331
          %v501 = vunpack.c.h.b16 %v331
          %v502 = vunpack.c.l.b16 %v332
          %v503 = vunpack.c.h.b16 %v332
          %v504 = vunpack.c.l.b16 %v333
          %v505 = vunpack.c.h.b16 %v333
          %v506 = vunpack.c.l.b16 %v334
          %v507 = vunpack.c.h.b16 %v334
          %v508 = vunpack.c.l.b16 %v335
          %v509 = vunpack.c.h.b16 %v335
          %v510 = vunpack.c.l.b16 %v336
          %v511 = vunpack.c.h.b16 %v336
          %v512 = vunpack.c.l.b16 %v337
          %v513 = vunpack.c.h.b16 %v337
          %v514 = vpack.c.b16 %v484, %v482
          %v515 = vpack.c.b16 %v485, %v483
          %v516 = vpack.c.b16 %v488, %v486
          %v517 = vpack.c.b16 %v489, %v487
          %v518 = vpack.c.b16 %v492, %v490
          %v519 = vpack.c.b16 %v493, %v491
          %v520 = vpack.c.b16 %v496, %v494
          %v521 = vpack.c.b16 %v497, %v495
          %v522 = vpack.c.b16 %v500, %v498
          %v523 = vpack.c.b16 %v501, %v499
          %v524 = vpack.c.b16 %v504, %v502
          %v525 = vpack.c.b16 %v505, %v503
          %v526 = vpack.c.b16 %v508, %v506
          %v527 = vpack.c.b16 %v509, %v507
          %v528 = vpack.c.b16 %v512, %v510
          %v529 = vpack.c.b16 %v513, %v511
          %546 = vmatprep.subr.bf16.mxu0 %v515
          %547 = vmatpush1.bf16.msra.mxu0 %v514
          %548 = vmatprep.subr.bf16.mxu0 %v517
          %549 = vmatpush1.bf16.msra.mxu0 %v516
          %550 = vmatprep.subr.bf16.mxu0 %v519
          %551 = vmatpush1.bf16.msra.mxu0 %v518
          %552 = vmatprep.subr.bf16.mxu0 %v521
          %553 = vmatpush1.bf16.msra.mxu0 %v520
          %554 = vmatprep.subr.bf16.mxu0 %v523
          %555 = vmatpush1.bf16.msra.mxu0 %v522
          %556 = vmatprep.subr.bf16.mxu0 %v525
          %557 = vmatpush1.bf16.msra.mxu0 %v524
          %558 = vmatprep.subr.bf16.mxu0 %v527
          %559 = vmatpush1.bf16.msra.mxu0 %v526
          %560 = vmatprep.subr.bf16.mxu0 %v529
          %561 = vmatpush1.bf16.msra.mxu0 %v528
          %562 = vmatprep.subr.bf16.mxu0 0
          %563 = vmatpush1.bf16.msra.mxu0 0
          %564 = vmatprep.subr.bf16.mxu0 0
          %565 = vmatpush1.bf16.msra.mxu0 0
          %566 = vmatprep.subr.bf16.mxu0 0
          %567 = vmatpush1.bf16.msra.mxu0 0
          %568 = vmatprep.subr.bf16.mxu0 0
          %569 = vmatpush1.bf16.msra.mxu0 0
          %570 = vmatprep.subr.bf16.mxu0 0
          %571 = vmatpush1.bf16.msra.mxu0 0
          %572 = vmatprep.subr.bf16.mxu0 0
          %573 = vmatpush1.bf16.msra.mxu0 0
          %574 = vmatprep.subr.bf16.mxu0 0
          %575 = vmatpush1.bf16.msra.mxu0 0
          %576 = vmatprep.subr.bf16.mxu0 0
          %577 = vmatpush1.bf16.msra.mxu0 0
          %578 = vmatprep.mubr.bf16.mxu0 0
          %579 = vmatmul.mubr.bf16.gmra.mrb[0].mxu0 %v454
          %v580 = vpop.f32.mrb[0].mxu0
          %v581 = vadd.f32 %v459, %v580
          %v582 = vpop.f32.mrb[0].mxu0
          %v583 = vadd.f32 %v463, %v582
          %v584 = vpop.f32.mrb[0].mxu0
          %v585 = vpop.f32.mrb[0].mxu0
          %586 = vdwg.mxu0
          %v587 = vmax.f32 %v581, 0.0
          %v588 = vmax.f32 %v583, 0.0
          %v590 = vlaneseq
          %v591 = vshrl.u32 %v590, 7
          %v592 = vsub.s32 0, %v591
          %v593 = vrot.slane %v339, %v592
          %v594 = vlaneseq
          %v595 = vshrl.u32 %v594, 7
          %v596 = vsub.s32 1, %v595
          %v597 = vrot.slane %v339, %v596
          %v600 = vmul.f32 %v587, %v593
          %v601 = vmul.f32 %v588, %v597
          %v603 = vlaneseq
          %v604 = vshrl.u32 %v603, 7
          %v605 = vsub.s32 0, %v604
          %v606 = vrot.slane %v340, %v605
          %v607 = vlaneseq
          %v608 = vshrl.u32 %v607, 7
          %v609 = vsub.s32 1, %v608
          %v610 = vrot.slane %v340, %v609
          %v613 = vadd.f32 %v600, %v606
          %v614 = vadd.f32 %v601, %v610
          %s615 = smul.u32 %s342, 2
          %s616 = smul.addr %s615, 8
          %s617 = scalar_lea.vmem %s315, %s616
          %618 = vst [vmem:[%s617] sm:$0x7f] %v613
          %619 = vst [vmem:[%s617 + $0x8] sm:$0x7f] %v614
        $region57: #{separable_convolution_model.13} parent=47 // loop_footer
          %s346 = sadd.s32 1, %s342
        $region58: #{separable_convolution_model.13} parent=47 // loop_footer_branch
          %341 = sbr.rel target = $region54
        $region59: #{separable_convolution_model.13} parent=47 // loop_exit
          _
        %s620 = smul.u32 7, %s24
        %p621 = scmp.lt.s32.totalorder %s23, 1
        %s622 = scalar_select %p621, %s23, 1
        %p623 = scmp.lt.s32.totalorder %s620, 6
        %s624 = scalar_select %p623, %s620, 6
        %s625 = smul.addr %s624, 2
        %s626 = smul.addr %s622, 14
        %s627 = sadd.s32 %s625, %s626
        %s628 = smul.addr %s627, 8
        %s629 = scalar_lea.vmem %s7, %s628
        // Predicated region
        $region60: #{separable_convolution_model.13} parent=47 // pred_check
          %p630 = pneg %p203
        $region61: #{separable_convolution_model.13} parent=47 // pred_check_branch
          %632 = sbr.rel (%p630) target = $region63
        $region62: #{separable_convolution_model.13} parent=47 // pred_region
          %s633 = smul.u32 7, %s24
        $region63: #{separable_convolution_model.13} parent=47 // pred_fallthru
          _
      $region48: #{separable_convolution_model.13} parent=5 // pred_fallthru
        _
      %p634 = scmp.le.s32.totalorder 2, %s14
      // Predicated region
      $region64: #{separable_convolution_model.13} parent=5 // pred_check
        %p635 = pneg %p634
      $region65: #{separable_convolution_model.13} parent=5 // pred_check_branch
        %637 = sbr.rel (%p635) target = $region67
      $region66: #{separable_convolution_model.13} parent=5 // pred_region
        %s638 = ssub.s32 %s14, 2
        // Predicated region
        $region68: #{separable_convolution_model.13} parent=66 // pred_check
          %p639 = pneg %p209
        $region69: #{separable_convolution_model.13} parent=66 // pred_check_branch
          %641 = sbr.rel (%p639) target = $region71
        $region70: #{separable_convolution_model.13} parent=66 // pred_region
          %s642 = smul.u32 7, %s26
          %p643 = scmp.lt.s32.totalorder %s25, 1
          %s644 = scalar_select %p643, %s25, 1
          %p645 = scmp.lt.s32.totalorder %s642, 6
          %s646 = scalar_select %p645, %s642, 6
          %s647 = smul.addr %s646, 2
          %s648 = smul.addr %s644, 14
          %s649 = sadd.s32 %s647, %s648
          %s650 = smul.addr %s649, 8
          %s651 = scalar_lea.vmem %s7, %s650
        $region71: #{separable_convolution_model.13} parent=66 // pred_fallthru
          _
      $region67: #{separable_convolution_model.13} parent=5 // pred_fallthru
        _
    $region6: #{separable_convolution_model.13} parent=1 // loop_footer
      %s18 = sadd.s32 1, %s14
    $region7: #{separable_convolution_model.13} parent=1 // loop_footer_branch
      %13 = sbr.rel target = $region3
    $region8: #{separable_convolution_model.13} parent=1 // loop_exit
      _
    %652 = vsyncpa [#allocation3], 1
    %s653 = scalar_lea.sflag [#allocation3], 1
    %654 = vsyncpa %s653, 1

// kernel: separable_convolution_model.12
$region0: #{separable_convolution_model.12}
  #allocation0 [shape = 'u32[]', space=smem, size = 0x4, offset = 0x4, fixed_abs, tag = 'smem constant byte address 0x4 - core index']
  #allocation1 [shape = 'u32[144,128]{1,0:T(1,128)}', space=vmem, size = 0x12000, scoped, tag = 'internal scratch']
  #allocation2 [shape = 'f32[18,128]{1,0:T(8,128)}', space=vmem, size = 0x3000, scoped, tag = 'scratch operand']
  %s0 = inlined_call_operand.vmem [shape: f32[2,20,20,128], index: 0, kind: input, shape index: {}]
  %s1 = inlined_call_operand.vmem [shape: f32[9,128], index: 1, kind: input, shape index: {}]
  %s2 = inlined_call_operand.hbm [shape: f32[1,128], index: 2, kind: input, shape index: {}]
  %s3 = inlined_call_operand.vmem [shape: bf16[128,128], index: 3, kind: input, shape index: {}]
  %s4 = inlined_call_operand.hbm [shape: f32[1,128], index: 4, kind: input, shape index: {}]
  %s5 = inlined_call_operand.hbm [shape: f32[1,128], index: 5, kind: input, shape index: {}]
  %s6 = inlined_call_operand.hbm [shape: f32[1,128], index: 6, kind: input, shape index: {}]
  %s7 = inlined_call_operand.vmem [shape: f32[2,9,9,128], index: 7, kind: output, shape index: {}]
  %s8 = sld [smem:[#allocation0]]
  $region84: #{separable_convolution_model.12} parent=0
    _
  %s10 = ssub.s32 1, %s8
  %s11 = scalar_select 0, %s10, %s8
  $region1: #{separable_convolution_model.12} parent=0
    #allocation3 [shape = 'u8[512]{0}', space=vmem, size = 0x400, scoped, tag = 'input window, operand 2, single buffered']
    #allocation4 [shape = 's32[2]{0}', space=sflag, size = 0x8, scoped, tag = 'scoped memory for separable_convolution_model.12']
    #allocation5 [shape = 'u8[512]{0}', space=vmem, size = 0x400, scoped, tag = 'input window, operand 4, single buffered']
    #allocation6 [shape = 's32[1]{0}', space=sflag, size = 0x4, scoped, tag = 'scoped memory for separable_convolution_model.12']
    #allocation7 [shape = 'u8[512]{0}', space=vmem, size = 0x400, scoped, tag = 'input window, operand 5, single buffered']
    #allocation8 [shape = 'u8[512]{0}', space=vmem, size = 0x400, scoped, tag = 'input window, operand 6, single buffered']
    #allocation9 [shape = 's32[1]{0}', space=sflag, size = 0x4, scoped, tag = 'scoped memory for separable_convolution_model.12']
    %12 = vsyncpa [#allocation4], 0
    %13 = vsyncpa [#allocation6], 0
    %14 = vsyncpa [#allocation9], 0
    loop: start=0, step=1, limit=4
    $region2: #{separable_convolution_model.12} parent=1 // loop_pre_header
      _
    $region3: #{separable_convolution_model.12} parent=1 // loop_header
      %s16 = sphi 0, %s20
      %p17 = scmp.ge.s32.totalorder %s16, 4
      %s23 = sphi 0, %s35
      %s24 = sphi 0, %s31
      %s25 = sphi 0, %s23
      %s26 = sphi 0, %s24
      %s27 = sphi 0, %s25
      %s28 = sphi 0, %s26
      %s38 = sphi 0, %s40
      %s41 = sphi 0, %s38
      %s42 = sphi 0, %s41
      %s58 = sphi 0, %s42
      %s62 = sphi 0, %s62
      %s64 = sphi 0, %s62
      %s65 = sphi 0, %s64
      %s79 = sphi 0, %s65
      %s83 = sphi 0, %s83
      %s85 = sphi 0, %s83
      %s86 = sphi 0, %s85
      %s100 = sphi 0, %s86
      %s104 = sphi 0, %s104
      %s106 = sphi 0, %s104
      %s107 = sphi 0, %s106
      %s121 = sphi 0, %s107
      %s125 = sphi 0, %s125
      %s127 = sphi 0, %s125
      %s128 = sphi 0, %s127
      %s142 = sphi 0, %s128
      %s146 = sphi 0, %s146
      %s148 = sphi 0, %s146
      %s149 = sphi 0, %s148
      %s163 = sphi 0, %s149
      %s167 = sphi 0, %s167
      %s169 = sphi 0, %s167
      %s170 = sphi 0, %s169
      %s184 = sphi 0, %s170
      %s192 = sphi 0, %s194
      %s195 = sphi 0, %s192
      %s196 = sphi 0, %s195
      %s212 = sphi 0, %s196
    $region4: #{separable_convolution_model.12} parent=1 // loop_header_branch
      %19 = sbr.rel (%p17) target = $region8
    $region5: #{separable_convolution_model.12} parent=1 // loop_body
      %s21 = ssub.s32 %s16, 1
      %s22 = ssub.s32 %s16, 2
      %s29 = sadd.s32 1, %s24
      %p30 = scmp.ge.s32.totalorder %s29, 1
      %s31 = scalar_select %p30, 0, %s29
      %s32 = sadd.s32 1, %s23
      %s33 = scalar_select %p30, %s32, %s23
      %p34 = scmp.ge.s32.totalorder %s33, 2
      %s35 = scalar_select %p34, 0, %s33
      %s36 = ssub.s32 %s23, %s35
      %p37 = scmp.eq.s32.totalorder %s36, 0
      %s39 = sadd.s32 %s38, 1
      %s40 = scalar_select %p37, %s38, %s39
      %p43 = pneg %p37
      %p44 = scmp.eq.s32.totalorder %s16, 1
      %p45 = por %p43, %p44
      %p46 = scmp.ne.s32.totalorder %s38, %s41
      %p47 = scmp.eq.s32.totalorder %s16, 0
      %p48 = por %p46, %p47
      %p49 = scmp.ne.s32.totalorder %s38, %s41
      %p50 = scmp.eq.s32.totalorder %s21, 1
      %p51 = por %p49, %p50
      %p52 = scmp.ne.s32.totalorder %s41, %s42
      %p53 = scmp.eq.s32.totalorder %s21, 0
      %p54 = por %p52, %p53
      %p55 = scmp.ne.s32.totalorder %s41, %s42
      %p56 = scmp.eq.s32.totalorder %s22, 1
      %p57 = por %p55, %p56
      %p59 = scmp.ne.s32.totalorder %s42, %s58
      %p60 = scmp.eq.s32.totalorder %s22, 0
      %p61 = por %p59, %p60
      %s63 = sadd.s32 %s62, 1
      %p66 = scmp.eq.s32.totalorder %s16, 1
      %p67 = scmp.ne.s32.totalorder %s62, %s64
      %p68 = scmp.eq.s32.totalorder %s16, 0
      %p69 = por %p67, %p68
      %p70 = scmp.ne.s32.totalorder %s62, %s64
      %p71 = scmp.eq.s32.totalorder %s21, 1
      %p72 = por %p70, %p71
      %p73 = scmp.ne.s32.totalorder %s64, %s65
      %p74 = scmp.eq.s32.totalorder %s21, 0
      %p75 = por %p73, %p74
      %p76 = scmp.ne.s32.totalorder %s64, %s65
      %p77 = scmp.eq.s32.totalorder %s22, 1
      %p78 = por %p76, %p77
      %p80 = scmp.ne.s32.totalorder %s65, %s79
      %p81 = scmp.eq.s32.totalorder %s22, 0
      %p82 = por %p80, %p81
      %s84 = sadd.s32 %s83, 1
      %p87 = scmp.eq.s32.totalorder %s16, 1
      %p88 = scmp.ne.s32.totalorder %s83, %s85
      %p89 = scmp.eq.s32.totalorder %s16, 0
      %p90 = por %p88, %p89
      %p91 = scmp.ne.s32.totalorder %s83, %s85
      %p92 = scmp.eq.s32.totalorder %s21, 1
      %p93 = por %p91, %p92
      %p94 = scmp.ne.s32.totalorder %s85, %s86
      %p95 = scmp.eq.s32.totalorder %s21, 0
      %p96 = por %p94, %p95
      %p97 = scmp.ne.s32.totalorder %s85, %s86
      %p98 = scmp.eq.s32.totalorder %s22, 1
      %p99 = por %p97, %p98
      %p101 = scmp.ne.s32.totalorder %s86, %s100
      %p102 = scmp.eq.s32.totalorder %s22, 0
      %p103 = por %p101, %p102
      %s105 = sadd.s32 %s104, 1
      %p108 = scmp.eq.s32.totalorder %s16, 1
      %p109 = scmp.ne.s32.totalorder %s104, %s106
      %p110 = scmp.eq.s32.totalorder %s16, 0
      %p111 = por %p109, %p110
      %p112 = scmp.ne.s32.totalorder %s104, %s106
      %p113 = scmp.eq.s32.totalorder %s21, 1
      %p114 = por %p112, %p113
      %p115 = scmp.ne.s32.totalorder %s106, %s107
      %p116 = scmp.eq.s32.totalorder %s21, 0
      %p117 = por %p115, %p116
      %p118 = scmp.ne.s32.totalorder %s106, %s107
      %p119 = scmp.eq.s32.totalorder %s22, 1
      %p120 = por %p118, %p119
      %p122 = scmp.ne.s32.totalorder %s107, %s121
      %p123 = scmp.eq.s32.totalorder %s22, 0
      %p124 = por %p122, %p123
      %s126 = sadd.s32 %s125, 1
      %p129 = scmp.eq.s32.totalorder %s16, 1
      %p130 = scmp.ne.s32.totalorder %s125, %s127
      %p131 = scmp.eq.s32.totalorder %s16, 0
      %p132 = por %p130, %p131
      %p133 = scmp.ne.s32.totalorder %s125, %s127
      %p134 = scmp.eq.s32.totalorder %s21, 1
      %p135 = por %p133, %p134
      %p136 = scmp.ne.s32.totalorder %s127, %s128
      %p137 = scmp.eq.s32.totalorder %s21, 0
      %p138 = por %p136, %p137
      %p139 = scmp.ne.s32.totalorder %s127, %s128
      %p140 = scmp.eq.s32.totalorder %s22, 1
      %p141 = por %p139, %p140
      %p143 = scmp.ne.s32.totalorder %s128, %s142
      %p144 = scmp.eq.s32.totalorder %s22, 0
      %p145 = por %p143, %p144
      %s147 = sadd.s32 %s146, 1
      %p150 = scmp.eq.s32.totalorder %s16, 1
      %p151 = scmp.ne.s32.totalorder %s146, %s148
      %p152 = scmp.eq.s32.totalorder %s16, 0
      %p153 = por %p151, %p152
      %p154 = scmp.ne.s32.totalorder %s146, %s148
      %p155 = scmp.eq.s32.totalorder %s21, 1
      %p156 = por %p154, %p155
      %p157 = scmp.ne.s32.totalorder %s148, %s149
      %p158 = scmp.eq.s32.totalorder %s21, 0
      %p159 = por %p157, %p158
      %p160 = scmp.ne.s32.totalorder %s148, %s149
      %p161 = scmp.eq.s32.totalorder %s22, 1
      %p162 = por %p160, %p161
      %p164 = scmp.ne.s32.totalorder %s149, %s163
      %p165 = scmp.eq.s32.totalorder %s22, 0
      %p166 = por %p164, %p165
      %s168 = sadd.s32 %s167, 1
      %p171 = scmp.eq.s32.totalorder %s16, 1
      %p172 = scmp.ne.s32.totalorder %s167, %s169
      %p173 = scmp.eq.s32.totalorder %s16, 0
      %p174 = por %p172, %p173
      %p175 = scmp.ne.s32.totalorder %s167, %s169
      %p176 = scmp.eq.s32.totalorder %s21, 1
      %p177 = por %p175, %p176
      %p178 = scmp.ne.s32.totalorder %s169, %s170
      %p179 = scmp.eq.s32.totalorder %s21, 0
      %p180 = por %p178, %p179
      %p181 = scmp.ne.s32.totalorder %s169, %s170
      %p182 = scmp.eq.s32.totalorder %s22, 1
      %p183 = por %p181, %p182
      %p185 = scmp.ne.s32.totalorder %s170, %s184
      %p186 = scmp.eq.s32.totalorder %s22, 0
      %p187 = por %p185, %p186
      %s188 = ssub.s32 %s23, %s35
      %s189 = ssub.s32 %s24, %s31
      %s190 = sor.u32 %s188, %s189
      %p191 = scmp.eq.s32.totalorder %s190, 0
      %s193 = sadd.s32 %s192, 1
      %s194 = scalar_select %p191, %s192, %s193
      %p197 = pneg %p191
      %p198 = scmp.eq.s32.totalorder %s16, 1
      %p199 = por %p197, %p198
      %p200 = scmp.ne.s32.totalorder %s192, %s195
      %p201 = scmp.eq.s32.totalorder %s16, 0
      %p202 = por %p200, %p201
      %p203 = scmp.ne.s32.totalorder %s192, %s195
      %p204 = scmp.eq.s32.totalorder %s21, 1
      %p205 = por %p203, %p204
      %p206 = scmp.ne.s32.totalorder %s195, %s196
      %p207 = scmp.eq.s32.totalorder %s21, 0
      %p208 = por %p206, %p207
      %p209 = scmp.ne.s32.totalorder %s195, %s196
      %p210 = scmp.eq.s32.totalorder %s22, 1
      %p211 = por %p209, %p210
      %p213 = scmp.ne.s32.totalorder %s196, %s212
      %p214 = scmp.eq.s32.totalorder %s22, 0
      %p215 = por %p213, %p214
      %p216 = scmp.le.s32.totalorder 1, %s16
      %p217 = scmp.lt.s32.totalorder %s16, 3
      %p218 = pnand %p216, %p217
      %p219 = pneg %p218
      // Predicated region
      $region9: #{separable_convolution_model.12} parent=5 // pred_check
        _
      $region10: #{separable_convolution_model.12} parent=5 // pred_check_branch
        %221 = sbr.rel (%p218) target = $region12
      $region11: #{separable_convolution_model.12} parent=5 // pred_region
        %s222 = ssub.s32 %s16, 1
        // Predicated region
        $region13: #{separable_convolution_model.12} parent=11 // pred_check
          %p223 = pneg %p75
        $region14: #{separable_convolution_model.12} parent=11 // pred_check_branch
          %225 = sbr.rel (%p223) target = $region16
        $region15: #{separable_convolution_model.12} parent=11 // pred_region
          _
        $region16: #{separable_convolution_model.12} parent=11 // pred_fallthru
          _
        // Predicated region
        $region17: #{separable_convolution_model.12} parent=11 // pred_check
          %p226 = pneg %p96
        $region18: #{separable_convolution_model.12} parent=11 // pred_check_branch
          %228 = sbr.rel (%p226) target = $region20
        $region19: #{separable_convolution_model.12} parent=11 // pred_region
          %s230 = ssub.s32 16, 16
          %231 = vsyncadd [#allocation4], %s230
          %s233 = sshll.u32 [#allocation3], 4
          %s234 = int_to_ptr.vmem [resolvable:$true] %s233
          %236 = dma.hbm_to_vmem [thread:$0]  %s2, 16, %s234, [#allocation4]
        $region20: #{separable_convolution_model.12} parent=11 // pred_fallthru
          _
        // Predicated region
        $region21: #{separable_convolution_model.12} parent=11 // pred_check
          %p237 = pneg %p117
        $region22: #{separable_convolution_model.12} parent=11 // pred_check_branch
          %239 = sbr.rel (%p237) target = $region24
        $region23: #{separable_convolution_model.12} parent=11 // pred_region
          _
        $region24: #{separable_convolution_model.12} parent=11 // pred_fallthru
          _
        // Predicated region
        $region25: #{separable_convolution_model.12} parent=11 // pred_check
          %p240 = pneg %p138
        $region26: #{separable_convolution_model.12} parent=11 // pred_check_branch
          %242 = sbr.rel (%p240) target = $region28
        $region27: #{separable_convolution_model.12} parent=11 // pred_region
          %s244 = ssub.s32 16, 16
          %245 = vsyncadd [#allocation6], %s244
          %s247 = sshll.u32 [#allocation5], 4
          %s248 = int_to_ptr.vmem [resolvable:$true] %s247
          %250 = dma.hbm_to_vmem [thread:$0]  %s4, 16, %s248, [#allocation6]
        $region28: #{separable_convolution_model.12} parent=11 // pred_fallthru
          _
        // Predicated region
        $region29: #{separable_convolution_model.12} parent=11 // pred_check
          %p251 = pneg %p159
        $region30: #{separable_convolution_model.12} parent=11 // pred_check_branch
          %253 = sbr.rel (%p251) target = $region32
        $region31: #{separable_convolution_model.12} parent=11 // pred_region
          %s255 = ssub.s32 16, 16
          %256 = vsyncadd [#allocation6], %s255
          %s258 = sshll.u32 [#allocation7], 4
          %s259 = int_to_ptr.vmem [resolvable:$true] %s258
          %261 = dma.hbm_to_vmem [thread:$0]  %s5, 16, %s259, [#allocation6]
        $region32: #{separable_convolution_model.12} parent=11 // pred_fallthru
          _
        // Predicated region
        $region33: #{separable_convolution_model.12} parent=11 // pred_check
          %p262 = pneg %p180
        $region34: #{separable_convolution_model.12} parent=11 // pred_check_branch
          %264 = sbr.rel (%p262) target = $region36
        $region35: #{separable_convolution_model.12} parent=11 // pred_region
          %s266 = ssub.s32 16, 16
          %267 = vsyncadd [#allocation9], %s266
          %s269 = sshll.u32 [#allocation8], 4
          %s270 = int_to_ptr.vmem [resolvable:$true] %s269
          %272 = dma.hbm_to_vmem [thread:$0]  %s6, 16, %s270, [#allocation9]
        $region36: #{separable_convolution_model.12} parent=11 // pred_fallthru
          _
      $region12: #{separable_convolution_model.12} parent=5 // pred_fallthru
        _
      %p273 = scmp.lt.s32.totalorder %s16, 2
      // Predicated region
      $region37: #{separable_convolution_model.12} parent=5 // pred_check
        %p274 = pneg %p273
      $region38: #{separable_convolution_model.12} parent=5 // pred_check_branch
        %276 = sbr.rel (%p274) target = $region40
      $region39: #{separable_convolution_model.12} parent=5 // pred_region
        // Predicated region
        $region41: #{separable_convolution_model.12} parent=39 // pred_check
          %p277 = pneg %p48
        $region42: #{separable_convolution_model.12} parent=39 // pred_check_branch
          %279 = sbr.rel (%p277) target = $region44
        $region43: #{separable_convolution_model.12} parent=39 // pred_region
          %p280 = scmp.lt.s32.totalorder %s23, 1
          %s281 = scalar_select %p280, %s23, 1
          %s282 = smul.addr %s281, 60
          %s283 = smul.addr %s282, 8
          %s284 = scalar_lea.vmem %s0, %s283
        $region44: #{separable_convolution_model.12} parent=39 // pred_fallthru
          _
      $region40: #{separable_convolution_model.12} parent=5 // pred_fallthru
        _
      %p285 = scmp.le.s32.totalorder 1, %s16
      %p286 = scmp.lt.s32.totalorder %s16, 3
      %p287 = pnand %p285, %p286
      %p288 = pneg %p287
      // Predicated region
      $region45: #{separable_convolution_model.12} parent=5 // pred_check
        _
      $region46: #{separable_convolution_model.12} parent=5 // pred_check_branch
        %290 = sbr.rel (%p287) target = $region48
      $region47: #{separable_convolution_model.12} parent=5 // pred_region
        %s291 = ssub.s32 %s16, 1
        // Predicated region
        $region49: #{separable_convolution_model.12} parent=47 // pred_check
          %p292 = pneg %p96
        $region50: #{separable_convolution_model.12} parent=47 // pred_check_branch
          %294 = sbr.rel (%p292) target = $region52
        $region51: #{separable_convolution_model.12} parent=47 // pred_region
          %295 = dma.done [#allocation4], 16
        $region52: #{separable_convolution_model.12} parent=47 // pred_fallthru
          _
        // Predicated region
        $region53: #{separable_convolution_model.12} parent=47 // pred_check
          %p296 = pneg %p138
        $region54: #{separable_convolution_model.12} parent=47 // pred_check_branch
          %298 = sbr.rel (%p296) target = $region56
        $region55: #{separable_convolution_model.12} parent=47 // pred_region
          %299 = dma.done [#allocation6], 16
        $region56: #{separable_convolution_model.12} parent=47 // pred_fallthru
          _
        // Predicated region
        $region57: #{separable_convolution_model.12} parent=47 // pred_check
          %p300 = pneg %p159
        $region58: #{separable_convolution_model.12} parent=47 // pred_check_branch
          %302 = sbr.rel (%p300) target = $region60
        $region59: #{separable_convolution_model.12} parent=47 // pred_region
          %303 = dma.done [#allocation6], 16
        $region60: #{separable_convolution_model.12} parent=47 // pred_fallthru
          _
        // Predicated region
        $region61: #{separable_convolution_model.12} parent=47 // pred_check
          %p304 = pneg %p180
        $region62: #{separable_convolution_model.12} parent=47 // pred_check_branch
          %306 = sbr.rel (%p304) target = $region64
        $region63: #{separable_convolution_model.12} parent=47 // pred_region
          %307 = dma.done [#allocation9], 16
        $region64: #{separable_convolution_model.12} parent=47 // pred_fallthru
          _
        %p308 = scmp.lt.s32.totalorder %s25, 1
        %s309 = scalar_select %p308, %s25, 1
        %s310 = smul.addr %s309, 60
        %s311 = smul.addr %s310, 8
        %s312 = scalar_lea.vmem %s0, %s311
        %p313 = pneg %p54
        %p314 = pneg %p51
        %p315 = pneg %p75
        %p316 = pneg %p72
        %p317 = pneg %p96
        %p318 = pneg %p93
        %p319 = pneg %p117
        %p320 = pneg %p114
        %p321 = pneg %p138
        %p322 = pneg %p135
        %p323 = pneg %p159
        %p324 = pneg %p156
        %p325 = pneg %p180
        %p326 = pneg %p177
        %p327 = pneg %p208
        %p328 = pneg %p205
        %s329 = smul.u32 9, %s26
        %p330 = scmp.lt.s32.totalorder %s25, 1
        %s331 = scalar_select %p330, %s25, 1
        %p332 = scmp.lt.s32.totalorder %s329, 8
        %s333 = scalar_select %p332, %s329, 8
        %s334 = smul.addr %s333, 2
        %s335 = smul.addr %s331, 18
        %s336 = sadd.s32 %s334, %s335
        %s337 = smul.addr %s336, 8
        %s338 = scalar_lea.vmem %s7, %s337
        %p339 = scmp.lt.s32.totalorder %s25, 1
        %s340 = scalar_select %p339, %s25, 1
        %s341 = smul.addr %s340, 60
        %s342 = smul.addr %s341, 8
        %s343 = scalar_lea.vmem %s0, %s342
        %s344 = smul.u32 9, %s26
        %p345 = scmp.lt.s32.totalorder %s25, 1
        %s346 = scalar_select %p345, %s25, 1
        %p347 = scmp.lt.s32.totalorder %s344, 8
        %s348 = scalar_select %p347, %s344, 8
        %s349 = smul.addr %s348, 2
        %s350 = smul.addr %s346, 18
        %s351 = sadd.s32 %s349, %s350
        %s352 = smul.addr %s351, 8
        %s353 = scalar_lea.vmem %s7, %s352
        %s354 = smul.u32 9, %s26
        %s356 = smul.u32 %s26, 18
        %v357 = vld [vmem:[%s1] sm:$0xff]
        %v358 = vld [vmem:[%s1 + $0x8] sm:$0x1]
        %v359 = vld [vmem:[#allocation3] sm:$0x1]
        %v360 = vld [vmem:[%s3] sm:$0xf]
        %v361 = vld [vmem:[%s3 + $0x4] sm:$0xf]
        %v362 = vld [vmem:[%s3 + $0x8] sm:$0xf]
        %v363 = vld [vmem:[%s3 + $0xc] sm:$0xf]
        %v364 = vld [vmem:[%s3 + $0x10] sm:$0xf]
        %v365 = vld [vmem:[%s3 + $0x14] sm:$0xf]
        %v366 = vld [vmem:[%s3 + $0x18] sm:$0xf]
        %v367 = vld [vmem:[%s3 + $0x1c] sm:$0xf]
        %v368 = vld [vmem:[%s3 + $0x20] sm:$0xf]
        %v369 = vld [vmem:[%s3 + $0x24] sm:$0xf]
        %v370 = vld [vmem:[%s3 + $0x28] sm:$0xf]
        %v371 = vld [vmem:[%s3 + $0x2c] sm:$0xf]
        %v372 = vld [vmem:[%s3 + $0x30] sm:$0xf]
        %v373 = vld [vmem:[%s3 + $0x34] sm:$0xf]
        %v374 = vld [vmem:[%s3 + $0x38] sm:$0xf]
        %v375 = vld [vmem:[%s3 + $0x3c] sm:$0xf]
        %v376 = vld [vmem:[#allocation5] sm:$0x1]
        %v377 = vld [vmem:[#allocation7] sm:$0x1]
        %v378 = vld [vmem:[#allocation8] sm:$0x1]
        loop: start=0, step=1, limit=9
        $region65: #{separable_convolution_model.12} parent=47 // loop_pre_header
          _
        $region66: #{separable_convolution_model.12} parent=47 // loop_header
          %s380 = sphi 0, %s384
          %p381 = scmp.ge.s32.totalorder %s380, 9
        $region67: #{separable_convolution_model.12} parent=47 // loop_header_branch
          %383 = sbr.rel (%p381) target = $region71
        $region68: #{separable_convolution_model.12} parent=47 // loop_body
          %s385 = smul.u32 %s380, 2
          %s386 = sadd.s32 %s356, %s385
          %s387 = smul.u32 %s386, 24
          %s388 = scalar_lea.vmem %s343, %s387
          %v389 = vld [vmem:[%s388] sm:$0xff]
          %v390 = vld [vmem:[%s388 + $0x8] sm:$0xff]
          %v391 = vld [vmem:[%s388 + $0x10] sm:$0xf]
          %v392 = vlaneseq
          %v393 = vshrl.u32 %v392, 7
          %v394 = vsub.s32 0, %v393
          %v395 = vrot.slane %v357, %v394
          %v396 = vmul.f32 %v389, %v395
          %v397 = vmul.f32 %v390, %v395
          %v398 = vmul.f32 %v391, %v395
          %v399 = vadd.f32 %v396, 0.0
          %v400 = vadd.f32 %v397, 0.0
          %v401 = vadd.f32 %v398, 0.0
          %v402 = vlaneseq
          %v403 = vshrl.u32 %v402, 7
          %v404 = vsub.s32 1, %v403
          %v405 = vrot.slane %v357, %v404
          %v406 = vmul.f32 %v389, %v405
          %v407 = vmul.f32 %v390, %v405
          %v408 = vmul.f32 %v391, %v405
          %vm412 = vcmask 1046528
          %v413 = vrot.slane %v406, 1
          %v414 = vrot.slane %v407, 1
          %v415 = vsel %vm412, %v413, %v414
          %v416 = vrot.slane %v408, 1
          %v417 = vsel %vm412, %v414, %v416
          %v421 = vadd.f32 %v399, %v415
          %v422 = vadd.f32 %v400, %v417
          %v423 = vadd.f32 %v401, %v416
          %v424 = vlaneseq
          %v425 = vshrl.u32 %v424, 7
          %v426 = vsub.s32 2, %v425
          %v427 = vrot.slane %v357, %v426
          %v428 = vmul.f32 %v389, %v427
          %v429 = vmul.f32 %v390, %v427
          %v430 = vmul.f32 %v391, %v427
          %vm434 = vcmask 1045504
          %v435 = vrot.slane %v428, 2
          %v436 = vrot.slane %v429, 2
          %v437 = vsel %vm434, %v435, %v436
          %v438 = vrot.slane %v430, 2
          %v439 = vsel %vm434, %v436, %v438
          %v443 = vadd.f32 %v421, %v437
          %v444 = vadd.f32 %v422, %v439
          %v445 = vadd.f32 %v423, %v438
          %s446 = sadd.s32 %s386, 1
          %s447 = smul.u32 %s446, 24
          %s448 = scalar_lea.vmem %s343, %s447
          %v449 = vld [vmem:[%s448] sm:$0xff]
          %v450 = vld [vmem:[%s448 + $0x8] sm:$0xff]
          %v451 = vld [vmem:[%s448 + $0x10] sm:$0xf]
          %v452 = vlaneseq
          %v453 = vshrl.u32 %v452, 7
          %v454 = vsub.s32 3, %v453
          %v455 = vrot.slane %v357, %v454
          %v456 = vmul.f32 %v449, %v455
          %v457 = vmul.f32 %v450, %v455
          %v458 = vmul.f32 %v451, %v455
          %v459 = vadd.f32 %v443, %v456
          %v460 = vadd.f32 %v444, %v457
          %v461 = vadd.f32 %v445, %v458
          %v462 = vlaneseq
          %v463 = vshrl.u32 %v462, 7
          %v464 = vsub.s32 4, %v463
          %v465 = vrot.slane %v357, %v464
          %v466 = vmul.f32 %v449, %v465
          %v467 = vmul.f32 %v450, %v465
          %v468 = vmul.f32 %v451, %v465
          %v472 = vrot.slane %v466, 1
          %v473 = vrot.slane %v467, 1
          %v474 = vsel %vm412, %v472, %v473
          %v475 = vrot.slane %v468, 1
          %v476 = vsel %vm412, %v473, %v475
          %v480 = vadd.f32 %v459, %v474
          %v481 = vadd.f32 %v460, %v476
          %v482 = vadd.f32 %v461, %v475
          %v483 = vlaneseq
          %v484 = vshrl.u32 %v483, 7
          %v485 = vsub.s32 5, %v484
          %v486 = vrot.slane %v357, %v485
          %v487 = vmul.f32 %v449, %v486
          %v488 = vmul.f32 %v450, %v486
          %v489 = vmul.f32 %v451, %v486
          %v493 = vrot.slane %v487, 2
          %v494 = vrot.slane %v488, 2
          %v495 = vsel %vm434, %v493, %v494
          %v496 = vrot.slane %v489, 2
          %v497 = vsel %vm434, %v494, %v496
          %v501 = vadd.f32 %v480, %v495
          %v502 = vadd.f32 %v481, %v497
          %v503 = vadd.f32 %v482, %v496
          %s504 = sadd.s32 %s386, 2
          %s505 = smul.u32 %s504, 24
          %s506 = scalar_lea.vmem %s343, %s505
          %v507 = vld [vmem:[%s506] sm:$0xff]
          %v508 = vld [vmem:[%s506 + $0x8] sm:$0xff]
          %v509 = vld [vmem:[%s506 + $0x10] sm:$0xf]
          %v510 = vlaneseq
          %v511 = vshrl.u32 %v510, 7
          %v512 = vsub.s32 6, %v511
          %v513 = vrot.slane %v357, %v512
          %v514 = vmul.f32 %v507, %v513
          %v515 = vmul.f32 %v508, %v513
          %v516 = vmul.f32 %v509, %v513
          %v517 = vadd.f32 %v501, %v514
          %v518 = vadd.f32 %v502, %v515
          %v519 = vadd.f32 %v503, %v516
          %v520 = vlaneseq
          %v521 = vshrl.u32 %v520, 7
          %v522 = vsub.s32 7, %v521
          %v523 = vrot.slane %v357, %v522
          %v524 = vmul.f32 %v507, %v523
          %v525 = vmul.f32 %v508, %v523
          %v526 = vmul.f32 %v509, %v523
          %v530 = vrot.slane %v524, 1
          %v531 = vrot.slane %v525, 1
          %v532 = vsel %vm412, %v530, %v531
          %v533 = vrot.slane %v526, 1
          %v534 = vsel %vm412, %v531, %v533
          %v538 = vadd.f32 %v517, %v532
          %v539 = vadd.f32 %v518, %v534
          %v540 = vadd.f32 %v519, %v533
          %v541 = vlaneseq
          %v542 = vshrl.u32 %v541, 7
          %v543 = vsub.s32 0, %v542
          %v544 = vrot.slane %v358, %v543
          %v545 = vmul.f32 %v507, %v544
          %v546 = vmul.f32 %v508, %v544
          %v547 = vmul.f32 %v509, %v544
          %v551 = vrot.slane %v545, 2
          %v552 = vrot.slane %v546, 2
          %v553 = vsel %vm434, %v551, %v552
          %v554 = vrot.slane %v547, 2
          %v555 = vsel %vm434, %v552, %v554
          %v559 = vadd.f32 %v538, %v553
          %v560 = vadd.f32 %v539, %v555
          %v561 = vadd.f32 %v540, %v554
          %v563 = vlaneseq
          %v564 = vshrl.u32 %v563, 7
          %v565 = vsub.s32 0, %v564
          %v566 = vrot.slane %v359, %v565
          %v568 = vadd.f32 %v559, %v566
          %v569 = vadd.f32 %v560, %v566
          %v570 = vadd.f32 %v561, %v566
          %v571 = vpack.c.bf16 %v569, %v568
          %v572 = vpack.c.bf16 %v570, %v570
          %v574 = vlaneseq
          %v575 = vshrl.u32 %v574, 7
          %v576 = vsub.s32 0, %v575
          %v577 = vrot.slane %v376, %v576
          %v595 = vunpack.c.l.b16 %v360
          %v596 = vunpack.c.l.b16 %v361
          %v597 = vunpack.c.l.b16 %v362
          %v598 = vunpack.c.l.b16 %v363
          %v599 = vunpack.c.l.b16 %v364
          %v600 = vunpack.c.l.b16 %v365
          %v601 = vunpack.c.l.b16 %v366
          %v602 = vunpack.c.l.b16 %v367
          %v603 = vunpack.c.l.b16 %v368
          %v604 = vunpack.c.l.b16 %v369
          %v605 = vunpack.c.l.b16 %v370
          %v606 = vunpack.c.l.b16 %v371
          %v607 = vunpack.c.l.b16 %v372
          %v608 = vunpack.c.l.b16 %v373
          %v609 = vunpack.c.l.b16 %v374
          %v610 = vunpack.c.l.b16 %v375
          %v611 = vpack.c.b16 %v596, %v595
          %v612 = vpack.c.b16 %v598, %v597
          %v613 = vpack.c.b16 %v600, %v599
          %v614 = vpack.c.b16 %v602, %v601
          %v615 = vpack.c.b16 %v604, %v603
          %v616 = vpack.c.b16 %v606, %v605
          %v617 = vpack.c.b16 %v608, %v607
          %v618 = vpack.c.b16 %v610, %v609
          %627 = vmatprep.subr.bf16.mxu0 0
          %628 = vmatpush1.bf16.msra.mxu0 %v611
          %629 = vmatprep.subr.bf16.mxu0 0
          %630 = vmatpush1.bf16.msra.mxu0 %v612
          %631 = vmatprep.subr.bf16.mxu0 0
          %632 = vmatpush1.bf16.msra.mxu0 %v613
          %633 = vmatprep.subr.bf16.mxu0 0
          %634 = vmatpush1.bf16.msra.mxu0 %v614
          %635 = vmatprep.subr.bf16.mxu0 0
          %636 = vmatpush1.bf16.msra.mxu0 %v615
          %637 = vmatprep.subr.bf16.mxu0 0
          %638 = vmatpush1.bf16.msra.mxu0 %v616
          %639 = vmatprep.subr.bf16.mxu0 0
          %640 = vmatpush1.bf16.msra.mxu0 %v617
          %641 = vmatprep.subr.bf16.mxu0 0
          %642 = vmatpush1.bf16.msra.mxu0 %v618
          %643 = vmatprep.subr.bf16.mxu0 0
          %644 = vmatpush1.bf16.msra.mxu0 0
          %645 = vmatprep.subr.bf16.mxu0 0
          %646 = vmatpush1.bf16.msra.mxu0 0
          %647 = vmatprep.subr.bf16.mxu0 0
          %648 = vmatpush1.bf16.msra.mxu0 0
          %649 = vmatprep.subr.bf16.mxu0 0
          %650 = vmatpush1.bf16.msra.mxu0 0
          %651 = vmatprep.subr.bf16.mxu0 0
          %652 = vmatpush1.bf16.msra.mxu0 0
          %653 = vmatprep.subr.bf16.mxu0 0
          %654 = vmatpush1.bf16.msra.mxu0 0
          %655 = vmatprep.subr.bf16.mxu0 0
          %656 = vmatpush1.bf16.msra.mxu0 0
          %657 = vmatprep.subr.bf16.mxu0 0
          %658 = vmatpush1.bf16.msra.mxu0 0
          %659 = vmatprep.mubr.bf16.mxu0 0
          %660 = vmatmul.mubr.bf16.gmra.mrb[0].mxu0 %v571
          %v661 = vpop.f32.mrb[0].mxu0
          %v662 = vadd.f32 %v577, %v661
          %v663 = vpop.f32.mrb[0].mxu0
          %v664 = vpop.f32.mrb[0].mxu0
          %v665 = vadd.f32 %v577, %v664
          %v666 = vpop.f32.mrb[0].mxu0
          %667 = vmatprep.mubr.bf16.mxu0 0
          %668 = vmatmul.mubr.bf16.gmra.mrb[0].mxu0 %v572
          %v669 = vpop.f32.mrb[0].mxu0
          %v670 = vadd.f32 %v577, %v669
          %v671 = vpop.f32.mrb[0].mxu0
          %v672 = vpop.f32.mrb[0].mxu0
          %v673 = vpop.f32.mrb[0].mxu0
          %674 = vdwg.mxu0
          %v675 = vmax.f32 %v662, 0.0
          %v676 = vmax.f32 %v665, 0.0
          %v677 = vmax.f32 %v670, 0.0
          %v679 = vlaneseq
          %v680 = vshrl.u32 %v679, 7
          %v681 = vsub.s32 0, %v680
          %v682 = vrot.slane %v377, %v681
          %v684 = vmul.f32 %v675, %v682
          %v685 = vmul.f32 %v676, %v682
          %v686 = vmul.f32 %v677, %v682
          %v688 = vlaneseq
          %v689 = vshrl.u32 %v688, 7
          %v690 = vsub.s32 0, %v689
          %v691 = vrot.slane %v378, %v690
          %v693 = vadd.f32 %v684, %v691
          %v694 = vadd.f32 %v685, %v691
          %v695 = vadd.f32 %v686, %v691
          %v696 = vmul.f32 %v449, %v395
          %v697 = vmul.f32 %v450, %v395
          %v698 = vmul.f32 %v451, %v395
          %v699 = vadd.f32 %v696, 0.0
          %v700 = vadd.f32 %v697, 0.0
          %v701 = vadd.f32 %v698, 0.0
          %v702 = vmul.f32 %v449, %v405
          %v703 = vmul.f32 %v450, %v405
          %v704 = vmul.f32 %v451, %v405
          %v708 = vrot.slane %v702, 1
          %v709 = vrot.slane %v703, 1
          %v710 = vsel %vm412, %v708, %v709
          %v711 = vrot.slane %v704, 1
          %v712 = vsel %vm412, %v709, %v711
          %v716 = vadd.f32 %v699, %v710
          %v717 = vadd.f32 %v700, %v712
          %v718 = vadd.f32 %v701, %v711
          %v719 = vmul.f32 %v449, %v427
          %v720 = vmul.f32 %v450, %v427
          %v721 = vmul.f32 %v451, %v427
          %v725 = vrot.slane %v719, 2
          %v726 = vrot.slane %v720, 2
          %v727 = vsel %vm434, %v725, %v726
          %v728 = vrot.slane %v721, 2
          %v729 = vsel %vm434, %v726, %v728
          %v733 = vadd.f32 %v716, %v727
          %v734 = vadd.f32 %v717, %v729
          %v735 = vadd.f32 %v718, %v728
          %v736 = vmul.f32 %v507, %v455
          %v737 = vmul.f32 %v508, %v455
          %v738 = vmul.f32 %v509, %v455
          %v739 = vadd.f32 %v733, %v736
          %v740 = vadd.f32 %v734, %v737
          %v741 = vadd.f32 %v735, %v738
          %v742 = vmul.f32 %v507, %v465
          %v743 = vmul.f32 %v508, %v465
          %v744 = vmul.f32 %v509, %v465
          %v748 = vrot.slane %v742, 1
          %v749 = vrot.slane %v743, 1
          %v750 = vsel %vm412, %v748, %v749
          %v751 = vrot.slane %v744, 1
          %v752 = vsel %vm412, %v749, %v751
          %v756 = vadd.f32 %v739, %v750
          %v757 = vadd.f32 %v740, %v752
          %v758 = vadd.f32 %v741, %v751
          %v759 = vmul.f32 %v507, %v486
          %v760 = vmul.f32 %v508, %v486
          %v761 = vmul.f32 %v509, %v486
          %v765 = vrot.slane %v759, 2
          %v766 = vrot.slane %v760, 2
          %v767 = vsel %vm434, %v765, %v766
          %v768 = vrot.slane %v761, 2
          %v769 = vsel %vm434, %v766, %v768
          %v773 = vadd.f32 %v756, %v767
          %v774 = vadd.f32 %v757, %v769
          %v775 = vadd.f32 %v758, %v768
          %s776 = sadd.s32 %s386, 3
          %s777 = smul.u32 %s776, 24
          %s778 = scalar_lea.vmem %s343, %s777
          %v779 = vld [vmem:[%s778] sm:$0xff]
          %v780 = vld [vmem:[%s778 + $0x8] sm:$0xff]
          %v781 = vld [vmem:[%s778 + $0x10] sm:$0xf]
          %v782 = vmul.f32 %v779, %v513
          %v783 = vmul.f32 %v780, %v513
          %v784 = vmul.f32 %v781, %v513
          %v785 = vadd.f32 %v773, %v782
          %v786 = vadd.f32 %v774, %v783
          %v787 = vadd.f32 %v775, %v784
          %v788 = vmul.f32 %v779, %v523
          %v789 = vmul.f32 %v780, %v523
          %v790 = vmul.f32 %v781, %v523
          %v794 = vrot.slane %v788, 1
          %v795 = vrot.slane %v789, 1
          %v796 = vsel %vm412, %v794, %v795
          %v797 = vrot.slane %v790, 1
          %v798 = vsel %vm412, %v795, %v797
          %v802 = vadd.f32 %v785, %v796
          %v803 = vadd.f32 %v786, %v798
          %v804 = vadd.f32 %v787, %v797
          %v805 = vmul.f32 %v779, %v544
          %v806 = vmul.f32 %v780, %v544
          %v807 = vmul.f32 %v781, %v544
          %v811 = vrot.slane %v805, 2
          %v812 = vrot.slane %v806, 2
          %v813 = vsel %vm434, %v811, %v812
          %v814 = vrot.slane %v807, 2
          %v815 = vsel %vm434, %v812, %v814
          %v819 = vadd.f32 %v802, %v813
          %v820 = vadd.f32 %v803, %v815
          %v821 = vadd.f32 %v804, %v814
          %v822 = vadd.f32 %v819, %v566
          %v823 = vadd.f32 %v820, %v566
          %v824 = vadd.f32 %v821, %v566
          %v825 = vpack.c.bf16 %v823, %v822
          %v826 = vpack.c.bf16 %v824, %v824
          %827 = vmatprep.subr.bf16.mxu0 0
          %828 = vmatpush1.bf16.msra.mxu0 %v611
          %829 = vmatprep.subr.bf16.mxu0 0
          %830 = vmatpush1.bf16.msra.mxu0 %v612
          %831 = vmatprep.subr.bf16.mxu0 0
          %832 = vmatpush1.bf16.msra.mxu0 %v613
          %833 = vmatprep.subr.bf16.mxu0 0
          %834 = vmatpush1.bf16.msra.mxu0 %v614
          %835 = vmatprep.subr.bf16.mxu0 0
          %836 = vmatpush1.bf16.msra.mxu0 %v615
          %837 = vmatprep.subr.bf16.mxu0 0
          %838 = vmatpush1.bf16.msra.mxu0 %v616
          %839 = vmatprep.subr.bf16.mxu0 0
          %840 = vmatpush1.bf16.msra.mxu0 %v617
          %841 = vmatprep.subr.bf16.mxu0 0
          %842 = vmatpush1.bf16.msra.mxu0 %v618
          %843 = vmatprep.subr.bf16.mxu0 0
          %844 = vmatpush1.bf16.msra.mxu0 0
          %845 = vmatprep.subr.bf16.mxu0 0
          %846 = vmatpush1.bf16.msra.mxu0 0
          %847 = vmatprep.subr.bf16.mxu0 0
          %848 = vmatpush1.bf16.msra.mxu0 0
          %849 = vmatprep.subr.bf16.mxu0 0
          %850 = vmatpush1.bf16.msra.mxu0 0
          %851 = vmatprep.subr.bf16.mxu0 0
          %852 = vmatpush1.bf16.msra.mxu0 0
          %853 = vmatprep.subr.bf16.mxu0 0
          %854 = vmatpush1.bf16.msra.mxu0 0
          %855 = vmatprep.subr.bf16.mxu0 0
          %856 = vmatpush1.bf16.msra.mxu0 0
          %857 = vmatprep.subr.bf16.mxu0 0
          %858 = vmatpush1.bf16.msra.mxu0 0
          %859 = vmatprep.mubr.bf16.mxu0 0
          %860 = vmatmul.mubr.bf16.gmra.mrb[0].mxu0 %v825
          %v861 = vpop.f32.mrb[0].mxu0
          %v862 = vadd.f32 %v577, %v861
          %v863 = vpop.f32.mrb[0].mxu0
          %v864 = vpop.f32.mrb[0].mxu0
          %v865 = vadd.f32 %v577, %v864
          %v866 = vpop.f32.mrb[0].mxu0
          %867 = vmatprep.mubr.bf16.mxu0 0
          %868 = vmatmul.mubr.bf16.gmra.mrb[0].mxu0 %v826
          %v869 = vpop.f32.mrb[0].mxu0
          %v870 = vadd.f32 %v577, %v869
          %v871 = vpop.f32.mrb[0].mxu0
          %v872 = vpop.f32.mrb[0].mxu0
          %v873 = vpop.f32.mrb[0].mxu0
          %874 = vdwg.mxu0
          %v875 = vmax.f32 %v862, 0.0
          %v876 = vmax.f32 %v865, 0.0
          %v877 = vmax.f32 %v870, 0.0
          %v878 = vmul.f32 %v875, %v682
          %v879 = vmul.f32 %v876, %v682
          %v880 = vmul.f32 %v877, %v682
          %v881 = vadd.f32 %v878, %v691
          %v882 = vadd.f32 %v879, %v691
          %v883 = vadd.f32 %v880, %v691
          %v884 = vmax.f32 %v693, %v881
          %v885 = vmax.f32 %v694, %v882
          %v886 = vmax.f32 %v695, %v883
          %887 = vst [vmem:[#allocation2] sm:$0xff] %v884
          %888 = vst [vmem:[#allocation2 + $0x8] sm:$0xff] %v885
          %889 = vst [vmem:[#allocation2 + $0x10] sm:$0x3] %v886
          %v890 = vld [vmem:[#allocation2] ss:$2 sm:$0xff]
          %s891 = scalar_lea.vmem [#allocation2], 16
          %v892 = vld [vmem:[%s891] ss:$2 sm:$0x1]
          %s893 = scalar_lea.vmem [#allocation2], 1
          %v894 = vld [vmem:[%s893] ss:$2 sm:$0xff]
          %s895 = scalar_lea.vmem [#allocation2], 17
          %v896 = vld [vmem:[%s895] ss:$2 sm:$0x1]
          %v897 = vmax.f32 %v890, %v894
          %v898 = vmax.f32 %v892, %v896
          %s899 = smul.u32 %s380, 16
          %s900 = scalar_lea.vmem %s353, %s899
          %901 = vst [vmem:[%s900] sm:$0xff] %v897
          %902 = vst [vmem:[%s900 + $0x8] sm:$0x1] %v898
        $region69: #{separable_convolution_model.12} parent=47 // loop_footer
          %s384 = sadd.s32 1, %s380
        $region70: #{separable_convolution_model.12} parent=47 // loop_footer_branch
          %379 = sbr.rel target = $region66
        $region71: #{separable_convolution_model.12} parent=47 // loop_exit
          _
        %s903 = smul.u32 9, %s26
        %p904 = scmp.lt.s32.totalorder %s25, 1
        %s905 = scalar_select %p904, %s25, 1
        %p906 = scmp.lt.s32.totalorder %s903, 8
        %s907 = scalar_select %p906, %s903, 8
        %s908 = smul.addr %s907, 2
        %s909 = smul.addr %s905, 18
        %s910 = sadd.s32 %s908, %s909
        %s911 = smul.addr %s910, 8
        %s912 = scalar_lea.vmem %s7, %s911
        // Predicated region
        $region72: #{separable_convolution_model.12} parent=47 // pred_check
          %p913 = pneg %p205
        $region73: #{separable_convolution_model.12} parent=47 // pred_check_branch
          %915 = sbr.rel (%p913) target = $region75
        $region74: #{separable_convolution_model.12} parent=47 // pred_region
          %s916 = smul.u32 9, %s26
        $region75: #{separable_convolution_model.12} parent=47 // pred_fallthru
          _
      $region48: #{separable_convolution_model.12} parent=5 // pred_fallthru
        _
      %p917 = scmp.le.s32.totalorder 2, %s16
      // Predicated region
      $region76: #{separable_convolution_model.12} parent=5 // pred_check
        %p918 = pneg %p917
      $region77: #{separable_convolution_model.12} parent=5 // pred_check_branch
        %920 = sbr.rel (%p918) target = $region79
      $region78: #{separable_convolution_model.12} parent=5 // pred_region
        %s921 = ssub.s32 %s16, 2
        // Predicated region
        $region80: #{separable_convolution_model.12} parent=78 // pred_check
          %p922 = pneg %p211
        $region81: #{separable_convolution_model.12} parent=78 // pred_check_branch
          %924 = sbr.rel (%p922) target = $region83
        $region82: #{separable_convolution_model.12} parent=78 // pred_region
          %s925 = smul.u32 9, %s28
          %p926 = scmp.lt.s32.totalorder %s27, 1
          %s927 = scalar_select %p926, %s27, 1
          %p928 = scmp.lt.s32.totalorder %s925, 8
          %s929 = scalar_select %p928, %s925, 8
          %s930 = smul.addr %s929, 2
          %s931 = smul.addr %s927, 18
          %s932 = sadd.s32 %s930, %s931
          %s933 = smul.addr %s932, 8
          %s934 = scalar_lea.vmem %s7, %s933
        $region83: #{separable_convolution_model.12} parent=78 // pred_fallthru
          _
      $region79: #{separable_convolution_model.12} parent=5 // pred_fallthru
        _
    $region6: #{separable_convolution_model.12} parent=1 // loop_footer
      %s20 = sadd.s32 1, %s16
    $region7: #{separable_convolution_model.12} parent=1 // loop_footer_branch
      %15 = sbr.rel target = $region3
    $region8: #{separable_convolution_model.12} parent=1 // loop_exit
      _
    %935 = vsyncpa [#allocation4], 1
    %s936 = scalar_lea.sflag [#allocation4], 1
    %937 = vsyncpa %s936, 1
    %938 = vsyncpa [#allocation6], 1
    %939 = vsyncpa [#allocation9], 1

// kernel: separable_convolution_model.14
$region0: #{separable_convolution_model.14}
  #allocation0 [shape = 'u32[]', space=smem, size = 0x4, offset = 0x4, fixed_abs, tag = 'smem constant byte address 0x4 - core index']
  #allocation1 [shape = 'u32[144,128]{1,0:T(1,128)}', space=vmem, size = 0x12000, scoped, tag = 'internal scratch']
  %s0 = inlined_call_operand.vmem [shape: f32[2,7,7,256], index: 0, kind: input, shape index: {}]
  %s1 = inlined_call_operand.vmem [shape: f32[9,256], index: 1, kind: input, shape index: {}]
  %s2 = inlined_call_operand.vmem [shape: f32[1,256], index: 2, kind: input, shape index: {}]
  %s3 = inlined_call_operand.vmem [shape: bf16[256,256], index: 3, kind: input, shape index: {}]
  %s4 = inlined_call_operand.vmem [shape: f32[1,256], index: 4, kind: input, shape index: {}]
  %s5 = inlined_call_operand.vmem [shape: f32[1,256], index: 5, kind: input, shape index: {}]
  %s6 = inlined_call_operand.vmem [shape: f32[1,256], index: 6, kind: input, shape index: {}]
  %s7 = inlined_call_operand.vmem [shape: f32[2,5,5,256], index: 7, kind: output, shape index: {}]
  %s8 = sld [smem:[#allocation0]]
  $region68: #{separable_convolution_model.14} parent=0
    _
  %s10 = ssub.s32 1, %s8
  %s11 = scalar_select 0, %s10, %s8
  loop: start=0, step=1, limit=4
  $region2: #{separable_convolution_model.14} parent=0 // loop_pre_header
    _
  $region3: #{separable_convolution_model.14} parent=0 // loop_header
    %s13 = sphi 0, %s17
    %p14 = scmp.ge.s32.totalorder %s13, 4
    %s20 = sphi 0, %s32
    %s21 = sphi 0, %s28
    %s22 = sphi 0, %s20
    %s23 = sphi 0, %s21
    %s24 = sphi 0, %s22
    %s25 = sphi 0, %s23
    %s35 = sphi 0, %s37
    %s38 = sphi 0, %s35
    %s39 = sphi 0, %s38
    %s55 = sphi 0, %s39
    %s59 = sphi 0, %s59
    %s61 = sphi 0, %s59
    %s62 = sphi 0, %s61
    %s76 = sphi 0, %s62
    %s80 = sphi 0, %s80
    %s82 = sphi 0, %s80
    %s83 = sphi 0, %s82
    %s97 = sphi 0, %s83
    %s101 = sphi 0, %s101
    %s103 = sphi 0, %s101
    %s104 = sphi 0, %s103
    %s118 = sphi 0, %s104
    %s122 = sphi 0, %s122
    %s124 = sphi 0, %s122
    %s125 = sphi 0, %s124
    %s139 = sphi 0, %s125
    %s143 = sphi 0, %s143
    %s145 = sphi 0, %s143
    %s146 = sphi 0, %s145
    %s160 = sphi 0, %s146
    %s164 = sphi 0, %s164
    %s166 = sphi 0, %s164
    %s167 = sphi 0, %s166
    %s181 = sphi 0, %s167
    %s189 = sphi 0, %s191
    %s192 = sphi 0, %s189
    %s193 = sphi 0, %s192
    %s209 = sphi 0, %s193
  $region4: #{separable_convolution_model.14} parent=0 // loop_header_branch
    %16 = sbr.rel (%p14) target = $region8
  $region5: #{separable_convolution_model.14} parent=0 // loop_body
    %s18 = ssub.s32 %s13, 1
    %s19 = ssub.s32 %s13, 2
    %s26 = sadd.s32 1, %s21
    %p27 = scmp.ge.s32.totalorder %s26, 1
    %s28 = scalar_select %p27, 0, %s26
    %s29 = sadd.s32 1, %s20
    %s30 = scalar_select %p27, %s29, %s20
    %p31 = scmp.ge.s32.totalorder %s30, 2
    %s32 = scalar_select %p31, 0, %s30
    %s33 = ssub.s32 %s20, %s32
    %p34 = scmp.eq.s32.totalorder %s33, 0
    %s36 = sadd.s32 %s35, 1
    %s37 = scalar_select %p34, %s35, %s36
    %p40 = pneg %p34
    %p41 = scmp.eq.s32.totalorder %s13, 1
    %p42 = por %p40, %p41
    %p43 = scmp.ne.s32.totalorder %s35, %s38
    %p44 = scmp.eq.s32.totalorder %s13, 0
    %p45 = por %p43, %p44
    %p46 = scmp.ne.s32.totalorder %s35, %s38
    %p47 = scmp.eq.s32.totalorder %s18, 1
    %p48 = por %p46, %p47
    %p49 = scmp.ne.s32.totalorder %s38, %s39
    %p50 = scmp.eq.s32.totalorder %s18, 0
    %p51 = por %p49, %p50
    %p52 = scmp.ne.s32.totalorder %s38, %s39
    %p53 = scmp.eq.s32.totalorder %s19, 1
    %p54 = por %p52, %p53
    %p56 = scmp.ne.s32.totalorder %s39, %s55
    %p57 = scmp.eq.s32.totalorder %s19, 0
    %p58 = por %p56, %p57
    %s60 = sadd.s32 %s59, 1
    %p63 = scmp.eq.s32.totalorder %s13, 1
    %p64 = scmp.ne.s32.totalorder %s59, %s61
    %p65 = scmp.eq.s32.totalorder %s13, 0
    %p66 = por %p64, %p65
    %p67 = scmp.ne.s32.totalorder %s59, %s61
    %p68 = scmp.eq.s32.totalorder %s18, 1
    %p69 = por %p67, %p68
    %p70 = scmp.ne.s32.totalorder %s61, %s62
    %p71 = scmp.eq.s32.totalorder %s18, 0
    %p72 = por %p70, %p71
    %p73 = scmp.ne.s32.totalorder %s61, %s62
    %p74 = scmp.eq.s32.totalorder %s19, 1
    %p75 = por %p73, %p74
    %p77 = scmp.ne.s32.totalorder %s62, %s76
    %p78 = scmp.eq.s32.totalorder %s19, 0
    %p79 = por %p77, %p78
    %s81 = sadd.s32 %s80, 1
    %p84 = scmp.eq.s32.totalorder %s13, 1
    %p85 = scmp.ne.s32.totalorder %s80, %s82
    %p86 = scmp.eq.s32.totalorder %s13, 0
    %p87 = por %p85, %p86
    %p88 = scmp.ne.s32.totalorder %s80, %s82
    %p89 = scmp.eq.s32.totalorder %s18, 1
    %p90 = por %p88, %p89
    %p91 = scmp.ne.s32.totalorder %s82, %s83
    %p92 = scmp.eq.s32.totalorder %s18, 0
    %p93 = por %p91, %p92
    %p94 = scmp.ne.s32.totalorder %s82, %s83
    %p95 = scmp.eq.s32.totalorder %s19, 1
    %p96 = por %p94, %p95
    %p98 = scmp.ne.s32.totalorder %s83, %s97
    %p99 = scmp.eq.s32.totalorder %s19, 0
    %p100 = por %p98, %p99
    %s102 = sadd.s32 %s101, 1
    %p105 = scmp.eq.s32.totalorder %s13, 1
    %p106 = scmp.ne.s32.totalorder %s101, %s103
    %p107 = scmp.eq.s32.totalorder %s13, 0
    %p108 = por %p106, %p107
    %p109 = scmp.ne.s32.totalorder %s101, %s103
    %p110 = scmp.eq.s32.totalorder %s18, 1
    %p111 = por %p109, %p110
    %p112 = scmp.ne.s32.totalorder %s103, %s104
    %p113 = scmp.eq.s32.totalorder %s18, 0
    %p114 = por %p112, %p113
    %p115 = scmp.ne.s32.totalorder %s103, %s104
    %p116 = scmp.eq.s32.totalorder %s19, 1
    %p117 = por %p115, %p116
    %p119 = scmp.ne.s32.totalorder %s104, %s118
    %p120 = scmp.eq.s32.totalorder %s19, 0
    %p121 = por %p119, %p120
    %s123 = sadd.s32 %s122, 1
    %p126 = scmp.eq.s32.totalorder %s13, 1
    %p127 = scmp.ne.s32.totalorder %s122, %s124
    %p128 = scmp.eq.s32.totalorder %s13, 0
    %p129 = por %p127, %p128
    %p130 = scmp.ne.s32.totalorder %s122, %s124
    %p131 = scmp.eq.s32.totalorder %s18, 1
    %p132 = por %p130, %p131
    %p133 = scmp.ne.s32.totalorder %s124, %s125
    %p134 = scmp.eq.s32.totalorder %s18, 0
    %p135 = por %p133, %p134
    %p136 = scmp.ne.s32.totalorder %s124, %s125
    %p137 = scmp.eq.s32.totalorder %s19, 1
    %p138 = por %p136, %p137
    %p140 = scmp.ne.s32.totalorder %s125, %s139
    %p141 = scmp.eq.s32.totalorder %s19, 0
    %p142 = por %p140, %p141
    %s144 = sadd.s32 %s143, 1
    %p147 = scmp.eq.s32.totalorder %s13, 1
    %p148 = scmp.ne.s32.totalorder %s143, %s145
    %p149 = scmp.eq.s32.totalorder %s13, 0
    %p150 = por %p148, %p149
    %p151 = scmp.ne.s32.totalorder %s143, %s145
    %p152 = scmp.eq.s32.totalorder %s18, 1
    %p153 = por %p151, %p152
    %p154 = scmp.ne.s32.totalorder %s145, %s146
    %p155 = scmp.eq.s32.totalorder %s18, 0
    %p156 = por %p154, %p155
    %p157 = scmp.ne.s32.totalorder %s145, %s146
    %p158 = scmp.eq.s32.totalorder %s19, 1
    %p159 = por %p157, %p158
    %p161 = scmp.ne.s32.totalorder %s146, %s160
    %p162 = scmp.eq.s32.totalorder %s19, 0
    %p163 = por %p161, %p162
    %s165 = sadd.s32 %s164, 1
    %p168 = scmp.eq.s32.totalorder %s13, 1
    %p169 = scmp.ne.s32.totalorder %s164, %s166
    %p170 = scmp.eq.s32.totalorder %s13, 0
    %p171 = por %p169, %p170
    %p172 = scmp.ne.s32.totalorder %s164, %s166
    %p173 = scmp.eq.s32.totalorder %s18, 1
    %p174 = por %p172, %p173
    %p175 = scmp.ne.s32.totalorder %s166, %s167
    %p176 = scmp.eq.s32.totalorder %s18, 0
    %p177 = por %p175, %p176
    %p178 = scmp.ne.s32.totalorder %s166, %s167
    %p179 = scmp.eq.s32.totalorder %s19, 1
    %p180 = por %p178, %p179
    %p182 = scmp.ne.s32.totalorder %s167, %s181
    %p183 = scmp.eq.s32.totalorder %s19, 0
    %p184 = por %p182, %p183
    %s185 = ssub.s32 %s20, %s32
    %s186 = ssub.s32 %s21, %s28
    %s187 = sor.u32 %s185, %s186
    %p188 = scmp.eq.s32.totalorder %s187, 0
    %s190 = sadd.s32 %s189, 1
    %s191 = scalar_select %p188, %s189, %s190
    %p194 = pneg %p188
    %p195 = scmp.eq.s32.totalorder %s13, 1
    %p196 = por %p194, %p195
    %p197 = scmp.ne.s32.totalorder %s189, %s192
    %p198 = scmp.eq.s32.totalorder %s13, 0
    %p199 = por %p197, %p198
    %p200 = scmp.ne.s32.totalorder %s189, %s192
    %p201 = scmp.eq.s32.totalorder %s18, 1
    %p202 = por %p200, %p201
    %p203 = scmp.ne.s32.totalorder %s192, %s193
    %p204 = scmp.eq.s32.totalorder %s18, 0
    %p205 = por %p203, %p204
    %p206 = scmp.ne.s32.totalorder %s192, %s193
    %p207 = scmp.eq.s32.totalorder %s19, 1
    %p208 = por %p206, %p207
    %p210 = scmp.ne.s32.totalorder %s193, %s209
    %p211 = scmp.eq.s32.totalorder %s19, 0
    %p212 = por %p210, %p211
    %p213 = scmp.le.s32.totalorder 1, %s13
    %p214 = scmp.lt.s32.totalorder %s13, 3
    %p215 = pnand %p213, %p214
    %p216 = pneg %p215
    // Predicated region
    $region9: #{separable_convolution_model.14} parent=5 // pred_check
      _
    $region10: #{separable_convolution_model.14} parent=5 // pred_check_branch
      %218 = sbr.rel (%p215) target = $region12
    $region11: #{separable_convolution_model.14} parent=5 // pred_region
      %s219 = ssub.s32 %s13, 1
      // Predicated region
      $region13: #{separable_convolution_model.14} parent=11 // pred_check
        %p220 = pneg %p72
      $region14: #{separable_convolution_model.14} parent=11 // pred_check_branch
        %222 = sbr.rel (%p220) target = $region16
      $region15: #{separable_convolution_model.14} parent=11 // pred_region
        _
      $region16: #{separable_convolution_model.14} parent=11 // pred_fallthru
        _
      // Predicated region
      $region17: #{separable_convolution_model.14} parent=11 // pred_check
        %p223 = pneg %p93
      $region18: #{separable_convolution_model.14} parent=11 // pred_check_branch
        %225 = sbr.rel (%p223) target = $region20
      $region19: #{separable_convolution_model.14} parent=11 // pred_region
        _
      $region20: #{separable_convolution_model.14} parent=11 // pred_fallthru
        _
      // Predicated region
      $region21: #{separable_convolution_model.14} parent=11 // pred_check
        %p226 = pneg %p114
      $region22: #{separable_convolution_model.14} parent=11 // pred_check_branch
        %228 = sbr.rel (%p226) target = $region24
      $region23: #{separable_convolution_model.14} parent=11 // pred_region
        _
      $region24: #{separable_convolution_model.14} parent=11 // pred_fallthru
        _
      // Predicated region
      $region25: #{separable_convolution_model.14} parent=11 // pred_check
        %p229 = pneg %p135
      $region26: #{separable_convolution_model.14} parent=11 // pred_check_branch
        %231 = sbr.rel (%p229) target = $region28
      $region27: #{separable_convolution_model.14} parent=11 // pred_region
        _
      $region28: #{separable_convolution_model.14} parent=11 // pred_fallthru
        _
      // Predicated region
      $region29: #{separable_convolution_model.14} parent=11 // pred_check
        %p232 = pneg %p156
      $region30: #{separable_convolution_model.14} parent=11 // pred_check_branch
        %234 = sbr.rel (%p232) target = $region32
      $region31: #{separable_convolution_model.14} parent=11 // pred_region
        _
      $region32: #{separable_convolution_model.14} parent=11 // pred_fallthru
        _
      // Predicated region
      $region33: #{separable_convolution_model.14} parent=11 // pred_check
        %p235 = pneg %p177
      $region34: #{separable_convolution_model.14} parent=11 // pred_check_branch
        %237 = sbr.rel (%p235) target = $region36
      $region35: #{separable_convolution_model.14} parent=11 // pred_region
        _
      $region36: #{separable_convolution_model.14} parent=11 // pred_fallthru
        _
    $region12: #{separable_convolution_model.14} parent=5 // pred_fallthru
      _
    %p238 = scmp.lt.s32.totalorder %s13, 2
    // Predicated region
    $region37: #{separable_convolution_model.14} parent=5 // pred_check
      %p239 = pneg %p238
    $region38: #{separable_convolution_model.14} parent=5 // pred_check_branch
      %241 = sbr.rel (%p239) target = $region40
    $region39: #{separable_convolution_model.14} parent=5 // pred_region
      // Predicated region
      $region41: #{separable_convolution_model.14} parent=39 // pred_check
        %p242 = pneg %p45
      $region42: #{separable_convolution_model.14} parent=39 // pred_check_branch
        %244 = sbr.rel (%p242) target = $region44
      $region43: #{separable_convolution_model.14} parent=39 // pred_region
        %p245 = scmp.lt.s32.totalorder %s20, 1
        %s246 = scalar_select %p245, %s20, 1
        %s247 = smul.addr %s246, 14
        %s248 = smul.addr %s247, 8
        %s249 = scalar_lea.vmem %s0, %s248
      $region44: #{separable_convolution_model.14} parent=39 // pred_fallthru
        _
    $region40: #{separable_convolution_model.14} parent=5 // pred_fallthru
      _
    %p250 = scmp.le.s32.totalorder 1, %s13
    %p251 = scmp.lt.s32.totalorder %s13, 3
    %p252 = pnand %p250, %p251
    %p253 = pneg %p252
    // Predicated region
    $region45: #{separable_convolution_model.14} parent=5 // pred_check
      _
    $region46: #{separable_convolution_model.14} parent=5 // pred_check_branch
      %255 = sbr.rel (%p252) target = $region48
    $region47: #{separable_convolution_model.14} parent=5 // pred_region
      %s256 = ssub.s32 %s13, 1
      %p257 = scmp.lt.s32.totalorder %s22, 1
      %s258 = scalar_select %p257, %s22, 1
      %s259 = smul.addr %s258, 14
      %s260 = smul.addr %s259, 8
      %s261 = scalar_lea.vmem %s0, %s260
      %p262 = pneg %p51
      %p263 = pneg %p48
      %p264 = pneg %p72
      %p265 = pneg %p69
      %p266 = pneg %p93
      %p267 = pneg %p90
      %p268 = pneg %p114
      %p269 = pneg %p111
      %p270 = pneg %p135
      %p271 = pneg %p132
      %p272 = pneg %p156
      %p273 = pneg %p153
      %p274 = pneg %p177
      %p275 = pneg %p174
      %p276 = pneg %p205
      %p277 = pneg %p202
      %s278 = smul.u32 5, %s23
      %p279 = scmp.lt.s32.totalorder %s22, 1
      %s280 = scalar_select %p279, %s22, 1
      %p281 = scmp.lt.s32.totalorder %s278, 4
      %s282 = scalar_select %p281, %s278, 4
      %s283 = smul.addr %s282, 2
      %s284 = smul.addr %s280, 10
      %s285 = sadd.s32 %s283, %s284
      %s286 = smul.addr %s285, 8
      %s287 = scalar_lea.vmem %s7, %s286
      %p288 = scmp.lt.s32.totalorder %s22, 1
      %s289 = scalar_select %p288, %s22, 1
      %s290 = smul.addr %s289, 14
      %s291 = smul.addr %s290, 8
      %s292 = scalar_lea.vmem %s0, %s291
      %s293 = smul.u32 5, %s23
      %p294 = scmp.lt.s32.totalorder %s22, 1
      %s295 = scalar_select %p294, %s22, 1
      %p296 = scmp.lt.s32.totalorder %s293, 4
      %s297 = scalar_select %p296, %s293, 4
      %s298 = smul.addr %s297, 2
      %s299 = smul.addr %s295, 10
      %s300 = sadd.s32 %s298, %s299
      %s301 = smul.addr %s300, 8
      %s302 = scalar_lea.vmem %s7, %s301
      %s303 = smul.u32 5, %s23
      %s304 = smul.u32 %s23, 5
      %v305 = vld [vmem:[%s1] sm:$0xff]
      %v306 = vld [vmem:[%s1 + $0x8] sm:$0xff]
      %v307 = vld [vmem:[%s1 + $0x10] sm:$0x1]
      %v308 = vld [vmem:[%s1 + $0x18] sm:$0x1]
      %v309 = vld [vmem:[%s2] sm:$0x3]
      %v310 = vld [vmem:[%s3] sm:$0xff]
      %v311 = vld [vmem:[%s3 + $0x8] sm:$0xff]
      %v312 = vld [vmem:[%s3 + $0x10] sm:$0xff]
      %v313 = vld [vmem:[%s3 + $0x18] sm:$0xff]
      %v314 = vld [vmem:[%s3 + $0x20] sm:$0xff]
      %v315 = vld [vmem:[%s3 + $0x28] sm:$0xff]
      %v316 = vld [vmem:[%s3 + $0x30] sm:$0xff]
      %v317 = vld [vmem:[%s3 + $0x38] sm:$0xff]
      %v318 = vld [vmem:[%s3 + $0x40] sm:$0xff]
      %v319 = vld [vmem:[%s3 + $0x48] sm:$0xff]
      %v320 = vld [vmem:[%s3 + $0x50] sm:$0xff]
      %v321 = vld [vmem:[%s3 + $0x58] sm:$0xff]
      %v322 = vld [vmem:[%s3 + $0x60] sm:$0xff]
      %v323 = vld [vmem:[%s3 + $0x68] sm:$0xff]
      %v324 = vld [vmem:[%s3 + $0x70] sm:$0xff]
      %v325 = vld [vmem:[%s3 + $0x78] sm:$0xff]
      %v326 = vld [vmem:[%s3 + $0x80] sm:$0xff]
      %v327 = vld [vmem:[%s3 + $0x88] sm:$0xff]
      %v328 = vld [vmem:[%s3 + $0x90] sm:$0xff]
      %v329 = vld [vmem:[%s3 + $0x98] sm:$0xff]
      %v330 = vld [vmem:[%s3 + $0xa0] sm:$0xff]
      %v331 = vld [vmem:[%s3 + $0xa8] sm:$0xff]
      %v332 = vld [vmem:[%s3 + $0xb0] sm:$0xff]
      %v333 = vld [vmem:[%s3 + $0xb8] sm:$0xff]
      %v334 = vld [vmem:[%s3 + $0xc0] sm:$0xff]
      %v335 = vld [vmem:[%s3 + $0xc8] sm:$0xff]
      %v336 = vld [vmem:[%s3 + $0xd0] sm:$0xff]
      %v337 = vld [vmem:[%s3 + $0xd8] sm:$0xff]
      %v338 = vld [vmem:[%s3 + $0xe0] sm:$0xff]
      %v339 = vld [vmem:[%s3 + $0xe8] sm:$0xff]
      %v340 = vld [vmem:[%s3 + $0xf0] sm:$0xff]
      %v341 = vld [vmem:[%s3 + $0xf8] sm:$0xff]
      %v342 = vld [vmem:[%s4] sm:$0x3]
      %v343 = vld [vmem:[%s5] sm:$0x3]
      %v344 = vld [vmem:[%s6] sm:$0x3]
      loop: start=0, step=1, limit=5
      $region49: #{separable_convolution_model.14} parent=47 // loop_pre_header
        _
      $region50: #{separable_convolution_model.14} parent=47 // loop_header
        %s346 = sphi 0, %s350
        %p347 = scmp.ge.s32.totalorder %s346, 5
      $region51: #{separable_convolution_model.14} parent=47 // loop_header_branch
        %349 = sbr.rel (%p347) target = $region55
      $region52: #{separable_convolution_model.14} parent=47 // loop_body
        %s351 = sadd.s32 %s304, %s346
        %s352 = smul.u32 %s351, 2
        %s353 = smul.addr %s352, 8
        %s354 = scalar_lea.vmem %s292, %s353
        %v355 = vld [vmem:[%s354] sm:$0x7f]
        %v356 = vld [vmem:[%s354 + $0x8] sm:$0x7f]
        %v357 = vlaneseq
        %v358 = vshrl.u32 %v357, 7
        %v359 = vsub.s32 0, %v358
        %v360 = vrot.slane %v305, %v359
        %v361 = vlaneseq
        %v362 = vshrl.u32 %v361, 7
        %v363 = vsub.s32 0, %v362
        %v364 = vrot.slane %v306, %v363
        %v365 = vmul.f32 %v355, %v360
        %v366 = vmul.f32 %v356, %v364
        %v367 = vadd.f32 %v365, 0.0
        %v368 = vadd.f32 %v366, 0.0
        %v369 = vlaneseq
        %v370 = vshrl.u32 %v369, 7
        %v371 = vsub.s32 1, %v370
        %v372 = vrot.slane %v305, %v371
        %v373 = vlaneseq
        %v374 = vshrl.u32 %v373, 7
        %v375 = vsub.s32 1, %v374
        %v376 = vrot.slane %v306, %v375
        %v377 = vmul.f32 %v355, %v372
        %v378 = vmul.f32 %v356, %v376
        %v381 = vrot.slane %v377, 1
        %v382 = vrot.slane %v378, 1
        %v385 = vadd.f32 %v367, %v381
        %v386 = vadd.f32 %v368, %v382
        %v387 = vlaneseq
        %v388 = vshrl.u32 %v387, 7
        %v389 = vsub.s32 2, %v388
        %v390 = vrot.slane %v305, %v389
        %v391 = vlaneseq
        %v392 = vshrl.u32 %v391, 7
        %v393 = vsub.s32 2, %v392
        %v394 = vrot.slane %v306, %v393
        %v395 = vmul.f32 %v355, %v390
        %v396 = vmul.f32 %v356, %v394
        %v399 = vrot.slane %v395, 2
        %v400 = vrot.slane %v396, 2
        %v403 = vadd.f32 %v385, %v399
        %v404 = vadd.f32 %v386, %v400
        %s405 = sadd.s32 %s351, 1
        %s406 = smul.u32 %s405, 2
        %s407 = smul.addr %s406, 8
        %s408 = scalar_lea.vmem %s292, %s407
        %v409 = vld [vmem:[%s408] sm:$0x7f]
        %v410 = vld [vmem:[%s408 + $0x8] sm:$0x7f]
        %v411 = vlaneseq
        %v412 = vshrl.u32 %v411, 7
        %v413 = vsub.s32 3, %v412
        %v414 = vrot.slane %v305, %v413
        %v415 = vlaneseq
        %v416 = vshrl.u32 %v415, 7
        %v417 = vsub.s32 3, %v416
        %v418 = vrot.slane %v306, %v417
        %v419 = vmul.f32 %v409, %v414
        %v420 = vmul.f32 %v410, %v418
        %v421 = vadd.f32 %v403, %v419
        %v422 = vadd.f32 %v404, %v420
        %v423 = vlaneseq
        %v424 = vshrl.u32 %v423, 7
        %v425 = vsub.s32 4, %v424
        %v426 = vrot.slane %v305, %v425
        %v427 = vlaneseq
        %v428 = vshrl.u32 %v427, 7
        %v429 = vsub.s32 4, %v428
        %v430 = vrot.slane %v306, %v429
        %v431 = vmul.f32 %v409, %v426
        %v432 = vmul.f32 %v410, %v430
        %v435 = vrot.slane %v431, 1
        %v436 = vrot.slane %v432, 1
        %v439 = vadd.f32 %v421, %v435
        %v440 = vadd.f32 %v422, %v436
        %v441 = vlaneseq
        %v442 = vshrl.u32 %v441, 7
        %v443 = vsub.s32 5, %v442
        %v444 = vrot.slane %v305, %v443
        %v445 = vlaneseq
        %v446 = vshrl.u32 %v445, 7
        %v447 = vsub.s32 5, %v446
        %v448 = vrot.slane %v306, %v447
        %v449 = vmul.f32 %v409, %v444
        %v450 = vmul.f32 %v410, %v448
        %v453 = vrot.slane %v449, 2
        %v454 = vrot.slane %v450, 2
        %v457 = vadd.f32 %v439, %v453
        %v458 = vadd.f32 %v440, %v454
        %s459 = sadd.s32 %s351, 2
        %s460 = smul.u32 %s459, 2
        %s461 = smul.addr %s460, 8
        %s462 = scalar_lea.vmem %s292, %s461
        %v463 = vld [vmem:[%s462] sm:$0x7f]
        %v464 = vld [vmem:[%s462 + $0x8] sm:$0x7f]
        %v465 = vlaneseq
        %v466 = vshrl.u32 %v465, 7
        %v467 = vsub.s32 6, %v466
        %v468 = vrot.slane %v305, %v467
        %v469 = vlaneseq
        %v470 = vshrl.u32 %v469, 7
        %v471 = vsub.s32 6, %v470
        %v472 = vrot.slane %v306, %v471
        %v473 = vmul.f32 %v463, %v468
        %v474 = vmul.f32 %v464, %v472
        %v475 = vadd.f32 %v457, %v473
        %v476 = vadd.f32 %v458, %v474
        %v477 = vlaneseq
        %v478 = vshrl.u32 %v477, 7
        %v479 = vsub.s32 7, %v478
        %v480 = vrot.slane %v305, %v479
        %v481 = vlaneseq
        %v482 = vshrl.u32 %v481, 7
        %v483 = vsub.s32 7, %v482
        %v484 = vrot.slane %v306, %v483
        %v485 = vmul.f32 %v463, %v480
        %v486 = vmul.f32 %v464, %v484
        %v489 = vrot.slane %v485, 1
        %v490 = vrot.slane %v486, 1
        %v493 = vadd.f32 %v475, %v489
        %v494 = vadd.f32 %v476, %v490
        %v495 = vlaneseq
        %v496 = vshrl.u32 %v495, 7
        %v497 = vsub.s32 0, %v496
        %v498 = vrot.slane %v307, %v497
        %v499 = vlaneseq
        %v500 = vshrl.u32 %v499, 7
        %v501 = vsub.s32 0, %v500
        %v502 = vrot.slane %v308, %v501
        %v503 = vmul.f32 %v463, %v498
        %v504 = vmul.f32 %v464, %v502
        %v507 = vrot.slane %v503, 2
        %v508 = vrot.slane %v504, 2
        %v511 = vadd.f32 %v493, %v507
        %v512 = vadd.f32 %v494, %v508
        %v514 = vlaneseq
        %v515 = vshrl.u32 %v514, 7
        %v516 = vsub.s32 0, %v515
        %v517 = vrot.slane %v309, %v516
        %v518 = vlaneseq
        %v519 = vshrl.u32 %v518, 7
        %v520 = vsub.s32 1, %v519
        %v521 = vrot.slane %v309, %v520
        %v524 = vadd.f32 %v511, %v517
        %v525 = vadd.f32 %v512, %v521
        %v526 = vpack.c.bf16 %v524, %v524
        %v527 = vpack.c.bf16 %v525, %v525
        %v529 = vlaneseq
        %v530 = vshrl.u32 %v529, 7
        %v531 = vsub.s32 0, %v530
        %v532 = vrot.slane %v342, %v531
        %v533 = vlaneseq
        %v534 = vshrl.u32 %v533, 7
        %v535 = vsub.s32 1, %v534
        %v536 = vrot.slane %v342, %v535
        %v571 = vunpack.c.l.b16 %v310
        %v572 = vunpack.c.h.b16 %v310
        %v573 = vunpack.c.l.b16 %v311
        %v574 = vunpack.c.h.b16 %v311
        %v575 = vunpack.c.l.b16 %v312
        %v576 = vunpack.c.h.b16 %v312
        %v577 = vunpack.c.l.b16 %v313
        %v578 = vunpack.c.h.b16 %v313
        %v579 = vunpack.c.l.b16 %v314
        %v580 = vunpack.c.h.b16 %v314
        %v581 = vunpack.c.l.b16 %v315
        %v582 = vunpack.c.h.b16 %v315
        %v583 = vunpack.c.l.b16 %v316
        %v584 = vunpack.c.h.b16 %v316
        %v585 = vunpack.c.l.b16 %v317
        %v586 = vunpack.c.h.b16 %v317
        %v587 = vunpack.c.l.b16 %v318
        %v588 = vunpack.c.h.b16 %v318
        %v589 = vunpack.c.l.b16 %v319
        %v590 = vunpack.c.h.b16 %v319
        %v591 = vunpack.c.l.b16 %v320
        %v592 = vunpack.c.h.b16 %v320
        %v593 = vunpack.c.l.b16 %v321
        %v594 = vunpack.c.h.b16 %v321
        %v595 = vunpack.c.l.b16 %v322
        %v596 = vunpack.c.h.b16 %v322
        %v597 = vunpack.c.l.b16 %v323
        %v598 = vunpack.c.h.b16 %v323
        %v599 = vunpack.c.l.b16 %v324
        %v600 = vunpack.c.h.b16 %v324
        %v601 = vunpack.c.l.b16 %v325
        %v602 = vunpack.c.h.b16 %v325
        %v603 = vunpack.c.l.b16 %v326
        %v604 = vunpack.c.h.b16 %v326
        %v605 = vunpack.c.l.b16 %v327
        %v606 = vunpack.c.h.b16 %v327
        %v607 = vunpack.c.l.b16 %v328
        %v608 = vunpack.c.h.b16 %v328
        %v609 = vunpack.c.l.b16 %v329
        %v610 = vunpack.c.h.b16 %v329
        %v611 = vunpack.c.l.b16 %v330
        %v612 = vunpack.c.h.b16 %v330
        %v613 = vunpack.c.l.b16 %v331
        %v614 = vunpack.c.h.b16 %v331
        %v615 = vunpack.c.l.b16 %v332
        %v616 = vunpack.c.h.b16 %v332
        %v617 = vunpack.c.l.b16 %v333
        %v618 = vunpack.c.h.b16 %v333
        %v619 = vunpack.c.l.b16 %v334
        %v620 = vunpack.c.h.b16 %v334
        %v621 = vunpack.c.l.b16 %v335
        %v622 = vunpack.c.h.b16 %v335
        %v623 = vunpack.c.l.b16 %v336
        %v624 = vunpack.c.h.b16 %v336
        %v625 = vunpack.c.l.b16 %v337
        %v626 = vunpack.c.h.b16 %v337
        %v627 = vunpack.c.l.b16 %v338
        %v628 = vunpack.c.h.b16 %v338
        %v629 = vunpack.c.l.b16 %v339
        %v630 = vunpack.c.h.b16 %v339
        %v631 = vunpack.c.l.b16 %v340
        %v632 = vunpack.c.h.b16 %v340
        %v633 = vunpack.c.l.b16 %v341
        %v634 = vunpack.c.h.b16 %v341
        %v635 = vpack.c.b16 %v573, %v571
        %v636 = vpack.c.b16 %v574, %v572
        %v637 = vpack.c.b16 %v577, %v575
        %v638 = vpack.c.b16 %v578, %v576
        %v639 = vpack.c.b16 %v581, %v579
        %v640 = vpack.c.b16 %v582, %v580
        %v641 = vpack.c.b16 %v585, %v583
        %v642 = vpack.c.b16 %v586, %v584
        %v643 = vpack.c.b16 %v589, %v587
        %v644 = vpack.c.b16 %v590, %v588
        %v645 = vpack.c.b16 %v593, %v591
        %v646 = vpack.c.b16 %v594, %v592
        %v647 = vpack.c.b16 %v597, %v595
        %v648 = vpack.c.b16 %v598, %v596
        %v649 = vpack.c.b16 %v601, %v599
        %v650 = vpack.c.b16 %v602, %v600
        %v651 = vpack.c.b16 %v605, %v603
        %v652 = vpack.c.b16 %v606, %v604
        %v653 = vpack.c.b16 %v609, %v607
        %v654 = vpack.c.b16 %v610, %v608
        %v655 = vpack.c.b16 %v613, %v611
        %v656 = vpack.c.b16 %v614, %v612
        %v657 = vpack.c.b16 %v617, %v615
        %v658 = vpack.c.b16 %v618, %v616
        %v659 = vpack.c.b16 %v621, %v619
        %v660 = vpack.c.b16 %v622, %v620
        %v661 = vpack.c.b16 %v625, %v623
        %v662 = vpack.c.b16 %v626, %v624
        %v663 = vpack.c.b16 %v629, %v627
        %v664 = vpack.c.b16 %v630, %v628
        %v665 = vpack.c.b16 %v633, %v631
        %v666 = vpack.c.b16 %v634, %v632
        %699 = vmatprep.subr.bf16.mxu0 %v636
        %700 = vmatpush1.bf16.msra.mxu0 %v635
        %701 = vmatprep.subr.bf16.mxu0 %v638
        %702 = vmatpush1.bf16.msra.mxu0 %v637
        %703 = vmatprep.subr.bf16.mxu0 %v640
        %704 = vmatpush1.bf16.msra.mxu0 %v639
        %705 = vmatprep.subr.bf16.mxu0 %v642
        %706 = vmatpush1.bf16.msra.mxu0 %v641
        %707 = vmatprep.subr.bf16.mxu0 %v644
        %708 = vmatpush1.bf16.msra.mxu0 %v643
        %709 = vmatprep.subr.bf16.mxu0 %v646
        %710 = vmatpush1.bf16.msra.mxu0 %v645
        %711 = vmatprep.subr.bf16.mxu0 %v648
        %712 = vmatpush1.bf16.msra.mxu0 %v647
        %713 = vmatprep.subr.bf16.mxu0 %v650
        %714 = vmatpush1.bf16.msra.mxu0 %v649
        %715 = vmatprep.subr.bf16.mxu0 %v652
        %716 = vmatpush1.bf16.msra.mxu0 %v651
        %717 = vmatprep.subr.bf16.mxu0 %v654
        %718 = vmatpush1.bf16.msra.mxu0 %v653
        %719 = vmatprep.subr.bf16.mxu0 %v656
        %720 = vmatpush1.bf16.msra.mxu0 %v655
        %721 = vmatprep.subr.bf16.mxu0 %v658
        %722 = vmatpush1.bf16.msra.mxu0 %v657
        %723 = vmatprep.subr.bf16.mxu0 %v660
        %724 = vmatpush1.bf16.msra.mxu0 %v659
        %725 = vmatprep.subr.bf16.mxu0 %v662
        %726 = vmatpush1.bf16.msra.mxu0 %v661
        %727 = vmatprep.subr.bf16.mxu0 %v664
        %728 = vmatpush1.bf16.msra.mxu0 %v663
        %729 = vmatprep.subr.bf16.mxu0 %v666
        %730 = vmatpush1.bf16.msra.mxu0 %v665
        %731 = vmatprep.mubr.bf16.mxu0 %v527
        %732 = vmatmul.mubr.bf16.gmra.mrb[0].mxu0 %v526
        %v733 = vpop.f32.mrb[0].mxu0
        %v734 = vadd.f32 %v532, %v733
        %v735 = vpop.f32.mrb[0].mxu0
        %v736 = vadd.f32 %v536, %v735
        %v737 = vpop.f32.mrb[0].mxu0
        %v738 = vpop.f32.mrb[0].mxu0
        %739 = vdwg.mxu0
        %v740 = vmax.f32 %v734, 0.0
        %v741 = vmax.f32 %v736, 0.0
        %v743 = vlaneseq
        %v744 = vshrl.u32 %v743, 7
        %v745 = vsub.s32 0, %v744
        %v746 = vrot.slane %v343, %v745
        %v747 = vlaneseq
        %v748 = vshrl.u32 %v747, 7
        %v749 = vsub.s32 1, %v748
        %v750 = vrot.slane %v343, %v749
        %v753 = vmul.f32 %v740, %v746
        %v754 = vmul.f32 %v741, %v750
        %v756 = vlaneseq
        %v757 = vshrl.u32 %v756, 7
        %v758 = vsub.s32 0, %v757
        %v759 = vrot.slane %v344, %v758
        %v760 = vlaneseq
        %v761 = vshrl.u32 %v760, 7
        %v762 = vsub.s32 1, %v761
        %v763 = vrot.slane %v344, %v762
        %v766 = vadd.f32 %v753, %v759
        %v767 = vadd.f32 %v754, %v763
        %s768 = smul.u32 %s346, 2
        %s769 = smul.addr %s768, 8
        %s770 = scalar_lea.vmem %s302, %s769
        %771 = vst [vmem:[%s770] sm:$0x1f] %v766
        %772 = vst [vmem:[%s770 + $0x8] sm:$0x1f] %v767
      $region53: #{separable_convolution_model.14} parent=47 // loop_footer
        %s350 = sadd.s32 1, %s346
      $region54: #{separable_convolution_model.14} parent=47 // loop_footer_branch
        %345 = sbr.rel target = $region50
      $region55: #{separable_convolution_model.14} parent=47 // loop_exit
        _
      %s773 = smul.u32 5, %s23
      %p774 = scmp.lt.s32.totalorder %s22, 1
      %s775 = scalar_select %p774, %s22, 1
      %p776 = scmp.lt.s32.totalorder %s773, 4
      %s777 = scalar_select %p776, %s773, 4
      %s778 = smul.addr %s777, 2
      %s779 = smul.addr %s775, 10
      %s780 = sadd.s32 %s778, %s779
      %s781 = smul.addr %s780, 8
      %s782 = scalar_lea.vmem %s7, %s781
      // Predicated region
      $region56: #{separable_convolution_model.14} parent=47 // pred_check
        %p783 = pneg %p202
      $region57: #{separable_convolution_model.14} parent=47 // pred_check_branch
        %785 = sbr.rel (%p783) target = $region59
      $region58: #{separable_convolution_model.14} parent=47 // pred_region
        %s786 = smul.u32 5, %s23
      $region59: #{separable_convolution_model.14} parent=47 // pred_fallthru
        _
    $region48: #{separable_convolution_model.14} parent=5 // pred_fallthru
      _
    %p787 = scmp.le.s32.totalorder 2, %s13
    // Predicated region
    $region60: #{separable_convolution_model.14} parent=5 // pred_check
      %p788 = pneg %p787
    $region61: #{separable_convolution_model.14} parent=5 // pred_check_branch
      %790 = sbr.rel (%p788) target = $region63
    $region62: #{separable_convolution_model.14} parent=5 // pred_region
      %s791 = ssub.s32 %s13, 2
      // Predicated region
      $region64: #{separable_convolution_model.14} parent=62 // pred_check
        %p792 = pneg %p208
      $region65: #{separable_convolution_model.14} parent=62 // pred_check_branch
        %794 = sbr.rel (%p792) target = $region67
      $region66: #{separable_convolution_model.14} parent=62 // pred_region
        %s795 = smul.u32 5, %s25
        %p796 = scmp.lt.s32.totalorder %s24, 1
        %s797 = scalar_select %p796, %s24, 1
        %p798 = scmp.lt.s32.totalorder %s795, 4
        %s799 = scalar_select %p798, %s795, 4
        %s800 = smul.addr %s799, 2
        %s801 = smul.addr %s797, 10
        %s802 = sadd.s32 %s800, %s801
        %s803 = smul.addr %s802, 8
        %s804 = scalar_lea.vmem %s7, %s803
      $region67: #{separable_convolution_model.14} parent=62 // pred_fallthru
        _
    $region63: #{separable_convolution_model.14} parent=5 // pred_fallthru
      _
  $region6: #{separable_convolution_model.14} parent=0 // loop_footer
    %s17 = sadd.s32 1, %s13
  $region7: #{separable_convolution_model.14} parent=0 // loop_footer_branch
    %12 = sbr.rel target = $region3
  $region8: #{separable_convolution_model.14} parent=0 // loop_exit
    _

// kernel: separable_convolution_model.15
$region0: #{separable_convolution_model.15}
  #allocation0 [shape = 'u32[]', space=smem, size = 0x4, offset = 0x4, fixed_abs, tag = 'smem constant byte address 0x4 - core index']
  #allocation1 [shape = 'u32[144,128]{1,0:T(1,128)}', space=vmem, size = 0x12000, scoped, tag = 'internal scratch']
  %s0 = inlined_call_operand.vmem [shape: f32[2,5,5,256], index: 0, kind: input, shape index: {}]
  %s1 = inlined_call_operand.vmem [shape: f32[9,256], index: 1, kind: input, shape index: {}]
  %s2 = inlined_call_operand.vmem [shape: f32[1,256], index: 2, kind: input, shape index: {}]
  %s3 = inlined_call_operand.vmem [shape: bf16[256,512], index: 3, kind: input, shape index: {}]
  %s4 = inlined_call_operand.vmem [shape: f32[1,512], index: 4, kind: input, shape index: {}]
  %s5 = inlined_call_operand.vmem [shape: f32[1,512], index: 5, kind: input, shape index: {}]
  %s6 = inlined_call_operand.vmem [shape: f32[1,512], index: 6, kind: input, shape index: {}]
  %s7 = inlined_call_operand.vmem [shape: f32[2,3,3,512], index: 7, kind: output, shape index: {}]
  %s8 = sld [smem:[#allocation0]]
  $region68: #{separable_convolution_model.15} parent=0
    _
  %s10 = ssub.s32 1, %s8
  %s11 = scalar_select 0, %s10, %s8
  loop: start=0, step=1, limit=4
  $region2: #{separable_convolution_model.15} parent=0 // loop_pre_header
    _
  $region3: #{separable_convolution_model.15} parent=0 // loop_header
    %s13 = sphi 0, %s17
    %p14 = scmp.ge.s32.totalorder %s13, 4
    %s20 = sphi 0, %s32
    %s21 = sphi 0, %s28
    %s22 = sphi 0, %s20
    %s23 = sphi 0, %s21
    %s24 = sphi 0, %s22
    %s25 = sphi 0, %s23
    %s35 = sphi 0, %s37
    %s38 = sphi 0, %s35
    %s39 = sphi 0, %s38
    %s55 = sphi 0, %s39
    %s59 = sphi 0, %s59
    %s61 = sphi 0, %s59
    %s62 = sphi 0, %s61
    %s76 = sphi 0, %s62
    %s80 = sphi 0, %s80
    %s82 = sphi 0, %s80
    %s83 = sphi 0, %s82
    %s97 = sphi 0, %s83
    %s101 = sphi 0, %s101
    %s103 = sphi 0, %s101
    %s104 = sphi 0, %s103
    %s118 = sphi 0, %s104
    %s122 = sphi 0, %s122
    %s124 = sphi 0, %s122
    %s125 = sphi 0, %s124
    %s139 = sphi 0, %s125
    %s143 = sphi 0, %s143
    %s145 = sphi 0, %s143
    %s146 = sphi 0, %s145
    %s160 = sphi 0, %s146
    %s164 = sphi 0, %s164
    %s166 = sphi 0, %s164
    %s167 = sphi 0, %s166
    %s181 = sphi 0, %s167
    %s189 = sphi 0, %s191
    %s192 = sphi 0, %s189
    %s193 = sphi 0, %s192
    %s209 = sphi 0, %s193
  $region4: #{separable_convolution_model.15} parent=0 // loop_header_branch
    %16 = sbr.rel (%p14) target = $region8
  $region5: #{separable_convolution_model.15} parent=0 // loop_body
    %s18 = ssub.s32 %s13, 1
    %s19 = ssub.s32 %s13, 2
    %s26 = sadd.s32 1, %s21
    %p27 = scmp.ge.s32.totalorder %s26, 1
    %s28 = scalar_select %p27, 0, %s26
    %s29 = sadd.s32 1, %s20
    %s30 = scalar_select %p27, %s29, %s20
    %p31 = scmp.ge.s32.totalorder %s30, 2
    %s32 = scalar_select %p31, 0, %s30
    %s33 = ssub.s32 %s20, %s32
    %p34 = scmp.eq.s32.totalorder %s33, 0
    %s36 = sadd.s32 %s35, 1
    %s37 = scalar_select %p34, %s35, %s36
    %p40 = pneg %p34
    %p41 = scmp.eq.s32.totalorder %s13, 1
    %p42 = por %p40, %p41
    %p43 = scmp.ne.s32.totalorder %s35, %s38
    %p44 = scmp.eq.s32.totalorder %s13, 0
    %p45 = por %p43, %p44
    %p46 = scmp.ne.s32.totalorder %s35, %s38
    %p47 = scmp.eq.s32.totalorder %s18, 1
    %p48 = por %p46, %p47
    %p49 = scmp.ne.s32.totalorder %s38, %s39
    %p50 = scmp.eq.s32.totalorder %s18, 0
    %p51 = por %p49, %p50
    %p52 = scmp.ne.s32.totalorder %s38, %s39
    %p53 = scmp.eq.s32.totalorder %s19, 1
    %p54 = por %p52, %p53
    %p56 = scmp.ne.s32.totalorder %s39, %s55
    %p57 = scmp.eq.s32.totalorder %s19, 0
    %p58 = por %p56, %p57
    %s60 = sadd.s32 %s59, 1
    %p63 = scmp.eq.s32.totalorder %s13, 1
    %p64 = scmp.ne.s32.totalorder %s59, %s61
    %p65 = scmp.eq.s32.totalorder %s13, 0
    %p66 = por %p64, %p65
    %p67 = scmp.ne.s32.totalorder %s59, %s61
    %p68 = scmp.eq.s32.totalorder %s18, 1
    %p69 = por %p67, %p68
    %p70 = scmp.ne.s32.totalorder %s61, %s62
    %p71 = scmp.eq.s32.totalorder %s18, 0
    %p72 = por %p70, %p71
    %p73 = scmp.ne.s32.totalorder %s61, %s62
    %p74 = scmp.eq.s32.totalorder %s19, 1
    %p75 = por %p73, %p74
    %p77 = scmp.ne.s32.totalorder %s62, %s76
    %p78 = scmp.eq.s32.totalorder %s19, 0
    %p79 = por %p77, %p78
    %s81 = sadd.s32 %s80, 1
    %p84 = scmp.eq.s32.totalorder %s13, 1
    %p85 = scmp.ne.s32.totalorder %s80, %s82
    %p86 = scmp.eq.s32.totalorder %s13, 0
    %p87 = por %p85, %p86
    %p88 = scmp.ne.s32.totalorder %s80, %s82
    %p89 = scmp.eq.s32.totalorder %s18, 1
    %p90 = por %p88, %p89
    %p91 = scmp.ne.s32.totalorder %s82, %s83
    %p92 = scmp.eq.s32.totalorder %s18, 0
    %p93 = por %p91, %p92
    %p94 = scmp.ne.s32.totalorder %s82, %s83
    %p95 = scmp.eq.s32.totalorder %s19, 1
    %p96 = por %p94, %p95
    %p98 = scmp.ne.s32.totalorder %s83, %s97
    %p99 = scmp.eq.s32.totalorder %s19, 0
    %p100 = por %p98, %p99
    %s102 = sadd.s32 %s101, 1
    %p105 = scmp.eq.s32.totalorder %s13, 1
    %p106 = scmp.ne.s32.totalorder %s101, %s103
    %p107 = scmp.eq.s32.totalorder %s13, 0
    %p108 = por %p106, %p107
    %p109 = scmp.ne.s32.totalorder %s101, %s103
    %p110 = scmp.eq.s32.totalorder %s18, 1
    %p111 = por %p109, %p110
    %p112 = scmp.ne.s32.totalorder %s103, %s104
    %p113 = scmp.eq.s32.totalorder %s18, 0
    %p114 = por %p112, %p113
    %p115 = scmp.ne.s32.totalorder %s103, %s104
    %p116 = scmp.eq.s32.totalorder %s19, 1
    %p117 = por %p115, %p116
    %p119 = scmp.ne.s32.totalorder %s104, %s118
    %p120 = scmp.eq.s32.totalorder %s19, 0
    %p121 = por %p119, %p120
    %s123 = sadd.s32 %s122, 1
    %p126 = scmp.eq.s32.totalorder %s13, 1
    %p127 = scmp.ne.s32.totalorder %s122, %s124
    %p128 = scmp.eq.s32.totalorder %s13, 0
    %p129 = por %p127, %p128
    %p130 = scmp.ne.s32.totalorder %s122, %s124
    %p131 = scmp.eq.s32.totalorder %s18, 1
    %p132 = por %p130, %p131
    %p133 = scmp.ne.s32.totalorder %s124, %s125
    %p134 = scmp.eq.s32.totalorder %s18, 0
    %p135 = por %p133, %p134
    %p136 = scmp.ne.s32.totalorder %s124, %s125
    %p137 = scmp.eq.s32.totalorder %s19, 1
    %p138 = por %p136, %p137
    %p140 = scmp.ne.s32.totalorder %s125, %s139
    %p141 = scmp.eq.s32.totalorder %s19, 0
    %p142 = por %p140, %p141
    %s144 = sadd.s32 %s143, 1
    %p147 = scmp.eq.s32.totalorder %s13, 1
    %p148 = scmp.ne.s32.totalorder %s143, %s145
    %p149 = scmp.eq.s32.totalorder %s13, 0
    %p150 = por %p148, %p149
    %p151 = scmp.ne.s32.totalorder %s143, %s145
    %p152 = scmp.eq.s32.totalorder %s18, 1
    %p153 = por %p151, %p152
    %p154 = scmp.ne.s32.totalorder %s145, %s146
    %p155 = scmp.eq.s32.totalorder %s18, 0
    %p156 = por %p154, %p155
    %p157 = scmp.ne.s32.totalorder %s145, %s146
    %p158 = scmp.eq.s32.totalorder %s19, 1
    %p159 = por %p157, %p158
    %p161 = scmp.ne.s32.totalorder %s146, %s160
    %p162 = scmp.eq.s32.totalorder %s19, 0
    %p163 = por %p161, %p162
    %s165 = sadd.s32 %s164, 1
    %p168 = scmp.eq.s32.totalorder %s13, 1
    %p169 = scmp.ne.s32.totalorder %s164, %s166
    %p170 = scmp.eq.s32.totalorder %s13, 0
    %p171 = por %p169, %p170
    %p172 = scmp.ne.s32.totalorder %s164, %s166
    %p173 = scmp.eq.s32.totalorder %s18, 1
    %p174 = por %p172, %p173
    %p175 = scmp.ne.s32.totalorder %s166, %s167
    %p176 = scmp.eq.s32.totalorder %s18, 0
    %p177 = por %p175, %p176
    %p178 = scmp.ne.s32.totalorder %s166, %s167
    %p179 = scmp.eq.s32.totalorder %s19, 1
    %p180 = por %p178, %p179
    %p182 = scmp.ne.s32.totalorder %s167, %s181
    %p183 = scmp.eq.s32.totalorder %s19, 0
    %p184 = por %p182, %p183
    %s185 = ssub.s32 %s20, %s32
    %s186 = ssub.s32 %s21, %s28
    %s187 = sor.u32 %s185, %s186
    %p188 = scmp.eq.s32.totalorder %s187, 0
    %s190 = sadd.s32 %s189, 1
    %s191 = scalar_select %p188, %s189, %s190
    %p194 = pneg %p188
    %p195 = scmp.eq.s32.totalorder %s13, 1
    %p196 = por %p194, %p195
    %p197 = scmp.ne.s32.totalorder %s189, %s192
    %p198 = scmp.eq.s32.totalorder %s13, 0
    %p199 = por %p197, %p198
    %p200 = scmp.ne.s32.totalorder %s189, %s192
    %p201 = scmp.eq.s32.totalorder %s18, 1
    %p202 = por %p200, %p201
    %p203 = scmp.ne.s32.totalorder %s192, %s193
    %p204 = scmp.eq.s32.totalorder %s18, 0
    %p205 = por %p203, %p204
    %p206 = scmp.ne.s32.totalorder %s192, %s193
    %p207 = scmp.eq.s32.totalorder %s19, 1
    %p208 = por %p206, %p207
    %p210 = scmp.ne.s32.totalorder %s193, %s209
    %p211 = scmp.eq.s32.totalorder %s19, 0
    %p212 = por %p210, %p211
    %p213 = scmp.le.s32.totalorder 1, %s13
    %p214 = scmp.lt.s32.totalorder %s13, 3
    %p215 = pnand %p213, %p214
    %p216 = pneg %p215
    // Predicated region
    $region9: #{separable_convolution_model.15} parent=5 // pred_check
      _
    $region10: #{separable_convolution_model.15} parent=5 // pred_check_branch
      %218 = sbr.rel (%p215) target = $region12
    $region11: #{separable_convolution_model.15} parent=5 // pred_region
      %s219 = ssub.s32 %s13, 1
      // Predicated region
      $region13: #{separable_convolution_model.15} parent=11 // pred_check
        %p220 = pneg %p72
      $region14: #{separable_convolution_model.15} parent=11 // pred_check_branch
        %222 = sbr.rel (%p220) target = $region16
      $region15: #{separable_convolution_model.15} parent=11 // pred_region
        _
      $region16: #{separable_convolution_model.15} parent=11 // pred_fallthru
        _
      // Predicated region
      $region17: #{separable_convolution_model.15} parent=11 // pred_check
        %p223 = pneg %p93
      $region18: #{separable_convolution_model.15} parent=11 // pred_check_branch
        %225 = sbr.rel (%p223) target = $region20
      $region19: #{separable_convolution_model.15} parent=11 // pred_region
        _
      $region20: #{separable_convolution_model.15} parent=11 // pred_fallthru
        _
      // Predicated region
      $region21: #{separable_convolution_model.15} parent=11 // pred_check
        %p226 = pneg %p114
      $region22: #{separable_convolution_model.15} parent=11 // pred_check_branch
        %228 = sbr.rel (%p226) target = $region24
      $region23: #{separable_convolution_model.15} parent=11 // pred_region
        _
      $region24: #{separable_convolution_model.15} parent=11 // pred_fallthru
        _
      // Predicated region
      $region25: #{separable_convolution_model.15} parent=11 // pred_check
        %p229 = pneg %p135
      $region26: #{separable_convolution_model.15} parent=11 // pred_check_branch
        %231 = sbr.rel (%p229) target = $region28
      $region27: #{separable_convolution_model.15} parent=11 // pred_region
        _
      $region28: #{separable_convolution_model.15} parent=11 // pred_fallthru
        _
      // Predicated region
      $region29: #{separable_convolution_model.15} parent=11 // pred_check
        %p232 = pneg %p156
      $region30: #{separable_convolution_model.15} parent=11 // pred_check_branch
        %234 = sbr.rel (%p232) target = $region32
      $region31: #{separable_convolution_model.15} parent=11 // pred_region
        _
      $region32: #{separable_convolution_model.15} parent=11 // pred_fallthru
        _
      // Predicated region
      $region33: #{separable_convolution_model.15} parent=11 // pred_check
        %p235 = pneg %p177
      $region34: #{separable_convolution_model.15} parent=11 // pred_check_branch
        %237 = sbr.rel (%p235) target = $region36
      $region35: #{separable_convolution_model.15} parent=11 // pred_region
        _
      $region36: #{separable_convolution_model.15} parent=11 // pred_fallthru
        _
    $region12: #{separable_convolution_model.15} parent=5 // pred_fallthru
      _
    %p238 = scmp.lt.s32.totalorder %s13, 2
    // Predicated region
    $region37: #{separable_convolution_model.15} parent=5 // pred_check
      %p239 = pneg %p238
    $region38: #{separable_convolution_model.15} parent=5 // pred_check_branch
      %241 = sbr.rel (%p239) target = $region40
    $region39: #{separable_convolution_model.15} parent=5 // pred_region
      // Predicated region
      $region41: #{separable_convolution_model.15} parent=39 // pred_check
        %p242 = pneg %p45
      $region42: #{separable_convolution_model.15} parent=39 // pred_check_branch
        %244 = sbr.rel (%p242) target = $region44
      $region43: #{separable_convolution_model.15} parent=39 // pred_region
        %p245 = scmp.lt.s32.totalorder %s20, 1
        %s246 = scalar_select %p245, %s20, 1
        %s247 = smul.addr %s246, 10
        %s248 = smul.addr %s247, 8
        %s249 = scalar_lea.vmem %s0, %s248
      $region44: #{separable_convolution_model.15} parent=39 // pred_fallthru
        _
    $region40: #{separable_convolution_model.15} parent=5 // pred_fallthru
      _
    %p250 = scmp.le.s32.totalorder 1, %s13
    %p251 = scmp.lt.s32.totalorder %s13, 3
    %p252 = pnand %p250, %p251
    %p253 = pneg %p252
    // Predicated region
    $region45: #{separable_convolution_model.15} parent=5 // pred_check
      _
    $region46: #{separable_convolution_model.15} parent=5 // pred_check_branch
      %255 = sbr.rel (%p252) target = $region48
    $region47: #{separable_convolution_model.15} parent=5 // pred_region
      %s256 = ssub.s32 %s13, 1
      %p257 = scmp.lt.s32.totalorder %s22, 1
      %s258 = scalar_select %p257, %s22, 1
      %s259 = smul.addr %s258, 10
      %s260 = smul.addr %s259, 8
      %s261 = scalar_lea.vmem %s0, %s260
      %p262 = pneg %p51
      %p263 = pneg %p48
      %p264 = pneg %p72
      %p265 = pneg %p69
      %p266 = pneg %p93
      %p267 = pneg %p90
      %p268 = pneg %p114
      %p269 = pneg %p111
      %p270 = pneg %p135
      %p271 = pneg %p132
      %p272 = pneg %p156
      %p273 = pneg %p153
      %p274 = pneg %p177
      %p275 = pneg %p174
      %p276 = pneg %p205
      %p277 = pneg %p202
      %s278 = smul.u32 3, %s23
      %p279 = scmp.lt.s32.totalorder %s22, 1
      %s280 = scalar_select %p279, %s22, 1
      %p281 = scmp.lt.s32.totalorder %s278, 2
      %s282 = scalar_select %p281, %s278, 2
      %s283 = smul.addr %s282, 4
      %s284 = smul.addr %s280, 12
      %s285 = sadd.s32 %s283, %s284
      %s286 = smul.addr %s285, 4
      %s287 = scalar_lea.vmem %s7, %s286
      %p288 = scmp.lt.s32.totalorder %s22, 1
      %s289 = scalar_select %p288, %s22, 1
      %s290 = smul.addr %s289, 10
      %s291 = smul.addr %s290, 8
      %s292 = scalar_lea.vmem %s0, %s291
      %s293 = smul.u32 3, %s23
      %p294 = scmp.lt.s32.totalorder %s22, 1
      %s295 = scalar_select %p294, %s22, 1
      %p296 = scmp.lt.s32.totalorder %s293, 2
      %s297 = scalar_select %p296, %s293, 2
      %s298 = smul.addr %s297, 4
      %s299 = smul.addr %s295, 12
      %s300 = sadd.s32 %s298, %s299
      %s301 = smul.addr %s300, 4
      %s302 = scalar_lea.vmem %s7, %s301
      %s303 = smul.u32 3, %s23
      %s304 = smul.u32 %s23, 3
      %v305 = vld [vmem:[%s1] sm:$0xff]
      %v306 = vld [vmem:[%s1 + $0x8] sm:$0xff]
      %v307 = vld [vmem:[%s1 + $0x10] sm:$0x1]
      %v308 = vld [vmem:[%s1 + $0x18] sm:$0x1]
      %v309 = vld [vmem:[%s2] sm:$0x3]
      %v310 = vld [vmem:[%s3] sm:$0xff]
      %v311 = vld [vmem:[%s3 + $0x8] sm:$0xff]
      %v312 = vld [vmem:[%s3 + $0x10] sm:$0xff]
      %v313 = vld [vmem:[%s3 + $0x18] sm:$0xff]
      %v314 = vld [vmem:[%s3 + $0x20] sm:$0xff]
      %v315 = vld [vmem:[%s3 + $0x28] sm:$0xff]
      %v316 = vld [vmem:[%s3 + $0x30] sm:$0xff]
      %v317 = vld [vmem:[%s3 + $0x38] sm:$0xff]
      %v318 = vld [vmem:[%s3 + $0x40] sm:$0xff]
      %v319 = vld [vmem:[%s3 + $0x48] sm:$0xff]
      %v320 = vld [vmem:[%s3 + $0x50] sm:$0xff]
      %v321 = vld [vmem:[%s3 + $0x58] sm:$0xff]
      %v322 = vld [vmem:[%s3 + $0x60] sm:$0xff]
      %v323 = vld [vmem:[%s3 + $0x68] sm:$0xff]
      %v324 = vld [vmem:[%s3 + $0x70] sm:$0xff]
      %v325 = vld [vmem:[%s3 + $0x78] sm:$0xff]
      %v326 = vld [vmem:[%s3 + $0x80] sm:$0xff]
      %v327 = vld [vmem:[%s3 + $0x88] sm:$0xff]
      %v328 = vld [vmem:[%s3 + $0x90] sm:$0xff]
      %v329 = vld [vmem:[%s3 + $0x98] sm:$0xff]
      %v330 = vld [vmem:[%s3 + $0xa0] sm:$0xff]
      %v331 = vld [vmem:[%s3 + $0xa8] sm:$0xff]
      %v332 = vld [vmem:[%s3 + $0xb0] sm:$0xff]
      %v333 = vld [vmem:[%s3 + $0xb8] sm:$0xff]
      %v334 = vld [vmem:[%s3 + $0xc0] sm:$0xff]
      %v335 = vld [vmem:[%s3 + $0xc8] sm:$0xff]
      %v336 = vld [vmem:[%s3 + $0xd0] sm:$0xff]
      %v337 = vld [vmem:[%s3 + $0xd8] sm:$0xff]
      %v338 = vld [vmem:[%s3 + $0xe0] sm:$0xff]
      %v339 = vld [vmem:[%s3 + $0xe8] sm:$0xff]
      %v340 = vld [vmem:[%s3 + $0xf0] sm:$0xff]
      %v341 = vld [vmem:[%s3 + $0xf8] sm:$0xff]
      %v342 = vld [vmem:[%s3 + $0x100] sm:$0xff]
      %v343 = vld [vmem:[%s3 + $0x108] sm:$0xff]
      %v344 = vld [vmem:[%s3 + $0x110] sm:$0xff]
      %v345 = vld [vmem:[%s3 + $0x118] sm:$0xff]
      %v346 = vld [vmem:[%s3 + $0x120] sm:$0xff]
      %v347 = vld [vmem:[%s3 + $0x128] sm:$0xff]
      %v348 = vld [vmem:[%s3 + $0x130] sm:$0xff]
      %v349 = vld [vmem:[%s3 + $0x138] sm:$0xff]
      %v350 = vld [vmem:[%s3 + $0x140] sm:$0xff]
      %v351 = vld [vmem:[%s3 + $0x148] sm:$0xff]
      %v352 = vld [vmem:[%s3 + $0x150] sm:$0xff]
      %v353 = vld [vmem:[%s3 + $0x158] sm:$0xff]
      %v354 = vld [vmem:[%s3 + $0x160] sm:$0xff]
      %v355 = vld [vmem:[%s3 + $0x168] sm:$0xff]
      %v356 = vld [vmem:[%s3 + $0x170] sm:$0xff]
      %v357 = vld [vmem:[%s3 + $0x178] sm:$0xff]
      %v358 = vld [vmem:[%s3 + $0x180] sm:$0xff]
      %v359 = vld [vmem:[%s3 + $0x188] sm:$0xff]
      %v360 = vld [vmem:[%s3 + $0x190] sm:$0xff]
      %v361 = vld [vmem:[%s3 + $0x198] sm:$0xff]
      %v362 = vld [vmem:[%s3 + $0x1a0] sm:$0xff]
      %v363 = vld [vmem:[%s3 + $0x1a8] sm:$0xff]
      %v364 = vld [vmem:[%s3 + $0x1b0] sm:$0xff]
      %v365 = vld [vmem:[%s3 + $0x1b8] sm:$0xff]
      %v366 = vld [vmem:[%s3 + $0x1c0] sm:$0xff]
      %v367 = vld [vmem:[%s3 + $0x1c8] sm:$0xff]
      %v368 = vld [vmem:[%s3 + $0x1d0] sm:$0xff]
      %v369 = vld [vmem:[%s3 + $0x1d8] sm:$0xff]
      %v370 = vld [vmem:[%s3 + $0x1e0] sm:$0xff]
      %v371 = vld [vmem:[%s3 + $0x1e8] sm:$0xff]
      %v372 = vld [vmem:[%s3 + $0x1f0] sm:$0xff]
      %v373 = vld [vmem:[%s3 + $0x1f8] sm:$0xff]
      %v374 = vld [vmem:[%s4] sm:$0xf]
      %v375 = vld [vmem:[%s5] sm:$0xf]
      %v376 = vld [vmem:[%s6] sm:$0xf]
      loop: start=0, step=1, limit=3
      $region49: #{separable_convolution_model.15} parent=47 // loop_pre_header
        _
      $region50: #{separable_convolution_model.15} parent=47 // loop_header
        %s378 = sphi 0, %s382
        %p379 = scmp.ge.s32.totalorder %s378, 3
      $region51: #{separable_convolution_model.15} parent=47 // loop_header_branch
        %381 = sbr.rel (%p379) target = $region55
      $region52: #{separable_convolution_model.15} parent=47 // loop_body
        %s383 = sadd.s32 %s304, %s378
        %s384 = smul.u32 %s383, 2
        %s385 = smul.addr %s384, 8
        %s386 = scalar_lea.vmem %s292, %s385
        %v387 = vld [vmem:[%s386] sm:$0x1f]
        %v388 = vld [vmem:[%s386 + $0x8] sm:$0x1f]
        %v389 = vlaneseq
        %v390 = vshrl.u32 %v389, 7
        %v391 = vsub.s32 0, %v390
        %v392 = vrot.slane %v305, %v391
        %v393 = vlaneseq
        %v394 = vshrl.u32 %v393, 7
        %v395 = vsub.s32 0, %v394
        %v396 = vrot.slane %v306, %v395
        %v397 = vmul.f32 %v387, %v392
        %v398 = vmul.f32 %v388, %v396
        %v399 = vadd.f32 %v397, 0.0
        %v400 = vadd.f32 %v398, 0.0
        %v401 = vlaneseq
        %v402 = vshrl.u32 %v401, 7
        %v403 = vsub.s32 1, %v402
        %v404 = vrot.slane %v305, %v403
        %v405 = vlaneseq
        %v406 = vshrl.u32 %v405, 7
        %v407 = vsub.s32 1, %v406
        %v408 = vrot.slane %v306, %v407
        %v409 = vmul.f32 %v387, %v404
        %v410 = vmul.f32 %v388, %v408
        %v413 = vrot.slane %v409, 1
        %v414 = vrot.slane %v410, 1
        %v417 = vadd.f32 %v399, %v413
        %v418 = vadd.f32 %v400, %v414
        %v419 = vlaneseq
        %v420 = vshrl.u32 %v419, 7
        %v421 = vsub.s32 2, %v420
        %v422 = vrot.slane %v305, %v421
        %v423 = vlaneseq
        %v424 = vshrl.u32 %v423, 7
        %v425 = vsub.s32 2, %v424
        %v426 = vrot.slane %v306, %v425
        %v427 = vmul.f32 %v387, %v422
        %v428 = vmul.f32 %v388, %v426
        %v431 = vrot.slane %v427, 2
        %v432 = vrot.slane %v428, 2
        %v435 = vadd.f32 %v417, %v431
        %v436 = vadd.f32 %v418, %v432
        %s437 = sadd.s32 %s383, 1
        %s438 = smul.u32 %s437, 2
        %s439 = smul.addr %s438, 8
        %s440 = scalar_lea.vmem %s292, %s439
        %v441 = vld [vmem:[%s440] sm:$0x1f]
        %v442 = vld [vmem:[%s440 + $0x8] sm:$0x1f]
        %v443 = vlaneseq
        %v444 = vshrl.u32 %v443, 7
        %v445 = vsub.s32 3, %v444
        %v446 = vrot.slane %v305, %v445
        %v447 = vlaneseq
        %v448 = vshrl.u32 %v447, 7
        %v449 = vsub.s32 3, %v448
        %v450 = vrot.slane %v306, %v449
        %v451 = vmul.f32 %v441, %v446
        %v452 = vmul.f32 %v442, %v450
        %v453 = vadd.f32 %v435, %v451
        %v454 = vadd.f32 %v436, %v452
        %v455 = vlaneseq
        %v456 = vshrl.u32 %v455, 7
        %v457 = vsub.s32 4, %v456
        %v458 = vrot.slane %v305, %v457
        %v459 = vlaneseq
        %v460 = vshrl.u32 %v459, 7
        %v461 = vsub.s32 4, %v460
        %v462 = vrot.slane %v306, %v461
        %v463 = vmul.f32 %v441, %v458
        %v464 = vmul.f32 %v442, %v462
        %v467 = vrot.slane %v463, 1
        %v468 = vrot.slane %v464, 1
        %v471 = vadd.f32 %v453, %v467
        %v472 = vadd.f32 %v454, %v468
        %v473 = vlaneseq
        %v474 = vshrl.u32 %v473, 7
        %v475 = vsub.s32 5, %v474
        %v476 = vrot.slane %v305, %v475
        %v477 = vlaneseq
        %v478 = vshrl.u32 %v477, 7
        %v479 = vsub.s32 5, %v478
        %v480 = vrot.slane %v306, %v479
        %v481 = vmul.f32 %v441, %v476
        %v482 = vmul.f32 %v442, %v480
        %v485 = vrot.slane %v481, 2
        %v486 = vrot.slane %v482, 2
        %v489 = vadd.f32 %v471, %v485
        %v490 = vadd.f32 %v472, %v486
        %s491 = sadd.s32 %s383, 2
        %s492 = smul.u32 %s491, 2
        %s493 = smul.addr %s492, 8
        %s494 = scalar_lea.vmem %s292, %s493
        %v495 = vld [vmem:[%s494] sm:$0x1f]
        %v496 = vld [vmem:[%s494 + $0x8] sm:$0x1f]
        %v497 = vlaneseq
        %v498 = vshrl.u32 %v497, 7
        %v499 = vsub.s32 6, %v498
        %v500 = vrot.slane %v305, %v499
        %v501 = vlaneseq
        %v502 = vshrl.u32 %v501, 7
        %v503 = vsub.s32 6, %v502
        %v504 = vrot.slane %v306, %v503
        %v505 = vmul.f32 %v495, %v500
        %v506 = vmul.f32 %v496, %v504
        %v507 = vadd.f32 %v489, %v505
        %v508 = vadd.f32 %v490, %v506
        %v509 = vlaneseq
        %v510 = vshrl.u32 %v509, 7
        %v511 = vsub.s32 7, %v510
        %v512 = vrot.slane %v305, %v511
        %v513 = vlaneseq
        %v514 = vshrl.u32 %v513, 7
        %v515 = vsub.s32 7, %v514
        %v516 = vrot.slane %v306, %v515
        %v517 = vmul.f32 %v495, %v512
        %v518 = vmul.f32 %v496, %v516
        %v521 = vrot.slane %v517, 1
        %v522 = vrot.slane %v518, 1
        %v525 = vadd.f32 %v507, %v521
        %v526 = vadd.f32 %v508, %v522
        %v527 = vlaneseq
        %v528 = vshrl.u32 %v527, 7
        %v529 = vsub.s32 0, %v528
        %v530 = vrot.slane %v307, %v529
        %v531 = vlaneseq
        %v532 = vshrl.u32 %v531, 7
        %v533 = vsub.s32 0, %v532
        %v534 = vrot.slane %v308, %v533
        %v535 = vmul.f32 %v495, %v530
        %v536 = vmul.f32 %v496, %v534
        %v539 = vrot.slane %v535, 2
        %v540 = vrot.slane %v536, 2
        %v543 = vadd.f32 %v525, %v539
        %v544 = vadd.f32 %v526, %v540
        %v546 = vlaneseq
        %v547 = vshrl.u32 %v546, 7
        %v548 = vsub.s32 0, %v547
        %v549 = vrot.slane %v309, %v548
        %v550 = vlaneseq
        %v551 = vshrl.u32 %v550, 7
        %v552 = vsub.s32 1, %v551
        %v553 = vrot.slane %v309, %v552
        %v556 = vadd.f32 %v543, %v549
        %v557 = vadd.f32 %v544, %v553
        %v558 = vpack.c.bf16 %v556, %v556
        %v559 = vpack.c.bf16 %v557, %v557
        %v561 = vlaneseq
        %v562 = vshrl.u32 %v561, 7
        %v563 = vsub.s32 0, %v562
        %v564 = vrot.slane %v374, %v563
        %v565 = vlaneseq
        %v566 = vshrl.u32 %v565, 7
        %v567 = vsub.s32 1, %v566
        %v568 = vrot.slane %v374, %v567
        %v569 = vlaneseq
        %v570 = vshrl.u32 %v569, 7
        %v571 = vsub.s32 2, %v570
        %v572 = vrot.slane %v374, %v571
        %v573 = vlaneseq
        %v574 = vshrl.u32 %v573, 7
        %v575 = vsub.s32 3, %v574
        %v576 = vrot.slane %v374, %v575
        %v645 = vunpack.c.l.b16 %v310
        %v646 = vunpack.c.h.b16 %v310
        %v647 = vunpack.c.l.b16 %v311
        %v648 = vunpack.c.h.b16 %v311
        %v649 = vunpack.c.l.b16 %v312
        %v650 = vunpack.c.h.b16 %v312
        %v651 = vunpack.c.l.b16 %v313
        %v652 = vunpack.c.h.b16 %v313
        %v653 = vunpack.c.l.b16 %v314
        %v654 = vunpack.c.h.b16 %v314
        %v655 = vunpack.c.l.b16 %v315
        %v656 = vunpack.c.h.b16 %v315
        %v657 = vunpack.c.l.b16 %v316
        %v658 = vunpack.c.h.b16 %v316
        %v659 = vunpack.c.l.b16 %v317
        %v660 = vunpack.c.h.b16 %v317
        %v661 = vunpack.c.l.b16 %v318
        %v662 = vunpack.c.h.b16 %v318
        %v663 = vunpack.c.l.b16 %v319
        %v664 = vunpack.c.h.b16 %v319
        %v665 = vunpack.c.l.b16 %v320
        %v666 = vunpack.c.h.b16 %v320
        %v667 = vunpack.c.l.b16 %v321
        %v668 = vunpack.c.h.b16 %v321
        %v669 = vunpack.c.l.b16 %v322
        %v670 = vunpack.c.h.b16 %v322
        %v671 = vunpack.c.l.b16 %v323
        %v672 = vunpack.c.h.b16 %v323
        %v673 = vunpack.c.l.b16 %v324
        %v674 = vunpack.c.h.b16 %v324
        %v675 = vunpack.c.l.b16 %v325
        %v676 = vunpack.c.h.b16 %v325
        %v677 = vunpack.c.l.b16 %v326
        %v678 = vunpack.c.h.b16 %v326
        %v679 = vunpack.c.l.b16 %v327
        %v680 = vunpack.c.h.b16 %v327
        %v681 = vunpack.c.l.b16 %v328
        %v682 = vunpack.c.h.b16 %v328
        %v683 = vunpack.c.l.b16 %v329
        %v684 = vunpack.c.h.b16 %v329
        %v685 = vunpack.c.l.b16 %v330
        %v686 = vunpack.c.h.b16 %v330
        %v687 = vunpack.c.l.b16 %v331
        %v688 = vunpack.c.h.b16 %v331
        %v689 = vunpack.c.l.b16 %v332
        %v690 = vunpack.c.h.b16 %v332
        %v691 = vunpack.c.l.b16 %v333
        %v692 = vunpack.c.h.b16 %v333
        %v693 = vunpack.c.l.b16 %v334
        %v694 = vunpack.c.h.b16 %v334
        %v695 = vunpack.c.l.b16 %v335
        %v696 = vunpack.c.h.b16 %v335
        %v697 = vunpack.c.l.b16 %v336
        %v698 = vunpack.c.h.b16 %v336
        %v699 = vunpack.c.l.b16 %v337
        %v700 = vunpack.c.h.b16 %v337
        %v701 = vunpack.c.l.b16 %v338
        %v702 = vunpack.c.h.b16 %v338
        %v703 = vunpack.c.l.b16 %v339
        %v704 = vunpack.c.h.b16 %v339
        %v705 = vunpack.c.l.b16 %v340
        %v706 = vunpack.c.h.b16 %v340
        %v707 = vunpack.c.l.b16 %v341
        %v708 = vunpack.c.h.b16 %v341
        %v709 = vunpack.c.l.b16 %v342
        %v710 = vunpack.c.h.b16 %v342
        %v711 = vunpack.c.l.b16 %v343
        %v712 = vunpack.c.h.b16 %v343
        %v713 = vunpack.c.l.b16 %v344
        %v714 = vunpack.c.h.b16 %v344
        %v715 = vunpack.c.l.b16 %v345
        %v716 = vunpack.c.h.b16 %v345
        %v717 = vunpack.c.l.b16 %v346
        %v718 = vunpack.c.h.b16 %v346
        %v719 = vunpack.c.l.b16 %v347
        %v720 = vunpack.c.h.b16 %v347
        %v721 = vunpack.c.l.b16 %v348
        %v722 = vunpack.c.h.b16 %v348
        %v723 = vunpack.c.l.b16 %v349
        %v724 = vunpack.c.h.b16 %v349
        %v725 = vunpack.c.l.b16 %v350
        %v726 = vunpack.c.h.b16 %v350
        %v727 = vunpack.c.l.b16 %v351
        %v728 = vunpack.c.h.b16 %v351
        %v729 = vunpack.c.l.b16 %v352
        %v730 = vunpack.c.h.b16 %v352
        %v731 = vunpack.c.l.b16 %v353
        %v732 = vunpack.c.h.b16 %v353
        %v733 = vunpack.c.l.b16 %v354
        %v734 = vunpack.c.h.b16 %v354
        %v735 = vunpack.c.l.b16 %v355
        %v736 = vunpack.c.h.b16 %v355
        %v737 = vunpack.c.l.b16 %v356
        %v738 = vunpack.c.h.b16 %v356
        %v739 = vunpack.c.l.b16 %v357
        %v740 = vunpack.c.h.b16 %v357
        %v741 = vunpack.c.l.b16 %v358
        %v742 = vunpack.c.h.b16 %v358
        %v743 = vunpack.c.l.b16 %v359
        %v744 = vunpack.c.h.b16 %v359
        %v745 = vunpack.c.l.b16 %v360
        %v746 = vunpack.c.h.b16 %v360
        %v747 = vunpack.c.l.b16 %v361
        %v748 = vunpack.c.h.b16 %v361
        %v749 = vunpack.c.l.b16 %v362
        %v750 = vunpack.c.h.b16 %v362
        %v751 = vunpack.c.l.b16 %v363
        %v752 = vunpack.c.h.b16 %v363
        %v753 = vunpack.c.l.b16 %v364
        %v754 = vunpack.c.h.b16 %v364
        %v755 = vunpack.c.l.b16 %v365
        %v756 = vunpack.c.h.b16 %v365
        %v757 = vunpack.c.l.b16 %v366
        %v758 = vunpack.c.h.b16 %v366
        %v759 = vunpack.c.l.b16 %v367
        %v760 = vunpack.c.h.b16 %v367
        %v761 = vunpack.c.l.b16 %v368
        %v762 = vunpack.c.h.b16 %v368
        %v763 = vunpack.c.l.b16 %v369
        %v764 = vunpack.c.h.b16 %v369
        %v765 = vunpack.c.l.b16 %v370
        %v766 = vunpack.c.h.b16 %v370
        %v767 = vunpack.c.l.b16 %v371
        %v768 = vunpack.c.h.b16 %v371
        %v769 = vunpack.c.l.b16 %v372
        %v770 = vunpack.c.h.b16 %v372
        %v771 = vunpack.c.l.b16 %v373
        %v772 = vunpack.c.h.b16 %v373
        %v773 = vpack.c.b16 %v649, %v645
        %v774 = vpack.c.b16 %v650, %v646
        %v775 = vpack.c.b16 %v651, %v647
        %v776 = vpack.c.b16 %v652, %v648
        %v777 = vpack.c.b16 %v657, %v653
        %v778 = vpack.c.b16 %v658, %v654
        %v779 = vpack.c.b16 %v659, %v655
        %v780 = vpack.c.b16 %v660, %v656
        %v781 = vpack.c.b16 %v665, %v661
        %v782 = vpack.c.b16 %v666, %v662
        %v783 = vpack.c.b16 %v667, %v663
        %v784 = vpack.c.b16 %v668, %v664
        %v785 = vpack.c.b16 %v673, %v669
        %v786 = vpack.c.b16 %v674, %v670
        %v787 = vpack.c.b16 %v675, %v671
        %v788 = vpack.c.b16 %v676, %v672
        %v789 = vpack.c.b16 %v681, %v677
        %v790 = vpack.c.b16 %v682, %v678
        %v791 = vpack.c.b16 %v683, %v679
        %v792 = vpack.c.b16 %v684, %v680
        %v793 = vpack.c.b16 %v689, %v685
        %v794 = vpack.c.b16 %v690, %v686
        %v795 = vpack.c.b16 %v691, %v687
        %v796 = vpack.c.b16 %v692, %v688
        %v797 = vpack.c.b16 %v697, %v693
        %v798 = vpack.c.b16 %v698, %v694
        %v799 = vpack.c.b16 %v699, %v695
        %v800 = vpack.c.b16 %v700, %v696
        %v801 = vpack.c.b16 %v705, %v701
        %v802 = vpack.c.b16 %v706, %v702
        %v803 = vpack.c.b16 %v707, %v703
        %v804 = vpack.c.b16 %v708, %v704
        %v805 = vpack.c.b16 %v713, %v709
        %v806 = vpack.c.b16 %v714, %v710
        %v807 = vpack.c.b16 %v715, %v711
        %v808 = vpack.c.b16 %v716, %v712
        %v809 = vpack.c.b16 %v721, %v717
        %v810 = vpack.c.b16 %v722, %v718
        %v811 = vpack.c.b16 %v723, %v719
        %v812 = vpack.c.b16 %v724, %v720
        %v813 = vpack.c.b16 %v729, %v725
        %v814 = vpack.c.b16 %v730, %v726
        %v815 = vpack.c.b16 %v731, %v727
        %v816 = vpack.c.b16 %v732, %v728
        %v817 = vpack.c.b16 %v737, %v733
        %v818 = vpack.c.b16 %v738, %v734
        %v819 = vpack.c.b16 %v739, %v735
        %v820 = vpack.c.b16 %v740, %v736
        %v821 = vpack.c.b16 %v745, %v741
        %v822 = vpack.c.b16 %v746, %v742
        %v823 = vpack.c.b16 %v747, %v743
        %v824 = vpack.c.b16 %v748, %v744
        %v825 = vpack.c.b16 %v753, %v749
        %v826 = vpack.c.b16 %v754, %v750
        %v827 = vpack.c.b16 %v755, %v751
        %v828 = vpack.c.b16 %v756, %v752
        %v829 = vpack.c.b16 %v761, %v757
        %v830 = vpack.c.b16 %v762, %v758
        %v831 = vpack.c.b16 %v763, %v759
        %v832 = vpack.c.b16 %v764, %v760
        %v833 = vpack.c.b16 %v769, %v765
        %v834 = vpack.c.b16 %v770, %v766
        %v835 = vpack.c.b16 %v771, %v767
        %v836 = vpack.c.b16 %v772, %v768
        %901 = vmatprep.subr.bf16.mxu0 %v774
        %902 = vmatpush1.bf16.msra.mxu0 %v773
        %903 = vmatprep.subr.bf16.mxu0 %v778
        %904 = vmatpush1.bf16.msra.mxu0 %v777
        %905 = vmatprep.subr.bf16.mxu0 %v782
        %906 = vmatpush1.bf16.msra.mxu0 %v781
        %907 = vmatprep.subr.bf16.mxu0 %v786
        %908 = vmatpush1.bf16.msra.mxu0 %v785
        %909 = vmatprep.subr.bf16.mxu0 %v790
        %910 = vmatpush1.bf16.msra.mxu0 %v789
        %911 = vmatprep.subr.bf16.mxu0 %v794
        %912 = vmatpush1.bf16.msra.mxu0 %v793
        %913 = vmatprep.subr.bf16.mxu0 %v798
        %914 = vmatpush1.bf16.msra.mxu0 %v797
        %915 = vmatprep.subr.bf16.mxu0 %v802
        %916 = vmatpush1.bf16.msra.mxu0 %v801
        %917 = vmatprep.subr.bf16.mxu0 %v806
        %918 = vmatpush1.bf16.msra.mxu0 %v805
        %919 = vmatprep.subr.bf16.mxu0 %v810
        %920 = vmatpush1.bf16.msra.mxu0 %v809
        %921 = vmatprep.subr.bf16.mxu0 %v814
        %922 = vmatpush1.bf16.msra.mxu0 %v813
        %923 = vmatprep.subr.bf16.mxu0 %v818
        %924 = vmatpush1.bf16.msra.mxu0 %v817
        %925 = vmatprep.subr.bf16.mxu0 %v822
        %926 = vmatpush1.bf16.msra.mxu0 %v821
        %927 = vmatprep.subr.bf16.mxu0 %v826
        %928 = vmatpush1.bf16.msra.mxu0 %v825
        %929 = vmatprep.subr.bf16.mxu0 %v830
        %930 = vmatpush1.bf16.msra.mxu0 %v829
        %931 = vmatprep.subr.bf16.mxu0 %v834
        %932 = vmatpush1.bf16.msra.mxu0 %v833
        %933 = vmatprep.mubr.bf16.mxu0 %v559
        %934 = vmatmul.mubr.bf16.gmra.mrb[0].mxu0 %v558
        %v935 = vpop.f32.mrb[0].mxu0
        %v936 = vadd.f32 %v564, %v935
        %v937 = vpop.f32.mrb[0].mxu0
        %v938 = vadd.f32 %v568, %v937
        %v939 = vpop.f32.mrb[0].mxu0
        %v940 = vpop.f32.mrb[0].mxu0
        %941 = vdwg.mxu0
        %942 = vmatprep.subr.bf16.mxu0 %v776
        %943 = vmatpush1.bf16.msra.mxu0 %v775
        %944 = vmatprep.subr.bf16.mxu0 %v780
        %945 = vmatpush1.bf16.msra.mxu0 %v779
        %946 = vmatprep.subr.bf16.mxu0 %v784
        %947 = vmatpush1.bf16.msra.mxu0 %v783
        %948 = vmatprep.subr.bf16.mxu0 %v788
        %949 = vmatpush1.bf16.msra.mxu0 %v787
        %950 = vmatprep.subr.bf16.mxu0 %v792
        %951 = vmatpush1.bf16.msra.mxu0 %v791
        %952 = vmatprep.subr.bf16.mxu0 %v796
        %953 = vmatpush1.bf16.msra.mxu0 %v795
        %954 = vmatprep.subr.bf16.mxu0 %v800
        %955 = vmatpush1.bf16.msra.mxu0 %v799
        %956 = vmatprep.subr.bf16.mxu0 %v804
        %957 = vmatpush1.bf16.msra.mxu0 %v803
        %958 = vmatprep.subr.bf16.mxu0 %v808
        %959 = vmatpush1.bf16.msra.mxu0 %v807
        %960 = vmatprep.subr.bf16.mxu0 %v812
        %961 = vmatpush1.bf16.msra.mxu0 %v811
        %962 = vmatprep.subr.bf16.mxu0 %v816
        %963 = vmatpush1.bf16.msra.mxu0 %v815
        %964 = vmatprep.subr.bf16.mxu0 %v820
        %965 = vmatpush1.bf16.msra.mxu0 %v819
        %966 = vmatprep.subr.bf16.mxu0 %v824
        %967 = vmatpush1.bf16.msra.mxu0 %v823
        %968 = vmatprep.subr.bf16.mxu0 %v828
        %969 = vmatpush1.bf16.msra.mxu0 %v827
        %970 = vmatprep.subr.bf16.mxu0 %v832
        %971 = vmatpush1.bf16.msra.mxu0 %v831
        %972 = vmatprep.subr.bf16.mxu0 %v836
        %973 = vmatpush1.bf16.msra.mxu0 %v835
        %974 = vmatprep.mubr.bf16.mxu0 %v559
        %975 = vmatmul.mubr.bf16.gmra.mrb[0].mxu0 %v558
        %v976 = vpop.f32.mrb[0].mxu0
        %v977 = vadd.f32 %v572, %v976
        %v978 = vpop.f32.mrb[0].mxu0
        %v979 = vadd.f32 %v576, %v978
        %v980 = vpop.f32.mrb[0].mxu0
        %v981 = vpop.f32.mrb[0].mxu0
        %982 = vdwg.mxu0
        %v983 = vmax.f32 %v936, 0.0
        %v984 = vmax.f32 %v938, 0.0
        %v985 = vmax.f32 %v977, 0.0
        %v986 = vmax.f32 %v979, 0.0
        %v988 = vlaneseq
        %v989 = vshrl.u32 %v988, 7
        %v990 = vsub.s32 0, %v989
        %v991 = vrot.slane %v375, %v990
        %v992 = vlaneseq
        %v993 = vshrl.u32 %v992, 7
        %v994 = vsub.s32 1, %v993
        %v995 = vrot.slane %v375, %v994
        %v996 = vlaneseq
        %v997 = vshrl.u32 %v996, 7
        %v998 = vsub.s32 2, %v997
        %v999 = vrot.slane %v375, %v998
        %v1000 = vlaneseq
        %v1001 = vshrl.u32 %v1000, 7
        %v1002 = vsub.s32 3, %v1001
        %v1003 = vrot.slane %v375, %v1002
        %v1008 = vmul.f32 %v983, %v991
        %v1009 = vmul.f32 %v984, %v995
        %v1010 = vmul.f32 %v985, %v999
        %v1011 = vmul.f32 %v986, %v1003
        %v1013 = vlaneseq
        %v1014 = vshrl.u32 %v1013, 7
        %v1015 = vsub.s32 0, %v1014
        %v1016 = vrot.slane %v376, %v1015
        %v1017 = vlaneseq
        %v1018 = vshrl.u32 %v1017, 7
        %v1019 = vsub.s32 1, %v1018
        %v1020 = vrot.slane %v376, %v1019
        %v1021 = vlaneseq
        %v1022 = vshrl.u32 %v1021, 7
        %v1023 = vsub.s32 2, %v1022
        %v1024 = vrot.slane %v376, %v1023
        %v1025 = vlaneseq
        %v1026 = vshrl.u32 %v1025, 7
        %v1027 = vsub.s32 3, %v1026
        %v1028 = vrot.slane %v376, %v1027
        %v1033 = vadd.f32 %v1008, %v1016
        %v1034 = vadd.f32 %v1009, %v1020
        %v1035 = vadd.f32 %v1010, %v1024
        %v1036 = vadd.f32 %v1011, %v1028
        %v1041 = vcombine.low %v1033, %v1034
        %v1042 = vcombine.low %v1035, %v1036
        %s1045 = smul.u32 %s378, 4
        %s1046 = smul.addr %s1045, 4
        %s1047 = scalar_lea.vmem %s302, %s1046
        %1048 = vst [vmem:[%s1047] sm:$0x77] %v1041
        %1049 = vst [vmem:[%s1047 + $0x8] sm:$0x77] %v1042
      $region53: #{separable_convolution_model.15} parent=47 // loop_footer
        %s382 = sadd.s32 1, %s378
      $region54: #{separable_convolution_model.15} parent=47 // loop_footer_branch
        %377 = sbr.rel target = $region50
      $region55: #{separable_convolution_model.15} parent=47 // loop_exit
        _
      %s1050 = smul.u32 3, %s23
      %p1051 = scmp.lt.s32.totalorder %s22, 1
      %s1052 = scalar_select %p1051, %s22, 1
      %p1053 = scmp.lt.s32.totalorder %s1050, 2
      %s1054 = scalar_select %p1053, %s1050, 2
      %s1055 = smul.addr %s1054, 4
      %s1056 = smul.addr %s1052, 12
      %s1057 = sadd.s32 %s1055, %s1056
      %s1058 = smul.addr %s1057, 4
      %s1059 = scalar_lea.vmem %s7, %s1058
      // Predicated region
      $region56: #{separable_convolution_model.15} parent=47 // pred_check
        %p1060 = pneg %p202
      $region57: #{separable_convolution_model.15} parent=47 // pred_check_branch
        %1062 = sbr.rel (%p1060) target = $region59
      $region58: #{separable_convolution_model.15} parent=47 // pred_region
        %s1063 = smul.u32 3, %s23
      $region59: #{separable_convolution_model.15} parent=47 // pred_fallthru
        _
    $region48: #{separable_convolution_model.15} parent=5 // pred_fallthru
      _
    %p1064 = scmp.le.s32.totalorder 2, %s13
    // Predicated region
    $region60: #{separable_convolution_model.15} parent=5 // pred_check
      %p1065 = pneg %p1064
    $region61: #{separable_convolution_model.15} parent=5 // pred_check_branch
      %1067 = sbr.rel (%p1065) target = $region63
    $region62: #{separable_convolution_model.15} parent=5 // pred_region
      %s1068 = ssub.s32 %s13, 2
      // Predicated region
      $region64: #{separable_convolution_model.15} parent=62 // pred_check
        %p1069 = pneg %p208
      $region65: #{separable_convolution_model.15} parent=62 // pred_check_branch
        %1071 = sbr.rel (%p1069) target = $region67
      $region66: #{separable_convolution_model.15} parent=62 // pred_region
        %s1072 = smul.u32 3, %s25
        %p1073 = scmp.lt.s32.totalorder %s24, 1
        %s1074 = scalar_select %p1073, %s24, 1
        %p1075 = scmp.lt.s32.totalorder %s1072, 2
        %s1076 = scalar_select %p1075, %s1072, 2
        %s1077 = smul.addr %s1076, 4
        %s1078 = smul.addr %s1074, 12
        %s1079 = sadd.s32 %s1077, %s1078
        %s1080 = smul.addr %s1079, 4
        %s1081 = scalar_lea.vmem %s7, %s1080
      $region67: #{separable_convolution_model.15} parent=62 // pred_fallthru
        _
    $region63: #{separable_convolution_model.15} parent=5 // pred_fallthru
      _
  $region6: #{separable_convolution_model.15} parent=0 // loop_footer
    %s17 = sadd.s32 1, %s13
  $region7: #{separable_convolution_model.15} parent=0 // loop_footer_branch
    %12 = sbr.rel target = $region3
  $region8: #{separable_convolution_model.15} parent=0 // loop_exit
    _

// kernel: separable_convolution_model.16
$region0: #{separable_convolution_model.16}
  #allocation0 [shape = 'u32[]', space=smem, size = 0x4, offset = 0x4, fixed_abs, tag = 'smem constant byte address 0x4 - core index']
  #allocation1 [shape = 'u32[144,128]{1,0:T(1,128)}', space=vmem, size = 0x12000, scoped, tag = 'internal scratch']
  %s0 = inlined_call_operand.vmem [shape: f32[2,3,3,512], index: 0, kind: input, shape index: {}]
  %s1 = inlined_call_operand.vmem [shape: f32[9,512], index: 1, kind: input, shape index: {}]
  %s2 = inlined_call_operand.vmem [shape: f32[1,512], index: 2, kind: input, shape index: {}]
  %s3 = inlined_call_operand.vmem [shape: bf16[512,512], index: 3, kind: input, shape index: {}]
  %s4 = inlined_call_operand.vmem [shape: f32[1,512], index: 4, kind: input, shape index: {}]
  %s5 = inlined_call_operand.vmem [shape: f32[1,512], index: 5, kind: input, shape index: {}]
  %s6 = inlined_call_operand.vmem [shape: f32[1,512], index: 6, kind: input, shape index: {}]
  %s7 = inlined_call_operand.vmem [shape: f32[2,1,1,512], index: 7, kind: output, shape index: {}]
  %s8 = sld [smem:[#allocation0]]
  $region61: #{separable_convolution_model.16} parent=0
    _
  %s10 = ssub.s32 1, %s8
  %s11 = scalar_select 0, %s10, %s8
  loop: start=0, step=1, limit=4
  $region2: #{separable_convolution_model.16} parent=0 // loop_pre_header
    _
  $region3: #{separable_convolution_model.16} parent=0 // loop_header
    %s13 = sphi 0, %s17
    %p14 = scmp.ge.s32.totalorder %s13, 4
    %s20 = sphi 0, %s32
    %s21 = sphi 0, %s28
    %s22 = sphi 0, %s20
    %s23 = sphi 0, %s21
    %s24 = sphi 0, %s22
    %s25 = sphi 0, %s23
    %s35 = sphi 0, %s37
    %s38 = sphi 0, %s35
    %s39 = sphi 0, %s38
    %s55 = sphi 0, %s39
    %s59 = sphi 0, %s59
    %s61 = sphi 0, %s59
    %s62 = sphi 0, %s61
    %s76 = sphi 0, %s62
    %s80 = sphi 0, %s80
    %s82 = sphi 0, %s80
    %s83 = sphi 0, %s82
    %s97 = sphi 0, %s83
    %s101 = sphi 0, %s101
    %s103 = sphi 0, %s101
    %s104 = sphi 0, %s103
    %s118 = sphi 0, %s104
    %s122 = sphi 0, %s122
    %s124 = sphi 0, %s122
    %s125 = sphi 0, %s124
    %s139 = sphi 0, %s125
    %s143 = sphi 0, %s143
    %s145 = sphi 0, %s143
    %s146 = sphi 0, %s145
    %s160 = sphi 0, %s146
    %s164 = sphi 0, %s164
    %s166 = sphi 0, %s164
    %s167 = sphi 0, %s166
    %s181 = sphi 0, %s167
    %s189 = sphi 0, %s191
    %s192 = sphi 0, %s189
    %s193 = sphi 0, %s192
    %s209 = sphi 0, %s193
  $region4: #{separable_convolution_model.16} parent=0 // loop_header_branch
    %16 = sbr.rel (%p14) target = $region8
  $region5: #{separable_convolution_model.16} parent=0 // loop_body
    %s18 = ssub.s32 %s13, 1
    %s19 = ssub.s32 %s13, 2
    %s26 = sadd.s32 1, %s21
    %p27 = scmp.ge.s32.totalorder %s26, 1
    %s28 = scalar_select %p27, 0, %s26
    %s29 = sadd.s32 1, %s20
    %s30 = scalar_select %p27, %s29, %s20
    %p31 = scmp.ge.s32.totalorder %s30, 2
    %s32 = scalar_select %p31, 0, %s30
    %s33 = ssub.s32 %s20, %s32
    %p34 = scmp.eq.s32.totalorder %s33, 0
    %s36 = sadd.s32 %s35, 1
    %s37 = scalar_select %p34, %s35, %s36
    %p40 = pneg %p34
    %p41 = scmp.eq.s32.totalorder %s13, 1
    %p42 = por %p40, %p41
    %p43 = scmp.ne.s32.totalorder %s35, %s38
    %p44 = scmp.eq.s32.totalorder %s13, 0
    %p45 = por %p43, %p44
    %p46 = scmp.ne.s32.totalorder %s35, %s38
    %p47 = scmp.eq.s32.totalorder %s18, 1
    %p48 = por %p46, %p47
    %p49 = scmp.ne.s32.totalorder %s38, %s39
    %p50 = scmp.eq.s32.totalorder %s18, 0
    %p51 = por %p49, %p50
    %p52 = scmp.ne.s32.totalorder %s38, %s39
    %p53 = scmp.eq.s32.totalorder %s19, 1
    %p54 = por %p52, %p53
    %p56 = scmp.ne.s32.totalorder %s39, %s55
    %p57 = scmp.eq.s32.totalorder %s19, 0
    %p58 = por %p56, %p57
    %s60 = sadd.s32 %s59, 1
    %p63 = scmp.eq.s32.totalorder %s13, 1
    %p64 = scmp.ne.s32.totalorder %s59, %s61
    %p65 = scmp.eq.s32.totalorder %s13, 0
    %p66 = por %p64, %p65
    %p67 = scmp.ne.s32.totalorder %s59, %s61
    %p68 = scmp.eq.s32.totalorder %s18, 1
    %p69 = por %p67, %p68
    %p70 = scmp.ne.s32.totalorder %s61, %s62
    %p71 = scmp.eq.s32.totalorder %s18, 0
    %p72 = por %p70, %p71
    %p73 = scmp.ne.s32.totalorder %s61, %s62
    %p74 = scmp.eq.s32.totalorder %s19, 1
    %p75 = por %p73, %p74
    %p77 = scmp.ne.s32.totalorder %s62, %s76
    %p78 = scmp.eq.s32.totalorder %s19, 0
    %p79 = por %p77, %p78
    %s81 = sadd.s32 %s80, 1
    %p84 = scmp.eq.s32.totalorder %s13, 1
    %p85 = scmp.ne.s32.totalorder %s80, %s82
    %p86 = scmp.eq.s32.totalorder %s13, 0
    %p87 = por %p85, %p86
    %p88 = scmp.ne.s32.totalorder %s80, %s82
    %p89 = scmp.eq.s32.totalorder %s18, 1
    %p90 = por %p88, %p89
    %p91 = scmp.ne.s32.totalorder %s82, %s83
    %p92 = scmp.eq.s32.totalorder %s18, 0
    %p93 = por %p91, %p92
    %p94 = scmp.ne.s32.totalorder %s82, %s83
    %p95 = scmp.eq.s32.totalorder %s19, 1
    %p96 = por %p94, %p95
    %p98 = scmp.ne.s32.totalorder %s83, %s97
    %p99 = scmp.eq.s32.totalorder %s19, 0
    %p100 = por %p98, %p99
    %s102 = sadd.s32 %s101, 1
    %p105 = scmp.eq.s32.totalorder %s13, 1
    %p106 = scmp.ne.s32.totalorder %s101, %s103
    %p107 = scmp.eq.s32.totalorder %s13, 0
    %p108 = por %p106, %p107
    %p109 = scmp.ne.s32.totalorder %s101, %s103
    %p110 = scmp.eq.s32.totalorder %s18, 1
    %p111 = por %p109, %p110
    %p112 = scmp.ne.s32.totalorder %s103, %s104
    %p113 = scmp.eq.s32.totalorder %s18, 0
    %p114 = por %p112, %p113
    %p115 = scmp.ne.s32.totalorder %s103, %s104
    %p116 = scmp.eq.s32.totalorder %s19, 1
    %p117 = por %p115, %p116
    %p119 = scmp.ne.s32.totalorder %s104, %s118
    %p120 = scmp.eq.s32.totalorder %s19, 0
    %p121 = por %p119, %p120
    %s123 = sadd.s32 %s122, 1
    %p126 = scmp.eq.s32.totalorder %s13, 1
    %p127 = scmp.ne.s32.totalorder %s122, %s124
    %p128 = scmp.eq.s32.totalorder %s13, 0
    %p129 = por %p127, %p128
    %p130 = scmp.ne.s32.totalorder %s122, %s124
    %p131 = scmp.eq.s32.totalorder %s18, 1
    %p132 = por %p130, %p131
    %p133 = scmp.ne.s32.totalorder %s124, %s125
    %p134 = scmp.eq.s32.totalorder %s18, 0
    %p135 = por %p133, %p134
    %p136 = scmp.ne.s32.totalorder %s124, %s125
    %p137 = scmp.eq.s32.totalorder %s19, 1
    %p138 = por %p136, %p137
    %p140 = scmp.ne.s32.totalorder %s125, %s139
    %p141 = scmp.eq.s32.totalorder %s19, 0
    %p142 = por %p140, %p141
    %s144 = sadd.s32 %s143, 1
    %p147 = scmp.eq.s32.totalorder %s13, 1
    %p148 = scmp.ne.s32.totalorder %s143, %s145
    %p149 = scmp.eq.s32.totalorder %s13, 0
    %p150 = por %p148, %p149
    %p151 = scmp.ne.s32.totalorder %s143, %s145
    %p152 = scmp.eq.s32.totalorder %s18, 1
    %p153 = por %p151, %p152
    %p154 = scmp.ne.s32.totalorder %s145, %s146
    %p155 = scmp.eq.s32.totalorder %s18, 0
    %p156 = por %p154, %p155
    %p157 = scmp.ne.s32.totalorder %s145, %s146
    %p158 = scmp.eq.s32.totalorder %s19, 1
    %p159 = por %p157, %p158
    %p161 = scmp.ne.s32.totalorder %s146, %s160
    %p162 = scmp.eq.s32.totalorder %s19, 0
    %p163 = por %p161, %p162
    %s165 = sadd.s32 %s164, 1
    %p168 = scmp.eq.s32.totalorder %s13, 1
    %p169 = scmp.ne.s32.totalorder %s164, %s166
    %p170 = scmp.eq.s32.totalorder %s13, 0
    %p171 = por %p169, %p170
    %p172 = scmp.ne.s32.totalorder %s164, %s166
    %p173 = scmp.eq.s32.totalorder %s18, 1
    %p174 = por %p172, %p173
    %p175 = scmp.ne.s32.totalorder %s166, %s167
    %p176 = scmp.eq.s32.totalorder %s18, 0
    %p177 = por %p175, %p176
    %p178 = scmp.ne.s32.totalorder %s166, %s167
    %p179 = scmp.eq.s32.totalorder %s19, 1
    %p180 = por %p178, %p179
    %p182 = scmp.ne.s32.totalorder %s167, %s181
    %p183 = scmp.eq.s32.totalorder %s19, 0
    %p184 = por %p182, %p183
    %s185 = ssub.s32 %s20, %s32
    %s186 = ssub.s32 %s21, %s28
    %s187 = sor.u32 %s185, %s186
    %p188 = scmp.eq.s32.totalorder %s187, 0
    %s190 = sadd.s32 %s189, 1
    %s191 = scalar_select %p188, %s189, %s190
    %p194 = pneg %p188
    %p195 = scmp.eq.s32.totalorder %s13, 1
    %p196 = por %p194, %p195
    %p197 = scmp.ne.s32.totalorder %s189, %s192
    %p198 = scmp.eq.s32.totalorder %s13, 0
    %p199 = por %p197, %p198
    %p200 = scmp.ne.s32.totalorder %s189, %s192
    %p201 = scmp.eq.s32.totalorder %s18, 1
    %p202 = por %p200, %p201
    %p203 = scmp.ne.s32.totalorder %s192, %s193
    %p204 = scmp.eq.s32.totalorder %s18, 0
    %p205 = por %p203, %p204
    %p206 = scmp.ne.s32.totalorder %s192, %s193
    %p207 = scmp.eq.s32.totalorder %s19, 1
    %p208 = por %p206, %p207
    %p210 = scmp.ne.s32.totalorder %s193, %s209
    %p211 = scmp.eq.s32.totalorder %s19, 0
    %p212 = por %p210, %p211
    %p213 = scmp.le.s32.totalorder 1, %s13
    %p214 = scmp.lt.s32.totalorder %s13, 3
    %p215 = pnand %p213, %p214
    %p216 = pneg %p215
    // Predicated region
    $region9: #{separable_convolution_model.16} parent=5 // pred_check
      _
    $region10: #{separable_convolution_model.16} parent=5 // pred_check_branch
      %218 = sbr.rel (%p215) target = $region12
    $region11: #{separable_convolution_model.16} parent=5 // pred_region
      %s219 = ssub.s32 %s13, 1
      // Predicated region
      $region13: #{separable_convolution_model.16} parent=11 // pred_check
        %p220 = pneg %p72
      $region14: #{separable_convolution_model.16} parent=11 // pred_check_branch
        %222 = sbr.rel (%p220) target = $region16
      $region15: #{separable_convolution_model.16} parent=11 // pred_region
        _
      $region16: #{separable_convolution_model.16} parent=11 // pred_fallthru
        _
      // Predicated region
      $region17: #{separable_convolution_model.16} parent=11 // pred_check
        %p223 = pneg %p93
      $region18: #{separable_convolution_model.16} parent=11 // pred_check_branch
        %225 = sbr.rel (%p223) target = $region20
      $region19: #{separable_convolution_model.16} parent=11 // pred_region
        _
      $region20: #{separable_convolution_model.16} parent=11 // pred_fallthru
        _
      // Predicated region
      $region21: #{separable_convolution_model.16} parent=11 // pred_check
        %p226 = pneg %p114
      $region22: #{separable_convolution_model.16} parent=11 // pred_check_branch
        %228 = sbr.rel (%p226) target = $region24
      $region23: #{separable_convolution_model.16} parent=11 // pred_region
        _
      $region24: #{separable_convolution_model.16} parent=11 // pred_fallthru
        _
      // Predicated region
      $region25: #{separable_convolution_model.16} parent=11 // pred_check
        %p229 = pneg %p135
      $region26: #{separable_convolution_model.16} parent=11 // pred_check_branch
        %231 = sbr.rel (%p229) target = $region28
      $region27: #{separable_convolution_model.16} parent=11 // pred_region
        _
      $region28: #{separable_convolution_model.16} parent=11 // pred_fallthru
        _
      // Predicated region
      $region29: #{separable_convolution_model.16} parent=11 // pred_check
        %p232 = pneg %p156
      $region30: #{separable_convolution_model.16} parent=11 // pred_check_branch
        %234 = sbr.rel (%p232) target = $region32
      $region31: #{separable_convolution_model.16} parent=11 // pred_region
        _
      $region32: #{separable_convolution_model.16} parent=11 // pred_fallthru
        _
      // Predicated region
      $region33: #{separable_convolution_model.16} parent=11 // pred_check
        %p235 = pneg %p177
      $region34: #{separable_convolution_model.16} parent=11 // pred_check_branch
        %237 = sbr.rel (%p235) target = $region36
      $region35: #{separable_convolution_model.16} parent=11 // pred_region
        _
      $region36: #{separable_convolution_model.16} parent=11 // pred_fallthru
        _
    $region12: #{separable_convolution_model.16} parent=5 // pred_fallthru
      _
    %p238 = scmp.lt.s32.totalorder %s13, 2
    // Predicated region
    $region37: #{separable_convolution_model.16} parent=5 // pred_check
      %p239 = pneg %p238
    $region38: #{separable_convolution_model.16} parent=5 // pred_check_branch
      %241 = sbr.rel (%p239) target = $region40
    $region39: #{separable_convolution_model.16} parent=5 // pred_region
      // Predicated region
      $region41: #{separable_convolution_model.16} parent=39 // pred_check
        %p242 = pneg %p45
      $region42: #{separable_convolution_model.16} parent=39 // pred_check_branch
        %244 = sbr.rel (%p242) target = $region44
      $region43: #{separable_convolution_model.16} parent=39 // pred_region
        %p245 = scmp.lt.s32.totalorder %s20, 1
        %s246 = scalar_select %p245, %s20, 1
        %s247 = smul.addr %s246, 12
        %s248 = smul.addr %s247, 4
        %s249 = scalar_lea.vmem %s0, %s248
      $region44: #{separable_convolution_model.16} parent=39 // pred_fallthru
        _
    $region40: #{separable_convolution_model.16} parent=5 // pred_fallthru
      _
    %p250 = scmp.le.s32.totalorder 1, %s13
    %p251 = scmp.lt.s32.totalorder %s13, 3
    %p252 = pnand %p250, %p251
    %p253 = pneg %p252
    // Predicated region
    $region45: #{separable_convolution_model.16} parent=5 // pred_check
      _
    $region46: #{separable_convolution_model.16} parent=5 // pred_check_branch
      %255 = sbr.rel (%p252) target = $region48
    $region47: #{separable_convolution_model.16} parent=5 // pred_region
      %s256 = ssub.s32 %s13, 1
      %p257 = scmp.lt.s32.totalorder %s22, 1
      %s258 = scalar_select %p257, %s22, 1
      %s259 = smul.addr %s258, 12
      %s260 = smul.addr %s259, 4
      %s261 = scalar_lea.vmem %s0, %s260
      %p262 = pneg %p51
      %p263 = pneg %p48
      %p264 = pneg %p72
      %p265 = pneg %p69
      %p266 = pneg %p93
      %p267 = pneg %p90
      %p268 = pneg %p114
      %p269 = pneg %p111
      %p270 = pneg %p135
      %p271 = pneg %p132
      %p272 = pneg %p156
      %p273 = pneg %p153
      %p274 = pneg %p177
      %p275 = pneg %p174
      %p276 = pneg %p205
      %p277 = pneg %p202
      %p278 = scmp.lt.s32.totalorder %s22, 1
      %s279 = scalar_select %p278, %s22, 1
      %p280 = scmp.lt.s32.totalorder %s23, 0
      %s281 = scalar_select %p280, %s23, 0
      %s282 = smul.addr %s281, 4
      %s283 = smul.addr %s279, 4
      %s284 = sadd.s32 %s282, %s283
      %s285 = scalar_lea.vmem %s7, %s284
      %p286 = scmp.lt.s32.totalorder %s22, 1
      %s287 = scalar_select %p286, %s22, 1
      %s288 = smul.addr %s287, 12
      %s289 = smul.addr %s288, 4
      %s290 = scalar_lea.vmem %s0, %s289
      %p291 = scmp.lt.s32.totalorder %s22, 1
      %s292 = scalar_select %p291, %s22, 1
      %p293 = scmp.lt.s32.totalorder %s23, 0
      %s294 = scalar_select %p293, %s23, 0
      %s295 = smul.addr %s294, 4
      %s296 = smul.addr %s292, 4
      %s297 = sadd.s32 %s295, %s296
      %s298 = scalar_lea.vmem %s7, %s297
      %v299 = vld [vmem:[%s1] sm:$0xff]
      %v300 = vld [vmem:[%s1 + $0x8] sm:$0xff]
      %v301 = vld [vmem:[%s1 + $0x10] sm:$0xff]
      %v302 = vld [vmem:[%s1 + $0x18] sm:$0xff]
      %v303 = vld [vmem:[%s1 + $0x20] sm:$0x1]
      %v304 = vld [vmem:[%s1 + $0x28] sm:$0x1]
      %v305 = vld [vmem:[%s1 + $0x30] sm:$0x1]
      %v306 = vld [vmem:[%s1 + $0x38] sm:$0x1]
      %v307 = vld [vmem:[%s2] sm:$0xf]
      %v308 = vld [vmem:[%s3] sm:$0xff]
      %v309 = vld [vmem:[%s3 + $0x8] sm:$0xff]
      %v310 = vld [vmem:[%s3 + $0x10] sm:$0xff]
      %v311 = vld [vmem:[%s3 + $0x18] sm:$0xff]
      %v312 = vld [vmem:[%s3 + $0x20] sm:$0xff]
      %v313 = vld [vmem:[%s3 + $0x28] sm:$0xff]
      %v314 = vld [vmem:[%s3 + $0x30] sm:$0xff]
      %v315 = vld [vmem:[%s3 + $0x38] sm:$0xff]
      %v316 = vld [vmem:[%s3 + $0x40] sm:$0xff]
      %v317 = vld [vmem:[%s3 + $0x48] sm:$0xff]
      %v318 = vld [vmem:[%s3 + $0x50] sm:$0xff]
      %v319 = vld [vmem:[%s3 + $0x58] sm:$0xff]
      %v320 = vld [vmem:[%s3 + $0x60] sm:$0xff]
      %v321 = vld [vmem:[%s3 + $0x68] sm:$0xff]
      %v322 = vld [vmem:[%s3 + $0x70] sm:$0xff]
      %v323 = vld [vmem:[%s3 + $0x78] sm:$0xff]
      %v324 = vld [vmem:[%s3 + $0x80] sm:$0xff]
      %v325 = vld [vmem:[%s3 + $0x88] sm:$0xff]
      %v326 = vld [vmem:[%s3 + $0x90] sm:$0xff]
      %v327 = vld [vmem:[%s3 + $0x98] sm:$0xff]
      %v328 = vld [vmem:[%s3 + $0xa0] sm:$0xff]
      %v329 = vld [vmem:[%s3 + $0xa8] sm:$0xff]
      %v330 = vld [vmem:[%s3 + $0xb0] sm:$0xff]
      %v331 = vld [vmem:[%s3 + $0xb8] sm:$0xff]
      %v332 = vld [vmem:[%s3 + $0xc0] sm:$0xff]
      %v333 = vld [vmem:[%s3 + $0xc8] sm:$0xff]
      %v334 = vld [vmem:[%s3 + $0xd0] sm:$0xff]
      %v335 = vld [vmem:[%s3 + $0xd8] sm:$0xff]
      %v336 = vld [vmem:[%s3 + $0xe0] sm:$0xff]
      %v337 = vld [vmem:[%s3 + $0xe8] sm:$0xff]
      %v338 = vld [vmem:[%s3 + $0xf0] sm:$0xff]
      %v339 = vld [vmem:[%s3 + $0xf8] sm:$0xff]
      %v340 = vld [vmem:[%s3 + $0x100] sm:$0xff]
      %v341 = vld [vmem:[%s3 + $0x108] sm:$0xff]
      %v342 = vld [vmem:[%s3 + $0x110] sm:$0xff]
      %v343 = vld [vmem:[%s3 + $0x118] sm:$0xff]
      %v344 = vld [vmem:[%s3 + $0x120] sm:$0xff]
      %v345 = vld [vmem:[%s3 + $0x128] sm:$0xff]
      %v346 = vld [vmem:[%s3 + $0x130] sm:$0xff]
      %v347 = vld [vmem:[%s3 + $0x138] sm:$0xff]
      %v348 = vld [vmem:[%s3 + $0x140] sm:$0xff]
      %v349 = vld [vmem:[%s3 + $0x148] sm:$0xff]
      %v350 = vld [vmem:[%s3 + $0x150] sm:$0xff]
      %v351 = vld [vmem:[%s3 + $0x158] sm:$0xff]
      %v352 = vld [vmem:[%s3 + $0x160] sm:$0xff]
      %v353 = vld [vmem:[%s3 + $0x168] sm:$0xff]
      %v354 = vld [vmem:[%s3 + $0x170] sm:$0xff]
      %v355 = vld [vmem:[%s3 + $0x178] sm:$0xff]
      %v356 = vld [vmem:[%s3 + $0x180] sm:$0xff]
      %v357 = vld [vmem:[%s3 + $0x188] sm:$0xff]
      %v358 = vld [vmem:[%s3 + $0x190] sm:$0xff]
      %v359 = vld [vmem:[%s3 + $0x198] sm:$0xff]
      %v360 = vld [vmem:[%s3 + $0x1a0] sm:$0xff]
      %v361 = vld [vmem:[%s3 + $0x1a8] sm:$0xff]
      %v362 = vld [vmem:[%s3 + $0x1b0] sm:$0xff]
      %v363 = vld [vmem:[%s3 + $0x1b8] sm:$0xff]
      %v364 = vld [vmem:[%s3 + $0x1c0] sm:$0xff]
      %v365 = vld [vmem:[%s3 + $0x1c8] sm:$0xff]
      %v366 = vld [vmem:[%s3 + $0x1d0] sm:$0xff]
      %v367 = vld [vmem:[%s3 + $0x1d8] sm:$0xff]
      %v368 = vld [vmem:[%s3 + $0x1e0] sm:$0xff]
      %v369 = vld [vmem:[%s3 + $0x1e8] sm:$0xff]
      %v370 = vld [vmem:[%s3 + $0x1f0] sm:$0xff]
      %v371 = vld [vmem:[%s3 + $0x1f8] sm:$0xff]
      %v372 = vld [vmem:[%s3 + $0x200] sm:$0xff]
      %v373 = vld [vmem:[%s3 + $0x208] sm:$0xff]
      %v374 = vld [vmem:[%s3 + $0x210] sm:$0xff]
      %v375 = vld [vmem:[%s3 + $0x218] sm:$0xff]
      %v376 = vld [vmem:[%s3 + $0x220] sm:$0xff]
      %v377 = vld [vmem:[%s3 + $0x228] sm:$0xff]
      %v378 = vld [vmem:[%s3 + $0x230] sm:$0xff]
      %v379 = vld [vmem:[%s3 + $0x238] sm:$0xff]
      %v380 = vld [vmem:[%s3 + $0x240] sm:$0xff]
      %v381 = vld [vmem:[%s3 + $0x248] sm:$0xff]
      %v382 = vld [vmem:[%s3 + $0x250] sm:$0xff]
      %v383 = vld [vmem:[%s3 + $0x258] sm:$0xff]
      %v384 = vld [vmem:[%s3 + $0x260] sm:$0xff]
      %v385 = vld [vmem:[%s3 + $0x268] sm:$0xff]
      %v386 = vld [vmem:[%s3 + $0x270] sm:$0xff]
      %v387 = vld [vmem:[%s3 + $0x278] sm:$0xff]
      %v388 = vld [vmem:[%s3 + $0x280] sm:$0xff]
      %v389 = vld [vmem:[%s3 + $0x288] sm:$0xff]
      %v390 = vld [vmem:[%s3 + $0x290] sm:$0xff]
      %v391 = vld [vmem:[%s3 + $0x298] sm:$0xff]
      %v392 = vld [vmem:[%s3 + $0x2a0] sm:$0xff]
      %v393 = vld [vmem:[%s3 + $0x2a8] sm:$0xff]
      %v394 = vld [vmem:[%s3 + $0x2b0] sm:$0xff]
      %v395 = vld [vmem:[%s3 + $0x2b8] sm:$0xff]
      %v396 = vld [vmem:[%s3 + $0x2c0] sm:$0xff]
      %v397 = vld [vmem:[%s3 + $0x2c8] sm:$0xff]
      %v398 = vld [vmem:[%s3 + $0x2d0] sm:$0xff]
      %v399 = vld [vmem:[%s3 + $0x2d8] sm:$0xff]
      %v400 = vld [vmem:[%s3 + $0x2e0] sm:$0xff]
      %v401 = vld [vmem:[%s3 + $0x2e8] sm:$0xff]
      %v402 = vld [vmem:[%s3 + $0x2f0] sm:$0xff]
      %v403 = vld [vmem:[%s3 + $0x2f8] sm:$0xff]
      %v404 = vld [vmem:[%s3 + $0x300] sm:$0xff]
      %v405 = vld [vmem:[%s3 + $0x308] sm:$0xff]
      %v406 = vld [vmem:[%s3 + $0x310] sm:$0xff]
      %v407 = vld [vmem:[%s3 + $0x318] sm:$0xff]
      %v408 = vld [vmem:[%s3 + $0x320] sm:$0xff]
      %v409 = vld [vmem:[%s3 + $0x328] sm:$0xff]
      %v410 = vld [vmem:[%s3 + $0x330] sm:$0xff]
      %v411 = vld [vmem:[%s3 + $0x338] sm:$0xff]
      %v412 = vld [vmem:[%s3 + $0x340] sm:$0xff]
      %v413 = vld [vmem:[%s3 + $0x348] sm:$0xff]
      %v414 = vld [vmem:[%s3 + $0x350] sm:$0xff]
      %v415 = vld [vmem:[%s3 + $0x358] sm:$0xff]
      %v416 = vld [vmem:[%s3 + $0x360] sm:$0xff]
      %v417 = vld [vmem:[%s3 + $0x368] sm:$0xff]
      %v418 = vld [vmem:[%s3 + $0x370] sm:$0xff]
      %v419 = vld [vmem:[%s3 + $0x378] sm:$0xff]
      %v420 = vld [vmem:[%s3 + $0x380] sm:$0xff]
      %v421 = vld [vmem:[%s3 + $0x388] sm:$0xff]
      %v422 = vld [vmem:[%s3 + $0x390] sm:$0xff]
      %v423 = vld [vmem:[%s3 + $0x398] sm:$0xff]
      %v424 = vld [vmem:[%s3 + $0x3a0] sm:$0xff]
      %v425 = vld [vmem:[%s3 + $0x3a8] sm:$0xff]
      %v426 = vld [vmem:[%s3 + $0x3b0] sm:$0xff]
      %v427 = vld [vmem:[%s3 + $0x3b8] sm:$0xff]
      %v428 = vld [vmem:[%s3 + $0x3c0] sm:$0xff]
      %v429 = vld [vmem:[%s3 + $0x3c8] sm:$0xff]
      %v430 = vld [vmem:[%s3 + $0x3d0] sm:$0xff]
      %v431 = vld [vmem:[%s3 + $0x3d8] sm:$0xff]
      %v432 = vld [vmem:[%s3 + $0x3e0] sm:$0xff]
      %v433 = vld [vmem:[%s3 + $0x3e8] sm:$0xff]
      %v434 = vld [vmem:[%s3 + $0x3f0] sm:$0xff]
      %v435 = vld [vmem:[%s3 + $0x3f8] sm:$0xff]
      %v436 = vld [vmem:[%s4] sm:$0xf]
      %v437 = vld [vmem:[%s5] sm:$0xf]
      %v438 = vld [vmem:[%s6] sm:$0xf]
      %s439 = smul.u32 %s23, 4
      %s440 = smul.addr %s439, 4
      %s441 = scalar_lea.vmem %s290, %s440
      %v442 = vld [vmem:[%s441] sm:$0x77]
      %v443 = vld [vmem:[%s441 + $0x8] sm:$0x77]
      %v448 = vcombine.low %v299, %v300
      %v449 = vcombine.low %v301, %v302
      %v452 = vmul.f32 %v442, %v448
      %v453 = vmul.f32 %v443, %v449
      %v454 = vadd.f32 %v452, 0.0
      %v455 = vadd.f32 %v453, 0.0
      %v458 = vrot.slane %v452, 5
      %v459 = vrot.slane %v458, 4
      %v460 = vrot.slane %v453, 5
      %v461 = vrot.slane %v460, 4
      %v464 = vadd.f32 %v454, %v459
      %v465 = vadd.f32 %v455, %v461
      %v466 = vrot.slane %v452, 6
      %v467 = vrot.slane %v466, 4
      %v468 = vrot.slane %v453, 6
      %v469 = vrot.slane %v468, 4
      %v472 = vadd.f32 %v464, %v467
      %v473 = vadd.f32 %v465, %v469
      %s474 = sadd.s32 %s23, 1
      %s475 = smul.u32 %s474, 4
      %s476 = smul.addr %s475, 4
      %s477 = scalar_lea.vmem %s290, %s476
      %v478 = vld [vmem:[%s477] sm:$0x77]
      %v479 = vld [vmem:[%s477 + $0x8] sm:$0x77]
      %v480 = vrot.slane %v448, 7
      %v481 = vrot.slane %v480, 4
      %v482 = vrot.slane %v449, 7
      %v483 = vrot.slane %v482, 4
      %v486 = vmul.f32 %v478, %v481
      %v487 = vmul.f32 %v479, %v483
      %v488 = vadd.f32 %v472, %v486
      %v489 = vadd.f32 %v473, %v487
      %v490 = vcombine.high %v299, %v300
      %v491 = vcombine.high %v301, %v302
      %v492 = vrot.slane %v490, 7
      %v493 = vrot.slane %v491, 7
      %v496 = vmul.f32 %v478, %v492
      %v497 = vmul.f32 %v479, %v493
      %v500 = vrot.slane %v496, 5
      %v501 = vrot.slane %v500, 4
      %v502 = vrot.slane %v497, 5
      %v503 = vrot.slane %v502, 4
      %v506 = vadd.f32 %v488, %v501
      %v507 = vadd.f32 %v489, %v503
      %v508 = vrot.slane %v496, 6
      %v509 = vrot.slane %v508, 4
      %v510 = vrot.slane %v497, 6
      %v511 = vrot.slane %v510, 4
      %v514 = vadd.f32 %v506, %v509
      %v515 = vadd.f32 %v507, %v511
      %s516 = sadd.s32 %s23, 2
      %s517 = smul.u32 %s516, 4
      %s518 = smul.addr %s517, 4
      %s519 = scalar_lea.vmem %s290, %s518
      %v520 = vld [vmem:[%s519] sm:$0x77]
      %v521 = vld [vmem:[%s519 + $0x8] sm:$0x77]
      %v522 = vrot.slane %v490, 6
      %v523 = vrot.slane %v522, 4
      %v524 = vrot.slane %v491, 6
      %v525 = vrot.slane %v524, 4
      %v528 = vmul.f32 %v520, %v523
      %v529 = vmul.f32 %v521, %v525
      %v530 = vadd.f32 %v514, %v528
      %v531 = vadd.f32 %v515, %v529
      %v534 = vrot.slane %v528, 5
      %v535 = vrot.slane %v534, 4
      %v536 = vrot.slane %v529, 5
      %v537 = vrot.slane %v536, 4
      %v540 = vadd.f32 %v530, %v535
      %v541 = vadd.f32 %v531, %v537
      %v546 = vcombine.low %v303, %v304
      %v547 = vcombine.low %v305, %v306
      %v548 = vrot.slane %v546, 6
      %v549 = vrot.slane %v547, 6
      %v552 = vmul.f32 %v520, %v548
      %v553 = vmul.f32 %v521, %v549
      %v556 = vrot.slane %v552, 6
      %v557 = vrot.slane %v556, 4
      %v558 = vrot.slane %v553, 6
      %v559 = vrot.slane %v558, 4
      %v562 = vadd.f32 %v540, %v557
      %v563 = vadd.f32 %v541, %v559
      %v566 = vunpack.c.l.s4 286326784
      %v567 = vunpack.c.0.s8 %v566
      %v568 = vlaneseq
      %v569 = vshrl.u32 %v568, 7
      %v570 = vsub.s32 %v567, %v569
      %v571 = vrot.slane %v307, %v570
      %v573 = vunpack.c.l.s4 858989090
      %v574 = vunpack.c.0.s8 %v573
      %v575 = vlaneseq
      %v576 = vshrl.u32 %v575, 7
      %v577 = vsub.s32 %v574, %v576
      %v578 = vrot.slane %v307, %v577
      %v581 = vadd.f32 %v562, %v571
      %v582 = vadd.f32 %v563, %v578
      %v585 = vlaneseq
      %v586 = vshrl.u32 %v585, 7
      %v587 = vsub.s32 0, %v586
      %v588 = vrot.slane %v581, %v587
      %v589 = vlaneseq
      %v590 = vshrl.u32 %v589, 7
      %v591 = vsub.s32 4, %v590
      %v592 = vrot.slane %v581, %v591
      %v593 = vlaneseq
      %v594 = vshrl.u32 %v593, 7
      %v595 = vsub.s32 0, %v594
      %v596 = vrot.slane %v582, %v595
      %v597 = vlaneseq
      %v598 = vshrl.u32 %v597, 7
      %v599 = vsub.s32 4, %v598
      %v600 = vrot.slane %v582, %v599
      %v605 = vpack.c.bf16 %v588, %v588
      %v606 = vpack.c.bf16 %v592, %v592
      %v607 = vpack.c.bf16 %v596, %v596
      %v608 = vpack.c.bf16 %v600, %v600
      %v737 = vunpack.c.l.b16 %v308
      %v738 = vunpack.c.h.b16 %v308
      %v739 = vunpack.c.l.b16 %v309
      %v740 = vunpack.c.h.b16 %v309
      %v741 = vunpack.c.l.b16 %v310
      %v742 = vunpack.c.h.b16 %v310
      %v743 = vunpack.c.l.b16 %v311
      %v744 = vunpack.c.h.b16 %v311
      %v745 = vunpack.c.l.b16 %v312
      %v746 = vunpack.c.h.b16 %v312
      %v747 = vunpack.c.l.b16 %v313
      %v748 = vunpack.c.h.b16 %v313
      %v749 = vunpack.c.l.b16 %v314
      %v750 = vunpack.c.h.b16 %v314
      %v751 = vunpack.c.l.b16 %v315
      %v752 = vunpack.c.h.b16 %v315
      %v753 = vunpack.c.l.b16 %v316
      %v754 = vunpack.c.h.b16 %v316
      %v755 = vunpack.c.l.b16 %v317
      %v756 = vunpack.c.h.b16 %v317
      %v757 = vunpack.c.l.b16 %v318
      %v758 = vunpack.c.h.b16 %v318
      %v759 = vunpack.c.l.b16 %v319
      %v760 = vunpack.c.h.b16 %v319
      %v761 = vunpack.c.l.b16 %v320
      %v762 = vunpack.c.h.b16 %v320
      %v763 = vunpack.c.l.b16 %v321
      %v764 = vunpack.c.h.b16 %v321
      %v765 = vunpack.c.l.b16 %v322
      %v766 = vunpack.c.h.b16 %v322
      %v767 = vunpack.c.l.b16 %v323
      %v768 = vunpack.c.h.b16 %v323
      %v769 = vunpack.c.l.b16 %v324
      %v770 = vunpack.c.h.b16 %v324
      %v771 = vunpack.c.l.b16 %v325
      %v772 = vunpack.c.h.b16 %v325
      %v773 = vunpack.c.l.b16 %v326
      %v774 = vunpack.c.h.b16 %v326
      %v775 = vunpack.c.l.b16 %v327
      %v776 = vunpack.c.h.b16 %v327
      %v777 = vunpack.c.l.b16 %v328
      %v778 = vunpack.c.h.b16 %v328
      %v779 = vunpack.c.l.b16 %v329
      %v780 = vunpack.c.h.b16 %v329
      %v781 = vunpack.c.l.b16 %v330
      %v782 = vunpack.c.h.b16 %v330
      %v783 = vunpack.c.l.b16 %v331
      %v784 = vunpack.c.h.b16 %v331
      %v785 = vunpack.c.l.b16 %v332
      %v786 = vunpack.c.h.b16 %v332
      %v787 = vunpack.c.l.b16 %v333
      %v788 = vunpack.c.h.b16 %v333
      %v789 = vunpack.c.l.b16 %v334
      %v790 = vunpack.c.h.b16 %v334
      %v791 = vunpack.c.l.b16 %v335
      %v792 = vunpack.c.h.b16 %v335
      %v793 = vunpack.c.l.b16 %v336
      %v794 = vunpack.c.h.b16 %v336
      %v795 = vunpack.c.l.b16 %v337
      %v796 = vunpack.c.h.b16 %v337
      %v797 = vunpack.c.l.b16 %v338
      %v798 = vunpack.c.h.b16 %v338
      %v799 = vunpack.c.l.b16 %v339
      %v800 = vunpack.c.h.b16 %v339
      %v801 = vunpack.c.l.b16 %v340
      %v802 = vunpack.c.h.b16 %v340
      %v803 = vunpack.c.l.b16 %v341
      %v804 = vunpack.c.h.b16 %v341
      %v805 = vunpack.c.l.b16 %v342
      %v806 = vunpack.c.h.b16 %v342
      %v807 = vunpack.c.l.b16 %v343
      %v808 = vunpack.c.h.b16 %v343
      %v809 = vunpack.c.l.b16 %v344
      %v810 = vunpack.c.h.b16 %v344
      %v811 = vunpack.c.l.b16 %v345
      %v812 = vunpack.c.h.b16 %v345
      %v813 = vunpack.c.l.b16 %v346
      %v814 = vunpack.c.h.b16 %v346
      %v815 = vunpack.c.l.b16 %v347
      %v816 = vunpack.c.h.b16 %v347
      %v817 = vunpack.c.l.b16 %v348
      %v818 = vunpack.c.h.b16 %v348
      %v819 = vunpack.c.l.b16 %v349
      %v820 = vunpack.c.h.b16 %v349
      %v821 = vunpack.c.l.b16 %v350
      %v822 = vunpack.c.h.b16 %v350
      %v823 = vunpack.c.l.b16 %v351
      %v824 = vunpack.c.h.b16 %v351
      %v825 = vunpack.c.l.b16 %v352
      %v826 = vunpack.c.h.b16 %v352
      %v827 = vunpack.c.l.b16 %v353
      %v828 = vunpack.c.h.b16 %v353
      %v829 = vunpack.c.l.b16 %v354
      %v830 = vunpack.c.h.b16 %v354
      %v831 = vunpack.c.l.b16 %v355
      %v832 = vunpack.c.h.b16 %v355
      %v833 = vunpack.c.l.b16 %v356
      %v834 = vunpack.c.h.b16 %v356
      %v835 = vunpack.c.l.b16 %v357
      %v836 = vunpack.c.h.b16 %v357
      %v837 = vunpack.c.l.b16 %v358
      %v838 = vunpack.c.h.b16 %v358
      %v839 = vunpack.c.l.b16 %v359
      %v840 = vunpack.c.h.b16 %v359
      %v841 = vunpack.c.l.b16 %v360
      %v842 = vunpack.c.h.b16 %v360
      %v843 = vunpack.c.l.b16 %v361
      %v844 = vunpack.c.h.b16 %v361
      %v845 = vunpack.c.l.b16 %v362
      %v846 = vunpack.c.h.b16 %v362
      %v847 = vunpack.c.l.b16 %v363
      %v848 = vunpack.c.h.b16 %v363
      %v849 = vunpack.c.l.b16 %v364
      %v850 = vunpack.c.h.b16 %v364
      %v851 = vunpack.c.l.b16 %v365
      %v852 = vunpack.c.h.b16 %v365
      %v853 = vunpack.c.l.b16 %v366
      %v854 = vunpack.c.h.b16 %v366
      %v855 = vunpack.c.l.b16 %v367
      %v856 = vunpack.c.h.b16 %v367
      %v857 = vunpack.c.l.b16 %v368
      %v858 = vunpack.c.h.b16 %v368
      %v859 = vunpack.c.l.b16 %v369
      %v860 = vunpack.c.h.b16 %v369
      %v861 = vunpack.c.l.b16 %v370
      %v862 = vunpack.c.h.b16 %v370
      %v863 = vunpack.c.l.b16 %v371
      %v864 = vunpack.c.h.b16 %v371
      %v865 = vunpack.c.l.b16 %v372
      %v866 = vunpack.c.h.b16 %v372
      %v867 = vunpack.c.l.b16 %v373
      %v868 = vunpack.c.h.b16 %v373
      %v869 = vunpack.c.l.b16 %v374
      %v870 = vunpack.c.h.b16 %v374
      %v871 = vunpack.c.l.b16 %v375
      %v872 = vunpack.c.h.b16 %v375
      %v873 = vunpack.c.l.b16 %v376
      %v874 = vunpack.c.h.b16 %v376
      %v875 = vunpack.c.l.b16 %v377
      %v876 = vunpack.c.h.b16 %v377
      %v877 = vunpack.c.l.b16 %v378
      %v878 = vunpack.c.h.b16 %v378
      %v879 = vunpack.c.l.b16 %v379
      %v880 = vunpack.c.h.b16 %v379
      %v881 = vunpack.c.l.b16 %v380
      %v882 = vunpack.c.h.b16 %v380
      %v883 = vunpack.c.l.b16 %v381
      %v884 = vunpack.c.h.b16 %v381
      %v885 = vunpack.c.l.b16 %v382
      %v886 = vunpack.c.h.b16 %v382
      %v887 = vunpack.c.l.b16 %v383
      %v888 = vunpack.c.h.b16 %v383
      %v889 = vunpack.c.l.b16 %v384
      %v890 = vunpack.c.h.b16 %v384
      %v891 = vunpack.c.l.b16 %v385
      %v892 = vunpack.c.h.b16 %v385
      %v893 = vunpack.c.l.b16 %v386
      %v894 = vunpack.c.h.b16 %v386
      %v895 = vunpack.c.l.b16 %v387
      %v896 = vunpack.c.h.b16 %v387
      %v897 = vunpack.c.l.b16 %v388
      %v898 = vunpack.c.h.b16 %v388
      %v899 = vunpack.c.l.b16 %v389
      %v900 = vunpack.c.h.b16 %v389
      %v901 = vunpack.c.l.b16 %v390
      %v902 = vunpack.c.h.b16 %v390
      %v903 = vunpack.c.l.b16 %v391
      %v904 = vunpack.c.h.b16 %v391
      %v905 = vunpack.c.l.b16 %v392
      %v906 = vunpack.c.h.b16 %v392
      %v907 = vunpack.c.l.b16 %v393
      %v908 = vunpack.c.h.b16 %v393
      %v909 = vunpack.c.l.b16 %v394
      %v910 = vunpack.c.h.b16 %v394
      %v911 = vunpack.c.l.b16 %v395
      %v912 = vunpack.c.h.b16 %v395
      %v913 = vunpack.c.l.b16 %v396
      %v914 = vunpack.c.h.b16 %v396
      %v915 = vunpack.c.l.b16 %v397
      %v916 = vunpack.c.h.b16 %v397
      %v917 = vunpack.c.l.b16 %v398
      %v918 = vunpack.c.h.b16 %v398
      %v919 = vunpack.c.l.b16 %v399
      %v920 = vunpack.c.h.b16 %v399
      %v921 = vunpack.c.l.b16 %v400
      %v922 = vunpack.c.h.b16 %v400
      %v923 = vunpack.c.l.b16 %v401
      %v924 = vunpack.c.h.b16 %v401
      %v925 = vunpack.c.l.b16 %v402
      %v926 = vunpack.c.h.b16 %v402
      %v927 = vunpack.c.l.b16 %v403
      %v928 = vunpack.c.h.b16 %v403
      %v929 = vunpack.c.l.b16 %v404
      %v930 = vunpack.c.h.b16 %v404
      %v931 = vunpack.c.l.b16 %v405
      %v932 = vunpack.c.h.b16 %v405
      %v933 = vunpack.c.l.b16 %v406
      %v934 = vunpack.c.h.b16 %v406
      %v935 = vunpack.c.l.b16 %v407
      %v936 = vunpack.c.h.b16 %v407
      %v937 = vunpack.c.l.b16 %v408
      %v938 = vunpack.c.h.b16 %v408
      %v939 = vunpack.c.l.b16 %v409
      %v940 = vunpack.c.h.b16 %v409
      %v941 = vunpack.c.l.b16 %v410
      %v942 = vunpack.c.h.b16 %v410
      %v943 = vunpack.c.l.b16 %v411
      %v944 = vunpack.c.h.b16 %v411
      %v945 = vunpack.c.l.b16 %v412
      %v946 = vunpack.c.h.b16 %v412
      %v947 = vunpack.c.l.b16 %v413
      %v948 = vunpack.c.h.b16 %v413
      %v949 = vunpack.c.l.b16 %v414
      %v950 = vunpack.c.h.b16 %v414
      %v951 = vunpack.c.l.b16 %v415
      %v952 = vunpack.c.h.b16 %v415
      %v953 = vunpack.c.l.b16 %v416
      %v954 = vunpack.c.h.b16 %v416
      %v955 = vunpack.c.l.b16 %v417
      %v956 = vunpack.c.h.b16 %v417
      %v957 = vunpack.c.l.b16 %v418
      %v958 = vunpack.c.h.b16 %v418
      %v959 = vunpack.c.l.b16 %v419
      %v960 = vunpack.c.h.b16 %v419
      %v961 = vunpack.c.l.b16 %v420
      %v962 = vunpack.c.h.b16 %v420
      %v963 = vunpack.c.l.b16 %v421
      %v964 = vunpack.c.h.b16 %v421
      %v965 = vunpack.c.l.b16 %v422
      %v966 = vunpack.c.h.b16 %v422
      %v967 = vunpack.c.l.b16 %v423
      %v968 = vunpack.c.h.b16 %v423
      %v969 = vunpack.c.l.b16 %v424
      %v970 = vunpack.c.h.b16 %v424
      %v971 = vunpack.c.l.b16 %v425
      %v972 = vunpack.c.h.b16 %v425
      %v973 = vunpack.c.l.b16 %v426
      %v974 = vunpack.c.h.b16 %v426
      %v975 = vunpack.c.l.b16 %v427
      %v976 = vunpack.c.h.b16 %v427
      %v977 = vunpack.c.l.b16 %v428
      %v978 = vunpack.c.h.b16 %v428
      %v979 = vunpack.c.l.b16 %v429
      %v980 = vunpack.c.h.b16 %v429
      %v981 = vunpack.c.l.b16 %v430
      %v982 = vunpack.c.h.b16 %v430
      %v983 = vunpack.c.l.b16 %v431
      %v984 = vunpack.c.h.b16 %v431
      %v985 = vunpack.c.l.b16 %v432
      %v986 = vunpack.c.h.b16 %v432
      %v987 = vunpack.c.l.b16 %v433
      %v988 = vunpack.c.h.b16 %v433
      %v989 = vunpack.c.l.b16 %v434
      %v990 = vunpack.c.h.b16 %v434
      %v991 = vunpack.c.l.b16 %v435
      %v992 = vunpack.c.h.b16 %v435
      %v993 = vpack.c.b16 %v741, %v737
      %v994 = vpack.c.b16 %v742, %v738
      %v995 = vpack.c.b16 %v743, %v739
      %v996 = vpack.c.b16 %v744, %v740
      %v997 = vpack.c.b16 %v749, %v745
      %v998 = vpack.c.b16 %v750, %v746
      %v999 = vpack.c.b16 %v751, %v747
      %v1000 = vpack.c.b16 %v752, %v748
      %v1001 = vpack.c.b16 %v757, %v753
      %v1002 = vpack.c.b16 %v758, %v754
      %v1003 = vpack.c.b16 %v759, %v755
      %v1004 = vpack.c.b16 %v760, %v756
      %v1005 = vpack.c.b16 %v765, %v761
      %v1006 = vpack.c.b16 %v766, %v762
      %v1007 = vpack.c.b16 %v767, %v763
      %v1008 = vpack.c.b16 %v768, %v764
      %v1009 = vpack.c.b16 %v773, %v769
      %v1010 = vpack.c.b16 %v774, %v770
      %v1011 = vpack.c.b16 %v775, %v771
      %v1012 = vpack.c.b16 %v776, %v772
      %v1013 = vpack.c.b16 %v781, %v777
      %v1014 = vpack.c.b16 %v782, %v778
      %v1015 = vpack.c.b16 %v783, %v779
      %v1016 = vpack.c.b16 %v784, %v780
      %v1017 = vpack.c.b16 %v789, %v785
      %v1018 = vpack.c.b16 %v790, %v786
      %v1019 = vpack.c.b16 %v791, %v787
      %v1020 = vpack.c.b16 %v792, %v788
      %v1021 = vpack.c.b16 %v797, %v793
      %v1022 = vpack.c.b16 %v798, %v794
      %v1023 = vpack.c.b16 %v799, %v795
      %v1024 = vpack.c.b16 %v800, %v796
      %v1025 = vpack.c.b16 %v805, %v801
      %v1026 = vpack.c.b16 %v806, %v802
      %v1027 = vpack.c.b16 %v807, %v803
      %v1028 = vpack.c.b16 %v808, %v804
      %v1029 = vpack.c.b16 %v813, %v809
      %v1030 = vpack.c.b16 %v814, %v810
      %v1031 = vpack.c.b16 %v815, %v811
      %v1032 = vpack.c.b16 %v816, %v812
      %v1033 = vpack.c.b16 %v821, %v817
      %v1034 = vpack.c.b16 %v822, %v818
      %v1035 = vpack.c.b16 %v823, %v819
      %v1036 = vpack.c.b16 %v824, %v820
      %v1037 = vpack.c.b16 %v829, %v825
      %v1038 = vpack.c.b16 %v830, %v826
      %v1039 = vpack.c.b16 %v831, %v827
      %v1040 = vpack.c.b16 %v832, %v828
      %v1041 = vpack.c.b16 %v837, %v833
      %v1042 = vpack.c.b16 %v838, %v834
      %v1043 = vpack.c.b16 %v839, %v835
      %v1044 = vpack.c.b16 %v840, %v836
      %v1045 = vpack.c.b16 %v845, %v841
      %v1046 = vpack.c.b16 %v846, %v842
      %v1047 = vpack.c.b16 %v847, %v843
      %v1048 = vpack.c.b16 %v848, %v844
      %v1049 = vpack.c.b16 %v853, %v849
      %v1050 = vpack.c.b16 %v854, %v850
      %v1051 = vpack.c.b16 %v855, %v851
      %v1052 = vpack.c.b16 %v856, %v852
      %v1053 = vpack.c.b16 %v861, %v857
      %v1054 = vpack.c.b16 %v862, %v858
      %v1055 = vpack.c.b16 %v863, %v859
      %v1056 = vpack.c.b16 %v864, %v860
      %v1057 = vpack.c.b16 %v869, %v865
      %v1058 = vpack.c.b16 %v870, %v866
      %v1059 = vpack.c.b16 %v871, %v867
      %v1060 = vpack.c.b16 %v872, %v868
      %v1061 = vpack.c.b16 %v877, %v873
      %v1062 = vpack.c.b16 %v878, %v874
      %v1063 = vpack.c.b16 %v879, %v875
      %v1064 = vpack.c.b16 %v880, %v876
      %v1065 = vpack.c.b16 %v885, %v881
      %v1066 = vpack.c.b16 %v886, %v882
      %v1067 = vpack.c.b16 %v887, %v883
      %v1068 = vpack.c.b16 %v888, %v884
      %v1069 = vpack.c.b16 %v893, %v889
      %v1070 = vpack.c.b16 %v894, %v890
      %v1071 = vpack.c.b16 %v895, %v891
      %v1072 = vpack.c.b16 %v896, %v892
      %v1073 = vpack.c.b16 %v901, %v897
      %v1074 = vpack.c.b16 %v902, %v898
      %v1075 = vpack.c.b16 %v903, %v899
      %v1076 = vpack.c.b16 %v904, %v900
      %v1077 = vpack.c.b16 %v909, %v905
      %v1078 = vpack.c.b16 %v910, %v906
      %v1079 = vpack.c.b16 %v911, %v907
      %v1080 = vpack.c.b16 %v912, %v908
      %v1081 = vpack.c.b16 %v917, %v913
      %v1082 = vpack.c.b16 %v918, %v914
      %v1083 = vpack.c.b16 %v919, %v915
      %v1084 = vpack.c.b16 %v920, %v916
      %v1085 = vpack.c.b16 %v925, %v921
      %v1086 = vpack.c.b16 %v926, %v922
      %v1087 = vpack.c.b16 %v927, %v923
      %v1088 = vpack.c.b16 %v928, %v924
      %v1089 = vpack.c.b16 %v933, %v929
      %v1090 = vpack.c.b16 %v934, %v930
      %v1091 = vpack.c.b16 %v935, %v931
      %v1092 = vpack.c.b16 %v936, %v932
      %v1093 = vpack.c.b16 %v941, %v937
      %v1094 = vpack.c.b16 %v942, %v938
      %v1095 = vpack.c.b16 %v943, %v939
      %v1096 = vpack.c.b16 %v944, %v940
      %v1097 = vpack.c.b16 %v949, %v945
      %v1098 = vpack.c.b16 %v950, %v946
      %v1099 = vpack.c.b16 %v951, %v947
      %v1100 = vpack.c.b16 %v952, %v948
      %v1101 = vpack.c.b16 %v957, %v953
      %v1102 = vpack.c.b16 %v958, %v954
      %v1103 = vpack.c.b16 %v959, %v955
      %v1104 = vpack.c.b16 %v960, %v956
      %v1105 = vpack.c.b16 %v965, %v961
      %v1106 = vpack.c.b16 %v966, %v962
      %v1107 = vpack.c.b16 %v967, %v963
      %v1108 = vpack.c.b16 %v968, %v964
      %v1109 = vpack.c.b16 %v973, %v969
      %v1110 = vpack.c.b16 %v974, %v970
      %v1111 = vpack.c.b16 %v975, %v971
      %v1112 = vpack.c.b16 %v976, %v972
      %v1113 = vpack.c.b16 %v981, %v977
      %v1114 = vpack.c.b16 %v982, %v978
      %v1115 = vpack.c.b16 %v983, %v979
      %v1116 = vpack.c.b16 %v984, %v980
      %v1117 = vpack.c.b16 %v989, %v985
      %v1118 = vpack.c.b16 %v990, %v986
      %v1119 = vpack.c.b16 %v991, %v987
      %v1120 = vpack.c.b16 %v992, %v988
      %v1250 = vlaneseq
      %v1251 = vshrl.u32 %v1250, 7
      %v1252 = vsub.s32 0, %v1251
      %v1253 = vrot.slane %v436, %v1252
      %v1254 = vlaneseq
      %v1255 = vshrl.u32 %v1254, 7
      %v1256 = vsub.s32 1, %v1255
      %v1257 = vrot.slane %v436, %v1256
      %v1258 = vlaneseq
      %v1259 = vshrl.u32 %v1258, 7
      %v1260 = vsub.s32 2, %v1259
      %v1261 = vrot.slane %v436, %v1260
      %v1262 = vlaneseq
      %v1263 = vshrl.u32 %v1262, 7
      %v1264 = vsub.s32 3, %v1263
      %v1265 = vrot.slane %v436, %v1264
      %1270 = vmatprep.subr.bf16.mxu0 %v994
      %1271 = vmatpush1.bf16.msra.mxu0 %v993
      %1272 = vmatprep.subr.bf16.mxu0 %v998
      %1273 = vmatpush1.bf16.msra.mxu0 %v997
      %1274 = vmatprep.subr.bf16.mxu0 %v1002
      %1275 = vmatpush1.bf16.msra.mxu0 %v1001
      %1276 = vmatprep.subr.bf16.mxu0 %v1006
      %1277 = vmatpush1.bf16.msra.mxu0 %v1005
      %1278 = vmatprep.subr.bf16.mxu0 %v1010
      %1279 = vmatpush1.bf16.msra.mxu0 %v1009
      %1280 = vmatprep.subr.bf16.mxu0 %v1014
      %1281 = vmatpush1.bf16.msra.mxu0 %v1013
      %1282 = vmatprep.subr.bf16.mxu0 %v1018
      %1283 = vmatpush1.bf16.msra.mxu0 %v1017
      %1284 = vmatprep.subr.bf16.mxu0 %v1022
      %1285 = vmatpush1.bf16.msra.mxu0 %v1021
      %1286 = vmatprep.subr.bf16.mxu0 %v1026
      %1287 = vmatpush1.bf16.msra.mxu0 %v1025
      %1288 = vmatprep.subr.bf16.mxu0 %v1030
      %1289 = vmatpush1.bf16.msra.mxu0 %v1029
      %1290 = vmatprep.subr.bf16.mxu0 %v1034
      %1291 = vmatpush1.bf16.msra.mxu0 %v1033
      %1292 = vmatprep.subr.bf16.mxu0 %v1038
      %1293 = vmatpush1.bf16.msra.mxu0 %v1037
      %1294 = vmatprep.subr.bf16.mxu0 %v1042
      %1295 = vmatpush1.bf16.msra.mxu0 %v1041
      %1296 = vmatprep.subr.bf16.mxu0 %v1046
      %1297 = vmatpush1.bf16.msra.mxu0 %v1045
      %1298 = vmatprep.subr.bf16.mxu0 %v1050
      %1299 = vmatpush1.bf16.msra.mxu0 %v1049
      %1300 = vmatprep.subr.bf16.mxu0 %v1054
      %1301 = vmatpush1.bf16.msra.mxu0 %v1053
      %1302 = vmatprep.mubr.bf16.mxu0 %v606
      %1303 = vmatmul.mubr.bf16.gmra.mrb[0].mxu0 %v605
      %v1304 = vpop.f32.mrb[0].mxu0
      %v1305 = vadd.f32 %v1253, %v1304
      %v1306 = vpop.f32.mrb[0].mxu0
      %v1307 = vadd.f32 %v1257, %v1306
      %v1308 = vpop.f32.mrb[0].mxu0
      %v1309 = vpop.f32.mrb[0].mxu0
      %1310 = vdwg.mxu0
      %1311 = vmatprep.subr.bf16.mxu0 %v1058
      %1312 = vmatpush1.bf16.msra.mxu0 %v1057
      %1313 = vmatprep.subr.bf16.mxu0 %v1062
      %1314 = vmatpush1.bf16.msra.mxu0 %v1061
      %1315 = vmatprep.subr.bf16.mxu0 %v1066
      %1316 = vmatpush1.bf16.msra.mxu0 %v1065
      %1317 = vmatprep.subr.bf16.mxu0 %v1070
      %1318 = vmatpush1.bf16.msra.mxu0 %v1069
      %1319 = vmatprep.subr.bf16.mxu0 %v1074
      %1320 = vmatpush1.bf16.msra.mxu0 %v1073
      %1321 = vmatprep.subr.bf16.mxu0 %v1078
      %1322 = vmatpush1.bf16.msra.mxu0 %v1077
      %1323 = vmatprep.subr.bf16.mxu0 %v1082
      %1324 = vmatpush1.bf16.msra.mxu0 %v1081
      %1325 = vmatprep.subr.bf16.mxu0 %v1086
      %1326 = vmatpush1.bf16.msra.mxu0 %v1085
      %1327 = vmatprep.subr.bf16.mxu0 %v1090
      %1328 = vmatpush1.bf16.msra.mxu0 %v1089
      %1329 = vmatprep.subr.bf16.mxu0 %v1094
      %1330 = vmatpush1.bf16.msra.mxu0 %v1093
      %1331 = vmatprep.subr.bf16.mxu0 %v1098
      %1332 = vmatpush1.bf16.msra.mxu0 %v1097
      %1333 = vmatprep.subr.bf16.mxu0 %v1102
      %1334 = vmatpush1.bf16.msra.mxu0 %v1101
      %1335 = vmatprep.subr.bf16.mxu0 %v1106
      %1336 = vmatpush1.bf16.msra.mxu0 %v1105
      %1337 = vmatprep.subr.bf16.mxu0 %v1110
      %1338 = vmatpush1.bf16.msra.mxu0 %v1109
      %1339 = vmatprep.subr.bf16.mxu0 %v1114
      %1340 = vmatpush1.bf16.msra.mxu0 %v1113
      %1341 = vmatprep.subr.bf16.mxu0 %v1118
      %1342 = vmatpush1.bf16.msra.mxu0 %v1117
      %1343 = vmatprep.mubr.bf16.mxu0 %v608
      %1344 = vmatmul.mubr.bf16.gmra.mrb[0].mxu0 %v607
      %v1345 = vpop.f32.mrb[0].mxu0
      %v1346 = vadd.f32 %v1305, %v1345
      %v1347 = vpop.f32.mrb[0].mxu0
      %v1348 = vadd.f32 %v1307, %v1347
      %v1349 = vpop.f32.mrb[0].mxu0
      %v1350 = vpop.f32.mrb[0].mxu0
      %1351 = vdwg.mxu0
      %1352 = vmatprep.subr.bf16.mxu0 %v996
      %1353 = vmatpush1.bf16.msra.mxu0 %v995
      %1354 = vmatprep.subr.bf16.mxu0 %v1000
      %1355 = vmatpush1.bf16.msra.mxu0 %v999
      %1356 = vmatprep.subr.bf16.mxu0 %v1004
      %1357 = vmatpush1.bf16.msra.mxu0 %v1003
      %1358 = vmatprep.subr.bf16.mxu0 %v1008
      %1359 = vmatpush1.bf16.msra.mxu0 %v1007
      %1360 = vmatprep.subr.bf16.mxu0 %v1012
      %1361 = vmatpush1.bf16.msra.mxu0 %v1011
      %1362 = vmatprep.subr.bf16.mxu0 %v1016
      %1363 = vmatpush1.bf16.msra.mxu0 %v1015
      %1364 = vmatprep.subr.bf16.mxu0 %v1020
      %1365 = vmatpush1.bf16.msra.mxu0 %v1019
      %1366 = vmatprep.subr.bf16.mxu0 %v1024
      %1367 = vmatpush1.bf16.msra.mxu0 %v1023
      %1368 = vmatprep.subr.bf16.mxu0 %v1028
      %1369 = vmatpush1.bf16.msra.mxu0 %v1027
      %1370 = vmatprep.subr.bf16.mxu0 %v1032
      %1371 = vmatpush1.bf16.msra.mxu0 %v1031
      %1372 = vmatprep.subr.bf16.mxu0 %v1036
      %1373 = vmatpush1.bf16.msra.mxu0 %v1035
      %1374 = vmatprep.subr.bf16.mxu0 %v1040
      %1375 = vmatpush1.bf16.msra.mxu0 %v1039
      %1376 = vmatprep.subr.bf16.mxu0 %v1044
      %1377 = vmatpush1.bf16.msra.mxu0 %v1043
      %1378 = vmatprep.subr.bf16.mxu0 %v1048
      %1379 = vmatpush1.bf16.msra.mxu0 %v1047
      %1380 = vmatprep.subr.bf16.mxu0 %v1052
      %1381 = vmatpush1.bf16.msra.mxu0 %v1051
      %1382 = vmatprep.subr.bf16.mxu0 %v1056
      %1383 = vmatpush1.bf16.msra.mxu0 %v1055
      %1384 = vmatprep.mubr.bf16.mxu0 %v606
      %1385 = vmatmul.mubr.bf16.gmra.mrb[0].mxu0 %v605
      %v1386 = vpop.f32.mrb[0].mxu0
      %v1387 = vadd.f32 %v1261, %v1386
      %v1388 = vpop.f32.mrb[0].mxu0
      %v1389 = vadd.f32 %v1265, %v1388
      %v1390 = vpop.f32.mrb[0].mxu0
      %v1391 = vpop.f32.mrb[0].mxu0
      %1392 = vdwg.mxu0
      %1393 = vmatprep.subr.bf16.mxu0 %v1060
      %1394 = vmatpush1.bf16.msra.mxu0 %v1059
      %1395 = vmatprep.subr.bf16.mxu0 %v1064
      %1396 = vmatpush1.bf16.msra.mxu0 %v1063
      %1397 = vmatprep.subr.bf16.mxu0 %v1068
      %1398 = vmatpush1.bf16.msra.mxu0 %v1067
      %1399 = vmatprep.subr.bf16.mxu0 %v1072
      %1400 = vmatpush1.bf16.msra.mxu0 %v1071
      %1401 = vmatprep.subr.bf16.mxu0 %v1076
      %1402 = vmatpush1.bf16.msra.mxu0 %v1075
      %1403 = vmatprep.subr.bf16.mxu0 %v1080
      %1404 = vmatpush1.bf16.msra.mxu0 %v1079
      %1405 = vmatprep.subr.bf16.mxu0 %v1084
      %1406 = vmatpush1.bf16.msra.mxu0 %v1083
      %1407 = vmatprep.subr.bf16.mxu0 %v1088
      %1408 = vmatpush1.bf16.msra.mxu0 %v1087
      %1409 = vmatprep.subr.bf16.mxu0 %v1092
      %1410 = vmatpush1.bf16.msra.mxu0 %v1091
      %1411 = vmatprep.subr.bf16.mxu0 %v1096
      %1412 = vmatpush1.bf16.msra.mxu0 %v1095
      %1413 = vmatprep.subr.bf16.mxu0 %v1100
      %1414 = vmatpush1.bf16.msra.mxu0 %v1099
      %1415 = vmatprep.subr.bf16.mxu0 %v1104
      %1416 = vmatpush1.bf16.msra.mxu0 %v1103
      %1417 = vmatprep.subr.bf16.mxu0 %v1108
      %1418 = vmatpush1.bf16.msra.mxu0 %v1107
      %1419 = vmatprep.subr.bf16.mxu0 %v1112
      %1420 = vmatpush1.bf16.msra.mxu0 %v1111
      %1421 = vmatprep.subr.bf16.mxu0 %v1116
      %1422 = vmatpush1.bf16.msra.mxu0 %v1115
      %1423 = vmatprep.subr.bf16.mxu0 %v1120
      %1424 = vmatpush1.bf16.msra.mxu0 %v1119
      %1425 = vmatprep.mubr.bf16.mxu0 %v608
      %1426 = vmatmul.mubr.bf16.gmra.mrb[0].mxu0 %v607
      %v1427 = vpop.f32.mrb[0].mxu0
      %v1428 = vadd.f32 %v1387, %v1427
      %v1429 = vpop.f32.mrb[0].mxu0
      %v1430 = vadd.f32 %v1389, %v1429
      %v1431 = vpop.f32.mrb[0].mxu0
      %v1432 = vpop.f32.mrb[0].mxu0
      %1433 = vdwg.mxu0
      %v1434 = vmax.f32 %v1346, 0.0
      %v1435 = vmax.f32 %v1348, 0.0
      %v1436 = vmax.f32 %v1428, 0.0
      %v1437 = vmax.f32 %v1430, 0.0
      %v1439 = vlaneseq
      %v1440 = vshrl.u32 %v1439, 7
      %v1441 = vsub.s32 0, %v1440
      %v1442 = vrot.slane %v437, %v1441
      %v1443 = vlaneseq
      %v1444 = vshrl.u32 %v1443, 7
      %v1445 = vsub.s32 1, %v1444
      %v1446 = vrot.slane %v437, %v1445
      %v1447 = vlaneseq
      %v1448 = vshrl.u32 %v1447, 7
      %v1449 = vsub.s32 2, %v1448
      %v1450 = vrot.slane %v437, %v1449
      %v1451 = vlaneseq
      %v1452 = vshrl.u32 %v1451, 7
      %v1453 = vsub.s32 3, %v1452
      %v1454 = vrot.slane %v437, %v1453
      %v1459 = vmul.f32 %v1434, %v1442
      %v1460 = vmul.f32 %v1435, %v1446
      %v1461 = vmul.f32 %v1436, %v1450
      %v1462 = vmul.f32 %v1437, %v1454
      %v1464 = vlaneseq
      %v1465 = vshrl.u32 %v1464, 7
      %v1466 = vsub.s32 0, %v1465
      %v1467 = vrot.slane %v438, %v1466
      %v1468 = vlaneseq
      %v1469 = vshrl.u32 %v1468, 7
      %v1470 = vsub.s32 1, %v1469
      %v1471 = vrot.slane %v438, %v1470
      %v1472 = vlaneseq
      %v1473 = vshrl.u32 %v1472, 7
      %v1474 = vsub.s32 2, %v1473
      %v1475 = vrot.slane %v438, %v1474
      %v1476 = vlaneseq
      %v1477 = vshrl.u32 %v1476, 7
      %v1478 = vsub.s32 3, %v1477
      %v1479 = vrot.slane %v438, %v1478
      %v1484 = vadd.f32 %v1459, %v1467
      %v1485 = vadd.f32 %v1460, %v1471
      %v1486 = vadd.f32 %v1461, %v1475
      %v1487 = vadd.f32 %v1462, %v1479
      %v1492 = vcombine.low %v1484, %v1485
      %v1493 = vcombine.low %v1486, %v1487
      %v1495 = vunpack.c.l.s4 1966171168
      %v1496 = vunpack.c.0.s8 %v1495
      %v1497 = vlaneseq
      %v1498 = vshrl.u32 %v1497, 7
      %v1499 = vsub.s32 %v1496, %v1498
      %v1500 = vrot.slane %v1492, %v1499
      %v1502 = vunpack.c.l.s4 1966171168
      %v1503 = vunpack.c.0.s8 %v1502
      %v1504 = vlaneseq
      %v1505 = vshrl.u32 %v1504, 7
      %v1506 = vsub.s32 %v1503, %v1505
      %v1507 = vrot.slane %v1493, %v1506
      %v1508 = vcombine.low %v1500, %v1507
      %v1510 = vunpack.c.l.s4 1966171168
      %v1511 = vunpack.c.0.s8 %v1510
      %v1512 = vlaneseq
      %v1513 = vshrl.u32 %v1512, 7
      %v1514 = vsub.s32 %v1511, %v1513
      %v1515 = vrot.slane %v1508, %v1514
      %v1517 = vlaneseq
      %vm1518 = vcmp.ge.s32.totalorder %v1517, 0
      %vm1519 = vcmp.lt.s32.totalorder %v1517, 512
      %vm1520 = vmand %vm1518, %vm1519
      %1521 = vst.msk [vmem:[%s298] sm:$0xf] %vm1520, %v1515
      %p1522 = scmp.lt.s32.totalorder %s22, 1
      %s1523 = scalar_select %p1522, %s22, 1
      %p1524 = scmp.lt.s32.totalorder %s23, 0
      %s1525 = scalar_select %p1524, %s23, 0
      %s1526 = smul.addr %s1525, 4
      %s1527 = smul.addr %s1523, 4
      %s1528 = sadd.s32 %s1526, %s1527
      %s1529 = scalar_lea.vmem %s7, %s1528
      // Predicated region
      $region49: #{separable_convolution_model.16} parent=47 // pred_check
        %p1530 = pneg %p202
      $region50: #{separable_convolution_model.16} parent=47 // pred_check_branch
        %1532 = sbr.rel (%p1530) target = $region52
      $region51: #{separable_convolution_model.16} parent=47 // pred_region
        _
      $region52: #{separable_convolution_model.16} parent=47 // pred_fallthru
        _
    $region48: #{separable_convolution_model.16} parent=5 // pred_fallthru
      _
    %p1533 = scmp.le.s32.totalorder 2, %s13
    // Predicated region
    $region53: #{separable_convolution_model.16} parent=5 // pred_check
      %p1534 = pneg %p1533
    $region54: #{separable_convolution_model.16} parent=5 // pred_check_branch
      %1536 = sbr.rel (%p1534) target = $region56
    $region55: #{separable_convolution_model.16} parent=5 // pred_region
      %s1537 = ssub.s32 %s13, 2
      // Predicated region
      $region57: #{separable_convolution_model.16} parent=55 // pred_check
        %p1538 = pneg %p208
      $region58: #{separable_convolution_model.16} parent=55 // pred_check_branch
        %1540 = sbr.rel (%p1538) target = $region60
      $region59: #{separable_convolution_model.16} parent=55 // pred_region
        %p1541 = scmp.lt.s32.totalorder %s24, 1
        %s1542 = scalar_select %p1541, %s24, 1
        %p1543 = scmp.lt.s32.totalorder %s25, 0
        %s1544 = scalar_select %p1543, %s25, 0
        %s1545 = smul.addr %s1544, 4
        %s1546 = smul.addr %s1542, 4
        %s1547 = sadd.s32 %s1545, %s1546
        %s1548 = scalar_lea.vmem %s7, %s1547
      $region60: #{separable_convolution_model.16} parent=55 // pred_fallthru
        _
    $region56: #{separable_convolution_model.16} parent=5 // pred_fallthru
      _
  $region6: #{separable_convolution_model.16} parent=0 // loop_footer
    %s17 = sadd.s32 1, %s13
  $region7: #{separable_convolution_model.16} parent=0 // loop_footer_branch
    %12 = sbr.rel target = $region3
  $region8: #{separable_convolution_model.16} parent=0 // loop_exit
    _

// kernel: separable_convolution_model.17
$region0: #{separable_convolution_model.17}
  #allocation0 [shape = 'u32[]', space=smem, size = 0x4, offset = 0x4, fixed_abs, tag = 'smem constant byte address 0x4 - core index']
  #allocation1 [shape = 'u32[144,128]{1,0:T(1,128)}', space=vmem, size = 0x12000, scoped, tag = 'internal scratch']
  %s0 = inlined_call_operand.vmem [shape: f32[2,1,1,512], index: 0, kind: input, shape index: {}]
  %s1 = inlined_call_operand.vmem [shape: bf16[512,256], index: 1, kind: input, shape index: {}]
  %s2 = inlined_call_operand.vmem [shape: f32[1,256], index: 2, kind: input, shape index: {}]
  %s3 = inlined_call_operand.vmem [shape: f32[1,256], index: 3, kind: input, shape index: {}]
  %s4 = inlined_call_operand.vmem [shape: f32[1,256], index: 4, kind: input, shape index: {}]
  %s5 = inlined_call_operand.vmem [shape: bf16[256,128], index: 5, kind: input, shape index: {}]
  %s6 = inlined_call_operand.vmem [shape: f32[1,128], index: 6, kind: input, shape index: {}]
  %s7 = inlined_call_operand.vmem [shape: f32[1,128], index: 7, kind: input, shape index: {}]
  %s8 = inlined_call_operand.vmem [shape: f32[1,128], index: 8, kind: input, shape index: {}]
  %s9 = inlined_call_operand.vmem [shape: bf16[128,7], index: 9, kind: input, shape index: {}]
  %s10 = inlined_call_operand.vmem [shape: f32[1,7], index: 10, kind: input, shape index: {}]
  %s11 = inlined_call_operand.hbm [shape: f32[2,7], index: 11, kind: output, shape index: {}]
  %s12 = sld [smem:[#allocation0]]
  $region54: #{separable_convolution_model.17} parent=0
    _
  %s14 = ssub.s32 1, %s12
  %s15 = scalar_select 0, %s14, %s12
  $region1: #{separable_convolution_model.17} parent=0
    #allocation2 [shape = 'u8[1024]{0}', space=vmem, size = 0x400, scoped, tag = 'output window, operand 0, single buffered']
    #allocation3 [shape = 's32[1]{0}', space=sflag, size = 0x4, scoped, tag = 'scoped memory for separable_convolution_model.17']
    %16 = vsyncpa [#allocation3], 0
    // Predicated region
    $region2: #{separable_convolution_model.17} parent=1 // pred_check
      _
    $region3: #{separable_convolution_model.17} parent=1 // pred_check_branch
      %18 = sbr.rel (0) target = $region5
    $region4: #{separable_convolution_model.17} parent=1 // pred_region
      _
    $region5: #{separable_convolution_model.17} parent=1 // pred_fallthru
      _
    // Predicated region
    $region6: #{separable_convolution_model.17} parent=1 // pred_check
      _
    $region7: #{separable_convolution_model.17} parent=1 // pred_check_branch
      %20 = sbr.rel (0) target = $region9
    $region8: #{separable_convolution_model.17} parent=1 // pred_region
      _
    $region9: #{separable_convolution_model.17} parent=1 // pred_fallthru
      _
    // Predicated region
    $region10: #{separable_convolution_model.17} parent=1 // pred_check
      _
    $region11: #{separable_convolution_model.17} parent=1 // pred_check_branch
      %22 = sbr.rel (0) target = $region13
    $region12: #{separable_convolution_model.17} parent=1 // pred_region
      _
    $region13: #{separable_convolution_model.17} parent=1 // pred_fallthru
      _
    // Predicated region
    $region14: #{separable_convolution_model.17} parent=1 // pred_check
      _
    $region15: #{separable_convolution_model.17} parent=1 // pred_check_branch
      %24 = sbr.rel (0) target = $region17
    $region16: #{separable_convolution_model.17} parent=1 // pred_region
      _
    $region17: #{separable_convolution_model.17} parent=1 // pred_fallthru
      _
    // Predicated region
    $region18: #{separable_convolution_model.17} parent=1 // pred_check
      _
    $region19: #{separable_convolution_model.17} parent=1 // pred_check_branch
      %26 = sbr.rel (0) target = $region21
    $region20: #{separable_convolution_model.17} parent=1 // pred_region
      _
    $region21: #{separable_convolution_model.17} parent=1 // pred_fallthru
      _
    // Predicated region
    $region22: #{separable_convolution_model.17} parent=1 // pred_check
      _
    $region23: #{separable_convolution_model.17} parent=1 // pred_check_branch
      %28 = sbr.rel (0) target = $region25
    $region24: #{separable_convolution_model.17} parent=1 // pred_region
      _
    $region25: #{separable_convolution_model.17} parent=1 // pred_fallthru
      _
    // Predicated region
    $region26: #{separable_convolution_model.17} parent=1 // pred_check
      _
    $region27: #{separable_convolution_model.17} parent=1 // pred_check_branch
      %30 = sbr.rel (0) target = $region29
    $region28: #{separable_convolution_model.17} parent=1 // pred_region
      _
    $region29: #{separable_convolution_model.17} parent=1 // pred_fallthru
      _
    // Predicated region
    $region30: #{separable_convolution_model.17} parent=1 // pred_check
      _
    $region31: #{separable_convolution_model.17} parent=1 // pred_check_branch
      %32 = sbr.rel (0) target = $region33
    $region32: #{separable_convolution_model.17} parent=1 // pred_region
      _
    $region33: #{separable_convolution_model.17} parent=1 // pred_fallthru
      _
    // Predicated region
    $region34: #{separable_convolution_model.17} parent=1 // pred_check
      _
    $region35: #{separable_convolution_model.17} parent=1 // pred_check_branch
      %34 = sbr.rel (0) target = $region37
    $region36: #{separable_convolution_model.17} parent=1 // pred_region
      _
    $region37: #{separable_convolution_model.17} parent=1 // pred_fallthru
      _
    // Predicated region
    $region38: #{separable_convolution_model.17} parent=1 // pred_check
      _
    $region39: #{separable_convolution_model.17} parent=1 // pred_check_branch
      %36 = sbr.rel (0) target = $region41
    $region40: #{separable_convolution_model.17} parent=1 // pred_region
      _
    $region41: #{separable_convolution_model.17} parent=1 // pred_fallthru
      _
    // Predicated region
    $region42: #{separable_convolution_model.17} parent=1 // pred_check
      _
    $region43: #{separable_convolution_model.17} parent=1 // pred_check_branch
      %38 = sbr.rel (0) target = $region45
    $region44: #{separable_convolution_model.17} parent=1 // pred_region
      _
    $region45: #{separable_convolution_model.17} parent=1 // pred_fallthru
      _
    %v40 = vld [vmem:[%s0] sm:$0xf]
    %v41 = vld [vmem:[%s0 + $0x4] sm:$0xf]
    %v42 = vadd.f32 %v40, 0.0
    %v43 = vadd.f32 %v41, 0.0
    %v46 = vlaneseq
    %v47 = vshrl.u32 %v46, 7
    %v48 = vsub.s32 0, %v47
    %v49 = vrot.slane %v42, %v48
    %v50 = vlaneseq
    %v51 = vshrl.u32 %v50, 7
    %v52 = vsub.s32 1, %v51
    %v53 = vrot.slane %v42, %v52
    %v54 = vlaneseq
    %v55 = vshrl.u32 %v54, 7
    %v56 = vsub.s32 2, %v55
    %v57 = vrot.slane %v42, %v56
    %v58 = vlaneseq
    %v59 = vshrl.u32 %v58, 7
    %v60 = vsub.s32 3, %v59
    %v61 = vrot.slane %v42, %v60
    %v62 = vlaneseq
    %v63 = vshrl.u32 %v62, 7
    %v64 = vsub.s32 0, %v63
    %v65 = vrot.slane %v43, %v64
    %v66 = vlaneseq
    %v67 = vshrl.u32 %v66, 7
    %v68 = vsub.s32 1, %v67
    %v69 = vrot.slane %v43, %v68
    %v70 = vlaneseq
    %v71 = vshrl.u32 %v70, 7
    %v72 = vsub.s32 2, %v71
    %v73 = vrot.slane %v43, %v72
    %v74 = vlaneseq
    %v75 = vshrl.u32 %v74, 7
    %v76 = vsub.s32 3, %v75
    %v77 = vrot.slane %v43, %v76
    %v86 = vpack.c.bf16 %v49, %v49
    %v87 = vpack.c.bf16 %v53, %v53
    %v88 = vpack.c.bf16 %v57, %v57
    %v89 = vpack.c.bf16 %v61, %v61
    %v90 = vpack.c.bf16 %v65, %v65
    %v91 = vpack.c.bf16 %v69, %v69
    %v92 = vpack.c.bf16 %v73, %v73
    %v93 = vpack.c.bf16 %v77, %v77
    %v94 = vld [vmem:[%s1] sm:$0xff]
    %v95 = vld [vmem:[%s1 + $0x8] sm:$0xff]
    %v96 = vld [vmem:[%s1 + $0x10] sm:$0xff]
    %v97 = vld [vmem:[%s1 + $0x18] sm:$0xff]
    %v98 = vld [vmem:[%s1 + $0x20] sm:$0xff]
    %v99 = vld [vmem:[%s1 + $0x28] sm:$0xff]
    %v100 = vld [vmem:[%s1 + $0x30] sm:$0xff]
    %v101 = vld [vmem:[%s1 + $0x38] sm:$0xff]
    %v102 = vld [vmem:[%s1 + $0x40] sm:$0xff]
    %v103 = vld [vmem:[%s1 + $0x48] sm:$0xff]
    %v104 = vld [vmem:[%s1 + $0x50] sm:$0xff]
    %v105 = vld [vmem:[%s1 + $0x58] sm:$0xff]
    %v106 = vld [vmem:[%s1 + $0x60] sm:$0xff]
    %v107 = vld [vmem:[%s1 + $0x68] sm:$0xff]
    %v108 = vld [vmem:[%s1 + $0x70] sm:$0xff]
    %v109 = vld [vmem:[%s1 + $0x78] sm:$0xff]
    %v110 = vld [vmem:[%s1 + $0x80] sm:$0xff]
    %v111 = vld [vmem:[%s1 + $0x88] sm:$0xff]
    %v112 = vld [vmem:[%s1 + $0x90] sm:$0xff]
    %v113 = vld [vmem:[%s1 + $0x98] sm:$0xff]
    %v114 = vld [vmem:[%s1 + $0xa0] sm:$0xff]
    %v115 = vld [vmem:[%s1 + $0xa8] sm:$0xff]
    %v116 = vld [vmem:[%s1 + $0xb0] sm:$0xff]
    %v117 = vld [vmem:[%s1 + $0xb8] sm:$0xff]
    %v118 = vld [vmem:[%s1 + $0xc0] sm:$0xff]
    %v119 = vld [vmem:[%s1 + $0xc8] sm:$0xff]
    %v120 = vld [vmem:[%s1 + $0xd0] sm:$0xff]
    %v121 = vld [vmem:[%s1 + $0xd8] sm:$0xff]
    %v122 = vld [vmem:[%s1 + $0xe0] sm:$0xff]
    %v123 = vld [vmem:[%s1 + $0xe8] sm:$0xff]
    %v124 = vld [vmem:[%s1 + $0xf0] sm:$0xff]
    %v125 = vld [vmem:[%s1 + $0xf8] sm:$0xff]
    %v126 = vld [vmem:[%s1 + $0x100] sm:$0xff]
    %v127 = vld [vmem:[%s1 + $0x108] sm:$0xff]
    %v128 = vld [vmem:[%s1 + $0x110] sm:$0xff]
    %v129 = vld [vmem:[%s1 + $0x118] sm:$0xff]
    %v130 = vld [vmem:[%s1 + $0x120] sm:$0xff]
    %v131 = vld [vmem:[%s1 + $0x128] sm:$0xff]
    %v132 = vld [vmem:[%s1 + $0x130] sm:$0xff]
    %v133 = vld [vmem:[%s1 + $0x138] sm:$0xff]
    %v134 = vld [vmem:[%s1 + $0x140] sm:$0xff]
    %v135 = vld [vmem:[%s1 + $0x148] sm:$0xff]
    %v136 = vld [vmem:[%s1 + $0x150] sm:$0xff]
    %v137 = vld [vmem:[%s1 + $0x158] sm:$0xff]
    %v138 = vld [vmem:[%s1 + $0x160] sm:$0xff]
    %v139 = vld [vmem:[%s1 + $0x168] sm:$0xff]
    %v140 = vld [vmem:[%s1 + $0x170] sm:$0xff]
    %v141 = vld [vmem:[%s1 + $0x178] sm:$0xff]
    %v142 = vld [vmem:[%s1 + $0x180] sm:$0xff]
    %v143 = vld [vmem:[%s1 + $0x188] sm:$0xff]
    %v144 = vld [vmem:[%s1 + $0x190] sm:$0xff]
    %v145 = vld [vmem:[%s1 + $0x198] sm:$0xff]
    %v146 = vld [vmem:[%s1 + $0x1a0] sm:$0xff]
    %v147 = vld [vmem:[%s1 + $0x1a8] sm:$0xff]
    %v148 = vld [vmem:[%s1 + $0x1b0] sm:$0xff]
    %v149 = vld [vmem:[%s1 + $0x1b8] sm:$0xff]
    %v150 = vld [vmem:[%s1 + $0x1c0] sm:$0xff]
    %v151 = vld [vmem:[%s1 + $0x1c8] sm:$0xff]
    %v152 = vld [vmem:[%s1 + $0x1d0] sm:$0xff]
    %v153 = vld [vmem:[%s1 + $0x1d8] sm:$0xff]
    %v154 = vld [vmem:[%s1 + $0x1e0] sm:$0xff]
    %v155 = vld [vmem:[%s1 + $0x1e8] sm:$0xff]
    %v156 = vld [vmem:[%s1 + $0x1f0] sm:$0xff]
    %v157 = vld [vmem:[%s1 + $0x1f8] sm:$0xff]
    %v158 = vld [vmem:[%s2] sm:$0x3]
    %v160 = vlaneseq
    %v161 = vshrl.u32 %v160, 7
    %v162 = vsub.s32 0, %v161
    %v163 = vrot.slane %v158, %v162
    %v164 = vlaneseq
    %v165 = vshrl.u32 %v164, 7
    %v166 = vsub.s32 1, %v165
    %v167 = vrot.slane %v158, %v166
    %v178 = vunpack.c.l.b16 %v86
    %v179 = vunpack.c.l.b16 %v87
    %v180 = vunpack.c.l.b16 %v88
    %v181 = vunpack.c.l.b16 %v89
    %v182 = vunpack.c.l.b16 %v90
    %v183 = vunpack.c.l.b16 %v91
    %v184 = vunpack.c.l.b16 %v92
    %v185 = vunpack.c.l.b16 %v93
    %v186 = vrot.slane %v182, 7
    %vm187 = vcmask 1041409
    %v188 = vsel %vm187, %v186, %v178
    %v189 = vrot.slane %v183, 7
    %v190 = vsel %vm187, %v189, %v179
    %v191 = vrot.slane %v184, 7
    %v192 = vsel %vm187, %v191, %v180
    %v193 = vrot.slane %v185, 7
    %v194 = vsel %vm187, %v193, %v181
    %v195 = vpack.c.b16 %v188, %v188
    %v196 = vpack.c.b16 %v190, %v190
    %v197 = vpack.c.b16 %v192, %v192
    %v198 = vpack.c.b16 %v194, %v194
    %v267 = vunpack.c.l.b16 %v94
    %v268 = vunpack.c.h.b16 %v94
    %v269 = vunpack.c.l.b16 %v95
    %v270 = vunpack.c.h.b16 %v95
    %v271 = vunpack.c.l.b16 %v96
    %v272 = vunpack.c.h.b16 %v96
    %v273 = vunpack.c.l.b16 %v97
    %v274 = vunpack.c.h.b16 %v97
    %v275 = vunpack.c.l.b16 %v98
    %v276 = vunpack.c.h.b16 %v98
    %v277 = vunpack.c.l.b16 %v99
    %v278 = vunpack.c.h.b16 %v99
    %v279 = vunpack.c.l.b16 %v100
    %v280 = vunpack.c.h.b16 %v100
    %v281 = vunpack.c.l.b16 %v101
    %v282 = vunpack.c.h.b16 %v101
    %v283 = vunpack.c.l.b16 %v102
    %v284 = vunpack.c.h.b16 %v102
    %v285 = vunpack.c.l.b16 %v103
    %v286 = vunpack.c.h.b16 %v103
    %v287 = vunpack.c.l.b16 %v104
    %v288 = vunpack.c.h.b16 %v104
    %v289 = vunpack.c.l.b16 %v105
    %v290 = vunpack.c.h.b16 %v105
    %v291 = vunpack.c.l.b16 %v106
    %v292 = vunpack.c.h.b16 %v106
    %v293 = vunpack.c.l.b16 %v107
    %v294 = vunpack.c.h.b16 %v107
    %v295 = vunpack.c.l.b16 %v108
    %v296 = vunpack.c.h.b16 %v108
    %v297 = vunpack.c.l.b16 %v109
    %v298 = vunpack.c.h.b16 %v109
    %v299 = vunpack.c.l.b16 %v110
    %v300 = vunpack.c.h.b16 %v110
    %v301 = vunpack.c.l.b16 %v111
    %v302 = vunpack.c.h.b16 %v111
    %v303 = vunpack.c.l.b16 %v112
    %v304 = vunpack.c.h.b16 %v112
    %v305 = vunpack.c.l.b16 %v113
    %v306 = vunpack.c.h.b16 %v113
    %v307 = vunpack.c.l.b16 %v114
    %v308 = vunpack.c.h.b16 %v114
    %v309 = vunpack.c.l.b16 %v115
    %v310 = vunpack.c.h.b16 %v115
    %v311 = vunpack.c.l.b16 %v116
    %v312 = vunpack.c.h.b16 %v116
    %v313 = vunpack.c.l.b16 %v117
    %v314 = vunpack.c.h.b16 %v117
    %v315 = vunpack.c.l.b16 %v118
    %v316 = vunpack.c.h.b16 %v118
    %v317 = vunpack.c.l.b16 %v119
    %v318 = vunpack.c.h.b16 %v119
    %v319 = vunpack.c.l.b16 %v120
    %v320 = vunpack.c.h.b16 %v120
    %v321 = vunpack.c.l.b16 %v121
    %v322 = vunpack.c.h.b16 %v121
    %v323 = vunpack.c.l.b16 %v122
    %v324 = vunpack.c.h.b16 %v122
    %v325 = vunpack.c.l.b16 %v123
    %v326 = vunpack.c.h.b16 %v123
    %v327 = vunpack.c.l.b16 %v124
    %v328 = vunpack.c.h.b16 %v124
    %v329 = vunpack.c.l.b16 %v125
    %v330 = vunpack.c.h.b16 %v125
    %v331 = vunpack.c.l.b16 %v126
    %v332 = vunpack.c.h.b16 %v126
    %v333 = vunpack.c.l.b16 %v127
    %v334 = vunpack.c.h.b16 %v127
    %v335 = vunpack.c.l.b16 %v128
    %v336 = vunpack.c.h.b16 %v128
    %v337 = vunpack.c.l.b16 %v129
    %v338 = vunpack.c.h.b16 %v129
    %v339 = vunpack.c.l.b16 %v130
    %v340 = vunpack.c.h.b16 %v130
    %v341 = vunpack.c.l.b16 %v131
    %v342 = vunpack.c.h.b16 %v131
    %v343 = vunpack.c.l.b16 %v132
    %v344 = vunpack.c.h.b16 %v132
    %v345 = vunpack.c.l.b16 %v133
    %v346 = vunpack.c.h.b16 %v133
    %v347 = vunpack.c.l.b16 %v134
    %v348 = vunpack.c.h.b16 %v134
    %v349 = vunpack.c.l.b16 %v135
    %v350 = vunpack.c.h.b16 %v135
    %v351 = vunpack.c.l.b16 %v136
    %v352 = vunpack.c.h.b16 %v136
    %v353 = vunpack.c.l.b16 %v137
    %v354 = vunpack.c.h.b16 %v137
    %v355 = vunpack.c.l.b16 %v138
    %v356 = vunpack.c.h.b16 %v138
    %v357 = vunpack.c.l.b16 %v139
    %v358 = vunpack.c.h.b16 %v139
    %v359 = vunpack.c.l.b16 %v140
    %v360 = vunpack.c.h.b16 %v140
    %v361 = vunpack.c.l.b16 %v141
    %v362 = vunpack.c.h.b16 %v141
    %v363 = vunpack.c.l.b16 %v142
    %v364 = vunpack.c.h.b16 %v142
    %v365 = vunpack.c.l.b16 %v143
    %v366 = vunpack.c.h.b16 %v143
    %v367 = vunpack.c.l.b16 %v144
    %v368 = vunpack.c.h.b16 %v144
    %v369 = vunpack.c.l.b16 %v145
    %v370 = vunpack.c.h.b16 %v145
    %v371 = vunpack.c.l.b16 %v146
    %v372 = vunpack.c.h.b16 %v146
    %v373 = vunpack.c.l.b16 %v147
    %v374 = vunpack.c.h.b16 %v147
    %v375 = vunpack.c.l.b16 %v148
    %v376 = vunpack.c.h.b16 %v148
    %v377 = vunpack.c.l.b16 %v149
    %v378 = vunpack.c.h.b16 %v149
    %v379 = vunpack.c.l.b16 %v150
    %v380 = vunpack.c.h.b16 %v150
    %v381 = vunpack.c.l.b16 %v151
    %v382 = vunpack.c.h.b16 %v151
    %v383 = vunpack.c.l.b16 %v152
    %v384 = vunpack.c.h.b16 %v152
    %v385 = vunpack.c.l.b16 %v153
    %v386 = vunpack.c.h.b16 %v153
    %v387 = vunpack.c.l.b16 %v154
    %v388 = vunpack.c.h.b16 %v154
    %v389 = vunpack.c.l.b16 %v155
    %v390 = vunpack.c.h.b16 %v155
    %v391 = vunpack.c.l.b16 %v156
    %v392 = vunpack.c.h.b16 %v156
    %v393 = vunpack.c.l.b16 %v157
    %v394 = vunpack.c.h.b16 %v157
    %v395 = vpack.c.b16 %v269, %v267
    %v396 = vpack.c.b16 %v270, %v268
    %v397 = vpack.c.b16 %v273, %v271
    %v398 = vpack.c.b16 %v274, %v272
    %v399 = vpack.c.b16 %v277, %v275
    %v400 = vpack.c.b16 %v278, %v276
    %v401 = vpack.c.b16 %v281, %v279
    %v402 = vpack.c.b16 %v282, %v280
    %v403 = vpack.c.b16 %v285, %v283
    %v404 = vpack.c.b16 %v286, %v284
    %v405 = vpack.c.b16 %v289, %v287
    %v406 = vpack.c.b16 %v290, %v288
    %v407 = vpack.c.b16 %v293, %v291
    %v408 = vpack.c.b16 %v294, %v292
    %v409 = vpack.c.b16 %v297, %v295
    %v410 = vpack.c.b16 %v298, %v296
    %v411 = vpack.c.b16 %v301, %v299
    %v412 = vpack.c.b16 %v302, %v300
    %v413 = vpack.c.b16 %v305, %v303
    %v414 = vpack.c.b16 %v306, %v304
    %v415 = vpack.c.b16 %v309, %v307
    %v416 = vpack.c.b16 %v310, %v308
    %v417 = vpack.c.b16 %v313, %v311
    %v418 = vpack.c.b16 %v314, %v312
    %v419 = vpack.c.b16 %v317, %v315
    %v420 = vpack.c.b16 %v318, %v316
    %v421 = vpack.c.b16 %v321, %v319
    %v422 = vpack.c.b16 %v322, %v320
    %v423 = vpack.c.b16 %v325, %v323
    %v424 = vpack.c.b16 %v326, %v324
    %v425 = vpack.c.b16 %v329, %v327
    %v426 = vpack.c.b16 %v330, %v328
    %v427 = vpack.c.b16 %v333, %v331
    %v428 = vpack.c.b16 %v334, %v332
    %v429 = vpack.c.b16 %v337, %v335
    %v430 = vpack.c.b16 %v338, %v336
    %v431 = vpack.c.b16 %v341, %v339
    %v432 = vpack.c.b16 %v342, %v340
    %v433 = vpack.c.b16 %v345, %v343
    %v434 = vpack.c.b16 %v346, %v344
    %v435 = vpack.c.b16 %v349, %v347
    %v436 = vpack.c.b16 %v350, %v348
    %v437 = vpack.c.b16 %v353, %v351
    %v438 = vpack.c.b16 %v354, %v352
    %v439 = vpack.c.b16 %v357, %v355
    %v440 = vpack.c.b16 %v358, %v356
    %v441 = vpack.c.b16 %v361, %v359
    %v442 = vpack.c.b16 %v362, %v360
    %v443 = vpack.c.b16 %v365, %v363
    %v444 = vpack.c.b16 %v366, %v364
    %v445 = vpack.c.b16 %v369, %v367
    %v446 = vpack.c.b16 %v370, %v368
    %v447 = vpack.c.b16 %v373, %v371
    %v448 = vpack.c.b16 %v374, %v372
    %v449 = vpack.c.b16 %v377, %v375
    %v450 = vpack.c.b16 %v378, %v376
    %v451 = vpack.c.b16 %v381, %v379
    %v452 = vpack.c.b16 %v382, %v380
    %v453 = vpack.c.b16 %v385, %v383
    %v454 = vpack.c.b16 %v386, %v384
    %v455 = vpack.c.b16 %v389, %v387
    %v456 = vpack.c.b16 %v390, %v388
    %v457 = vpack.c.b16 %v393, %v391
    %v458 = vpack.c.b16 %v394, %v392
    %523 = vmatprep.subr.bf16.mxu0 %v396
    %524 = vmatpush1.bf16.msra.mxu0 %v395
    %525 = vmatprep.subr.bf16.mxu0 %v398
    %526 = vmatpush1.bf16.msra.mxu0 %v397
    %527 = vmatprep.subr.bf16.mxu0 %v400
    %528 = vmatpush1.bf16.msra.mxu0 %v399
    %529 = vmatprep.subr.bf16.mxu0 %v402
    %530 = vmatpush1.bf16.msra.mxu0 %v401
    %531 = vmatprep.subr.bf16.mxu0 %v404
    %532 = vmatpush1.bf16.msra.mxu0 %v403
    %533 = vmatprep.subr.bf16.mxu0 %v406
    %534 = vmatpush1.bf16.msra.mxu0 %v405
    %535 = vmatprep.subr.bf16.mxu0 %v408
    %536 = vmatpush1.bf16.msra.mxu0 %v407
    %537 = vmatprep.subr.bf16.mxu0 %v410
    %538 = vmatpush1.bf16.msra.mxu0 %v409
    %539 = vmatprep.subr.bf16.mxu0 %v412
    %540 = vmatpush1.bf16.msra.mxu0 %v411
    %541 = vmatprep.subr.bf16.mxu0 %v414
    %542 = vmatpush1.bf16.msra.mxu0 %v413
    %543 = vmatprep.subr.bf16.mxu0 %v416
    %544 = vmatpush1.bf16.msra.mxu0 %v415
    %545 = vmatprep.subr.bf16.mxu0 %v418
    %546 = vmatpush1.bf16.msra.mxu0 %v417
    %547 = vmatprep.subr.bf16.mxu0 %v420
    %548 = vmatpush1.bf16.msra.mxu0 %v419
    %549 = vmatprep.subr.bf16.mxu0 %v422
    %550 = vmatpush1.bf16.msra.mxu0 %v421
    %551 = vmatprep.subr.bf16.mxu0 %v424
    %552 = vmatpush1.bf16.msra.mxu0 %v423
    %553 = vmatprep.subr.bf16.mxu0 %v426
    %554 = vmatpush1.bf16.msra.mxu0 %v425
    %555 = vmatprep.mubr.bf16.mxu0 %v196
    %556 = vmatmul.mubr.bf16.gmra.mrb[0].mxu0 %v195
    %v557 = vpop.f32.mrb[0].mxu0
    %v558 = vadd.f32 %v163, %v557
    %v559 = vpop.f32.mrb[0].mxu0
    %v560 = vadd.f32 %v167, %v559
    %v561 = vpop.f32.mrb[0].mxu0
    %v562 = vpop.f32.mrb[0].mxu0
    %563 = vdwg.mxu0
    %564 = vmatprep.subr.bf16.mxu0 %v428
    %565 = vmatpush1.bf16.msra.mxu0 %v427
    %566 = vmatprep.subr.bf16.mxu0 %v430
    %567 = vmatpush1.bf16.msra.mxu0 %v429
    %568 = vmatprep.subr.bf16.mxu0 %v432
    %569 = vmatpush1.bf16.msra.mxu0 %v431
    %570 = vmatprep.subr.bf16.mxu0 %v434
    %571 = vmatpush1.bf16.msra.mxu0 %v433
    %572 = vmatprep.subr.bf16.mxu0 %v436
    %573 = vmatpush1.bf16.msra.mxu0 %v435
    %574 = vmatprep.subr.bf16.mxu0 %v438
    %575 = vmatpush1.bf16.msra.mxu0 %v437
    %576 = vmatprep.subr.bf16.mxu0 %v440
    %577 = vmatpush1.bf16.msra.mxu0 %v439
    %578 = vmatprep.subr.bf16.mxu0 %v442
    %579 = vmatpush1.bf16.msra.mxu0 %v441
    %580 = vmatprep.subr.bf16.mxu0 %v444
    %581 = vmatpush1.bf16.msra.mxu0 %v443
    %582 = vmatprep.subr.bf16.mxu0 %v446
    %583 = vmatpush1.bf16.msra.mxu0 %v445
    %584 = vmatprep.subr.bf16.mxu0 %v448
    %585 = vmatpush1.bf16.msra.mxu0 %v447
    %586 = vmatprep.subr.bf16.mxu0 %v450
    %587 = vmatpush1.bf16.msra.mxu0 %v449
    %588 = vmatprep.subr.bf16.mxu0 %v452
    %589 = vmatpush1.bf16.msra.mxu0 %v451
    %590 = vmatprep.subr.bf16.mxu0 %v454
    %591 = vmatpush1.bf16.msra.mxu0 %v453
    %592 = vmatprep.subr.bf16.mxu0 %v456
    %593 = vmatpush1.bf16.msra.mxu0 %v455
    %594 = vmatprep.subr.bf16.mxu0 %v458
    %595 = vmatpush1.bf16.msra.mxu0 %v457
    %596 = vmatprep.mubr.bf16.mxu0 %v198
    %597 = vmatmul.mubr.bf16.gmra.mrb[0].mxu0 %v197
    %v598 = vpop.f32.mrb[0].mxu0
    %v599 = vadd.f32 %v558, %v598
    %v600 = vpop.f32.mrb[0].mxu0
    %v601 = vadd.f32 %v560, %v600
    %v602 = vpop.f32.mrb[0].mxu0
    %v603 = vpop.f32.mrb[0].mxu0
    %604 = vdwg.mxu0
    %v605 = vmax.f32 %v599, 0.0
    %v606 = vmax.f32 %v601, 0.0
    %v607 = vld [vmem:[%s3] sm:$0x3]
    %v609 = vlaneseq
    %v610 = vshrl.u32 %v609, 7
    %v611 = vsub.s32 0, %v610
    %v612 = vrot.slane %v607, %v611
    %v613 = vlaneseq
    %v614 = vshrl.u32 %v613, 7
    %v615 = vsub.s32 1, %v614
    %v616 = vrot.slane %v607, %v615
    %v619 = vmul.f32 %v605, %v612
    %v620 = vmul.f32 %v606, %v616
    %v621 = vld [vmem:[%s4] sm:$0x3]
    %v623 = vlaneseq
    %v624 = vshrl.u32 %v623, 7
    %v625 = vsub.s32 0, %v624
    %v626 = vrot.slane %v621, %v625
    %v627 = vlaneseq
    %v628 = vshrl.u32 %v627, 7
    %v629 = vsub.s32 1, %v628
    %v630 = vrot.slane %v621, %v629
    %v633 = vadd.f32 %v619, %v626
    %v634 = vadd.f32 %v620, %v630
    %v635 = vpack.c.bf16 %v633, %v633
    %v636 = vpack.c.bf16 %v634, %v634
    %v637 = vld [vmem:[%s5] sm:$0xf]
    %v638 = vld [vmem:[%s5 + $0x4] sm:$0xf]
    %v639 = vld [vmem:[%s5 + $0x8] sm:$0xf]
    %v640 = vld [vmem:[%s5 + $0xc] sm:$0xf]
    %v641 = vld [vmem:[%s5 + $0x10] sm:$0xf]
    %v642 = vld [vmem:[%s5 + $0x14] sm:$0xf]
    %v643 = vld [vmem:[%s5 + $0x18] sm:$0xf]
    %v644 = vld [vmem:[%s5 + $0x1c] sm:$0xf]
    %v645 = vld [vmem:[%s5 + $0x20] sm:$0xf]
    %v646 = vld [vmem:[%s5 + $0x24] sm:$0xf]
    %v647 = vld [vmem:[%s5 + $0x28] sm:$0xf]
    %v648 = vld [vmem:[%s5 + $0x2c] sm:$0xf]
    %v649 = vld [vmem:[%s5 + $0x30] sm:$0xf]
    %v650 = vld [vmem:[%s5 + $0x34] sm:$0xf]
    %v651 = vld [vmem:[%s5 + $0x38] sm:$0xf]
    %v652 = vld [vmem:[%s5 + $0x3c] sm:$0xf]
    %v653 = vld [vmem:[%s5 + $0x40] sm:$0xf]
    %v654 = vld [vmem:[%s5 + $0x44] sm:$0xf]
    %v655 = vld [vmem:[%s5 + $0x48] sm:$0xf]
    %v656 = vld [vmem:[%s5 + $0x4c] sm:$0xf]
    %v657 = vld [vmem:[%s5 + $0x50] sm:$0xf]
    %v658 = vld [vmem:[%s5 + $0x54] sm:$0xf]
    %v659 = vld [vmem:[%s5 + $0x58] sm:$0xf]
    %v660 = vld [vmem:[%s5 + $0x5c] sm:$0xf]
    %v661 = vld [vmem:[%s5 + $0x60] sm:$0xf]
    %v662 = vld [vmem:[%s5 + $0x64] sm:$0xf]
    %v663 = vld [vmem:[%s5 + $0x68] sm:$0xf]
    %v664 = vld [vmem:[%s5 + $0x6c] sm:$0xf]
    %v665 = vld [vmem:[%s5 + $0x70] sm:$0xf]
    %v666 = vld [vmem:[%s5 + $0x74] sm:$0xf]
    %v667 = vld [vmem:[%s5 + $0x78] sm:$0xf]
    %v668 = vld [vmem:[%s5 + $0x7c] sm:$0xf]
    %v669 = vld [vmem:[%s6] sm:$0x1]
    %v671 = vlaneseq
    %v672 = vshrl.u32 %v671, 7
    %v673 = vsub.s32 0, %v672
    %v674 = vrot.slane %v669, %v673
    %v708 = vunpack.c.l.b16 %v637
    %v709 = vunpack.c.l.b16 %v638
    %v710 = vunpack.c.l.b16 %v639
    %v711 = vunpack.c.l.b16 %v640
    %v712 = vunpack.c.l.b16 %v641
    %v713 = vunpack.c.l.b16 %v642
    %v714 = vunpack.c.l.b16 %v643
    %v715 = vunpack.c.l.b16 %v644
    %v716 = vunpack.c.l.b16 %v645
    %v717 = vunpack.c.l.b16 %v646
    %v718 = vunpack.c.l.b16 %v647
    %v719 = vunpack.c.l.b16 %v648
    %v720 = vunpack.c.l.b16 %v649
    %v721 = vunpack.c.l.b16 %v650
    %v722 = vunpack.c.l.b16 %v651
    %v723 = vunpack.c.l.b16 %v652
    %v724 = vunpack.c.l.b16 %v653
    %v725 = vunpack.c.l.b16 %v654
    %v726 = vunpack.c.l.b16 %v655
    %v727 = vunpack.c.l.b16 %v656
    %v728 = vunpack.c.l.b16 %v657
    %v729 = vunpack.c.l.b16 %v658
    %v730 = vunpack.c.l.b16 %v659
    %v731 = vunpack.c.l.b16 %v660
    %v732 = vunpack.c.l.b16 %v661
    %v733 = vunpack.c.l.b16 %v662
    %v734 = vunpack.c.l.b16 %v663
    %v735 = vunpack.c.l.b16 %v664
    %v736 = vunpack.c.l.b16 %v665
    %v737 = vunpack.c.l.b16 %v666
    %v738 = vunpack.c.l.b16 %v667
    %v739 = vunpack.c.l.b16 %v668
    %v740 = vpack.c.b16 %v709, %v708
    %v741 = vpack.c.b16 %v711, %v710
    %v742 = vpack.c.b16 %v713, %v712
    %v743 = vpack.c.b16 %v715, %v714
    %v744 = vpack.c.b16 %v717, %v716
    %v745 = vpack.c.b16 %v719, %v718
    %v746 = vpack.c.b16 %v721, %v720
    %v747 = vpack.c.b16 %v723, %v722
    %v748 = vpack.c.b16 %v725, %v724
    %v749 = vpack.c.b16 %v727, %v726
    %v750 = vpack.c.b16 %v729, %v728
    %v751 = vpack.c.b16 %v731, %v730
    %v752 = vpack.c.b16 %v733, %v732
    %v753 = vpack.c.b16 %v735, %v734
    %v754 = vpack.c.b16 %v737, %v736
    %v755 = vpack.c.b16 %v739, %v738
    %772 = vmatprep.subr.bf16.mxu0 0
    %773 = vmatpush1.bf16.msra.mxu0 %v740
    %774 = vmatprep.subr.bf16.mxu0 0
    %775 = vmatpush1.bf16.msra.mxu0 %v741
    %776 = vmatprep.subr.bf16.mxu0 0
    %777 = vmatpush1.bf16.msra.mxu0 %v742
    %778 = vmatprep.subr.bf16.mxu0 0
    %779 = vmatpush1.bf16.msra.mxu0 %v743
    %780 = vmatprep.subr.bf16.mxu0 0
    %781 = vmatpush1.bf16.msra.mxu0 %v744
    %782 = vmatprep.subr.bf16.mxu0 0
    %783 = vmatpush1.bf16.msra.mxu0 %v745
    %784 = vmatprep.subr.bf16.mxu0 0
    %785 = vmatpush1.bf16.msra.mxu0 %v746
    %786 = vmatprep.subr.bf16.mxu0 0
    %787 = vmatpush1.bf16.msra.mxu0 %v747
    %788 = vmatprep.subr.bf16.mxu0 0
    %789 = vmatpush1.bf16.msra.mxu0 %v748
    %790 = vmatprep.subr.bf16.mxu0 0
    %791 = vmatpush1.bf16.msra.mxu0 %v749
    %792 = vmatprep.subr.bf16.mxu0 0
    %793 = vmatpush1.bf16.msra.mxu0 %v750
    %794 = vmatprep.subr.bf16.mxu0 0
    %795 = vmatpush1.bf16.msra.mxu0 %v751
    %796 = vmatprep.subr.bf16.mxu0 0
    %797 = vmatpush1.bf16.msra.mxu0 %v752
    %798 = vmatprep.subr.bf16.mxu0 0
    %799 = vmatpush1.bf16.msra.mxu0 %v753
    %800 = vmatprep.subr.bf16.mxu0 0
    %801 = vmatpush1.bf16.msra.mxu0 %v754
    %802 = vmatprep.subr.bf16.mxu0 0
    %803 = vmatpush1.bf16.msra.mxu0 %v755
    %804 = vmatprep.mubr.bf16.mxu0 %v636
    %805 = vmatmul.mubr.bf16.gmra.mrb[0].mxu0 %v635
    %v806 = vpop.f32.mrb[0].mxu0
    %v807 = vadd.f32 %v674, %v806
    %v808 = vpop.f32.mrb[0].mxu0
    %v809 = vpop.f32.mrb[0].mxu0
    %v810 = vpop.f32.mrb[0].mxu0
    %811 = vdwg.mxu0
    %v812 = vmax.f32 %v807, 0.0
    %v813 = vld [vmem:[%s7] sm:$0x1]
    %v815 = vlaneseq
    %v816 = vshrl.u32 %v815, 7
    %v817 = vsub.s32 0, %v816
    %v818 = vrot.slane %v813, %v817
    %v820 = vmul.f32 %v812, %v818
    %v821 = vld [vmem:[%s8] sm:$0x1]
    %v823 = vlaneseq
    %v824 = vshrl.u32 %v823, 7
    %v825 = vsub.s32 0, %v824
    %v826 = vrot.slane %v821, %v825
    %v828 = vadd.f32 %v820, %v826
    %v829 = vpack.c.bf16 %v828, %v828
    %v830 = vld [vmem:[%s9] sm:$0xf]
    %v831 = vld [vmem:[%s9 + $0x4] sm:$0xf]
    %v832 = vld [vmem:[%s9 + $0x8] sm:$0xf]
    %v833 = vld [vmem:[%s9 + $0xc] sm:$0xf]
    %v834 = vld [vmem:[%s9 + $0x10] sm:$0xf]
    %v835 = vld [vmem:[%s9 + $0x14] sm:$0xf]
    %v836 = vld [vmem:[%s9 + $0x18] sm:$0xf]
    %v837 = vld [vmem:[%s9 + $0x1c] sm:$0xf]
    %v838 = vld [vmem:[%s9 + $0x20] sm:$0xf]
    %v839 = vld [vmem:[%s9 + $0x24] sm:$0xf]
    %v840 = vld [vmem:[%s9 + $0x28] sm:$0xf]
    %v841 = vld [vmem:[%s9 + $0x2c] sm:$0xf]
    %v842 = vld [vmem:[%s9 + $0x30] sm:$0xf]
    %v843 = vld [vmem:[%s9 + $0x34] sm:$0xf]
    %v844 = vld [vmem:[%s9 + $0x38] sm:$0xf]
    %v845 = vld [vmem:[%s9 + $0x3c] sm:$0xf]
    %v846 = vld [vmem:[%s10] sm:$0x1]
    %v848 = vlaneseq
    %v849 = vshrl.u32 %v848, 7
    %v850 = vsub.s32 0, %v849
    %v851 = vrot.slane %v846, %v850
    %v869 = vunpack.c.l.b16 %v830
    %v870 = vunpack.c.l.b16 %v831
    %v871 = vunpack.c.l.b16 %v832
    %v872 = vunpack.c.l.b16 %v833
    %v873 = vunpack.c.l.b16 %v834
    %v874 = vunpack.c.l.b16 %v835
    %v875 = vunpack.c.l.b16 %v836
    %v876 = vunpack.c.l.b16 %v837
    %v877 = vunpack.c.l.b16 %v838
    %v878 = vunpack.c.l.b16 %v839
    %v879 = vunpack.c.l.b16 %v840
    %v880 = vunpack.c.l.b16 %v841
    %v881 = vunpack.c.l.b16 %v842
    %v882 = vunpack.c.l.b16 %v843
    %v883 = vunpack.c.l.b16 %v844
    %v884 = vunpack.c.l.b16 %v845
    %v885 = vpack.c.b16 %v870, %v869
    %v886 = vpack.c.b16 %v872, %v871
    %v887 = vpack.c.b16 %v874, %v873
    %v888 = vpack.c.b16 %v876, %v875
    %v889 = vpack.c.b16 %v878, %v877
    %v890 = vpack.c.b16 %v880, %v879
    %v891 = vpack.c.b16 %v882, %v881
    %v892 = vpack.c.b16 %v884, %v883
    %901 = vmatprep.subr.bf16.mxu0 0
    %902 = vmatpush1.bf16.msra.mxu0 %v885
    %903 = vmatprep.subr.bf16.mxu0 0
    %904 = vmatpush1.bf16.msra.mxu0 %v886
    %905 = vmatprep.subr.bf16.mxu0 0
    %906 = vmatpush1.bf16.msra.mxu0 %v887
    %907 = vmatprep.subr.bf16.mxu0 0
    %908 = vmatpush1.bf16.msra.mxu0 %v888
    %909 = vmatprep.subr.bf16.mxu0 0
    %910 = vmatpush1.bf16.msra.mxu0 %v889
    %911 = vmatprep.subr.bf16.mxu0 0
    %912 = vmatpush1.bf16.msra.mxu0 %v890
    %913 = vmatprep.subr.bf16.mxu0 0
    %914 = vmatpush1.bf16.msra.mxu0 %v891
    %915 = vmatprep.subr.bf16.mxu0 0
    %916 = vmatpush1.bf16.msra.mxu0 %v892
    %917 = vmatprep.subr.bf16.mxu0 0
    %918 = vmatpush1.bf16.msra.mxu0 0
    %919 = vmatprep.subr.bf16.mxu0 0
    %920 = vmatpush1.bf16.msra.mxu0 0
    %921 = vmatprep.subr.bf16.mxu0 0
    %922 = vmatpush1.bf16.msra.mxu0 0
    %923 = vmatprep.subr.bf16.mxu0 0
    %924 = vmatpush1.bf16.msra.mxu0 0
    %925 = vmatprep.subr.bf16.mxu0 0
    %926 = vmatpush1.bf16.msra.mxu0 0
    %927 = vmatprep.subr.bf16.mxu0 0
    %928 = vmatpush1.bf16.msra.mxu0 0
    %929 = vmatprep.subr.bf16.mxu0 0
    %930 = vmatpush1.bf16.msra.mxu0 0
    %931 = vmatprep.subr.bf16.mxu0 0
    %932 = vmatpush1.bf16.msra.mxu0 0
    %933 = vmatprep.mubr.bf16.mxu0 0
    %934 = vmatmul.mubr.bf16.gmra.mrb[0].mxu0 %v829
    %v935 = vpop.f32.mrb[0].mxu0
    %v936 = vadd.f32 %v851, %v935
    %v937 = vpop.f32.mrb[0].mxu0
    %v938 = vpop.f32.mrb[0].mxu0
    %v939 = vpop.f32.mrb[0].mxu0
    %940 = vdwg.mxu0
    %vm941 = vcmask 50176
    %942 = vst.msk [vmem:[#allocation2] sm:$0x3] %vm941, %v936
    // Predicated region
    $region46: #{separable_convolution_model.17} parent=1 // pred_check
      _
    $region47: #{separable_convolution_model.17} parent=1 // pred_check_branch
      %944 = sbr.rel (0) target = $region49
    $region48: #{separable_convolution_model.17} parent=1 // pred_region
      %s946 = ssub.s32 32, 32
      %947 = vsyncadd [#allocation3], %s946
      %s949 = sshll.u32 [#allocation2], 4
      %s950 = int_to_ptr.vmem [resolvable:$true] %s949
      %952 = dma.vmem_to_hbm [thread:$0]  %s950, 32, %s11, [#allocation3]
    $region49: #{separable_convolution_model.17} parent=1 // pred_fallthru
      _
    // Predicated region
    $region50: #{separable_convolution_model.17} parent=1 // pred_check
      _
    $region51: #{separable_convolution_model.17} parent=1 // pred_check_branch
      %954 = sbr.rel (0) target = $region53
    $region52: #{separable_convolution_model.17} parent=1 // pred_region
      %955 = dma.done [#allocation3], 32
    $region53: #{separable_convolution_model.17} parent=1 // pred_fallthru
      _
    %956 = vsyncpa [#allocation3], 1

</llo_original>
